<compile_context>
chip_gen: v6e
topology: v6e:2x2x1
jax: 0.10.0
libtpu: 0.0.40
codegen_flags: <defaults>
</compile_context>

<pallas_src>
import math
import functools

import jax
import jax.numpy as jnp
from jax.experimental import pallas as pl
from jax.experimental.pallas import tpu as pltpu

EPS = 1e-5                      # PyTorch InstanceNorm2d default (affine=False)
UPSAMPLE_SCALE = math.sqrt(512.0 / 180.0)
ACT_DTYPE = jnp.bfloat16        # activation storage dtype between pallas_calls


# ---------------------------------------------------------------------------
# In-kernel helpers
# ---------------------------------------------------------------------------
def _shift_right(x, k):
    """y[:, p] = x[:, p-k]  (zeros enter on the left)."""
    return jnp.concatenate([jnp.zeros((x.shape[0], k), x.dtype), x[:, :-k]], axis=1)


def _shift_left(x, k):
    """y[:, p] = x[:, p+k]  (zeros enter on the right)."""
    return jnp.concatenate([x[:, k:], jnp.zeros((x.shape[0], k), x.dtype)], axis=1)


def _reflect_pad_flat(x, H, W, Wp):
    """In-kernel ReflectionPad2d(1) on a flattened 'loose' slab.

    x: (C, H*Wp) with row stride Wp = W+2, valid cols 0..W-1 (cols W..Wp-1 are
    don't-care but finite).  Returns (C, (H+2)*Wp + 2); the 2 tail lanes are 0.
    """
    C, Mp = x.shape
    col = jax.lax.broadcasted_iota(jnp.int32, (1, Mp), 1) % Wp
    sr1 = _shift_right(x, 1)      # src col c-1  for dest cols 1..W
    sl1 = _shift_left(x, 1)       # src col 1    for dest col  0
    sr3 = _shift_right(x, 3)      # src col W-2  for dest col  W+1
    xc = jnp.where(col == 0, sl1, jnp.where(col == Wp - 1, sr3, sr1))
    top = xc[:, Wp:2 * Wp]                       # reflected row 1
    bot = xc[:, (H - 2) * Wp:(H - 1) * Wp]       # reflected row H-2
    tail = jnp.zeros((C, 2), x.dtype)
    return jnp.concatenate([top, xc, bot, tail], axis=1)


def _stack_taps(xpad, offsets, mp):
    """(Cin, L) -> (T*Cin, mp): rows t*Cin .. t*Cin+Cin-1 hold tap t's slice."""
    return jnp.concatenate([xpad[:, o:o + mp] for o in offsets], axis=0)


def _masked_instance_norm(a, mask, inv_count):
    """InstanceNorm (biased var) over the masked (valid) columns of (C, M)."""
    mean = jnp.sum(a * mask, axis=1, keepdims=True) * inv_count
    cen = a - mean
    var = jnp.sum(cen * cen * mask, axis=1, keepdims=True) * inv_count
    return cen * jax.lax.rsqrt(var + EPS)


# ---------------------------------------------------------------------------
# Pallas kernels
# ---------------------------------------------------------------------------
def _make_stage1_kernel(offsets, mp, count):
    """ReplicationPad(3)+Conv7 (single stacked-K matmul) + InstanceNorm + ReLU."""
    inv = 1.0 / float(count)

    def kernel(x_ref, w_ref, b_ref, mask_ref, o_ref):
        x = x_ref[0]                                        # (Cin, L) f32
        stack = _stack_taps(x, offsets, mp)                 # (T*Cin, mp)
        a = jnp.dot(w_ref[...], stack, preferred_element_type=jnp.float32)
        a = a + b_ref[...]
        a = _masked_instance_norm(a, mask_ref[...], inv)
        o_ref[0] = jnp.maximum(a, 0.0).astype(o_ref.dtype)

    return kernel


def _make_block_kernel(offsets, H, W, Wp, mp, count):
    """SELayer2d + ResidualBlock2d fully fused: one pallas_call per block."""
    inv = 1.0 / float(count)

    def kernel(x_ref, w1_ref, b1_ref, w2_ref, b2_ref, sw1_ref, sw2_ref,
               mask_ref, o_ref):
        hf = x_ref[0].astype(jnp.float32)                   # (C, mp) loose layout
        mask = mask_ref[...]

        # --- SE: global avg pool -> fc -> relu -> fc -> sigmoid -> scale ---
        pooled = jnp.sum(hf * mask, axis=1, keepdims=True) * inv          # (C,1)
        z = jnp.maximum(
            jnp.dot(sw1_ref[...], pooled, preferred_element_type=jnp.float32), 0.0)
        s = jax.nn.sigmoid(
            jnp.dot(sw2_ref[...], z, preferred_element_type=jnp.float32))  # (C,1)
        x1 = hf * s                                                        # SE(h)

        # --- conv1: in-kernel reflect pad -> stacked-K matmul -> IN -> ReLU ---
        xp = _reflect_pad_flat(x1, H, W, Wp).astype(jnp.bfloat16)
        a1 = jnp.dot(w1_ref[...], _stack_taps(xp, offsets, mp),
                     preferred_element_type=jnp.float32) + b1_ref[...]
        t = jnp.maximum(_masked_instance_norm(a1, mask, inv), 0.0)

        # --- conv2: in-kernel reflect pad -> stacked-K matmul -> IN ---
        tp = _reflect_pad_flat(t, H, W, Wp).astype(jnp.bfloat16)
        a2 = jnp.dot(w2_ref[...], _stack_taps(tp, offsets, mp),
                     preferred_element_type=jnp.float32) + b2_ref[...]
        y = _masked_instance_norm(a2, mask, inv)

        o_ref[0] = (x1 + y).astype(o_ref.dtype)             # residual: SE(h) + conv

    return kernel


def _make_conv_out_kernel(offsets, mp, count):
    """[InstanceNorm + ReLU prologue] + zero-pad Conv3 (stacked-K) + ReLU."""
    inv = 1.0 / float(count)

    def kernel(x_ref, w_ref, b_ref, fmask_ref, o_ref):
        x = x_ref[0].astype(jnp.float32)                    # zero-padded slab
        fmask = fmask_ref[...]                              # 1 at interior pixels
        mean = jnp.sum(x * fmask, axis=1, keepdims=True) * inv
        cen = x - mean
        var = jnp.sum(cen * cen * fmask, axis=1, keepdims=True) * inv
        xn = jnp.maximum(cen * jax.lax.rsqrt(var + EPS), 0.0) * fmask
        a = jnp.dot(w_ref[...],
                    _stack_taps(xn.astype(jnp.bfloat16), offsets, mp),
                    preferred_element_type=jnp.float32) + b_ref[...]
        o_ref[0] = jnp.maximum(a, 0.0).astype(o_ref.dtype)

    return kernel


def _in_relu_kernel(x_ref, o_ref):
    """InstanceNorm2d (no affine) + ReLU on a (C, M) slab (no garbage cols)."""
    x = x_ref[0].astype(jnp.float32)
    mean = jnp.mean(x, axis=1, keepdims=True)
    var = jnp.mean(jnp.square(x - mean), axis=1, keepdims=True)
    y = (x - mean) * jax.lax.rsqrt(var + EPS)
    o_ref[0] = jnp.maximum(y, 0.0).astype(o_ref.dtype)


# ---------------------------------------------------------------------------
# Pallas wrappers
# ---------------------------------------------------------------------------
def _parallel_params():
    # "parallel" lets the batch grid shard across the 2 TCs on v7x; harmless
    # (near-zero overhead) on single-TC v5e/v6e.
    return pltpu.CompilerParams(dimension_semantics=("parallel",))


def _stage1_call(xpad, w, b, mask, *, H, W, Wp):
    N, Cin, Lin = xpad.shape
    Cout, K = w.shape
    Mp = H * Wp
    offsets = tuple(kh * Wp + kw for kh in range(7) for kw in range(7))
    return pl.pallas_call(
        _make_stage1_kernel(offsets, Mp, H * W),
        out_shape=jax.ShapeDtypeStruct((N, Cout, Mp), ACT_DTYPE),
        grid=(N,),
        in_specs=[
            pl.BlockSpec((1, Cin, Lin), lambda n: (n, 0, 0)),
            pl.BlockSpec((Cout, K), lambda n: (0, 0)),
            pl.BlockSpec((Cout, 1), lambda n: (0, 0)),
            pl.BlockSpec((1, Mp), lambda n: (0, 0)),
        ],
        out_specs=pl.BlockSpec((1, Cout, Mp), lambda n: (n, 0, 0)),
        compiler_params=_parallel_params(),
    )(xpad, w, b, mask)


def _block_call(h_loose, blk, mask, *, H, W, Wp):
    N, C, Mp = h_loose.shape
    offsets = tuple(kh * Wp + kw for kh in range(3) for kw in range(3))
    w1, b1 = blk["rconv1_w"], blk["rconv1_b"]
    w2, b2 = blk["rconv2_w"], blk["rconv2_b"]
    sw1, sw2 = blk["se_w1"], blk["se_w2"]
    return pl.pallas_call(
        _make_block_kernel(offsets, H, W, Wp, Mp, H * W),
        out_shape=jax.ShapeDtypeStruct((N, C, Mp), ACT_DTYPE),
        grid=(N,),
        in_specs=[
            pl.BlockSpec((1, C, Mp), lambda n: (n, 0, 0)),
            pl.BlockSpec(w1.shape, lambda n: (0, 0)),
            pl.BlockSpec(b1.shape, lambda n: (0, 0)),
            pl.BlockSpec(w2.shape, lambda n: (0, 0)),
            pl.BlockSpec(b2.shape, lambda n: (0, 0)),
            pl.BlockSpec(sw1.shape, lambda n: (0, 0)),
            pl.BlockSpec(sw2.shape, lambda n: (0, 0)),
            pl.BlockSpec((1, Mp), lambda n: (0, 0)),
        ],
        out_specs=pl.BlockSpec((1, C, Mp), lambda n: (n, 0, 0)),
        compiler_params=_parallel_params(),
    )(h_loose, w1, b1, w2, b2, sw1, sw2, mask)


def _conv_out_call(xpad, w, b, fmask, *, H, W, Wp):
    N, Cin, Lin = xpad.shape
    Cout, K = w.shape
    Mp = H * Wp
    offsets = tuple(kh * Wp + kw for kh in range(3) for kw in range(3))
    return pl.pallas_call(
        _make_conv_out_kernel(offsets, Mp, H * W),
        out_shape=jax.ShapeDtypeStruct((N, Cout, Mp), jnp.float32),
        grid=(N,),
        in_specs=[
            pl.BlockSpec((1, Cin, Lin), lambda n: (n, 0, 0)),
            pl.BlockSpec((Cout, K), lambda n: (0, 0)),
            pl.BlockSpec((Cout, 1), lambda n: (0, 0)),
            pl.BlockSpec((1, Lin), lambda n: (0, 0)),
        ],
        out_specs=pl.BlockSpec((1, Cout, Mp), lambda n: (n, 0, 0)),
        compiler_params=_parallel_params(),
    )(xpad, w, b, fmask)


def _in_relu(h_flat):
    N, C, L = h_flat.shape
    return pl.pallas_call(
        _in_relu_kernel,
        out_shape=jax.ShapeDtypeStruct((N, C, L), h_flat.dtype),
        grid=(N,),
        in_specs=[pl.BlockSpec((1, C, L), lambda n: (n, 0, 0))],
        out_specs=pl.BlockSpec((1, C, L), lambda n: (n, 0, 0)),
        compiler_params=_parallel_params(),
    )(h_flat)


# ---------------------------------------------------------------------------
# Glue (pure index / layout work; kept in XLA)
# ---------------------------------------------------------------------------
def _pad_flatten(x, pad, mode, kw_extra):
    """NCHW -> padded, flattened (N, C, Hp*Wp + kw_extra)."""
    N, C, H, W = x.shape
    xp = jnp.pad(x, ((0, 0), (0, 0), (pad, pad), (pad, pad)), mode=mode) if pad > 0 else x
    Hp, Wp = H + 2 * pad, W + 2 * pad
    flat = xp.reshape(N, C, Hp * Wp)
    if kw_extra:
        flat = jnp.concatenate(
            [flat, jnp.zeros((N, C, kw_extra), flat.dtype)], axis=2)
    return flat, Hp, Wp


def _valid_mask(H, W, Wp):
    cols = jnp.arange(H * Wp, dtype=jnp.int32) % Wp
    return (cols < W).astype(jnp.float32).reshape(1, H * Wp)


def _interior_mask(H, W, Wp):
    """Mask (1, (H+2)*Wp + 2): 1.0 at real image pixels of a zero-padded slab."""
    Hp = H + 2
    p = jnp.arange(Hp * Wp, dtype=jnp.int32)
    row, col = p // Wp, p % Wp
    m = ((row >= 1) & (row <= H) & (col >= 1) & (col <= W)).astype(jnp.float32)
    return jnp.concatenate([m, jnp.zeros((2,), jnp.float32)]).reshape(1, Hp * Wp + 2)


def _upsample_nearest_flat(h_flat, H, W, scale):
    """Single fused nearest-neighbor gather on the flattened spatial axis."""
    # TODO(synk): this matches the modern PyTorch default (src = floor(dst/scale));
    # builds using recompute_scale_factor=True use src = floor(dst*in/out) instead.
    Ho, Wo = int(math.floor(H * scale)), int(math.floor(W * scale))
    idx_h = jnp.minimum(jnp.floor(jnp.arange(Ho) / scale).astype(jnp.int32), H - 1)
    idx_w = jnp.minimum(jnp.floor(jnp.arange(Wo) / scale).astype(jnp.int32), W - 1)
    flat_idx = (idx_h[:, None] * W + idx_w[None, :]).reshape(Ho * Wo)
    return jnp.take(h_flat, flat_idx, axis=2), Ho, Wo


# ---------------------------------------------------------------------------
# Decoder2D forward
# ---------------------------------------------------------------------------
def decoder2d_forward(x_nchw, params, n_residual_blocks=4):
    N, Cin, H, W = x_nchw.shape
    C = 32

    # --- ReplicationPad2d(3) + Conv2d(input_nc, 32, 7) + IN + ReLU (1 call) ---
    xpad, _, W1p = _pad_flatten(x_nchw.astype(jnp.float32), 3, "edge", kw_extra=6)
    cin1 = params["conv1_cin"]
    if cin1 > Cin:                                    # sublane-align im2col pieces
        xpad = jnp.pad(xpad, ((0, 0), (0, cin1 - Cin), (0, 0)))
    y1 = _stage1_call(xpad, params["conv1_w"], params["conv1_b"],
                      _valid_mask(H, W, W1p), H=H, W=W, Wp=W1p)

    # one-time re-layout into the "loose" (C, H*(W+2)) layout the blocks chain in
    Wp = W + 2
    h_img = y1.reshape(N, C, H, W1p)[:, :, :, :W]
    h_loose = jnp.pad(h_img, ((0, 0), (0, 0), (0, 0), (0, Wp - W))).reshape(N, C, H * Wp)

    # --- 4 x [SELayer2d(32) + ResidualBlock2d(32)], one fused call per block ---
    mask = _valid_mask(H, W, Wp)
    for blk in params["blocks"][:n_residual_blocks]:
        h_loose = _block_call(h_loose, blk, mask, H=H, W=W, Wp=Wp)
    h_flat = h_loose.reshape(N, C, H, Wp)[:, :, :, :W].reshape(N, C, H * W)

    # --- 2 x [Upsample(sqrt(512/180), nearest) + IN + ReLU]
    #     (the 2nd IN+ReLU is fused into the final conv kernel) ---
    h_flat, H1, W1 = _upsample_nearest_flat(h_flat, H, W, UPSAMPLE_SCALE)
    h_flat = _in_relu(h_flat)
    h_flat, H2, W2 = _upsample_nearest_flat(h_flat, H1, W1, UPSAMPLE_SCALE)

    # --- [IN + ReLU] + Conv2d(32, output_nc, 3, padding=1) + ReLU (1 call) ---
    h_img2 = h_flat.reshape(N, C, H2, W2)
    xpad2, _, Wp2 = _pad_flatten(h_img2, 1, "constant", kw_extra=2)
    y = _conv_out_call(xpad2, params["conv_out_w"], params["conv_out_b"],
                       _interior_mask(H2, W2, Wp2), H=H2, W=W2, Wp=Wp2)
    out_nc = params["output_nc"]
    return y.reshape(N, -1, H2, Wp2)[:, :out_nc, :, :W2]   # NCHW


# ---------------------------------------------------------------------------
# Parameters: synthetic PyTorch-layout init + one-time layout preparation
# ---------------------------------------------------------------------------
def init_params(key, input_nc, output_nc, n_residual_blocks=4, reduction=16):
    C = 32
    keys = iter(jax.random.split(key, 8 + 6 * n_residual_blocks))

    def w(shape, scale=0.05):
        return (scale * jax.random.normal(next(keys), shape)).astype(jnp.float32)

    params = {
        "conv1_w": w((C, input_nc, 7, 7)), "conv1_b": w((C,)),
        "conv_out_w": w((output_nc, C, 3, 3)), "conv_out_b": w((output_nc,)),
        "blocks": [],
    }
    for _ in range(n_residual_blocks):
        params["blocks"].append({
            "se_fc1": w((C // reduction, C)),   # Linear(32 -> 2), no bias
            "se_fc2": w((C, C // reduction)),   # Linear(2 -> 32), no bias
            "rconv1_w": w((C, C, 3, 3)), "rconv1_b": w((C,)),
            "rconv2_w": w((C, C, 3, 3)), "rconv2_b": w((C,)),
        })
    return params


def prepare_params(p):
    """One-time transform of PyTorch-layout weights into the kernel layout."""
    def fold(wt, cin_pad=None):
        # (Cout, Cin, KH, KW) -> (Cout, KH*KW*Cin);  col = (kh*KW + kw)*Cin + cin
        Cout, Cin, KH, KW = wt.shape
        if cin_pad is not None and cin_pad > Cin:
            wt = jnp.pad(wt, ((0, 0), (0, cin_pad - Cin), (0, 0), (0, 0)))
            Cin = cin_pad
        return jnp.transpose(wt, (0, 2, 3, 1)).reshape(Cout, KH * KW * Cin)

    def bias(b):
        return b.reshape(-1, 1).astype(jnp.float32)

    input_nc = p["conv1_w"].shape[1]
    cin1 = -(-input_nc // 8) * 8                  # sublane-aligned im2col pieces
    out_nc = p["conv_out_w"].shape[0]
    cout_pad = -(-out_nc // 8) * 8                # full-sublane output store

    w_out = fold(p["conv_out_w"]).astype(jnp.bfloat16)
    w_out = jnp.pad(w_out, ((0, cout_pad - out_nc), (0, 0)))
    b_out = jnp.pad(bias(p["conv_out_b"]), ((0, cout_pad - out_nc), (0, 0)))

    out = {
        "conv1_w": fold(p["conv1_w"], cin_pad=cin1).astype(jnp.float32),
        "conv1_b": bias(p["conv1_b"]),
        "conv1_cin": cin1,
        "conv_out_w": w_out,
        "conv_out_b": b_out,
        "output_nc": out_nc,
        "blocks": [],
    }
    for blk in p["blocks"]:
        out["blocks"].append({
            "se_w1": blk["se_fc1"].astype(jnp.float32),   # (C//r, C)
            "se_w2": blk["se_fc2"].astype(jnp.float32),   # (C, C//r)
            "rconv1_w": fold(blk["rconv1_w"]).astype(jnp.bfloat16),
            "rconv1_b": bias(blk["rconv1_b"]),
            "rconv2_w": fold(blk["rconv2_w"]).astype(jnp.bfloat16),
            "rconv2_b": bias(blk["rconv2_b"]),
        })
    return out


if __name__ == "__main__":
    key = jax.random.PRNGKey(0)
    k_params, k_x = jax.random.split(key)

    input_nc, output_nc = 4, 1
    batch, spatial = 2, 16

    raw_params = init_params(k_params, input_nc, output_nc)
    params = prepare_params(raw_params)          # one-time weight layout prep
    x = jax.random.normal(k_x, (batch, input_nc, spatial, spatial), dtype=jnp.float32)

    fwd = jax.jit(functools.partial(decoder2d_forward, params=params))
    out = fwd(x)
    jax.block_until_ready(out)

    # 16 -> (pad3, conv7) 16 -> upsample 26 -> upsample 43 -> conv3(pad1) 43
    assert out.shape == (batch, output_nc, 43, 43), out.shape
    assert bool(jnp.all(jnp.isfinite(out)))
    print("KERNEL_OK")
</pallas_src>

<mosaic_0001>
module attributes {stable_mosaic.version = 11 : i64} {
  func.func @kernel(%arg0: i32, %arg1: memref<1x8x490xf32, #tpu.memory_space<vmem>>, %arg2: memref<32x392xf32, #tpu.memory_space<vmem>>, %arg3: memref<32x1xf32, #tpu.memory_space<vmem>>, %arg4: memref<1x352xf32, #tpu.memory_space<vmem>>, %arg5: memref<1x32x352xbf16, #tpu.memory_space<vmem>>) attributes {dimension_semantics = [#tpu.dimension_semantics<parallel>], iteration_bounds = array<i64: 2>, scalar_prefetch = 0 : i64, scratch_operands = 0 : i64, tpu.core_type = #tpu.core_type<tc>, window_params = [{transform_indices = @transform_0, window_bounds = array<i64: 1, 8, 490>}, {pipeline_mode = #tpu.pipeline_mode<synchronous>, transform_indices = @transform_1, window_bounds = array<i64: 32, 392>}, {pipeline_mode = #tpu.pipeline_mode<synchronous>, transform_indices = @transform_2, window_bounds = array<i64: 32, 1>}, {pipeline_mode = #tpu.pipeline_mode<synchronous>, transform_indices = @transform_3, window_bounds = array<i64: 1, 352>}, {transform_indices = @transform_4, window_bounds = array<i64: 1, 32, 352>}]} {
    %c0 = arith.constant 0 : index
    %c0_0 = arith.constant 0 : index
    %c0_1 = arith.constant 0 : index
    %0 = vector.load %arg1[%c0, %c0_0, %c0_1] : memref<1x8x490xf32, #tpu.memory_space<vmem>>, vector<1x8x490xf32>
    %1 = vector.shape_cast %0 : vector<1x8x490xf32> to vector<8x490xf32>
    %2 = vector.extract_strided_slice %1 {offsets = [0, 0], sizes = [8, 352], strides = [1, 1]} : vector<8x490xf32> to vector<8x352xf32>
    %3 = vector.extract_strided_slice %1 {offsets = [0, 1], sizes = [8, 352], strides = [1, 1]} : vector<8x490xf32> to vector<8x352xf32>
    %4 = vector.extract_strided_slice %1 {offsets = [0, 2], sizes = [8, 352], strides = [1, 1]} : vector<8x490xf32> to vector<8x352xf32>
    %5 = vector.extract_strided_slice %1 {offsets = [0, 3], sizes = [8, 352], strides = [1, 1]} : vector<8x490xf32> to vector<8x352xf32>
    %6 = vector.extract_strided_slice %1 {offsets = [0, 4], sizes = [8, 352], strides = [1, 1]} : vector<8x490xf32> to vector<8x352xf32>
    %7 = vector.extract_strided_slice %1 {offsets = [0, 5], sizes = [8, 352], strides = [1, 1]} : vector<8x490xf32> to vector<8x352xf32>
    %8 = vector.extract_strided_slice %1 {offsets = [0, 6], sizes = [8, 352], strides = [1, 1]} : vector<8x490xf32> to vector<8x352xf32>
    %9 = vector.extract_strided_slice %1 {offsets = [0, 22], sizes = [8, 352], strides = [1, 1]} : vector<8x490xf32> to vector<8x352xf32>
    %10 = vector.extract_strided_slice %1 {offsets = [0, 23], sizes = [8, 352], strides = [1, 1]} : vector<8x490xf32> to vector<8x352xf32>
    %11 = vector.extract_strided_slice %1 {offsets = [0, 24], sizes = [8, 352], strides = [1, 1]} : vector<8x490xf32> to vector<8x352xf32>
    %12 = vector.extract_strided_slice %1 {offsets = [0, 25], sizes = [8, 352], strides = [1, 1]} : vector<8x490xf32> to vector<8x352xf32>
    %13 = vector.extract_strided_slice %1 {offsets = [0, 26], sizes = [8, 352], strides = [1, 1]} : vector<8x490xf32> to vector<8x352xf32>
    %14 = vector.extract_strided_slice %1 {offsets = [0, 27], sizes = [8, 352], strides = [1, 1]} : vector<8x490xf32> to vector<8x352xf32>
    %15 = vector.extract_strided_slice %1 {offsets = [0, 28], sizes = [8, 352], strides = [1, 1]} : vector<8x490xf32> to vector<8x352xf32>
    %16 = vector.extract_strided_slice %1 {offsets = [0, 44], sizes = [8, 352], strides = [1, 1]} : vector<8x490xf32> to vector<8x352xf32>
    %17 = vector.extract_strided_slice %1 {offsets = [0, 45], sizes = [8, 352], strides = [1, 1]} : vector<8x490xf32> to vector<8x352xf32>
    %18 = vector.extract_strided_slice %1 {offsets = [0, 46], sizes = [8, 352], strides = [1, 1]} : vector<8x490xf32> to vector<8x352xf32>
    %19 = vector.extract_strided_slice %1 {offsets = [0, 47], sizes = [8, 352], strides = [1, 1]} : vector<8x490xf32> to vector<8x352xf32>
    %20 = vector.extract_strided_slice %1 {offsets = [0, 48], sizes = [8, 352], strides = [1, 1]} : vector<8x490xf32> to vector<8x352xf32>
    %21 = vector.extract_strided_slice %1 {offsets = [0, 49], sizes = [8, 352], strides = [1, 1]} : vector<8x490xf32> to vector<8x352xf32>
    %22 = vector.extract_strided_slice %1 {offsets = [0, 50], sizes = [8, 352], strides = [1, 1]} : vector<8x490xf32> to vector<8x352xf32>
    %23 = vector.extract_strided_slice %1 {offsets = [0, 66], sizes = [8, 352], strides = [1, 1]} : vector<8x490xf32> to vector<8x352xf32>
    %24 = vector.extract_strided_slice %1 {offsets = [0, 67], sizes = [8, 352], strides = [1, 1]} : vector<8x490xf32> to vector<8x352xf32>
    %25 = vector.extract_strided_slice %1 {offsets = [0, 68], sizes = [8, 352], strides = [1, 1]} : vector<8x490xf32> to vector<8x352xf32>
    %26 = vector.extract_strided_slice %1 {offsets = [0, 69], sizes = [8, 352], strides = [1, 1]} : vector<8x490xf32> to vector<8x352xf32>
    %27 = vector.extract_strided_slice %1 {offsets = [0, 70], sizes = [8, 352], strides = [1, 1]} : vector<8x490xf32> to vector<8x352xf32>
    %28 = vector.extract_strided_slice %1 {offsets = [0, 71], sizes = [8, 352], strides = [1, 1]} : vector<8x490xf32> to vector<8x352xf32>
    %29 = vector.extract_strided_slice %1 {offsets = [0, 72], sizes = [8, 352], strides = [1, 1]} : vector<8x490xf32> to vector<8x352xf32>
    %30 = vector.extract_strided_slice %1 {offsets = [0, 88], sizes = [8, 352], strides = [1, 1]} : vector<8x490xf32> to vector<8x352xf32>
    %31 = vector.extract_strided_slice %1 {offsets = [0, 89], sizes = [8, 352], strides = [1, 1]} : vector<8x490xf32> to vector<8x352xf32>
    %32 = vector.extract_strided_slice %1 {offsets = [0, 90], sizes = [8, 352], strides = [1, 1]} : vector<8x490xf32> to vector<8x352xf32>
    %33 = vector.extract_strided_slice %1 {offsets = [0, 91], sizes = [8, 352], strides = [1, 1]} : vector<8x490xf32> to vector<8x352xf32>
    %34 = vector.extract_strided_slice %1 {offsets = [0, 92], sizes = [8, 352], strides = [1, 1]} : vector<8x490xf32> to vector<8x352xf32>
    %35 = vector.extract_strided_slice %1 {offsets = [0, 93], sizes = [8, 352], strides = [1, 1]} : vector<8x490xf32> to vector<8x352xf32>
    %36 = vector.extract_strided_slice %1 {offsets = [0, 94], sizes = [8, 352], strides = [1, 1]} : vector<8x490xf32> to vector<8x352xf32>
    %37 = vector.extract_strided_slice %1 {offsets = [0, 110], sizes = [8, 352], strides = [1, 1]} : vector<8x490xf32> to vector<8x352xf32>
    %38 = vector.extract_strided_slice %1 {offsets = [0, 111], sizes = [8, 352], strides = [1, 1]} : vector<8x490xf32> to vector<8x352xf32>
    %39 = vector.extract_strided_slice %1 {offsets = [0, 112], sizes = [8, 352], strides = [1, 1]} : vector<8x490xf32> to vector<8x352xf32>
    %40 = vector.extract_strided_slice %1 {offsets = [0, 113], sizes = [8, 352], strides = [1, 1]} : vector<8x490xf32> to vector<8x352xf32>
    %41 = vector.extract_strided_slice %1 {offsets = [0, 114], sizes = [8, 352], strides = [1, 1]} : vector<8x490xf32> to vector<8x352xf32>
    %42 = vector.extract_strided_slice %1 {offsets = [0, 115], sizes = [8, 352], strides = [1, 1]} : vector<8x490xf32> to vector<8x352xf32>
    %43 = vector.extract_strided_slice %1 {offsets = [0, 116], sizes = [8, 352], strides = [1, 1]} : vector<8x490xf32> to vector<8x352xf32>
    %44 = vector.extract_strided_slice %1 {offsets = [0, 132], sizes = [8, 352], strides = [1, 1]} : vector<8x490xf32> to vector<8x352xf32>
    %45 = vector.extract_strided_slice %1 {offsets = [0, 133], sizes = [8, 352], strides = [1, 1]} : vector<8x490xf32> to vector<8x352xf32>
    %46 = vector.extract_strided_slice %1 {offsets = [0, 134], sizes = [8, 352], strides = [1, 1]} : vector<8x490xf32> to vector<8x352xf32>
    %47 = vector.extract_strided_slice %1 {offsets = [0, 135], sizes = [8, 352], strides = [1, 1]} : vector<8x490xf32> to vector<8x352xf32>
    %48 = vector.extract_strided_slice %1 {offsets = [0, 136], sizes = [8, 352], strides = [1, 1]} : vector<8x490xf32> to vector<8x352xf32>
    %49 = vector.extract_strided_slice %1 {offsets = [0, 137], sizes = [8, 352], strides = [1, 1]} : vector<8x490xf32> to vector<8x352xf32>
    %50 = vector.extract_strided_slice %1 {offsets = [0, 138], sizes = [8, 352], strides = [1, 1]} : vector<8x490xf32> to vector<8x352xf32>
    %51 = tpu.concatenate %2, %3, %4, %5, %6, %7, %8, %9, %10, %11, %12, %13, %14, %15, %16, %17 in 0 : vector<8x352xf32>, vector<8x352xf32>, vector<8x352xf32>, vector<8x352xf32>, vector<8x352xf32>, vector<8x352xf32>, vector<8x352xf32>, vector<8x352xf32>, vector<8x352xf32>, vector<8x352xf32>, vector<8x352xf32>, vector<8x352xf32>, vector<8x352xf32>, vector<8x352xf32>, vector<8x352xf32>, vector<8x352xf32> -> vector<128x352xf32>
    %52 = tpu.concatenate %18, %19, %20, %21, %22, %23, %24, %25, %26, %27, %28, %29, %30, %31, %32, %33 in 0 : vector<8x352xf32>, vector<8x352xf32>, vector<8x352xf32>, vector<8x352xf32>, vector<8x352xf32>, vector<8x352xf32>, vector<8x352xf32>, vector<8x352xf32>, vector<8x352xf32>, vector<8x352xf32>, vector<8x352xf32>, vector<8x352xf32>, vector<8x352xf32>, vector<8x352xf32>, vector<8x352xf32>, vector<8x352xf32> -> vector<128x352xf32>
    %53 = tpu.concatenate %34, %35, %36, %37, %38, %39, %40, %41, %42, %43, %44, %45, %46, %47, %48, %49 in 0 : vector<8x352xf32>, vector<8x352xf32>, vector<8x352xf32>, vector<8x352xf32>, vector<8x352xf32>, vector<8x352xf32>, vector<8x352xf32>, vector<8x352xf32>, vector<8x352xf32>, vector<8x352xf32>, vector<8x352xf32>, vector<8x352xf32>, vector<8x352xf32>, vector<8x352xf32>, vector<8x352xf32>, vector<8x352xf32> -> vector<128x352xf32>
    %54 = tpu.concatenate %51, %52, %53, %50 in 0 : vector<128x352xf32>, vector<128x352xf32>, vector<128x352xf32>, vector<8x352xf32> -> vector<392x352xf32>
    %c0_2 = arith.constant 0 : index
    %c0_3 = arith.constant 0 : index
    %55 = vector.load %arg2[%c0_2, %c0_3] : memref<32x392xf32, #tpu.memory_space<vmem>>, vector<32x392xf32>
    %cst = arith.constant dense<0.000000e+00> : vector<32x352xf32>
    %56 = tpu.matmul %55, %54, %cst {dimension_numbers = #tpu.dot_dimension_numbers<[1], [0], [0], [1], [0, 0, 1, 1], [], []>} : vector<32x392xf32>, vector<392x352xf32>, vector<32x352xf32> -> vector<32x352xf32>
    %c0_4 = arith.constant 0 : index
    %c0_5 = arith.constant 0 : index
    %57 = vector.load %arg3[%c0_4, %c0_5] : memref<32x1xf32, #tpu.memory_space<vmem>>, vector<32x1xf32>
    %58 = vector.broadcast %57 : vector<32x1xf32> to vector<32x352xf32>
    %59 = arith.addf %56, %58 : vector<32x352xf32>
    %c0_6 = arith.constant 0 : index
    %c0_7 = arith.constant 0 : index
    %60 = vector.load %arg4[%c0_6, %c0_7] : memref<1x352xf32, #tpu.memory_space<vmem>>, vector<1x352xf32>
    %61 = vector.broadcast %60 : vector<1x352xf32> to vector<32x352xf32>
    %62 = arith.mulf %59, %61 : vector<32x352xf32>
    %cst_8 = arith.constant dense<0.000000e+00> : vector<32xf32>
    %63 = vector.multi_reduction <add>, %62, %cst_8 [1] : vector<32x352xf32> to vector<32xf32>
    %64 = vector.shape_cast %63 : vector<32xf32> to vector<32x1xf32>
    %cst_9 = arith.constant 3.906250e-03 : f32
    %65 = vector.broadcast %cst_9 : f32 to vector<32x1xf32>
    %66 = arith.mulf %64, %65 : vector<32x1xf32>
    %67 = vector.broadcast %66 : vector<32x1xf32> to vector<32x352xf32>
    %68 = arith.subf %59, %67 : vector<32x352xf32>
    %69 = arith.mulf %68, %68 : vector<32x352xf32>
    %70 = vector.broadcast %60 : vector<1x352xf32> to vector<32x352xf32>
    %71 = arith.mulf %69, %70 : vector<32x352xf32>
    %cst_10 = arith.constant dense<0.000000e+00> : vector<32xf32>
    %72 = vector.multi_reduction <add>, %71, %cst_10 [1] : vector<32x352xf32> to vector<32xf32>
    %73 = vector.shape_cast %72 : vector<32xf32> to vector<32x1xf32>
    %cst_11 = arith.constant 3.906250e-03 : f32
    %74 = vector.broadcast %cst_11 : f32 to vector<32x1xf32>
    %75 = arith.mulf %73, %74 : vector<32x1xf32>
    %cst_12 = arith.constant 9.99999974E-6 : f32
    %76 = vector.broadcast %cst_12 : f32 to vector<32x1xf32>
    %77 = arith.addf %75, %76 : vector<32x1xf32>
    %78 = math.rsqrt %77 : vector<32x1xf32>
    %79 = vector.broadcast %78 : vector<32x1xf32> to vector<32x352xf32>
    %80 = arith.mulf %68, %79 : vector<32x352xf32>
    %cst_13 = arith.constant 0.000000e+00 : f32
    %81 = vector.broadcast %cst_13 : f32 to vector<32x352xf32>
    %82 = arith.maximumf %80, %81 : vector<32x352xf32>
    %83 = arith.truncf %82 : vector<32x352xf32> to vector<32x352xbf16>
    %c0_14 = arith.constant 0 : index
    %c0_15 = arith.constant 0 : index
    %c0_16 = arith.constant 0 : index
    %84 = vector.load %arg5[%c0_14, %c0_15, %c0_16] : memref<1x32x352xbf16, #tpu.memory_space<vmem>>, vector<1x32x352xbf16>
    %85 = vector.shape_cast %84 : vector<1x32x352xbf16> to vector<32x352xbf16>
    %86 = vector.shape_cast %83 : vector<32x352xbf16> to vector<1x32x352xbf16>
    tpu.vector_store %arg5[%c0_14, %c0_15, %c0_16], %86 {strides = array<i32>} : memref<1x32x352xbf16, #tpu.memory_space<vmem>>, vector<1x32x352xbf16>,
    return
  }
  func.func @transform_0(%arg0: i32) -> (i32, i32, i32) {
    %c0_i32 = arith.constant 0 : i32
    %c0_i32_0 = arith.constant 0 : i32
    %c0_i32_1 = arith.constant 0 : i32
    return %arg0, %c0_i32, %c0_i32_0 : i32, i32, i32
  }
  func.func @transform_1(%arg0: i32) -> (i32, i32) {
    %c0_i32 = arith.constant 0 : i32
    %c0_i32_0 = arith.constant 0 : i32
    %c0_i32_1 = arith.constant 0 : i32
    return %c0_i32, %c0_i32_0 : i32, i32
  }
  func.func @transform_2(%arg0: i32) -> (i32, i32) {
    %c0_i32 = arith.constant 0 : i32
    %c0_i32_0 = arith.constant 0 : i32
    %c0_i32_1 = arith.constant 0 : i32
    return %c0_i32, %c0_i32_0 : i32, i32
  }
  func.func @transform_3(%arg0: i32) -> (i32, i32) {
    %c0_i32 = arith.constant 0 : i32
    %c0_i32_0 = arith.constant 0 : i32
    %c0_i32_1 = arith.constant 0 : i32
    return %c0_i32, %c0_i32_0 : i32, i32
  }
  func.func @transform_4(%arg0: i32) -> (i32, i32, i32) {
    %c0_i32 = arith.constant 0 : i32
    %c0_i32_0 = arith.constant 0 : i32
    %c0_i32_1 = arith.constant 0 : i32
    return %arg0, %c0_i32, %c0_i32_0 : i32, i32, i32
  }
}

module attributes {stable_mosaic.version = 11 : i64} {
  func.func @kernel(%arg0: i32, %arg1: memref<1x32x288xbf16, #tpu.memory_space<vmem>>, %arg2: memref<32x288xbf16, #tpu.memory_space<vmem>>, %arg3: memref<32x1xf32, #tpu.memory_space<vmem>>, %arg4: memref<32x288xbf16, #tpu.memory_space<vmem>>, %arg5: memref<32x1xf32, #tpu.memory_space<vmem>>, %arg6: memref<2x32xf32, #tpu.memory_space<vmem>>, %arg7: memref<32x2xf32, #tpu.memory_space<vmem>>, %arg8: memref<1x288xf32, #tpu.memory_space<vmem>>, %arg9: memref<1x32x288xbf16, #tpu.memory_space<vmem>>) attributes {dimension_semantics = [#tpu.dimension_semantics<parallel>], iteration_bounds = array<i64: 2>, scalar_prefetch = 0 : i64, scratch_operands = 0 : i64, tpu.core_type = #tpu.core_type<tc>, window_params = [{transform_indices = @transform_0, window_bounds = array<i64: 1, 32, 288>}, {pipeline_mode = #tpu.pipeline_mode<synchronous>, transform_indices = @transform_1, window_bounds = array<i64: 32, 288>}, {pipeline_mode = #tpu.pipeline_mode<synchronous>, transform_indices = @transform_2, window_bounds = array<i64: 32, 1>}, {pipeline_mode = #tpu.pipeline_mode<synchronous>, transform_indices = @transform_3, window_bounds = array<i64: 32, 288>}, {pipeline_mode = #tpu.pipeline_mode<synchronous>, transform_indices = @transform_4, window_bounds = array<i64: 32, 1>}, {pipeline_mode = #tpu.pipeline_mode<synchronous>, transform_indices = @transform_5, window_bounds = array<i64: 2, 32>}, {pipeline_mode = #tpu.pipeline_mode<synchronous>, transform_indices = @transform_6, window_bounds = array<i64: 32, 2>}, {pipeline_mode = #tpu.pipeline_mode<synchronous>, transform_indices = @transform_7, window_bounds = array<i64: 1, 288>}, {transform_indices = @transform_8, window_bounds = array<i64: 1, 32, 288>}]} {
    %c0 = arith.constant 0 : index
    %c0_0 = arith.constant 0 : index
    %c0_1 = arith.constant 0 : index
    %0 = vector.load %arg1[%c0, %c0_0, %c0_1] : memref<1x32x288xbf16, #tpu.memory_space<vmem>>, vector<1x32x288xbf16>
    %1 = vector.shape_cast %0 : vector<1x32x288xbf16> to vector<32x288xbf16>
    %2 = arith.extf %1 : vector<32x288xbf16> to vector<32x288xf32>
    %c0_2 = arith.constant 0 : index
    %c0_3 = arith.constant 0 : index
    %3 = vector.load %arg8[%c0_2, %c0_3] : memref<1x288xf32, #tpu.memory_space<vmem>>, vector<1x288xf32>
    %4 = vector.broadcast %3 : vector<1x288xf32> to vector<32x288xf32>
    %5 = arith.mulf %2, %4 : vector<32x288xf32>
    %cst = arith.constant dense<0.000000e+00> : vector<32xf32>
    %6 = vector.multi_reduction <add>, %5, %cst [1] : vector<32x288xf32> to vector<32xf32>
    %7 = vector.shape_cast %6 : vector<32xf32> to vector<32x1xf32>
    %cst_4 = arith.constant 3.906250e-03 : f32
    %8 = vector.broadcast %cst_4 : f32 to vector<32x1xf32>
    %9 = arith.mulf %7, %8 : vector<32x1xf32>
    %c0_5 = arith.constant 0 : index
    %c0_6 = arith.constant 0 : index
    %10 = vector.load %arg6[%c0_5, %c0_6] : memref<2x32xf32, #tpu.memory_space<vmem>>, vector<2x32xf32>
    %cst_7 = arith.constant dense<0.000000e+00> : vector<2x1xf32>
    %11 = tpu.matmul %10, %9, %cst_7 {dimension_numbers = #tpu.dot_dimension_numbers<[1], [0], [0], [1], [0, 0, 1, 1], [], []>} : vector<2x32xf32>, vector<32x1xf32>, vector<2x1xf32> -> vector<2x1xf32>
    %cst_8 = arith.constant 0.000000e+00 : f32
    %12 = vector.broadcast %cst_8 : f32 to vector<2x1xf32>
    %13 = arith.maximumf %11, %12 : vector<2x1xf32>
    %c0_9 = arith.constant 0 : index
    %c0_10 = arith.constant 0 : index
    %14 = vector.load %arg7[%c0_9, %c0_10] : memref<32x2xf32, #tpu.memory_space<vmem>>, vector<32x2xf32>
    %cst_11 = arith.constant dense<0.000000e+00> : vector<32x1xf32>
    %15 = tpu.matmul %14, %13, %cst_11 {dimension_numbers = #tpu.dot_dimension_numbers<[1], [0], [0], [1], [0, 0, 1, 1], [], []>} : vector<32x2xf32>, vector<2x1xf32>, vector<32x1xf32> -> vector<32x1xf32>
    %16 = arith.negf %15 : vector<32x1xf32>
    %17 = math.exp %16 : vector<32x1xf32>
    %cst_12 = arith.constant 1.000000e+00 : f32
    %18 = vector.broadcast %cst_12 : f32 to vector<32x1xf32>
    %19 = arith.addf %18, %17 : vector<32x1xf32>
    %20 = arith.divf %18, %19 : vector<32x1xf32>
    %21 = vector.broadcast %20 : vector<32x1xf32> to vector<32x288xf32>
    %22 = arith.mulf %2, %21 : vector<32x288xf32>
    %23 = tpu.iota {dimensions = array<i32: 1>} : vector<1x288xi32>
    %c18_i32 = arith.constant 18 : i32
    %c0_i32 = arith.constant 0 : i32
    %24 = arith.cmpi eq, %c18_i32, %c0_i32 : i32
    %c1_i32 = arith.constant 1 : i32
    %25 = arith.select %24, %c1_i32, %c18_i32 : i32
    %26 = vector.broadcast %25 : i32 to vector<1x288xi32>
    %27 = arith.remsi %23, %26 : vector<1x288xi32>
    %c0_i32_13 = arith.constant 0 : i32
    %28 = vector.broadcast %c0_i32_13 : i32 to vector<1x288xi32>
    %29 = arith.cmpi ne, %27, %28 : vector<1x288xi32>
    %c0_i32_14 = arith.constant 0 : i32
    %30 = vector.broadcast %c0_i32_14 : i32 to vector<1x288xi32>
    %31 = arith.cmpi slt, %27, %30 : vector<1x288xi32>
    %c0_i32_15 = arith.constant 0 : i32
    %32 = arith.cmpi slt, %25, %c0_i32_15 : i32
    %33 = vector.broadcast %32 : i1 to vector<1x288xi1>
    %34 = vector.broadcast %33 : vector<1x288xi1> to vector<1x288xi1>
    %35 = arith.xori %31, %34 : vector<1x288xi1>
    %36 = arith.andi %35, %29 : vector<1x288xi1>
    %37 = vector.broadcast %25 : i32 to vector<1x288xi32>
    %38 = arith.addi %27, %37 : vector<1x288xi32>
    %39 = arith.select %36, %38, %27 : vector<1x288xi1>, vector<1x288xi32>
    %cst_16 = arith.constant 0.000000e+00 : f32
    %40 = vector.broadcast %cst_16 : f32 to vector<32x1xf32>
    %41 = vector.extract_strided_slice %22 {offsets = [0, 0], sizes = [32, 287], strides = [1, 1]} : vector<32x288xf32> to vector<32x287xf32>
    %42 = tpu.concatenate %40, %41 in 1 : vector<32x1xf32>, vector<32x287xf32> -> vector<32x288xf32>
    %43 = vector.extract_strided_slice %22 {offsets = [0, 1], sizes = [32, 287], strides = [1, 1]} : vector<32x288xf32> to vector<32x287xf32>
    %cst_17 = arith.constant 0.000000e+00 : f32
    %44 = vector.broadcast %cst_17 : f32 to vector<32x1xf32>
    %45 = tpu.concatenate %43, %44 in 1 : vector<32x287xf32>, vector<32x1xf32> -> vector<32x288xf32>
    %cst_18 = arith.constant 0.000000e+00 : f32
    %46 = vector.broadcast %cst_18 : f32 to vector<32x3xf32>
    %47 = vector.extract_strided_slice %22 {offsets = [0, 0], sizes = [32, 285], strides = [1, 1]} : vector<32x288xf32> to vector<32x285xf32>
    %48 = tpu.concatenate %46, %47 in 1 : vector<32x3xf32>, vector<32x285xf32> -> vector<32x288xf32>
    %c0_i32_19 = arith.constant 0 : i32
    %49 = vector.broadcast %c0_i32_19 : i32 to vector<1x288xi32>
    %50 = arith.cmpi eq, %39, %49 : vector<1x288xi32>
    %c17_i32 = arith.constant 17 : i32
    %51 = vector.broadcast %c17_i32 : i32 to vector<1x288xi32>
    %52 = arith.cmpi eq, %39, %51 : vector<1x288xi32>
    %53 = vector.shape_cast %52 : vector<1x288xi1> to vector<1x288xi1>
    %54 = vector.broadcast %53 : vector<1x288xi1> to vector<32x288xi1>
    %55 = arith.select %54, %48, %42 : vector<32x288xi1>, vector<32x288xf32>
    %56 = vector.shape_cast %50 : vector<1x288xi1> to vector<1x288xi1>
    %57 = vector.broadcast %56 : vector<1x288xi1> to vector<32x288xi1>
    %58 = arith.select %57, %45, %55 : vector<32x288xi1>, vector<32x288xf32>
    %59 = vector.extract_strided_slice %58 {offsets = [0, 18], sizes = [32, 18], strides = [1, 1]} : vector<32x288xf32> to vector<32x18xf32>
    %60 = vector.extract_strided_slice %58 {offsets = [0, 252], sizes = [32, 18], strides = [1, 1]} : vector<32x288xf32> to vector<32x18xf32>
    %cst_20 = arith.constant 0.000000e+00 : f32
    %61 = vector.broadcast %cst_20 : f32 to vector<32x2xf32>
    %62 = tpu.concatenate %59, %58, %60, %61 in 1 : vector<32x18xf32>, vector<32x288xf32>, vector<32x18xf32>, vector<32x2xf32> -> vector<32x326xf32>
    %63 = arith.truncf %62 : vector<32x326xf32> to vector<32x326xbf16>
    %c0_21 = arith.constant 0 : index
    %c0_22 = arith.constant 0 : index
    %64 = vector.load %arg2[%c0_21, %c0_22] : memref<32x288xbf16, #tpu.memory_space<vmem>>, vector<32x288xbf16>
    %65 = vector.extract_strided_slice %63 {offsets = [0, 0], sizes = [32, 288], strides = [1, 1]} : vector<32x326xbf16> to vector<32x288xbf16>
    %66 = vector.extract_strided_slice %63 {offsets = [0, 1], sizes = [32, 288], strides = [1, 1]} : vector<32x326xbf16> to vector<32x288xbf16>
    %67 = vector.extract_strided_slice %63 {offsets = [0, 2], sizes = [32, 288], strides = [1, 1]} : vector<32x326xbf16> to vector<32x288xbf16>
    %68 = vector.extract_strided_slice %63 {offsets = [0, 18], sizes = [32, 288], strides = [1, 1]} : vector<32x326xbf16> to vector<32x288xbf16>
    %69 = vector.extract_strided_slice %63 {offsets = [0, 19], sizes = [32, 288], strides = [1, 1]} : vector<32x326xbf16> to vector<32x288xbf16>
    %70 = vector.extract_strided_slice %63 {offsets = [0, 20], sizes = [32, 288], strides = [1, 1]} : vector<32x326xbf16> to vector<32x288xbf16>
    %71 = vector.extract_strided_slice %63 {offsets = [0, 36], sizes = [32, 288], strides = [1, 1]} : vector<32x326xbf16> to vector<32x288xbf16>
    %72 = vector.extract_strided_slice %63 {offsets = [0, 37], sizes = [32, 288], strides = [1, 1]} : vector<32x326xbf16> to vector<32x288xbf16>
    %73 = vector.extract_strided_slice %63 {offsets = [0, 38], sizes = [32, 288], strides = [1, 1]} : vector<32x326xbf16> to vector<32x288xbf16>
    %74 = tpu.concatenate %65, %66, %67, %68, %69, %70, %71, %72, %73 in 0 : vector<32x288xbf16>, vector<32x288xbf16>, vector<32x288xbf16>, vector<32x288xbf16>, vector<32x288xbf16>, vector<32x288xbf16>, vector<32x288xbf16>, vector<32x288xbf16>, vector<32x288xbf16> -> vector<288x288xbf16>
    %cst_23 = arith.constant dense<0.000000e+00> : vector<32x288xf32>
    %75 = tpu.matmul %64, %74, %cst_23 {dimension_numbers = #tpu.dot_dimension_numbers<[1], [0], [0], [1], [0, 0, 1, 1], [], []>} : vector<32x288xbf16>, vector<288x288xbf16>, vector<32x288xf32> -> vector<32x288xf32>
    %c0_24 = arith.constant 0 : index
    %c0_25 = arith.constant 0 : index
    %76 = vector.load %arg3[%c0_24, %c0_25] : memref<32x1xf32, #tpu.memory_space<vmem>>, vector<32x1xf32>
    %77 = vector.broadcast %76 : vector<32x1xf32> to vector<32x288xf32>
    %78 = arith.addf %75, %77 : vector<32x288xf32>
    %79 = vector.broadcast %3 : vector<1x288xf32> to vector<32x288xf32>
    %80 = arith.mulf %78, %79 : vector<32x288xf32>
    %cst_26 = arith.constant dense<0.000000e+00> : vector<32xf32>
    %81 = vector.multi_reduction <add>, %80, %cst_26 [1] : vector<32x288xf32> to vector<32xf32>
    %82 = vector.shape_cast %81 : vector<32xf32> to vector<32x1xf32>
    %cst_27 = arith.constant 3.906250e-03 : f32
    %83 = vector.broadcast %cst_27 : f32 to vector<32x1xf32>
    %84 = arith.mulf %82, %83 : vector<32x1xf32>
    %85 = vector.broadcast %84 : vector<32x1xf32> to vector<32x288xf32>
    %86 = arith.subf %78, %85 : vector<32x288xf32>
    %87 = arith.mulf %86, %86 : vector<32x288xf32>
    %88 = vector.broadcast %3 : vector<1x288xf32> to vector<32x288xf32>
    %89 = arith.mulf %87, %88 : vector<32x288xf32>
    %cst_28 = arith.constant dense<0.000000e+00> : vector<32xf32>
    %90 = vector.multi_reduction <add>, %89, %cst_28 [1] : vector<32x288xf32> to vector<32xf32>
    %91 = vector.shape_cast %90 : vector<32xf32> to vector<32x1xf32>
    %cst_29 = arith.constant 3.906250e-03 : f32
    %92 = vector.broadcast %cst_29 : f32 to vector<32x1xf32>
    %93 = arith.mulf %91, %92 : vector<32x1xf32>
    %cst_30 = arith.constant 9.99999974E-6 : f32
    %94 = vector.broadcast %cst_30 : f32 to vector<32x1xf32>
    %95 = arith.addf %93, %94 : vector<32x1xf32>
    %96 = math.rsqrt %95 : vector<32x1xf32>
    %97 = vector.broadcast %96 : vector<32x1xf32> to vector<32x288xf32>
    %98 = arith.mulf %86, %97 : vector<32x288xf32>
    %cst_31 = arith.constant 0.000000e+00 : f32
    %99 = vector.broadcast %cst_31 : f32 to vector<32x288xf32>
    %100 = arith.maximumf %98, %99 : vector<32x288xf32>
    %101 = tpu.iota {dimensions = array<i32: 1>} : vector<1x288xi32>
    %c18_i32_32 = arith.constant 18 : i32
    %c0_i32_33 = arith.constant 0 : i32
    %102 = arith.cmpi eq, %c18_i32_32, %c0_i32_33 : i32
    %c1_i32_34 = arith.constant 1 : i32
    %103 = arith.select %102, %c1_i32_34, %c18_i32_32 : i32
    %104 = vector.broadcast %103 : i32 to vector<1x288xi32>
    %105 = arith.remsi %101, %104 : vector<1x288xi32>
    %c0_i32_35 = arith.constant 0 : i32
    %106 = vector.broadcast %c0_i32_35 : i32 to vector<1x288xi32>
    %107 = arith.cmpi ne, %105, %106 : vector<1x288xi32>
    %c0_i32_36 = arith.constant 0 : i32
    %108 = vector.broadcast %c0_i32_36 : i32 to vector<1x288xi32>
    %109 = arith.cmpi slt, %105, %108 : vector<1x288xi32>
    %c0_i32_37 = arith.constant 0 : i32
    %110 = arith.cmpi slt, %103, %c0_i32_37 : i32
    %111 = vector.broadcast %110 : i1 to vector<1x288xi1>
    %112 = vector.broadcast %111 : vector<1x288xi1> to vector<1x288xi1>
    %113 = arith.xori %109, %112 : vector<1x288xi1>
    %114 = arith.andi %113, %107 : vector<1x288xi1>
    %115 = vector.broadcast %103 : i32 to vector<1x288xi32>
    %116 = arith.addi %105, %115 : vector<1x288xi32>
    %117 = arith.select %114, %116, %105 : vector<1x288xi1>, vector<1x288xi32>
    %cst_38 = arith.constant 0.000000e+00 : f32
    %118 = vector.broadcast %cst_38 : f32 to vector<32x1xf32>
    %119 = vector.extract_strided_slice %100 {offsets = [0, 0], sizes = [32, 287], strides = [1, 1]} : vector<32x288xf32> to vector<32x287xf32>
    %120 = tpu.concatenate %118, %119 in 1 : vector<32x1xf32>, vector<32x287xf32> -> vector<32x288xf32>
    %121 = vector.extract_strided_slice %100 {offsets = [0, 1], sizes = [32, 287], strides = [1, 1]} : vector<32x288xf32> to vector<32x287xf32>
    %cst_39 = arith.constant 0.000000e+00 : f32
    %122 = vector.broadcast %cst_39 : f32 to vector<32x1xf32>
    %123 = tpu.concatenate %121, %122 in 1 : vector<32x287xf32>, vector<32x1xf32> -> vector<32x288xf32>
    %cst_40 = arith.constant 0.000000e+00 : f32
    %124 = vector.broadcast %cst_40 : f32 to vector<32x3xf32>
    %125 = vector.extract_strided_slice %100 {offsets = [0, 0], sizes = [32, 285], strides = [1, 1]} : vector<32x288xf32> to vector<32x285xf32>
    %126 = tpu.concatenate %124, %125 in 1 : vector<32x3xf32>, vector<32x285xf32> -> vector<32x288xf32>
    %c0_i32_41 = arith.constant 0 : i32
    %127 = vector.broadcast %c0_i32_41 : i32 to vector<1x288xi32>
    %128 = arith.cmpi eq, %117, %127 : vector<1x288xi32>
    %c17_i32_42 = arith.constant 17 : i32
    %129 = vector.broadcast %c17_i32_42 : i32 to vector<1x288xi32>
    %130 = arith.cmpi eq, %117, %129 : vector<1x288xi32>
    %131 = vector.shape_cast %130 : vector<1x288xi1> to vector<1x288xi1>
    %132 = vector.broadcast %131 : vector<1x288xi1> to vector<32x288xi1>
    %133 = arith.select %132, %126, %120 : vector<32x288xi1>, vector<32x288xf32>
    %134 = vector.shape_cast %128 : vector<1x288xi1> to vector<1x288xi1>
    %135 = vector.broadcast %134 : vector<1x288xi1> to vector<32x288xi1>
    %136 = arith.select %135, %123, %133 : vector<32x288xi1>, vector<32x288xf32>
    %137 = vector.extract_strided_slice %136 {offsets = [0, 18], sizes = [32, 18], strides = [1, 1]} : vector<32x288xf32> to vector<32x18xf32>
    %138 = vector.extract_strided_slice %136 {offsets = [0, 252], sizes = [32, 18], strides = [1, 1]} : vector<32x288xf32> to vector<32x18xf32>
    %cst_43 = arith.constant 0.000000e+00 : f32
    %139 = vector.broadcast %cst_43 : f32 to vector<32x2xf32>
    %140 = tpu.concatenate %137, %136, %138, %139 in 1 : vector<32x18xf32>, vector<32x288xf32>, vector<32x18xf32>, vector<32x2xf32> -> vector<32x326xf32>
    %141 = arith.truncf %140 : vector<32x326xf32> to vector<32x326xbf16>
    %c0_44 = arith.constant 0 : index
    %c0_45 = arith.constant 0 : index
    %142 = vector.load %arg4[%c0_44, %c0_45] : memref<32x288xbf16, #tpu.memory_space<vmem>>, vector<32x288xbf16>
    %143 = vector.extract_strided_slice %141 {offsets = [0, 0], sizes = [32, 288], strides = [1, 1]} : vector<32x326xbf16> to vector<32x288xbf16>
    %144 = vector.extract_strided_slice %141 {offsets = [0, 1], sizes = [32, 288], strides = [1, 1]} : vector<32x326xbf16> to vector<32x288xbf16>
    %145 = vector.extract_strided_slice %141 {offsets = [0, 2], sizes = [32, 288], strides = [1, 1]} : vector<32x326xbf16> to vector<32x288xbf16>
    %146 = vector.extract_strided_slice %141 {offsets = [0, 18], sizes = [32, 288], strides = [1, 1]} : vector<32x326xbf16> to vector<32x288xbf16>
    %147 = vector.extract_strided_slice %141 {offsets = [0, 19], sizes = [32, 288], strides = [1, 1]} : vector<32x326xbf16> to vector<32x288xbf16>
    %148 = vector.extract_strided_slice %141 {offsets = [0, 20], sizes = [32, 288], strides = [1, 1]} : vector<32x326xbf16> to vector<32x288xbf16>
    %149 = vector.extract_strided_slice %141 {offsets = [0, 36], sizes = [32, 288], strides = [1, 1]} : vector<32x326xbf16> to vector<32x288xbf16>
    %150 = vector.extract_strided_slice %141 {offsets = [0, 37], sizes = [32, 288], strides = [1, 1]} : vector<32x326xbf16> to vector<32x288xbf16>
    %151 = vector.extract_strided_slice %141 {offsets = [0, 38], sizes = [32, 288], strides = [1, 1]} : vector<32x326xbf16> to vector<32x288xbf16>
    %152 = tpu.concatenate %143, %144, %145, %146, %147, %148, %149, %150, %151 in 0 : vector<32x288xbf16>, vector<32x288xbf16>, vector<32x288xbf16>, vector<32x288xbf16>, vector<32x288xbf16>, vector<32x288xbf16>, vector<32x288xbf16>, vector<32x288xbf16>, vector<32x288xbf16> -> vector<288x288xbf16>
    %cst_46 = arith.constant dense<0.000000e+00> : vector<32x288xf32>
    %153 = tpu.matmul %142, %152, %cst_46 {dimension_numbers = #tpu.dot_dimension_numbers<[1], [0], [0], [1], [0, 0, 1, 1], [], []>} : vector<32x288xbf16>, vector<288x288xbf16>, vector<32x288xf32> -> vector<32x288xf32>
    %c0_47 = arith.constant 0 : index
    %c0_48 = arith.constant 0 : index
    %154 = vector.load %arg5[%c0_47, %c0_48] : memref<32x1xf32, #tpu.memory_space<vmem>>, vector<32x1xf32>
    %155 = vector.broadcast %154 : vector<32x1xf32> to vector<32x288xf32>
    %156 = arith.addf %153, %155 : vector<32x288xf32>
    %157 = vector.broadcast %3 : vector<1x288xf32> to vector<32x288xf32>
    %158 = arith.mulf %156, %157 : vector<32x288xf32>
    %cst_49 = arith.constant dense<0.000000e+00> : vector<32xf32>
    %159 = vector.multi_reduction <add>, %158, %cst_49 [1] : vector<32x288xf32> to vector<32xf32>
    %160 = vector.shape_cast %159 : vector<32xf32> to vector<32x1xf32>
    %cst_50 = arith.constant 3.906250e-03 : f32
    %161 = vector.broadcast %cst_50 : f32 to vector<32x1xf32>
    %162 = arith.mulf %160, %161 : vector<32x1xf32>
    %163 = vector.broadcast %162 : vector<32x1xf32> to vector<32x288xf32>
    %164 = arith.subf %156, %163 : vector<32x288xf32>
    %165 = arith.mulf %164, %164 : vector<32x288xf32>
    %166 = vector.broadcast %3 : vector<1x288xf32> to vector<32x288xf32>
    %167 = arith.mulf %165, %166 : vector<32x288xf32>
    %cst_51 = arith.constant dense<0.000000e+00> : vector<32xf32>
    %168 = vector.multi_reduction <add>, %167, %cst_51 [1] : vector<32x288xf32> to vector<32xf32>
    %169 = vector.shape_cast %168 : vector<32xf32> to vector<32x1xf32>
    %cst_52 = arith.constant 3.906250e-03 : f32
    %170 = vector.broadcast %cst_52 : f32 to vector<32x1xf32>
    %171 = arith.mulf %169, %170 : vector<32x1xf32>
    %cst_53 = arith.constant 9.99999974E-6 : f32
    %172 = vector.broadcast %cst_53 : f32 to vector<32x1xf32>
    %173 = arith.addf %171, %172 : vector<32x1xf32>
    %174 = math.rsqrt %173 : vector<32x1xf32>
    %175 = vector.broadcast %174 : vector<32x1xf32> to vector<32x288xf32>
    %176 = arith.mulf %164, %175 : vector<32x288xf32>
    %177 = arith.addf %22, %176 : vector<32x288xf32>
    %178 = arith.truncf %177 : vector<32x288xf32> to vector<32x288xbf16>
    %c0_54 = arith.constant 0 : index
    %c0_55 = arith.constant 0 : index
    %c0_56 = arith.constant 0 : index
    %179 = vector.load %arg9[%c0_54, %c0_55, %c0_56] : memref<1x32x288xbf16, #tpu.memory_space<vmem>>, vector<1x32x288xbf16>
    %180 = vector.shape_cast %179 : vector<1x32x288xbf16> to vector<32x288xbf16>
    %181 = vector.shape_cast %178 : vector<32x288xbf16> to vector<1x32x288xbf16>
    tpu.vector_store %arg9[%c0_54, %c0_55, %c0_56], %181 {strides = array<i32>} : memref<1x32x288xbf16, #tpu.memory_space<vmem>>, vector<1x32x288xbf16>,
    return
  }
  func.func @transform_0(%arg0: i32) -> (i32, i32, i32) {
    %c0_i32 = arith.constant 0 : i32
    %c0_i32_0 = arith.constant 0 : i32
    %c0_i32_1 = arith.constant 0 : i32
    return %arg0, %c0_i32, %c0_i32_0 : i32, i32, i32
  }
  func.func @transform_1(%arg0: i32) -> (i32, i32) {
    %c0_i32 = arith.constant 0 : i32
    %c0_i32_0 = arith.constant 0 : i32
    %c0_i32_1 = arith.constant 0 : i32
    return %c0_i32, %c0_i32_0 : i32, i32
  }
  func.func @transform_2(%arg0: i32) -> (i32, i32) {
    %c0_i32 = arith.constant 0 : i32
    %c0_i32_0 = arith.constant 0 : i32
    %c0_i32_1 = arith.constant 0 : i32
    return %c0_i32, %c0_i32_0 : i32, i32
  }
  func.func @transform_3(%arg0: i32) -> (i32, i32) {
    %c0_i32 = arith.constant 0 : i32
    %c0_i32_0 = arith.constant 0 : i32
    %c0_i32_1 = arith.constant 0 : i32
    return %c0_i32, %c0_i32_0 : i32, i32
  }
  func.func @transform_4(%arg0: i32) -> (i32, i32) {
    %c0_i32 = arith.constant 0 : i32
    %c0_i32_0 = arith.constant 0 : i32
    %c0_i32_1 = arith.constant 0 : i32
    return %c0_i32, %c0_i32_0 : i32, i32
  }
  func.func @transform_5(%arg0: i32) -> (i32, i32) {
    %c0_i32 = arith.constant 0 : i32
    %c0_i32_0 = arith.constant 0 : i32
    %c0_i32_1 = arith.constant 0 : i32
    return %c0_i32, %c0_i32_0 : i32, i32
  }
  func.func @transform_6(%arg0: i32) -> (i32, i32) {
    %c0_i32 = arith.constant 0 : i32
    %c0_i32_0 = arith.constant 0 : i32
    %c0_i32_1 = arith.constant 0 : i32
    return %c0_i32, %c0_i32_0 : i32, i32
  }
  func.func @transform_7(%arg0: i32) -> (i32, i32) {
    %c0_i32 = arith.constant 0 : i32
    %c0_i32_0 = arith.constant 0 : i32
    %c0_i32_1 = arith.constant 0 : i32
    return %c0_i32, %c0_i32_0 : i32, i32
  }
  func.func @transform_8(%arg0: i32) -> (i32, i32, i32) {
    %c0_i32 = arith.constant 0 : i32
    %c0_i32_0 = arith.constant 0 : i32
    %c0_i32_1 = arith.constant 0 : i32
    return %arg0, %c0_i32, %c0_i32_0 : i32, i32, i32
  }
}

module attributes {stable_mosaic.version = 11 : i64} {
  func.func @_in_relu_kernel(%arg0: i32, %arg1: memref<1x32x676xbf16, #tpu.memory_space<vmem>>, %arg2: memref<1x32x676xbf16, #tpu.memory_space<vmem>>) attributes {dimension_semantics = [#tpu.dimension_semantics<parallel>], iteration_bounds = array<i64: 2>, scalar_prefetch = 0 : i64, scratch_operands = 0 : i64, tpu.core_type = #tpu.core_type<tc>, window_params = [{transform_indices = @transform_0, window_bounds = array<i64: 1, 32, 676>}, {transform_indices = @transform_1, window_bounds = array<i64: 1, 32, 676>}]} {
    %c0 = arith.constant 0 : index
    %c0_0 = arith.constant 0 : index
    %c0_1 = arith.constant 0 : index
    %0 = vector.load %arg1[%c0, %c0_0, %c0_1] : memref<1x32x676xbf16, #tpu.memory_space<vmem>>, vector<1x32x676xbf16>
    %1 = vector.shape_cast %0 : vector<1x32x676xbf16> to vector<32x676xbf16>
    %2 = arith.extf %1 : vector<32x676xbf16> to vector<32x676xf32>
    %cst = arith.constant dense<0.000000e+00> : vector<32xf32>
    %3 = vector.multi_reduction <add>, %2, %cst [1] : vector<32x676xf32> to vector<32xf32>
    %4 = vector.shape_cast %3 : vector<32xf32> to vector<32x1xf32>
    %cst_2 = arith.constant 6.760000e+02 : f32
    %5 = vector.broadcast %cst_2 : f32 to vector<32x1xf32>
    %6 = arith.divf %4, %5 : vector<32x1xf32>
    %7 = vector.broadcast %6 : vector<32x1xf32> to vector<32x676xf32>
    %8 = arith.subf %2, %7 : vector<32x676xf32>
    %9 = arith.mulf %8, %8 : vector<32x676xf32>
    %cst_3 = arith.constant dense<0.000000e+00> : vector<32xf32>
    %10 = vector.multi_reduction <add>, %9, %cst_3 [1] : vector<32x676xf32> to vector<32xf32>
    %11 = vector.shape_cast %10 : vector<32xf32> to vector<32x1xf32>
    %cst_4 = arith.constant 6.760000e+02 : f32
    %12 = vector.broadcast %cst_4 : f32 to vector<32x1xf32>
    %13 = arith.divf %11, %12 : vector<32x1xf32>
    %14 = vector.broadcast %6 : vector<32x1xf32> to vector<32x676xf32>
    %15 = arith.subf %2, %14 : vector<32x676xf32>
    %cst_5 = arith.constant 9.99999974E-6 : f32
    %16 = vector.broadcast %cst_5 : f32 to vector<32x1xf32>
    %17 = arith.addf %13, %16 : vector<32x1xf32>
    %18 = math.rsqrt %17 : vector<32x1xf32>
    %19 = vector.broadcast %18 : vector<32x1xf32> to vector<32x676xf32>
    %20 = arith.mulf %15, %19 : vector<32x676xf32>
    %cst_6 = arith.constant 0.000000e+00 : f32
    %21 = vector.broadcast %cst_6 : f32 to vector<32x676xf32>
    %22 = arith.maximumf %20, %21 : vector<32x676xf32>
    %23 = arith.truncf %22 : vector<32x676xf32> to vector<32x676xbf16>
    %c0_7 = arith.constant 0 : index
    %c0_8 = arith.constant 0 : index
    %c0_9 = arith.constant 0 : index
    %24 = vector.load %arg2[%c0_7, %c0_8, %c0_9] : memref<1x32x676xbf16, #tpu.memory_space<vmem>>, vector<1x32x676xbf16>
    %25 = vector.shape_cast %24 : vector<1x32x676xbf16> to vector<32x676xbf16>
    %26 = vector.shape_cast %23 : vector<32x676xbf16> to vector<1x32x676xbf16>
    tpu.vector_store %arg2[%c0_7, %c0_8, %c0_9], %26 {strides = array<i32>} : memref<1x32x676xbf16, #tpu.memory_space<vmem>>, vector<1x32x676xbf16>,
    return
  }
  func.func @transform_0(%arg0: i32) -> (i32, i32, i32) {
    %c0_i32 = arith.constant 0 : i32
    %c0_i32_0 = arith.constant 0 : i32
    %c0_i32_1 = arith.constant 0 : i32
    return %arg0, %c0_i32, %c0_i32_0 : i32, i32, i32
  }
  func.func @transform_1(%arg0: i32) -> (i32, i32, i32) {
    %c0_i32 = arith.constant 0 : i32
    %c0_i32_0 = arith.constant 0 : i32
    %c0_i32_1 = arith.constant 0 : i32
    return %arg0, %c0_i32, %c0_i32_0 : i32, i32, i32
  }
}

module attributes {stable_mosaic.version = 11 : i64} {
  func.func @kernel(%arg0: i32, %arg1: memref<1x32x2027xbf16, #tpu.memory_space<vmem>>, %arg2: memref<8x288xbf16, #tpu.memory_space<vmem>>, %arg3: memref<8x1xf32, #tpu.memory_space<vmem>>, %arg4: memref<1x2027xf32, #tpu.memory_space<vmem>>, %arg5: memref<1x8x1935xf32, #tpu.memory_space<vmem>>) attributes {dimension_semantics = [#tpu.dimension_semantics<parallel>], iteration_bounds = array<i64: 2>, scalar_prefetch = 0 : i64, scratch_operands = 0 : i64, tpu.core_type = #tpu.core_type<tc>, window_params = [{transform_indices = @transform_0, window_bounds = array<i64: 1, 32, 2027>}, {pipeline_mode = #tpu.pipeline_mode<synchronous>, transform_indices = @transform_1, window_bounds = array<i64: 8, 288>}, {pipeline_mode = #tpu.pipeline_mode<synchronous>, transform_indices = @transform_2, window_bounds = array<i64: 8, 1>}, {pipeline_mode = #tpu.pipeline_mode<synchronous>, transform_indices = @transform_3, window_bounds = array<i64: 1, 2027>}, {transform_indices = @transform_4, window_bounds = array<i64: 1, 8, 1935>}]} {
    %c0 = arith.constant 0 : index
    %c0_0 = arith.constant 0 : index
    %c0_1 = arith.constant 0 : index
    %0 = vector.load %arg1[%c0, %c0_0, %c0_1] : memref<1x32x2027xbf16, #tpu.memory_space<vmem>>, vector<1x32x2027xbf16>
    %1 = vector.shape_cast %0 : vector<1x32x2027xbf16> to vector<32x2027xbf16>
    %2 = arith.extf %1 : vector<32x2027xbf16> to vector<32x2027xf32>
    %c0_2 = arith.constant 0 : index
    %c0_3 = arith.constant 0 : index
    %3 = vector.load %arg4[%c0_2, %c0_3] : memref<1x2027xf32, #tpu.memory_space<vmem>>, vector<1x2027xf32>
    %4 = vector.broadcast %3 : vector<1x2027xf32> to vector<32x2027xf32>
    %5 = arith.mulf %2, %4 : vector<32x2027xf32>
    %cst = arith.constant dense<0.000000e+00> : vector<32xf32>
    %6 = vector.multi_reduction <add>, %5, %cst [1] : vector<32x2027xf32> to vector<32xf32>
    %7 = vector.shape_cast %6 : vector<32xf32> to vector<32x1xf32>
    %cst_4 = arith.constant 5.40832873E-4 : f32
    %8 = vector.broadcast %cst_4 : f32 to vector<32x1xf32>
    %9 = arith.mulf %7, %8 : vector<32x1xf32>
    %10 = vector.broadcast %9 : vector<32x1xf32> to vector<32x2027xf32>
    %11 = arith.subf %2, %10 : vector<32x2027xf32>
    %12 = arith.mulf %11, %11 : vector<32x2027xf32>
    %13 = vector.broadcast %3 : vector<1x2027xf32> to vector<32x2027xf32>
    %14 = arith.mulf %12, %13 : vector<32x2027xf32>
    %cst_5 = arith.constant dense<0.000000e+00> : vector<32xf32>
    %15 = vector.multi_reduction <add>, %14, %cst_5 [1] : vector<32x2027xf32> to vector<32xf32>
    %16 = vector.shape_cast %15 : vector<32xf32> to vector<32x1xf32>
    %cst_6 = arith.constant 5.40832873E-4 : f32
    %17 = vector.broadcast %cst_6 : f32 to vector<32x1xf32>
    %18 = arith.mulf %16, %17 : vector<32x1xf32>
    %cst_7 = arith.constant 9.99999974E-6 : f32
    %19 = vector.broadcast %cst_7 : f32 to vector<32x1xf32>
    %20 = arith.addf %18, %19 : vector<32x1xf32>
    %21 = math.rsqrt %20 : vector<32x1xf32>
    %22 = vector.broadcast %21 : vector<32x1xf32> to vector<32x2027xf32>
    %23 = arith.mulf %11, %22 : vector<32x2027xf32>
    %cst_8 = arith.constant 0.000000e+00 : f32
    %24 = vector.broadcast %cst_8 : f32 to vector<32x2027xf32>
    %25 = arith.maximumf %23, %24 : vector<32x2027xf32>
    %26 = vector.broadcast %3 : vector<1x2027xf32> to vector<32x2027xf32>
    %27 = arith.mulf %25, %26 : vector<32x2027xf32>
    %c0_9 = arith.constant 0 : index
    %c0_10 = arith.constant 0 : index
    %28 = vector.load %arg2[%c0_9, %c0_10] : memref<8x288xbf16, #tpu.memory_space<vmem>>, vector<8x288xbf16>
    %29 = arith.truncf %27 : vector<32x2027xf32> to vector<32x2027xbf16>
    %30 = vector.extract_strided_slice %29 {offsets = [0, 0], sizes = [32, 1935], strides = [1, 1]} : vector<32x2027xbf16> to vector<32x1935xbf16>
    %31 = vector.extract_strided_slice %29 {offsets = [0, 1], sizes = [32, 1935], strides = [1, 1]} : vector<32x2027xbf16> to vector<32x1935xbf16>
    %32 = vector.extract_strided_slice %29 {offsets = [0, 2], sizes = [32, 1935], strides = [1, 1]} : vector<32x2027xbf16> to vector<32x1935xbf16>
    %33 = vector.extract_strided_slice %29 {offsets = [0, 45], sizes = [32, 1935], strides = [1, 1]} : vector<32x2027xbf16> to vector<32x1935xbf16>
    %34 = vector.extract_strided_slice %29 {offsets = [0, 46], sizes = [32, 1935], strides = [1, 1]} : vector<32x2027xbf16> to vector<32x1935xbf16>
    %35 = vector.extract_strided_slice %29 {offsets = [0, 47], sizes = [32, 1935], strides = [1, 1]} : vector<32x2027xbf16> to vector<32x1935xbf16>
    %36 = vector.extract_strided_slice %29 {offsets = [0, 90], sizes = [32, 1935], strides = [1, 1]} : vector<32x2027xbf16> to vector<32x1935xbf16>
    %37 = vector.extract_strided_slice %29 {offsets = [0, 91], sizes = [32, 1935], strides = [1, 1]} : vector<32x2027xbf16> to vector<32x1935xbf16>
    %38 = vector.extract_strided_slice %29 {offsets = [0, 92], sizes = [32, 1935], strides = [1, 1]} : vector<32x2027xbf16> to vector<32x1935xbf16>
    %39 = tpu.concatenate %30, %31, %32, %33, %34, %35, %36, %37, %38 in 0 : vector<32x1935xbf16>, vector<32x1935xbf16>, vector<32x1935xbf16>, vector<32x1935xbf16>, vector<32x1935xbf16>, vector<32x1935xbf16>, vector<32x1935xbf16>, vector<32x1935xbf16>, vector<32x1935xbf16> -> vector<288x1935xbf16>
    %cst_11 = arith.constant dense<0.000000e+00> : vector<8x1935xf32>
    %40 = tpu.matmul %28, %39, %cst_11 {dimension_numbers = #tpu.dot_dimension_numbers<[1], [0], [0], [1], [0, 0, 1, 1], [], []>} : vector<8x288xbf16>, vector<288x1935xbf16>, vector<8x1935xf32> -> vector<8x1935xf32>
    %c0_12 = arith.constant 0 : index
    %c0_13 = arith.constant 0 : index
    %41 = vector.load %arg3[%c0_12, %c0_13] : memref<8x1xf32, #tpu.memory_space<vmem>>, vector<8x1xf32>
    %42 = vector.broadcast %41 : vector<8x1xf32> to vector<8x1935xf32>
    %43 = arith.addf %40, %42 : vector<8x1935xf32>
    %cst_14 = arith.constant 0.000000e+00 : f32
    %44 = vector.broadcast %cst_14 : f32 to vector<8x1935xf32>
    %45 = arith.maximumf %43, %44 : vector<8x1935xf32>
    %c0_15 = arith.constant 0 : index
    %c0_16 = arith.constant 0 : index
    %c0_17 = arith.constant 0 : index
    %46 = vector.load %arg5[%c0_15, %c0_16, %c0_17] : memref<1x8x1935xf32, #tpu.memory_space<vmem>>, vector<1x8x1935xf32>
    %47 = vector.shape_cast %46 : vector<1x8x1935xf32> to vector<8x1935xf32>
    %48 = vector.shape_cast %45 : vector<8x1935xf32> to vector<1x8x1935xf32>
    tpu.vector_store %arg5[%c0_15, %c0_16, %c0_17], %48 {strides = array<i32>} : memref<1x8x1935xf32, #tpu.memory_space<vmem>>, vector<1x8x1935xf32>,
    return
  }
  func.func @transform_0(%arg0: i32) -> (i32, i32, i32) {
    %c0_i32 = arith.constant 0 : i32
    %c0_i32_0 = arith.constant 0 : i32
    %c0_i32_1 = arith.constant 0 : i32
    return %arg0, %c0_i32, %c0_i32_0 : i32, i32, i32
  }
  func.func @transform_1(%arg0: i32) -> (i32, i32) {
    %c0_i32 = arith.constant 0 : i32
    %c0_i32_0 = arith.constant 0 : i32
    %c0_i32_1 = arith.constant 0 : i32
    return %c0_i32, %c0_i32_0 : i32, i32
  }
  func.func @transform_2(%arg0: i32) -> (i32, i32) {
    %c0_i32 = arith.constant 0 : i32
    %c0_i32_0 = arith.constant 0 : i32
    %c0_i32_1 = arith.constant 0 : i32
    return %c0_i32, %c0_i32_0 : i32, i32
  }
  func.func @transform_3(%arg0: i32) -> (i32, i32) {
    %c0_i32 = arith.constant 0 : i32
    %c0_i32_0 = arith.constant 0 : i32
    %c0_i32_1 = arith.constant 0 : i32
    return %c0_i32, %c0_i32_0 : i32, i32
  }
  func.func @transform_4(%arg0: i32) -> (i32, i32, i32) {
    %c0_i32 = arith.constant 0 : i32
    %c0_i32_0 = arith.constant 0 : i32
    %c0_i32_1 = arith.constant 0 : i32
    return %arg0, %c0_i32, %c0_i32_0 : i32, i32, i32
  }
}

</mosaic_0001>

<llo_original>
// kernel: decoder2d_forward.7
$region0: #{decoder2d_forward.7}
  #allocation0 [shape = 'u32[]', space=smem, size = 0x4, offset = 0x4, fixed_abs, tag = 'smem constant byte address 0x4 - core index']
  #allocation1 [shape = 'u32[144,128]{1,0:T(1,128)}', space=vmem, size = 0x12000, scoped, tag = 'internal scratch']
  %s0 = inlined_call_operand.vmem [shape: f32[2,8,490], index: 0, kind: input, shape index: {}]
  %s1 = inlined_call_operand.vmem [shape: f32[32,392], index: 1, kind: input, shape index: {}]
  %s2 = inlined_call_operand.vmem [shape: f32[32,1], index: 2, kind: input, shape index: {}]
  %s3 = inlined_call_operand.vmem [shape: f32[1,352], index: 3, kind: input, shape index: {}]
  %s4 = inlined_call_operand.vmem [shape: bf16[2,32,352], index: 4, kind: output, shape index: {}]
  %s5 = sld [smem:[#allocation0]]
  $region49: #{decoder2d_forward.7} parent=0
    _
  %s7 = ssub.s32 1, %s5
  %s8 = scalar_select 0, %s7, %s5
  loop: start=0, step=1, limit=4
  $region2: #{decoder2d_forward.7} parent=0 // loop_pre_header
    _
  $region3: #{decoder2d_forward.7} parent=0 // loop_header
    %s10 = sphi 0, %s14
    %p11 = scmp.ge.s32.totalorder %s10, 4
    %s20 = sphi 0, %s22
    %s23 = sphi 0, %s20
    %s24 = sphi 0, %s23
    %s40 = sphi 0, %s24
    %s44 = sphi 0, %s44
    %s46 = sphi 0, %s44
    %s47 = sphi 0, %s46
    %s61 = sphi 0, %s47
    %s65 = sphi 0, %s65
    %s67 = sphi 0, %s65
    %s68 = sphi 0, %s67
    %s82 = sphi 0, %s68
    %s86 = sphi 0, %s86
    %s88 = sphi 0, %s86
    %s89 = sphi 0, %s88
    %s103 = sphi 0, %s89
    %s109 = sphi 0, %s111
    %s112 = sphi 0, %s109
    %s113 = sphi 0, %s112
    %s129 = sphi 0, %s113
  $region4: #{decoder2d_forward.7} parent=0 // loop_header_branch
    %13 = sbr.rel (%p11) target = $region8
  $region5: #{decoder2d_forward.7} parent=0 // loop_body
    %s15 = ssub.s32 %s10, 1
    %s16 = ssub.s32 %s10, 2
    %s17 = sadd.s32 %s10, 1
    %s18 = ssub.s32 %s10, %s17
    %p19 = scmp.eq.s32.totalorder %s18, 0
    %s21 = sadd.s32 %s20, 1
    %s22 = scalar_select %p19, %s20, %s21
    %p25 = pneg %p19
    %p26 = scmp.eq.s32.totalorder %s10, 1
    %p27 = por %p25, %p26
    %p28 = scmp.ne.s32.totalorder %s20, %s23
    %p29 = scmp.eq.s32.totalorder %s10, 0
    %p30 = por %p28, %p29
    %p31 = scmp.ne.s32.totalorder %s20, %s23
    %p32 = scmp.eq.s32.totalorder %s15, 1
    %p33 = por %p31, %p32
    %p34 = scmp.ne.s32.totalorder %s23, %s24
    %p35 = scmp.eq.s32.totalorder %s15, 0
    %p36 = por %p34, %p35
    %p37 = scmp.ne.s32.totalorder %s23, %s24
    %p38 = scmp.eq.s32.totalorder %s16, 1
    %p39 = por %p37, %p38
    %p41 = scmp.ne.s32.totalorder %s24, %s40
    %p42 = scmp.eq.s32.totalorder %s16, 0
    %p43 = por %p41, %p42
    %s45 = sadd.s32 %s44, 1
    %p48 = scmp.eq.s32.totalorder %s10, 1
    %p49 = scmp.ne.s32.totalorder %s44, %s46
    %p50 = scmp.eq.s32.totalorder %s10, 0
    %p51 = por %p49, %p50
    %p52 = scmp.ne.s32.totalorder %s44, %s46
    %p53 = scmp.eq.s32.totalorder %s15, 1
    %p54 = por %p52, %p53
    %p55 = scmp.ne.s32.totalorder %s46, %s47
    %p56 = scmp.eq.s32.totalorder %s15, 0
    %p57 = por %p55, %p56
    %p58 = scmp.ne.s32.totalorder %s46, %s47
    %p59 = scmp.eq.s32.totalorder %s16, 1
    %p60 = por %p58, %p59
    %p62 = scmp.ne.s32.totalorder %s47, %s61
    %p63 = scmp.eq.s32.totalorder %s16, 0
    %p64 = por %p62, %p63
    %s66 = sadd.s32 %s65, 1
    %p69 = scmp.eq.s32.totalorder %s10, 1
    %p70 = scmp.ne.s32.totalorder %s65, %s67
    %p71 = scmp.eq.s32.totalorder %s10, 0
    %p72 = por %p70, %p71
    %p73 = scmp.ne.s32.totalorder %s65, %s67
    %p74 = scmp.eq.s32.totalorder %s15, 1
    %p75 = por %p73, %p74
    %p76 = scmp.ne.s32.totalorder %s67, %s68
    %p77 = scmp.eq.s32.totalorder %s15, 0
    %p78 = por %p76, %p77
    %p79 = scmp.ne.s32.totalorder %s67, %s68
    %p80 = scmp.eq.s32.totalorder %s16, 1
    %p81 = por %p79, %p80
    %p83 = scmp.ne.s32.totalorder %s68, %s82
    %p84 = scmp.eq.s32.totalorder %s16, 0
    %p85 = por %p83, %p84
    %s87 = sadd.s32 %s86, 1
    %p90 = scmp.eq.s32.totalorder %s10, 1
    %p91 = scmp.ne.s32.totalorder %s86, %s88
    %p92 = scmp.eq.s32.totalorder %s10, 0
    %p93 = por %p91, %p92
    %p94 = scmp.ne.s32.totalorder %s86, %s88
    %p95 = scmp.eq.s32.totalorder %s15, 1
    %p96 = por %p94, %p95
    %p97 = scmp.ne.s32.totalorder %s88, %s89
    %p98 = scmp.eq.s32.totalorder %s15, 0
    %p99 = por %p97, %p98
    %p100 = scmp.ne.s32.totalorder %s88, %s89
    %p101 = scmp.eq.s32.totalorder %s16, 1
    %p102 = por %p100, %p101
    %p104 = scmp.ne.s32.totalorder %s89, %s103
    %p105 = scmp.eq.s32.totalorder %s16, 0
    %p106 = por %p104, %p105
    %s107 = ssub.s32 %s10, %s17
    %p108 = scmp.eq.s32.totalorder %s107, 0
    %s110 = sadd.s32 %s109, 1
    %s111 = scalar_select %p108, %s109, %s110
    %p114 = pneg %p108
    %p115 = scmp.eq.s32.totalorder %s10, 1
    %p116 = por %p114, %p115
    %p117 = scmp.ne.s32.totalorder %s109, %s112
    %p118 = scmp.eq.s32.totalorder %s10, 0
    %p119 = por %p117, %p118
    %p120 = scmp.ne.s32.totalorder %s109, %s112
    %p121 = scmp.eq.s32.totalorder %s15, 1
    %p122 = por %p120, %p121
    %p123 = scmp.ne.s32.totalorder %s112, %s113
    %p124 = scmp.eq.s32.totalorder %s15, 0
    %p125 = por %p123, %p124
    %p126 = scmp.ne.s32.totalorder %s112, %s113
    %p127 = scmp.eq.s32.totalorder %s16, 1
    %p128 = por %p126, %p127
    %p130 = scmp.ne.s32.totalorder %s113, %s129
    %p131 = scmp.eq.s32.totalorder %s16, 0
    %p132 = por %p130, %p131
    %p133 = scmp.le.s32.totalorder 1, %s10
    %p134 = scmp.lt.s32.totalorder %s10, 3
    %p135 = pnand %p133, %p134
    %p136 = pneg %p135
    // Predicated region
    $region9: #{decoder2d_forward.7} parent=5 // pred_check
      _
    $region10: #{decoder2d_forward.7} parent=5 // pred_check_branch
      %138 = sbr.rel (%p135) target = $region12
    $region11: #{decoder2d_forward.7} parent=5 // pred_region
      %s139 = ssub.s32 %s10, 1
      // Predicated region
      $region13: #{decoder2d_forward.7} parent=11 // pred_check
        %p140 = pneg %p57
      $region14: #{decoder2d_forward.7} parent=11 // pred_check_branch
        %142 = sbr.rel (%p140) target = $region16
      $region15: #{decoder2d_forward.7} parent=11 // pred_region
        _
      $region16: #{decoder2d_forward.7} parent=11 // pred_fallthru
        _
      // Predicated region
      $region17: #{decoder2d_forward.7} parent=11 // pred_check
        %p143 = pneg %p78
      $region18: #{decoder2d_forward.7} parent=11 // pred_check_branch
        %145 = sbr.rel (%p143) target = $region20
      $region19: #{decoder2d_forward.7} parent=11 // pred_region
        _
      $region20: #{decoder2d_forward.7} parent=11 // pred_fallthru
        _
      // Predicated region
      $region21: #{decoder2d_forward.7} parent=11 // pred_check
        %p146 = pneg %p99
      $region22: #{decoder2d_forward.7} parent=11 // pred_check_branch
        %148 = sbr.rel (%p146) target = $region24
      $region23: #{decoder2d_forward.7} parent=11 // pred_region
        _
      $region24: #{decoder2d_forward.7} parent=11 // pred_fallthru
        _
    $region12: #{decoder2d_forward.7} parent=5 // pred_fallthru
      _
    %p149 = scmp.lt.s32.totalorder %s10, 2
    // Predicated region
    $region25: #{decoder2d_forward.7} parent=5 // pred_check
      %p150 = pneg %p149
    $region26: #{decoder2d_forward.7} parent=5 // pred_check_branch
      %152 = sbr.rel (%p150) target = $region28
    $region27: #{decoder2d_forward.7} parent=5 // pred_region
      // Predicated region
      $region29: #{decoder2d_forward.7} parent=27 // pred_check
        %p153 = pneg %p30
      $region30: #{decoder2d_forward.7} parent=27 // pred_check_branch
        %155 = sbr.rel (%p153) target = $region32
      $region31: #{decoder2d_forward.7} parent=27 // pred_region
        %p156 = scmp.lt.s32.totalorder %s10, 1
        %s157 = scalar_select %p156, %s10, 1
        %s158 = smul.addr %s157, 4
        %s159 = smul.addr %s158, 8
        %s160 = scalar_lea.vmem %s0, %s159
      $region32: #{decoder2d_forward.7} parent=27 // pred_fallthru
        _
    $region28: #{decoder2d_forward.7} parent=5 // pred_fallthru
      _
    %p161 = scmp.le.s32.totalorder 1, %s10
    %p162 = scmp.lt.s32.totalorder %s10, 3
    %p163 = pnand %p161, %p162
    %p164 = pneg %p163
    // Predicated region
    $region33: #{decoder2d_forward.7} parent=5 // pred_check
      _
    $region34: #{decoder2d_forward.7} parent=5 // pred_check_branch
      %166 = sbr.rel (%p163) target = $region36
    $region35: #{decoder2d_forward.7} parent=5 // pred_region
      %s167 = ssub.s32 %s10, 1
      %p168 = scmp.lt.s32.totalorder %s15, 1
      %s169 = scalar_select %p168, %s15, 1
      %s170 = smul.addr %s169, 4
      %s171 = smul.addr %s170, 8
      %s172 = scalar_lea.vmem %s0, %s171
      %p173 = pneg %p36
      %p174 = pneg %p33
      %p175 = pneg %p57
      %p176 = pneg %p54
      %p177 = pneg %p78
      %p178 = pneg %p75
      %p179 = pneg %p99
      %p180 = pneg %p96
      %p181 = pneg %p125
      %p182 = pneg %p122
      %p183 = scmp.lt.s32.totalorder %s15, 1
      %s184 = scalar_select %p183, %s15, 1
      %s185 = smul.addr %s184, 12
      %s186 = smul.addr %s185, 4
      %s187 = scalar_lea.vmem %s4, %s186
      %p188 = scmp.lt.s32.totalorder %s15, 1
      %s189 = scalar_select %p188, %s15, 1
      %s190 = smul.addr %s189, 4
      %s191 = smul.addr %s190, 8
      %s192 = scalar_lea.vmem %s0, %s191
      %p193 = scmp.lt.s32.totalorder %s15, 1
      %s194 = scalar_select %p193, %s15, 1
      %s195 = smul.addr %s194, 12
      %s196 = smul.addr %s195, 4
      %s197 = scalar_lea.vmem %s4, %s196
      %v198 = vld [vmem:[%s192] sm:$0xff]
      %v199 = vld [vmem:[%s192 + $0x8] sm:$0xff]
      %v200 = vld [vmem:[%s192 + $0x10] sm:$0xff]
      %v201 = vld [vmem:[%s192 + $0x18] sm:$0xff]
      %205 = vrot.lane.b32.xlu0 %v198, 127
      %v206 = vpop.permute.xlu0 %205
      %207 = vrot.lane.b32.xlu0 %v199, 127
      %v208 = vpop.permute.xlu0 %207
      %209 = vrot.lane.b32.xlu0 %v200, 127
      %v210 = vpop.permute.xlu0 %209
      %vm211 = vcmask 1039360
      %v212 = vsel %vm211, %v206, %v208
      %v213 = vsel %vm211, %v208, %v210
      %217 = vrot.lane.b32.xlu0 %v198, 126
      %v218 = vpop.permute.xlu0 %217
      %219 = vrot.lane.b32.xlu0 %v199, 126
      %v220 = vpop.permute.xlu0 %219
      %221 = vrot.lane.b32.xlu0 %v200, 126
      %v222 = vpop.permute.xlu0 %221
      %vm223 = vcmask 1031168
      %v224 = vsel %vm223, %v218, %v220
      %v225 = vsel %vm223, %v220, %v222
      %229 = vrot.lane.b32.xlu0 %v198, 125
      %v230 = vpop.permute.xlu0 %229
      %231 = vrot.lane.b32.xlu0 %v199, 125
      %v232 = vpop.permute.xlu0 %231
      %233 = vrot.lane.b32.xlu0 %v200, 125
      %v234 = vpop.permute.xlu0 %233
      %vm235 = vcmask 1022976
      %v236 = vsel %vm235, %v230, %v232
      %v237 = vsel %vm235, %v232, %v234
      %241 = vrot.lane.b32.xlu0 %v198, 124
      %v242 = vpop.permute.xlu0 %241
      %243 = vrot.lane.b32.xlu0 %v199, 124
      %v244 = vpop.permute.xlu0 %243
      %245 = vrot.lane.b32.xlu0 %v200, 124
      %v246 = vpop.permute.xlu0 %245
      %vm247 = vcmask 1014784
      %v248 = vsel %vm247, %v242, %v244
      %v249 = vsel %vm247, %v244, %v246
      %253 = vrot.lane.b32.xlu0 %v198, 123
      %v254 = vpop.permute.xlu0 %253
      %255 = vrot.lane.b32.xlu0 %v199, 123
      %v256 = vpop.permute.xlu0 %255
      %257 = vrot.lane.b32.xlu0 %v200, 123
      %v258 = vpop.permute.xlu0 %257
      %vm259 = vcmask 1006592
      %v260 = vsel %vm259, %v254, %v256
      %v261 = vsel %vm259, %v256, %v258
      %265 = vrot.lane.b32.xlu0 %v198, 122
      %v266 = vpop.permute.xlu0 %265
      %267 = vrot.lane.b32.xlu0 %v199, 122
      %v268 = vpop.permute.xlu0 %267
      %269 = vrot.lane.b32.xlu0 %v200, 122
      %v270 = vpop.permute.xlu0 %269
      %vm271 = vcmask 998400
      %v272 = vsel %vm271, %v266, %v268
      %v273 = vsel %vm271, %v268, %v270
      %277 = vrot.lane.b32.xlu0 %v198, 106
      %v278 = vpop.permute.xlu0 %277
      %279 = vrot.lane.b32.xlu0 %v199, 106
      %v280 = vpop.permute.xlu0 %279
      %281 = vrot.lane.b32.xlu0 %v200, 106
      %v282 = vpop.permute.xlu0 %281
      %vm283 = vcmask 867328
      %v284 = vsel %vm283, %v278, %v280
      %v285 = vsel %vm283, %v280, %v282
      %289 = vrot.lane.b32.xlu0 %v198, 105
      %v290 = vpop.permute.xlu0 %289
      %291 = vrot.lane.b32.xlu0 %v199, 105
      %v292 = vpop.permute.xlu0 %291
      %293 = vrot.lane.b32.xlu0 %v200, 105
      %v294 = vpop.permute.xlu0 %293
      %vm295 = vcmask 859136
      %v296 = vsel %vm295, %v290, %v292
      %v297 = vsel %vm295, %v292, %v294
      %301 = vrot.lane.b32.xlu0 %v198, 104
      %v302 = vpop.permute.xlu0 %301
      %303 = vrot.lane.b32.xlu0 %v199, 104
      %v304 = vpop.permute.xlu0 %303
      %305 = vrot.lane.b32.xlu0 %v200, 104
      %v306 = vpop.permute.xlu0 %305
      %vm307 = vcmask 850944
      %v308 = vsel %vm307, %v302, %v304
      %v309 = vsel %vm307, %v304, %v306
      %313 = vrot.lane.b32.xlu0 %v198, 103
      %v314 = vpop.permute.xlu0 %313
      %315 = vrot.lane.b32.xlu0 %v199, 103
      %v316 = vpop.permute.xlu0 %315
      %317 = vrot.lane.b32.xlu0 %v200, 103
      %v318 = vpop.permute.xlu0 %317
      %vm319 = vcmask 842752
      %v320 = vsel %vm319, %v314, %v316
      %v321 = vsel %vm319, %v316, %v318
      %325 = vrot.lane.b32.xlu0 %v198, 102
      %v326 = vpop.permute.xlu0 %325
      %327 = vrot.lane.b32.xlu0 %v199, 102
      %v328 = vpop.permute.xlu0 %327
      %329 = vrot.lane.b32.xlu0 %v200, 102
      %v330 = vpop.permute.xlu0 %329
      %vm331 = vcmask 834560
      %v332 = vsel %vm331, %v326, %v328
      %v333 = vsel %vm331, %v328, %v330
      %337 = vrot.lane.b32.xlu0 %v198, 101
      %v338 = vpop.permute.xlu0 %337
      %339 = vrot.lane.b32.xlu0 %v199, 101
      %v340 = vpop.permute.xlu0 %339
      %341 = vrot.lane.b32.xlu0 %v200, 101
      %v342 = vpop.permute.xlu0 %341
      %vm343 = vcmask 826368
      %v344 = vsel %vm343, %v338, %v340
      %v345 = vsel %vm343, %v340, %v342
      %349 = vrot.lane.b32.xlu0 %v198, 100
      %v350 = vpop.permute.xlu0 %349
      %351 = vrot.lane.b32.xlu0 %v199, 100
      %v352 = vpop.permute.xlu0 %351
      %353 = vrot.lane.b32.xlu0 %v200, 100
      %v354 = vpop.permute.xlu0 %353
      %vm355 = vcmask 818176
      %v356 = vsel %vm355, %v350, %v352
      %v357 = vsel %vm355, %v352, %v354
      %362 = vrot.lane.b32.xlu0 %v198, 84
      %v363 = vpop.permute.xlu0 %362
      %364 = vrot.lane.b32.xlu0 %v199, 84
      %v365 = vpop.permute.xlu0 %364
      %366 = vrot.lane.b32.xlu0 %v200, 84
      %v367 = vpop.permute.xlu0 %366
      %368 = vrot.lane.b32.xlu0 %v201, 84
      %v369 = vpop.permute.xlu0 %368
      %vm370 = vcmask 687104
      %v371 = vsel %vm370, %v363, %v365
      %v372 = vsel %vm370, %v365, %v367
      %v373 = vsel %vm370, %v367, %v369
      %377 = vrot.lane.b32.xlu0 %v198, 83
      %v378 = vpop.permute.xlu0 %377
      %379 = vrot.lane.b32.xlu0 %v199, 83
      %v380 = vpop.permute.xlu0 %379
      %381 = vrot.lane.b32.xlu0 %v200, 83
      %v382 = vpop.permute.xlu0 %381
      %383 = vrot.lane.b32.xlu0 %v201, 83
      %v384 = vpop.permute.xlu0 %383
      %vm385 = vcmask 678912
      %v386 = vsel %vm385, %v378, %v380
      %v387 = vsel %vm385, %v380, %v382
      %v388 = vsel %vm385, %v382, %v384
      %392 = vrot.lane.b32.xlu0 %v201, 127
      %v393 = vpop.permute.xlu0 %392
      %v394 = vsel %vm211, %v210, %v393
      %395 = vrot.lane.b32.xlu0 %v201, 126
      %v396 = vpop.permute.xlu0 %395
      %v397 = vsel %vm223, %v222, %v396
      %398 = vrot.lane.b32.xlu0 %v201, 125
      %v399 = vpop.permute.xlu0 %398
      %v400 = vsel %vm235, %v234, %v399
      %401 = vrot.lane.b32.xlu0 %v201, 124
      %v402 = vpop.permute.xlu0 %401
      %v403 = vsel %vm247, %v246, %v402
      %404 = vrot.lane.b32.xlu0 %v198, 108
      %v405 = vpop.permute.xlu0 %404
      %406 = vrot.lane.b32.xlu0 %v199, 108
      %v407 = vpop.permute.xlu0 %406
      %408 = vrot.lane.b32.xlu0 %v200, 108
      %v409 = vpop.permute.xlu0 %408
      %410 = vrot.lane.b32.xlu0 %v201, 108
      %v411 = vpop.permute.xlu0 %410
      %vm412 = vcmask 883712
      %v413 = vsel %vm412, %v405, %v407
      %v414 = vsel %vm412, %v407, %v409
      %v415 = vsel %vm412, %v409, %v411
      %416 = vrot.lane.b32.xlu0 %v198, 107
      %v417 = vpop.permute.xlu0 %416
      %418 = vrot.lane.b32.xlu0 %v199, 107
      %v419 = vpop.permute.xlu0 %418
      %420 = vrot.lane.b32.xlu0 %v200, 107
      %v421 = vpop.permute.xlu0 %420
      %422 = vrot.lane.b32.xlu0 %v201, 107
      %v423 = vpop.permute.xlu0 %422
      %vm424 = vcmask 875520
      %v425 = vsel %vm424, %v417, %v419
      %v426 = vsel %vm424, %v419, %v421
      %v427 = vsel %vm424, %v421, %v423
      %428 = vrot.lane.b32.xlu0 %v201, 106
      %v429 = vpop.permute.xlu0 %428
      %v430 = vsel %vm283, %v282, %v429
      %431 = vrot.lane.b32.xlu0 %v201, 105
      %v432 = vpop.permute.xlu0 %431
      %v433 = vsel %vm295, %v294, %v432
      %434 = vrot.lane.b32.xlu0 %v201, 104
      %v435 = vpop.permute.xlu0 %434
      %v436 = vsel %vm307, %v306, %v435
      %437 = vrot.lane.b32.xlu0 %v201, 103
      %v438 = vpop.permute.xlu0 %437
      %v439 = vsel %vm319, %v318, %v438
      %440 = vrot.lane.b32.xlu0 %v201, 102
      %v441 = vpop.permute.xlu0 %440
      %v442 = vsel %vm331, %v330, %v441
      %443 = vrot.lane.b32.xlu0 %v198, 86
      %v444 = vpop.permute.xlu0 %443
      %445 = vrot.lane.b32.xlu0 %v199, 86
      %v446 = vpop.permute.xlu0 %445
      %447 = vrot.lane.b32.xlu0 %v200, 86
      %v448 = vpop.permute.xlu0 %447
      %449 = vrot.lane.b32.xlu0 %v201, 86
      %v450 = vpop.permute.xlu0 %449
      %vm451 = vcmask 703488
      %v452 = vsel %vm451, %v444, %v446
      %v453 = vsel %vm451, %v446, %v448
      %v454 = vsel %vm451, %v448, %v450
      %455 = vrot.lane.b32.xlu0 %v198, 85
      %v456 = vpop.permute.xlu0 %455
      %457 = vrot.lane.b32.xlu0 %v199, 85
      %v458 = vpop.permute.xlu0 %457
      %459 = vrot.lane.b32.xlu0 %v200, 85
      %v460 = vpop.permute.xlu0 %459
      %461 = vrot.lane.b32.xlu0 %v201, 85
      %v462 = vpop.permute.xlu0 %461
      %vm463 = vcmask 695296
      %v464 = vsel %vm463, %v456, %v458
      %v465 = vsel %vm463, %v458, %v460
      %v466 = vsel %vm463, %v460, %v462
      %467 = vrot.lane.b32.xlu0 %v198, 110
      %v468 = vpop.permute.xlu0 %467
      %469 = vrot.lane.b32.xlu0 %v199, 110
      %v470 = vpop.permute.xlu0 %469
      %471 = vrot.lane.b32.xlu0 %v200, 110
      %v472 = vpop.permute.xlu0 %471
      %473 = vrot.lane.b32.xlu0 %v201, 110
      %v474 = vpop.permute.xlu0 %473
      %vm475 = vcmask 900096
      %v476 = vsel %vm475, %v468, %v470
      %v477 = vsel %vm475, %v470, %v472
      %v478 = vsel %vm475, %v472, %v474
      %479 = vrot.lane.b32.xlu0 %v198, 109
      %v480 = vpop.permute.xlu0 %479
      %481 = vrot.lane.b32.xlu0 %v199, 109
      %v482 = vpop.permute.xlu0 %481
      %483 = vrot.lane.b32.xlu0 %v200, 109
      %v484 = vpop.permute.xlu0 %483
      %485 = vrot.lane.b32.xlu0 %v201, 109
      %v486 = vpop.permute.xlu0 %485
      %vm487 = vcmask 891904
      %v488 = vsel %vm487, %v480, %v482
      %v489 = vsel %vm487, %v482, %v484
      %v490 = vsel %vm487, %v484, %v486
      %491 = vrot.lane.b32.xlu0 %v199, 88
      %v492 = vpop.permute.xlu0 %491
      %493 = vrot.lane.b32.xlu0 %v200, 88
      %v494 = vpop.permute.xlu0 %493
      %495 = vrot.lane.b32.xlu0 %v201, 88
      %v496 = vpop.permute.xlu0 %495
      %vm497 = vcmask 719872
      %v498 = vsel %vm497, %v492, %v494
      %v499 = vsel %vm497, %v494, %v496
      %500 = vrot.lane.b32.xlu0 %v199, 87
      %v501 = vpop.permute.xlu0 %500
      %502 = vrot.lane.b32.xlu0 %v200, 87
      %v503 = vpop.permute.xlu0 %502
      %504 = vrot.lane.b32.xlu0 %v201, 87
      %v505 = vpop.permute.xlu0 %504
      %vm506 = vcmask 711680
      %v507 = vsel %vm506, %v501, %v503
      %v508 = vsel %vm506, %v503, %v505
      %509 = vrot.lane.b32.xlu0 %v198, 82
      %v510 = vpop.permute.xlu0 %509
      %511 = vrot.lane.b32.xlu0 %v199, 82
      %v512 = vpop.permute.xlu0 %511
      %513 = vrot.lane.b32.xlu0 %v200, 82
      %v514 = vpop.permute.xlu0 %513
      %515 = vrot.lane.b32.xlu0 %v201, 82
      %v516 = vpop.permute.xlu0 %515
      %517 = vrot.lane.b32.xlu0 %v212, 82
      %v518 = vpop.permute.xlu0 %517
      %519 = vrot.lane.b32.xlu0 %v213, 82
      %v520 = vpop.permute.xlu0 %519
      %521 = vrot.lane.b32.xlu0 %v394, 82
      %v522 = vpop.permute.xlu0 %521
      %523 = vrot.lane.b32.xlu0 %v393, 82
      %v524 = vpop.permute.xlu0 %523
      %525 = vrot.lane.b32.xlu0 %v224, 82
      %v526 = vpop.permute.xlu0 %525
      %527 = vrot.lane.b32.xlu0 %v225, 82
      %v528 = vpop.permute.xlu0 %527
      %529 = vrot.lane.b32.xlu0 %v397, 82
      %v530 = vpop.permute.xlu0 %529
      %531 = vrot.lane.b32.xlu0 %v396, 82
      %v532 = vpop.permute.xlu0 %531
      %533 = vrot.lane.b32.xlu0 %v236, 82
      %v534 = vpop.permute.xlu0 %533
      %535 = vrot.lane.b32.xlu0 %v237, 82
      %v536 = vpop.permute.xlu0 %535
      %537 = vrot.lane.b32.xlu0 %v400, 82
      %v538 = vpop.permute.xlu0 %537
      %539 = vrot.lane.b32.xlu0 %v399, 82
      %v540 = vpop.permute.xlu0 %539
      %541 = vrot.lane.b32.xlu0 %v248, 82
      %v542 = vpop.permute.xlu0 %541
      %543 = vrot.lane.b32.xlu0 %v249, 82
      %v544 = vpop.permute.xlu0 %543
      %545 = vrot.lane.b32.xlu0 %v403, 82
      %v546 = vpop.permute.xlu0 %545
      %547 = vrot.lane.b32.xlu0 %v402, 82
      %v548 = vpop.permute.xlu0 %547
      %549 = vrot.lane.b32.xlu0 %v413, 82
      %v550 = vpop.permute.xlu0 %549
      %551 = vrot.lane.b32.xlu0 %v414, 82
      %v552 = vpop.permute.xlu0 %551
      %553 = vrot.lane.b32.xlu0 %v415, 82
      %v554 = vpop.permute.xlu0 %553
      %555 = vrot.lane.b32.xlu0 %v411, 82
      %v556 = vpop.permute.xlu0 %555
      %557 = vrot.lane.b32.xlu0 %v425, 82
      %v558 = vpop.permute.xlu0 %557
      %559 = vrot.lane.b32.xlu0 %v426, 82
      %v560 = vpop.permute.xlu0 %559
      %561 = vrot.lane.b32.xlu0 %v427, 82
      %v562 = vpop.permute.xlu0 %561
      %563 = vrot.lane.b32.xlu0 %v423, 82
      %v564 = vpop.permute.xlu0 %563
      %565 = vrot.lane.b32.xlu0 %v284, 82
      %v566 = vpop.permute.xlu0 %565
      %567 = vrot.lane.b32.xlu0 %v285, 82
      %v568 = vpop.permute.xlu0 %567
      %569 = vrot.lane.b32.xlu0 %v430, 82
      %v570 = vpop.permute.xlu0 %569
      %571 = vrot.lane.b32.xlu0 %v429, 82
      %v572 = vpop.permute.xlu0 %571
      %573 = vrot.lane.b32.xlu0 %v296, 82
      %v574 = vpop.permute.xlu0 %573
      %575 = vrot.lane.b32.xlu0 %v297, 82
      %v576 = vpop.permute.xlu0 %575
      %577 = vrot.lane.b32.xlu0 %v433, 82
      %v578 = vpop.permute.xlu0 %577
      %579 = vrot.lane.b32.xlu0 %v432, 82
      %v580 = vpop.permute.xlu0 %579
      %581 = vrot.lane.b32.xlu0 %v308, 82
      %v582 = vpop.permute.xlu0 %581
      %583 = vrot.lane.b32.xlu0 %v309, 82
      %v584 = vpop.permute.xlu0 %583
      %585 = vrot.lane.b32.xlu0 %v436, 82
      %v586 = vpop.permute.xlu0 %585
      %587 = vrot.lane.b32.xlu0 %v435, 82
      %v588 = vpop.permute.xlu0 %587
      %589 = vrot.lane.b32.xlu0 %v320, 82
      %v590 = vpop.permute.xlu0 %589
      %591 = vrot.lane.b32.xlu0 %v321, 82
      %v592 = vpop.permute.xlu0 %591
      %593 = vrot.lane.b32.xlu0 %v439, 82
      %v594 = vpop.permute.xlu0 %593
      %595 = vrot.lane.b32.xlu0 %v438, 82
      %v596 = vpop.permute.xlu0 %595
      %597 = vrot.lane.b32.xlu0 %v332, 82
      %v598 = vpop.permute.xlu0 %597
      %599 = vrot.lane.b32.xlu0 %v333, 82
      %v600 = vpop.permute.xlu0 %599
      %601 = vrot.lane.b32.xlu0 %v442, 82
      %v602 = vpop.permute.xlu0 %601
      %603 = vrot.lane.b32.xlu0 %v441, 82
      %v604 = vpop.permute.xlu0 %603
      %605 = vrot.lane.b32.xlu0 %v452, 82
      %v606 = vpop.permute.xlu0 %605
      %607 = vrot.lane.b32.xlu0 %v453, 82
      %v608 = vpop.permute.xlu0 %607
      %609 = vrot.lane.b32.xlu0 %v454, 82
      %v610 = vpop.permute.xlu0 %609
      %611 = vrot.lane.b32.xlu0 %v450, 82
      %v612 = vpop.permute.xlu0 %611
      %613 = vrot.lane.b32.xlu0 %v464, 82
      %v614 = vpop.permute.xlu0 %613
      %615 = vrot.lane.b32.xlu0 %v465, 82
      %v616 = vpop.permute.xlu0 %615
      %617 = vrot.lane.b32.xlu0 %v466, 82
      %v618 = vpop.permute.xlu0 %617
      %619 = vrot.lane.b32.xlu0 %v462, 82
      %v620 = vpop.permute.xlu0 %619
      %621 = vrot.lane.b32.xlu0 %v371, 82
      %v622 = vpop.permute.xlu0 %621
      %623 = vrot.lane.b32.xlu0 %v372, 82
      %v624 = vpop.permute.xlu0 %623
      %625 = vrot.lane.b32.xlu0 %v373, 82
      %v626 = vpop.permute.xlu0 %625
      %627 = vrot.lane.b32.xlu0 %v369, 82
      %v628 = vpop.permute.xlu0 %627
      %629 = vrot.lane.b32.xlu0 %v386, 82
      %v630 = vpop.permute.xlu0 %629
      %631 = vrot.lane.b32.xlu0 %v387, 82
      %v632 = vpop.permute.xlu0 %631
      %633 = vrot.lane.b32.xlu0 %v388, 82
      %v634 = vpop.permute.xlu0 %633
      %635 = vrot.lane.b32.xlu0 %v384, 82
      %v636 = vpop.permute.xlu0 %635
      %vm637 = vcmask 670720
      %v638 = vsel %vm637, %v510, %v512
      %v639 = vsel %vm637, %v512, %v514
      %v640 = vsel %vm637, %v514, %v516
      %v641 = vsel %vm637, %v518, %v520
      %v642 = vsel %vm637, %v520, %v522
      %v643 = vsel %vm637, %v522, %v524
      %v644 = vsel %vm637, %v526, %v528
      %v645 = vsel %vm637, %v528, %v530
      %v646 = vsel %vm637, %v530, %v532
      %v647 = vsel %vm637, %v534, %v536
      %v648 = vsel %vm637, %v536, %v538
      %v649 = vsel %vm637, %v538, %v540
      %v650 = vsel %vm637, %v542, %v544
      %v651 = vsel %vm637, %v544, %v546
      %v652 = vsel %vm637, %v546, %v548
      %v653 = vsel %vm637, %v550, %v552
      %v654 = vsel %vm637, %v552, %v554
      %v655 = vsel %vm637, %v554, %v556
      %v656 = vsel %vm637, %v558, %v560
      %v657 = vsel %vm637, %v560, %v562
      %v658 = vsel %vm637, %v562, %v564
      %v659 = vsel %vm637, %v566, %v568
      %v660 = vsel %vm637, %v568, %v570
      %v661 = vsel %vm637, %v570, %v572
      %v662 = vsel %vm637, %v574, %v576
      %v663 = vsel %vm637, %v576, %v578
      %v664 = vsel %vm637, %v578, %v580
      %v665 = vsel %vm637, %v582, %v584
      %v666 = vsel %vm637, %v584, %v586
      %v667 = vsel %vm637, %v586, %v588
      %v668 = vsel %vm637, %v590, %v592
      %v669 = vsel %vm637, %v592, %v594
      %v670 = vsel %vm637, %v594, %v596
      %v671 = vsel %vm637, %v598, %v600
      %v672 = vsel %vm637, %v600, %v602
      %v673 = vsel %vm637, %v602, %v604
      %v674 = vsel %vm637, %v606, %v608
      %v675 = vsel %vm637, %v608, %v610
      %v676 = vsel %vm637, %v610, %v612
      %v677 = vsel %vm637, %v614, %v616
      %v678 = vsel %vm637, %v616, %v618
      %v679 = vsel %vm637, %v618, %v620
      %v680 = vsel %vm637, %v622, %v624
      %v681 = vsel %vm637, %v624, %v626
      %v682 = vsel %vm637, %v626, %v628
      %v683 = vsel %vm637, %v630, %v632
      %v684 = vsel %vm637, %v632, %v634
      %v685 = vsel %vm637, %v634, %v636
      %734 = vrot.lane.b32.xlu0 %v198, 36
      %v735 = vpop.permute.xlu0 %734
      %736 = vrot.lane.b32.xlu0 %v199, 36
      %v737 = vpop.permute.xlu0 %736
      %738 = vrot.lane.b32.xlu0 %v200, 36
      %v739 = vpop.permute.xlu0 %738
      %740 = vrot.lane.b32.xlu0 %v201, 36
      %v741 = vpop.permute.xlu0 %740
      %742 = vrot.lane.b32.xlu0 %v212, 36
      %v743 = vpop.permute.xlu0 %742
      %744 = vrot.lane.b32.xlu0 %v213, 36
      %v745 = vpop.permute.xlu0 %744
      %746 = vrot.lane.b32.xlu0 %v394, 36
      %v747 = vpop.permute.xlu0 %746
      %748 = vrot.lane.b32.xlu0 %v393, 36
      %v749 = vpop.permute.xlu0 %748
      %750 = vrot.lane.b32.xlu0 %v224, 36
      %v751 = vpop.permute.xlu0 %750
      %752 = vrot.lane.b32.xlu0 %v225, 36
      %v753 = vpop.permute.xlu0 %752
      %754 = vrot.lane.b32.xlu0 %v397, 36
      %v755 = vpop.permute.xlu0 %754
      %756 = vrot.lane.b32.xlu0 %v396, 36
      %v757 = vpop.permute.xlu0 %756
      %758 = vrot.lane.b32.xlu0 %v476, 36
      %v759 = vpop.permute.xlu0 %758
      %760 = vrot.lane.b32.xlu0 %v477, 36
      %v761 = vpop.permute.xlu0 %760
      %762 = vrot.lane.b32.xlu0 %v478, 36
      %v763 = vpop.permute.xlu0 %762
      %764 = vrot.lane.b32.xlu0 %v474, 36
      %v765 = vpop.permute.xlu0 %764
      %766 = vrot.lane.b32.xlu0 %v488, 36
      %v767 = vpop.permute.xlu0 %766
      %768 = vrot.lane.b32.xlu0 %v489, 36
      %v769 = vpop.permute.xlu0 %768
      %770 = vrot.lane.b32.xlu0 %v490, 36
      %v771 = vpop.permute.xlu0 %770
      %772 = vrot.lane.b32.xlu0 %v486, 36
      %v773 = vpop.permute.xlu0 %772
      %774 = vrot.lane.b32.xlu0 %v413, 36
      %v775 = vpop.permute.xlu0 %774
      %776 = vrot.lane.b32.xlu0 %v414, 36
      %v777 = vpop.permute.xlu0 %776
      %778 = vrot.lane.b32.xlu0 %v415, 36
      %v779 = vpop.permute.xlu0 %778
      %780 = vrot.lane.b32.xlu0 %v411, 36
      %v781 = vpop.permute.xlu0 %780
      %782 = vrot.lane.b32.xlu0 %v425, 36
      %v783 = vpop.permute.xlu0 %782
      %784 = vrot.lane.b32.xlu0 %v426, 36
      %v785 = vpop.permute.xlu0 %784
      %786 = vrot.lane.b32.xlu0 %v427, 36
      %v787 = vpop.permute.xlu0 %786
      %788 = vrot.lane.b32.xlu0 %v423, 36
      %v789 = vpop.permute.xlu0 %788
      %790 = vrot.lane.b32.xlu0 %v284, 36
      %v791 = vpop.permute.xlu0 %790
      %792 = vrot.lane.b32.xlu0 %v285, 36
      %v793 = vpop.permute.xlu0 %792
      %794 = vrot.lane.b32.xlu0 %v430, 36
      %v795 = vpop.permute.xlu0 %794
      %796 = vrot.lane.b32.xlu0 %v429, 36
      %v797 = vpop.permute.xlu0 %796
      %798 = vrot.lane.b32.xlu0 %v296, 36
      %v799 = vpop.permute.xlu0 %798
      %800 = vrot.lane.b32.xlu0 %v297, 36
      %v801 = vpop.permute.xlu0 %800
      %802 = vrot.lane.b32.xlu0 %v433, 36
      %v803 = vpop.permute.xlu0 %802
      %804 = vrot.lane.b32.xlu0 %v432, 36
      %v805 = vpop.permute.xlu0 %804
      %806 = vrot.lane.b32.xlu0 %v308, 36
      %v807 = vpop.permute.xlu0 %806
      %808 = vrot.lane.b32.xlu0 %v309, 36
      %v809 = vpop.permute.xlu0 %808
      %810 = vrot.lane.b32.xlu0 %v436, 36
      %v811 = vpop.permute.xlu0 %810
      %812 = vrot.lane.b32.xlu0 %v435, 36
      %v813 = vpop.permute.xlu0 %812
      %814 = vrot.lane.b32.xlu0 %v492, 36
      %v815 = vpop.permute.xlu0 %814
      %816 = vrot.lane.b32.xlu0 %v498, 36
      %v817 = vpop.permute.xlu0 %816
      %818 = vrot.lane.b32.xlu0 %v499, 36
      %v819 = vpop.permute.xlu0 %818
      %820 = vrot.lane.b32.xlu0 %v496, 36
      %v821 = vpop.permute.xlu0 %820
      %822 = vrot.lane.b32.xlu0 %v501, 36
      %v823 = vpop.permute.xlu0 %822
      %824 = vrot.lane.b32.xlu0 %v507, 36
      %v825 = vpop.permute.xlu0 %824
      %826 = vrot.lane.b32.xlu0 %v508, 36
      %v827 = vpop.permute.xlu0 %826
      %828 = vrot.lane.b32.xlu0 %v505, 36
      %v829 = vpop.permute.xlu0 %828
      %830 = vrot.lane.b32.xlu0 %v446, 36
      %v831 = vpop.permute.xlu0 %830
      %832 = vrot.lane.b32.xlu0 %v453, 36
      %v833 = vpop.permute.xlu0 %832
      %834 = vrot.lane.b32.xlu0 %v454, 36
      %v835 = vpop.permute.xlu0 %834
      %836 = vrot.lane.b32.xlu0 %v450, 36
      %v837 = vpop.permute.xlu0 %836
      %838 = vrot.lane.b32.xlu0 %v458, 36
      %v839 = vpop.permute.xlu0 %838
      %840 = vrot.lane.b32.xlu0 %v465, 36
      %v841 = vpop.permute.xlu0 %840
      %842 = vrot.lane.b32.xlu0 %v466, 36
      %v843 = vpop.permute.xlu0 %842
      %844 = vrot.lane.b32.xlu0 %v462, 36
      %v845 = vpop.permute.xlu0 %844
      %846 = vrot.lane.b32.xlu0 %v365, 36
      %v847 = vpop.permute.xlu0 %846
      %848 = vrot.lane.b32.xlu0 %v372, 36
      %v849 = vpop.permute.xlu0 %848
      %850 = vrot.lane.b32.xlu0 %v373, 36
      %v851 = vpop.permute.xlu0 %850
      %852 = vrot.lane.b32.xlu0 %v369, 36
      %v853 = vpop.permute.xlu0 %852
      %854 = vrot.lane.b32.xlu0 %v380, 36
      %v855 = vpop.permute.xlu0 %854
      %856 = vrot.lane.b32.xlu0 %v387, 36
      %v857 = vpop.permute.xlu0 %856
      %858 = vrot.lane.b32.xlu0 %v388, 36
      %v859 = vpop.permute.xlu0 %858
      %860 = vrot.lane.b32.xlu0 %v384, 36
      %v861 = vpop.permute.xlu0 %860
      %vm862 = vcmask 293888
      %v863 = vsel %vm862, %v735, %v737
      %v864 = vsel %vm862, %v737, %v739
      %v865 = vsel %vm862, %v739, %v741
      %v866 = vsel %vm862, %v743, %v745
      %v867 = vsel %vm862, %v745, %v747
      %v868 = vsel %vm862, %v747, %v749
      %v869 = vsel %vm862, %v751, %v753
      %v870 = vsel %vm862, %v753, %v755
      %v871 = vsel %vm862, %v755, %v757
      %v872 = vsel %vm862, %v759, %v761
      %v873 = vsel %vm862, %v761, %v763
      %v874 = vsel %vm862, %v763, %v765
      %v875 = vsel %vm862, %v767, %v769
      %v876 = vsel %vm862, %v769, %v771
      %v877 = vsel %vm862, %v771, %v773
      %v878 = vsel %vm862, %v775, %v777
      %v879 = vsel %vm862, %v777, %v779
      %v880 = vsel %vm862, %v779, %v781
      %v881 = vsel %vm862, %v783, %v785
      %v882 = vsel %vm862, %v785, %v787
      %v883 = vsel %vm862, %v787, %v789
      %v884 = vsel %vm862, %v791, %v793
      %v885 = vsel %vm862, %v793, %v795
      %v886 = vsel %vm862, %v795, %v797
      %v887 = vsel %vm862, %v799, %v801
      %v888 = vsel %vm862, %v801, %v803
      %v889 = vsel %vm862, %v803, %v805
      %v890 = vsel %vm862, %v807, %v809
      %v891 = vsel %vm862, %v809, %v811
      %v892 = vsel %vm862, %v811, %v813
      %v893 = vsel %vm862, %v815, %v817
      %v894 = vsel %vm862, %v817, %v819
      %v895 = vsel %vm862, %v819, %v821
      %v896 = vsel %vm862, %v823, %v825
      %v897 = vsel %vm862, %v825, %v827
      %v898 = vsel %vm862, %v827, %v829
      %v899 = vsel %vm862, %v831, %v833
      %v900 = vsel %vm862, %v833, %v835
      %v901 = vsel %vm862, %v835, %v837
      %v902 = vsel %vm862, %v839, %v841
      %v903 = vsel %vm862, %v841, %v843
      %v904 = vsel %vm862, %v843, %v845
      %v905 = vsel %vm862, %v847, %v849
      %v906 = vsel %vm862, %v849, %v851
      %v907 = vsel %vm862, %v851, %v853
      %v908 = vsel %vm862, %v855, %v857
      %v909 = vsel %vm862, %v857, %v859
      %v910 = vsel %vm862, %v859, %v861
      %959 = vrot.lane.b32.xlu0 %v199, 118
      %v960 = vpop.permute.xlu0 %959
      %961 = vrot.lane.b32.xlu0 %v200, 118
      %v962 = vpop.permute.xlu0 %961
      %963 = vrot.lane.b32.xlu0 %v201, 118
      %v964 = vpop.permute.xlu0 %963
      %vm965 = vcmask 965632
      %v966 = vsel %vm965, %v960, %v962
      %v967 = vsel %vm965, %v962, %v964
      %v971 = vld [vmem:[%s1] sm:$0xff]
      %v972 = vld [vmem:[%s1 + $0x8] sm:$0xff]
      %v973 = vld [vmem:[%s1 + $0x10] sm:$0xff]
      %v974 = vld [vmem:[%s1 + $0x18] sm:$0xff]
      %v975 = vld [vmem:[%s1 + $0x20] sm:$0xff]
      %v976 = vld [vmem:[%s1 + $0x28] sm:$0xff]
      %v977 = vld [vmem:[%s1 + $0x30] sm:$0xff]
      %v978 = vld [vmem:[%s1 + $0x38] sm:$0xff]
      %v979 = vld [vmem:[%s1 + $0x40] sm:$0xff]
      %v980 = vld [vmem:[%s1 + $0x48] sm:$0xff]
      %v981 = vld [vmem:[%s1 + $0x50] sm:$0xff]
      %v982 = vld [vmem:[%s1 + $0x58] sm:$0xff]
      %v983 = vld [vmem:[%s1 + $0x60] sm:$0xff]
      %v984 = vld [vmem:[%s1 + $0x68] sm:$0xff]
      %v985 = vld [vmem:[%s1 + $0x70] sm:$0xff]
      %v986 = vld [vmem:[%s1 + $0x78] sm:$0xff]
      %v987 = vld [vmem:[%s2] sm:$0xff]
      %v988 = vld [vmem:[%s2 + $0x8] sm:$0xff]
      %v989 = vld [vmem:[%s2 + $0x10] sm:$0xff]
      %v990 = vld [vmem:[%s2 + $0x18] sm:$0xff]
      %992 = vset.pattern.permute.xlu0 0
      %993 = vperm.xlu0 %992, %v987
      %v994 = vpop.permute.xlu0 %993
      %997 = vset.pattern.permute.xlu0 0
      %998 = vperm.xlu0 %997, %v988
      %v999 = vpop.permute.xlu0 %998
      %1002 = vset.pattern.permute.xlu0 0
      %1003 = vperm.xlu0 %1002, %v989
      %v1004 = vpop.permute.xlu0 %1003
      %1007 = vset.pattern.permute.xlu0 0
      %1008 = vperm.xlu0 %1007, %v990
      %v1009 = vpop.permute.xlu0 %1008
      %vm1011 = vcmask 64512
      %v1013 = vsel %vm1011, %v974, 0
      %v1016 = vsel %vm1011, %v978, 0
      %v1019 = vsel %vm1011, %v982, 0
      %v1022 = vsel %vm1011, %v986, 0
      %1024 = vmatprep.subr.mxu0 %v387
      %1025 = vmatpush1.msra.mxu0 %v386
      %1026 = vmatprep.subr.mxu0 %v372
      %1027 = vmatpush1.msra.mxu0 %v371
      %1028 = vmatprep.subr.mxu0 %v357
      %1029 = vmatpush1.msra.mxu0 %v356
      %1030 = vmatprep.subr.mxu0 %v345
      %1031 = vmatpush1.msra.mxu0 %v344
      %1032 = vmatprep.subr.mxu0 %v333
      %1033 = vmatpush1.msra.mxu0 %v332
      %1034 = vmatprep.subr.mxu0 %v321
      %1035 = vmatpush1.msra.mxu0 %v320
      %1036 = vmatprep.subr.mxu0 %v309
      %1037 = vmatpush1.msra.mxu0 %v308
      %1038 = vmatprep.subr.mxu0 %v297
      %1039 = vmatpush1.msra.mxu0 %v296
      %1040 = vmatprep.subr.mxu0 %v285
      %1041 = vmatpush1.msra.mxu0 %v284
      %1042 = vmatprep.subr.mxu0 %v273
      %1043 = vmatpush1.msra.mxu0 %v272
      %1044 = vmatprep.subr.mxu0 %v261
      %1045 = vmatpush1.msra.mxu0 %v260
      %1046 = vmatprep.subr.mxu0 %v249
      %1047 = vmatpush1.msra.mxu0 %v248
      %1048 = vmatprep.subr.mxu0 %v237
      %1049 = vmatpush1.msra.mxu0 %v236
      %1050 = vmatprep.subr.mxu0 %v225
      %1051 = vmatpush1.msra.mxu0 %v224
      %1052 = vmatprep.subr.mxu0 %v213
      %1053 = vmatpush1.msra.mxu0 %v212
      %1054 = vmatprep.subr.mxu0 %v199
      %1055 = vmatpush1.msra.mxu0 %v198
      %1056 = vmatprep.subr.mxu0 %v684
      %1057 = vmatpush2.msra.mxu0 %v683
      %1058 = vmatprep.subr.mxu0 %v681
      %1059 = vmatpush2.msra.mxu0 %v680
      %1060 = vmatprep.subr.mxu0 %v678
      %1061 = vmatpush2.msra.mxu0 %v677
      %1062 = vmatprep.subr.mxu0 %v675
      %1063 = vmatpush2.msra.mxu0 %v674
      %1064 = vmatprep.subr.mxu0 %v672
      %1065 = vmatpush2.msra.mxu0 %v671
      %1066 = vmatprep.subr.mxu0 %v669
      %1067 = vmatpush2.msra.mxu0 %v668
      %1068 = vmatprep.subr.mxu0 %v666
      %1069 = vmatpush2.msra.mxu0 %v665
      %1070 = vmatprep.subr.mxu0 %v663
      %1071 = vmatpush2.msra.mxu0 %v662
      %1072 = vmatprep.subr.mxu0 %v660
      %1073 = vmatpush2.msra.mxu0 %v659
      %1074 = vmatprep.subr.mxu0 %v657
      %1075 = vmatpush2.msra.mxu0 %v656
      %1076 = vmatprep.subr.mxu0 %v654
      %1077 = vmatpush2.msra.mxu0 %v653
      %1078 = vmatprep.subr.mxu0 %v651
      %1079 = vmatpush2.msra.mxu0 %v650
      %1080 = vmatprep.subr.mxu0 %v648
      %1081 = vmatpush2.msra.mxu0 %v647
      %1082 = vmatprep.subr.mxu0 %v645
      %1083 = vmatpush2.msra.mxu0 %v644
      %1084 = vmatprep.subr.mxu0 %v642
      %1085 = vmatpush2.msra.mxu0 %v641
      %1086 = vmatprep.subr.mxu0 %v639
      %1087 = vmatpush2.msra.mxu0 %v638
      %1088 = vmatprep.mubr.f32.mxu0 %v972
      %1089 = vmatmul.mubr.f32.gmra.mxu0 %v971
      %v1090 = vpop.f32.mrf.mxu0
      %v1091 = vadd.f32 %v994, %v1090
      %v1092 = vpop.f32.mrf.mxu0
      %v1093 = vadd.f32 %v994, %v1092
      %1094 = vmatprep.mubr.f32.mxu0 %v976
      %1095 = vmatmul.mubr.f32.gmra.mxu0 %v975
      %v1096 = vpop.f32.mrf.mxu0
      %v1097 = vadd.f32 %v999, %v1096
      %v1098 = vpop.f32.mrf.mxu0
      %v1099 = vadd.f32 %v999, %v1098
      %1100 = vmatprep.mubr.f32.mxu0 %v980
      %1101 = vmatmul.mubr.f32.gmra.mxu0 %v979
      %v1102 = vpop.f32.mrf.mxu0
      %v1103 = vadd.f32 %v1004, %v1102
      %v1104 = vpop.f32.mrf.mxu0
      %v1105 = vadd.f32 %v1004, %v1104
      %1106 = vmatprep.mubr.f32.mxu0 %v984
      %1107 = vmatmul.mubr.f32.gmra.mxu0 %v983
      %v1108 = vpop.f32.mrf.mxu0
      %v1109 = vadd.f32 %v1009, %v1108
      %v1110 = vpop.f32.mrf.mxu0
      %v1111 = vadd.f32 %v1009, %v1110
      %1112 = vdwg.mxu0
      %1113 = vmatprep.subr.mxu0 %v909
      %1114 = vmatpush1.msra.mxu0 %v908
      %1115 = vmatprep.subr.mxu0 %v906
      %1116 = vmatpush1.msra.mxu0 %v905
      %1117 = vmatprep.subr.mxu0 %v903
      %1118 = vmatpush1.msra.mxu0 %v902
      %1119 = vmatprep.subr.mxu0 %v900
      %1120 = vmatpush1.msra.mxu0 %v899
      %1121 = vmatprep.subr.mxu0 %v897
      %1122 = vmatpush1.msra.mxu0 %v896
      %1123 = vmatprep.subr.mxu0 %v894
      %1124 = vmatpush1.msra.mxu0 %v893
      %1125 = vmatprep.subr.mxu0 %v891
      %1126 = vmatpush1.msra.mxu0 %v890
      %1127 = vmatprep.subr.mxu0 %v888
      %1128 = vmatpush1.msra.mxu0 %v887
      %1129 = vmatprep.subr.mxu0 %v885
      %1130 = vmatpush1.msra.mxu0 %v884
      %1131 = vmatprep.subr.mxu0 %v882
      %1132 = vmatpush1.msra.mxu0 %v881
      %1133 = vmatprep.subr.mxu0 %v879
      %1134 = vmatpush1.msra.mxu0 %v878
      %1135 = vmatprep.subr.mxu0 %v876
      %1136 = vmatpush1.msra.mxu0 %v875
      %1137 = vmatprep.subr.mxu0 %v873
      %1138 = vmatpush1.msra.mxu0 %v872
      %1139 = vmatprep.subr.mxu0 %v870
      %1140 = vmatpush1.msra.mxu0 %v869
      %1141 = vmatprep.subr.mxu0 %v867
      %1142 = vmatpush1.msra.mxu0 %v866
      %1143 = vmatprep.subr.mxu0 %v864
      %1144 = vmatpush1.msra.mxu0 %v863
      %1145 = vmatprep.subr.mxu0 0.0
      %1146 = vmatpush2.msra.mxu0 0.0
      %1147 = vmatprep.subr.mxu0 0.0
      %1148 = vmatpush2.msra.mxu0 0.0
      %1149 = vmatprep.subr.mxu0 0.0
      %1150 = vmatpush2.msra.mxu0 0.0
      %1151 = vmatprep.subr.mxu0 0.0
      %1152 = vmatpush2.msra.mxu0 0.0
      %1153 = vmatprep.subr.mxu0 0.0
      %1154 = vmatpush2.msra.mxu0 0.0
      %1155 = vmatprep.subr.mxu0 0.0
      %1156 = vmatpush2.msra.mxu0 0.0
      %1157 = vmatprep.subr.mxu0 0.0
      %1158 = vmatpush2.msra.mxu0 0.0
      %1159 = vmatprep.subr.mxu0 0.0
      %1160 = vmatpush2.msra.mxu0 0.0
      %1161 = vmatprep.subr.mxu0 0.0
      %1162 = vmatpush2.msra.mxu0 0.0
      %1163 = vmatprep.subr.mxu0 0.0
      %1164 = vmatpush2.msra.mxu0 0.0
      %1165 = vmatprep.subr.mxu0 0.0
      %1166 = vmatpush2.msra.mxu0 0.0
      %1167 = vmatprep.subr.mxu0 0.0
      %1168 = vmatpush2.msra.mxu0 0.0
      %1169 = vmatprep.subr.mxu0 0.0
      %1170 = vmatpush2.msra.mxu0 0.0
      %1171 = vmatprep.subr.mxu0 0.0
      %1172 = vmatpush2.msra.mxu0 0.0
      %1173 = vmatprep.subr.mxu0 0.0
      %1174 = vmatpush2.msra.mxu0 0.0
      %1175 = vmatprep.subr.mxu0 %v967
      %1176 = vmatpush2.msra.mxu0 %v966
      %1177 = vmatprep.mubr.f32.mxu0 %v1013
      %1178 = vmatmul.mubr.f32.gmra.mxu0 %v973
      %v1179 = vpop.f32.mrf.mxu0
      %v1180 = vadd.f32 %v1091, %v1179
      %v1181 = vpop.f32.mrf.mxu0
      %v1182 = vadd.f32 %v1093, %v1181
      %1183 = vmatprep.mubr.f32.mxu0 %v1016
      %1184 = vmatmul.mubr.f32.gmra.mxu0 %v977
      %v1185 = vpop.f32.mrf.mxu0
      %v1186 = vadd.f32 %v1097, %v1185
      %v1187 = vpop.f32.mrf.mxu0
      %v1188 = vadd.f32 %v1099, %v1187
      %1189 = vmatprep.mubr.f32.mxu0 %v1019
      %1190 = vmatmul.mubr.f32.gmra.mxu0 %v981
      %v1191 = vpop.f32.mrf.mxu0
      %v1192 = vadd.f32 %v1103, %v1191
      %v1193 = vpop.f32.mrf.mxu0
      %v1194 = vadd.f32 %v1105, %v1193
      %1195 = vmatprep.mubr.f32.mxu0 %v1022
      %1196 = vmatmul.mubr.f32.gmra.mxu0 %v985
      %v1197 = vpop.f32.mrf.mxu0
      %v1198 = vadd.f32 %v1109, %v1197
      %v1199 = vpop.f32.mrf.mxu0
      %v1200 = vadd.f32 %v1111, %v1199
      %1201 = vdwg.mxu0
      %1202 = vmatprep.subr.mxu0 0.0
      %1203 = vmatpush1.msra.mxu0 %v388
      %1204 = vmatprep.subr.mxu0 0.0
      %1205 = vmatpush1.msra.mxu0 %v373
      %1206 = vmatprep.subr.mxu0 0.0
      %1207 = vmatpush1.msra.mxu0 %v354
      %1208 = vmatprep.subr.mxu0 0.0
      %1209 = vmatpush1.msra.mxu0 %v342
      %1210 = vmatprep.subr.mxu0 0.0
      %1211 = vmatpush1.msra.mxu0 %v330
      %1212 = vmatprep.subr.mxu0 0.0
      %1213 = vmatpush1.msra.mxu0 %v318
      %1214 = vmatprep.subr.mxu0 0.0
      %1215 = vmatpush1.msra.mxu0 %v306
      %1216 = vmatprep.subr.mxu0 0.0
      %1217 = vmatpush1.msra.mxu0 %v294
      %1218 = vmatprep.subr.mxu0 0.0
      %1219 = vmatpush1.msra.mxu0 %v282
      %1220 = vmatprep.subr.mxu0 0.0
      %1221 = vmatpush1.msra.mxu0 %v270
      %1222 = vmatprep.subr.mxu0 0.0
      %1223 = vmatpush1.msra.mxu0 %v258
      %1224 = vmatprep.subr.mxu0 0.0
      %1225 = vmatpush1.msra.mxu0 %v246
      %1226 = vmatprep.subr.mxu0 0.0
      %1227 = vmatpush1.msra.mxu0 %v234
      %1228 = vmatprep.subr.mxu0 0.0
      %1229 = vmatpush1.msra.mxu0 %v222
      %1230 = vmatprep.subr.mxu0 0.0
      %1231 = vmatpush1.msra.mxu0 %v210
      %1232 = vmatprep.subr.mxu0 0.0
      %1233 = vmatpush1.msra.mxu0 %v200
      %1234 = vmatprep.subr.mxu0 0.0
      %1235 = vmatpush2.msra.mxu0 %v685
      %1236 = vmatprep.subr.mxu0 0.0
      %1237 = vmatpush2.msra.mxu0 %v682
      %1238 = vmatprep.subr.mxu0 0.0
      %1239 = vmatpush2.msra.mxu0 %v679
      %1240 = vmatprep.subr.mxu0 0.0
      %1241 = vmatpush2.msra.mxu0 %v676
      %1242 = vmatprep.subr.mxu0 0.0
      %1243 = vmatpush2.msra.mxu0 %v673
      %1244 = vmatprep.subr.mxu0 0.0
      %1245 = vmatpush2.msra.mxu0 %v670
      %1246 = vmatprep.subr.mxu0 0.0
      %1247 = vmatpush2.msra.mxu0 %v667
      %1248 = vmatprep.subr.mxu0 0.0
      %1249 = vmatpush2.msra.mxu0 %v664
      %1250 = vmatprep.subr.mxu0 0.0
      %1251 = vmatpush2.msra.mxu0 %v661
      %1252 = vmatprep.subr.mxu0 0.0
      %1253 = vmatpush2.msra.mxu0 %v658
      %1254 = vmatprep.subr.mxu0 0.0
      %1255 = vmatpush2.msra.mxu0 %v655
      %1256 = vmatprep.subr.mxu0 0.0
      %1257 = vmatpush2.msra.mxu0 %v652
      %1258 = vmatprep.subr.mxu0 0.0
      %1259 = vmatpush2.msra.mxu0 %v649
      %1260 = vmatprep.subr.mxu0 0.0
      %1261 = vmatpush2.msra.mxu0 %v646
      %1262 = vmatprep.subr.mxu0 0.0
      %1263 = vmatpush2.msra.mxu0 %v643
      %1264 = vmatprep.subr.mxu0 0.0
      %1265 = vmatpush2.msra.mxu0 %v640
      %1266 = vmatprep.mubr.f32.mxu0 %v972
      %1267 = vmatmul.mubr.f32.gmra.mxu0 %v971
      %v1268 = vpop.f32.mrf.mxu0
      %v1269 = vadd.f32 %v994, %v1268
      %v1270 = vpop.f32.mrf.mxu0
      %1271 = vmatprep.mubr.f32.mxu0 %v976
      %1272 = vmatmul.mubr.f32.gmra.mxu0 %v975
      %v1273 = vpop.f32.mrf.mxu0
      %v1274 = vadd.f32 %v999, %v1273
      %v1275 = vpop.f32.mrf.mxu0
      %1276 = vmatprep.mubr.f32.mxu0 %v980
      %1277 = vmatmul.mubr.f32.gmra.mxu0 %v979
      %v1278 = vpop.f32.mrf.mxu0
      %v1279 = vadd.f32 %v1004, %v1278
      %v1280 = vpop.f32.mrf.mxu0
      %1281 = vmatprep.mubr.f32.mxu0 %v984
      %1282 = vmatmul.mubr.f32.gmra.mxu0 %v983
      %v1283 = vpop.f32.mrf.mxu0
      %v1284 = vadd.f32 %v1009, %v1283
      %v1285 = vpop.f32.mrf.mxu0
      %1286 = vdwg.mxu0
      %1287 = vmatprep.subr.mxu0 0.0
      %1288 = vmatpush1.msra.mxu0 %v910
      %1289 = vmatprep.subr.mxu0 0.0
      %1290 = vmatpush1.msra.mxu0 %v907
      %1291 = vmatprep.subr.mxu0 0.0
      %1292 = vmatpush1.msra.mxu0 %v904
      %1293 = vmatprep.subr.mxu0 0.0
      %1294 = vmatpush1.msra.mxu0 %v901
      %1295 = vmatprep.subr.mxu0 0.0
      %1296 = vmatpush1.msra.mxu0 %v898
      %1297 = vmatprep.subr.mxu0 0.0
      %1298 = vmatpush1.msra.mxu0 %v895
      %1299 = vmatprep.subr.mxu0 0.0
      %1300 = vmatpush1.msra.mxu0 %v892
      %1301 = vmatprep.subr.mxu0 0.0
      %1302 = vmatpush1.msra.mxu0 %v889
      %1303 = vmatprep.subr.mxu0 0.0
      %1304 = vmatpush1.msra.mxu0 %v886
      %1305 = vmatprep.subr.mxu0 0.0
      %1306 = vmatpush1.msra.mxu0 %v883
      %1307 = vmatprep.subr.mxu0 0.0
      %1308 = vmatpush1.msra.mxu0 %v880
      %1309 = vmatprep.subr.mxu0 0.0
      %1310 = vmatpush1.msra.mxu0 %v877
      %1311 = vmatprep.subr.mxu0 0.0
      %1312 = vmatpush1.msra.mxu0 %v874
      %1313 = vmatprep.subr.mxu0 0.0
      %1314 = vmatpush1.msra.mxu0 %v871
      %1315 = vmatprep.subr.mxu0 0.0
      %1316 = vmatpush1.msra.mxu0 %v868
      %1317 = vmatprep.subr.mxu0 0.0
      %1318 = vmatpush1.msra.mxu0 %v865
      %1319 = vmatprep.subr.mxu0 0.0
      %1320 = vmatpush2.msra.mxu0 0.0
      %1321 = vmatprep.subr.mxu0 0.0
      %1322 = vmatpush2.msra.mxu0 0.0
      %1323 = vmatprep.subr.mxu0 0.0
      %1324 = vmatpush2.msra.mxu0 0.0
      %1325 = vmatprep.subr.mxu0 0.0
      %1326 = vmatpush2.msra.mxu0 0.0
      %1327 = vmatprep.subr.mxu0 0.0
      %1328 = vmatpush2.msra.mxu0 0.0
      %1329 = vmatprep.subr.mxu0 0.0
      %1330 = vmatpush2.msra.mxu0 0.0
      %1331 = vmatprep.subr.mxu0 0.0
      %1332 = vmatpush2.msra.mxu0 0.0
      %1333 = vmatprep.subr.mxu0 0.0
      %1334 = vmatpush2.msra.mxu0 0.0
      %1335 = vmatprep.subr.mxu0 0.0
      %1336 = vmatpush2.msra.mxu0 0.0
      %1337 = vmatprep.subr.mxu0 0.0
      %1338 = vmatpush2.msra.mxu0 0.0
      %1339 = vmatprep.subr.mxu0 0.0
      %1340 = vmatpush2.msra.mxu0 0.0
      %1341 = vmatprep.subr.mxu0 0.0
      %1342 = vmatpush2.msra.mxu0 0.0
      %1343 = vmatprep.subr.mxu0 0.0
      %1344 = vmatpush2.msra.mxu0 0.0
      %1345 = vmatprep.subr.mxu0 0.0
      %1346 = vmatpush2.msra.mxu0 0.0
      %1347 = vmatprep.subr.mxu0 0.0
      %1348 = vmatpush2.msra.mxu0 0.0
      %1349 = vmatprep.subr.mxu0 0.0
      %1350 = vmatpush2.msra.mxu0 %v964
      %1351 = vmatprep.mubr.f32.mxu0 %v1013
      %1352 = vmatmul.mubr.f32.gmra.mxu0 %v973
      %v1353 = vpop.f32.mrf.mxu0
      %v1354 = vadd.f32 %v1269, %v1353
      %v1355 = vpop.f32.mrf.mxu0
      %1356 = vmatprep.mubr.f32.mxu0 %v1016
      %1357 = vmatmul.mubr.f32.gmra.mxu0 %v977
      %v1358 = vpop.f32.mrf.mxu0
      %v1359 = vadd.f32 %v1274, %v1358
      %v1360 = vpop.f32.mrf.mxu0
      %1361 = vmatprep.mubr.f32.mxu0 %v1019
      %1362 = vmatmul.mubr.f32.gmra.mxu0 %v981
      %v1363 = vpop.f32.mrf.mxu0
      %v1364 = vadd.f32 %v1279, %v1363
      %v1365 = vpop.f32.mrf.mxu0
      %1366 = vmatprep.mubr.f32.mxu0 %v1022
      %1367 = vmatmul.mubr.f32.gmra.mxu0 %v985
      %v1368 = vpop.f32.mrf.mxu0
      %v1369 = vadd.f32 %v1284, %v1368
      %v1370 = vpop.f32.mrf.mxu0
      %1371 = vdwg.mxu0
      %v1372 = vld [vmem:[%s3] sm:$0x7]
      %v1374 = vlaneseq
      %v1375 = vshrl.u32 %v1374, 7
      %v1376 = vsub.s32 0, %v1375
      %v1377 = vrot.slane %v1372, %v1376
      %v1378 = vlaneseq
      %v1379 = vshrl.u32 %v1378, 7
      %v1380 = vsub.s32 1, %v1379
      %v1381 = vrot.slane %v1372, %v1380
      %v1382 = vlaneseq
      %v1383 = vshrl.u32 %v1382, 7
      %v1384 = vsub.s32 2, %v1383
      %v1385 = vrot.slane %v1372, %v1384
      %v1389 = vmul.f32 %v1180, %v1377
      %v1390 = vmul.f32 %v1182, %v1381
      %v1391 = vmul.f32 %v1354, %v1385
      %v1392 = vmul.f32 %v1186, %v1377
      %v1393 = vmul.f32 %v1188, %v1381
      %v1394 = vmul.f32 %v1359, %v1385
      %v1395 = vmul.f32 %v1192, %v1377
      %v1396 = vmul.f32 %v1194, %v1381
      %v1397 = vmul.f32 %v1364, %v1385
      %v1398 = vmul.f32 %v1198, %v1377
      %v1399 = vmul.f32 %v1200, %v1381
      %v1400 = vmul.f32 %v1369, %v1385
      %v1401 = vadd.f32 %v1389, %v1390
      %vm1402 = vcmask 785408
      %v1403 = vsel %vm1402, %v1391, 0.0
      %v1404 = vadd.f32 %v1401, %v1403
      %1405 = vadd.xlane.f32.xlu0 %v1404
      %v1406 = vpop.xlane.xlu0 %1405
      %v1407 = vadd.f32 %v1392, %v1393
      %v1408 = vsel %vm1402, %v1394, 0.0
      %v1409 = vadd.f32 %v1407, %v1408
      %1410 = vadd.xlane.f32.xlu0 %v1409
      %v1411 = vpop.xlane.xlu0 %1410
      %v1412 = vadd.f32 %v1395, %v1396
      %v1413 = vsel %vm1402, %v1397, 0.0
      %v1414 = vadd.f32 %v1412, %v1413
      %1415 = vadd.xlane.f32.xlu0 %v1414
      %v1416 = vpop.xlane.xlu0 %1415
      %v1417 = vadd.f32 %v1398, %v1399
      %v1418 = vsel %vm1402, %v1400, 0.0
      %v1419 = vadd.f32 %v1417, %v1418
      %1420 = vadd.xlane.f32.xlu0 %v1419
      %v1421 = vpop.xlane.xlu0 %1420
      %v1422 = vmul.f32 %v1406, 0.00390625
      %v1423 = vmul.f32 %v1411, 0.00390625
      %v1424 = vmul.f32 %v1416, 0.00390625
      %v1425 = vmul.f32 %v1421, 0.00390625
      %v1426 = vsub.f32 %v1180, %v1422
      %v1427 = vsub.f32 %v1182, %v1422
      %v1428 = vsub.f32 %v1354, %v1422
      %v1429 = vsub.f32 %v1186, %v1423
      %v1430 = vsub.f32 %v1188, %v1423
      %v1431 = vsub.f32 %v1359, %v1423
      %v1432 = vsub.f32 %v1192, %v1424
      %v1433 = vsub.f32 %v1194, %v1424
      %v1434 = vsub.f32 %v1364, %v1424
      %v1435 = vsub.f32 %v1198, %v1425
      %v1436 = vsub.f32 %v1200, %v1425
      %v1437 = vsub.f32 %v1369, %v1425
      %v1438 = vmul.f32 %v1426, %v1426
      %v1439 = vmul.f32 %v1427, %v1427
      %v1440 = vmul.f32 %v1428, %v1428
      %v1441 = vmul.f32 %v1429, %v1429
      %v1442 = vmul.f32 %v1430, %v1430
      %v1443 = vmul.f32 %v1431, %v1431
      %v1444 = vmul.f32 %v1432, %v1432
      %v1445 = vmul.f32 %v1433, %v1433
      %v1446 = vmul.f32 %v1434, %v1434
      %v1447 = vmul.f32 %v1435, %v1435
      %v1448 = vmul.f32 %v1436, %v1436
      %v1449 = vmul.f32 %v1437, %v1437
      %v1450 = vmul.f32 %v1438, %v1377
      %v1451 = vmul.f32 %v1439, %v1381
      %v1452 = vmul.f32 %v1440, %v1385
      %v1453 = vmul.f32 %v1441, %v1377
      %v1454 = vmul.f32 %v1442, %v1381
      %v1455 = vmul.f32 %v1443, %v1385
      %v1456 = vmul.f32 %v1444, %v1377
      %v1457 = vmul.f32 %v1445, %v1381
      %v1458 = vmul.f32 %v1446, %v1385
      %v1459 = vmul.f32 %v1447, %v1377
      %v1460 = vmul.f32 %v1448, %v1381
      %v1461 = vmul.f32 %v1449, %v1385
      %v1462 = vadd.f32 %v1450, %v1451
      %v1463 = vsel %vm1402, %v1452, 0.0
      %v1464 = vadd.f32 %v1462, %v1463
      %1465 = vadd.xlane.f32.xlu0 %v1464
      %v1466 = vpop.xlane.xlu0 %1465
      %v1467 = vadd.f32 %v1453, %v1454
      %v1468 = vsel %vm1402, %v1455, 0.0
      %v1469 = vadd.f32 %v1467, %v1468
      %1470 = vadd.xlane.f32.xlu0 %v1469
      %v1471 = vpop.xlane.xlu0 %1470
      %v1472 = vadd.f32 %v1456, %v1457
      %v1473 = vsel %vm1402, %v1458, 0.0
      %v1474 = vadd.f32 %v1472, %v1473
      %1475 = vadd.xlane.f32.xlu0 %v1474
      %v1476 = vpop.xlane.xlu0 %1475
      %v1477 = vadd.f32 %v1459, %v1460
      %v1478 = vsel %vm1402, %v1461, 0.0
      %v1479 = vadd.f32 %v1477, %v1478
      %1480 = vadd.xlane.f32.xlu0 %v1479
      %v1481 = vpop.xlane.xlu0 %1480
      %v1482 = vmul.f32 %v1466, 0.00390625
      %v1483 = vmul.f32 %v1471, 0.00390625
      %v1484 = vmul.f32 %v1476, 0.00390625
      %v1485 = vmul.f32 %v1481, 0.00390625
      %v1486 = vadd.f32 %v1482, 1e-05
      %v1487 = vadd.f32 %v1483, 1e-05
      %v1488 = vadd.f32 %v1484, 1e-05
      %v1489 = vadd.f32 %v1485, 1e-05
      %v1490 = vrsqrt.pop %v1486
      %v1491 = vrsqrt.pop %v1487
      %v1492 = vrsqrt.pop %v1488
      %v1493 = vrsqrt.pop %v1489
      %v1494 = vmul.f32 %v1426, %v1490
      %v1495 = vmul.f32 %v1427, %v1490
      %v1496 = vmul.f32 %v1428, %v1490
      %v1497 = vmul.f32 %v1429, %v1491
      %v1498 = vmul.f32 %v1430, %v1491
      %v1499 = vmul.f32 %v1431, %v1491
      %v1500 = vmul.f32 %v1432, %v1492
      %v1501 = vmul.f32 %v1433, %v1492
      %v1502 = vmul.f32 %v1434, %v1492
      %v1503 = vmul.f32 %v1435, %v1493
      %v1504 = vmul.f32 %v1436, %v1493
      %v1505 = vmul.f32 %v1437, %v1493
      %v1506 = vmax.f32 %v1494, 0.0
      %v1507 = vmax.f32 %v1495, 0.0
      %v1508 = vmax.f32 %v1496, 0.0
      %v1509 = vmax.f32 %v1497, 0.0
      %v1510 = vmax.f32 %v1498, 0.0
      %v1511 = vmax.f32 %v1499, 0.0
      %v1512 = vmax.f32 %v1500, 0.0
      %v1513 = vmax.f32 %v1501, 0.0
      %v1514 = vmax.f32 %v1502, 0.0
      %v1515 = vmax.f32 %v1503, 0.0
      %v1516 = vmax.f32 %v1504, 0.0
      %v1517 = vmax.f32 %v1505, 0.0
      %v1518 = vpack.c.bf16 %v1509, %v1506
      %v1519 = vpack.c.bf16 %v1510, %v1507
      %v1520 = vpack.c.bf16 %v1511, %v1508
      %v1521 = vpack.c.bf16 %v1515, %v1512
      %v1522 = vpack.c.bf16 %v1516, %v1513
      %v1523 = vpack.c.bf16 %v1517, %v1514
      %v1530 = vunpack.c.l.b16 %v1518
      %v1531 = vunpack.c.l.b16 %v1519
      %v1532 = vunpack.c.l.b16 %v1520
      %v1533 = vunpack.c.h.b16 %v1518
      %v1534 = vunpack.c.h.b16 %v1519
      %v1535 = vunpack.c.h.b16 %v1520
      %v1536 = vunpack.c.l.b16 %v1521
      %v1537 = vunpack.c.l.b16 %v1522
      %v1538 = vunpack.c.l.b16 %v1523
      %v1539 = vunpack.c.h.b16 %v1521
      %v1540 = vunpack.c.h.b16 %v1522
      %v1541 = vunpack.c.h.b16 %v1523
      %v1542 = vpack.c.b16 %v1531, %v1530
      %v1543 = vpack.c.b16 %v1532, %v1532
      %v1544 = vpack.c.b16 %v1534, %v1533
      %v1545 = vpack.c.b16 %v1535, %v1535
      %v1546 = vpack.c.b16 %v1537, %v1536
      %v1547 = vpack.c.b16 %v1538, %v1538
      %v1548 = vpack.c.b16 %v1540, %v1539
      %v1549 = vpack.c.b16 %v1541, %v1541
      %1558 = vst [vmem:[%s197] sm:$0xff] %v1542
      %vm1559 = vcmask 781312
      %1560 = vst.msk [vmem:[%s197 + $0x8] sm:$0xf] %vm1559, %v1543
      %1561 = vst [vmem:[%s197 + $0xc] sm:$0xff] %v1544
      %1562 = vst.msk [vmem:[%s197 + $0x14] sm:$0xf] %vm1559, %v1545
      %1563 = vst [vmem:[%s197 + $0x18] sm:$0xff] %v1546
      %1564 = vst.msk [vmem:[%s197 + $0x20] sm:$0xf] %vm1559, %v1547
      %1565 = vst [vmem:[%s197 + $0x24] sm:$0xff] %v1548
      %1566 = vst.msk [vmem:[%s197 + $0x2c] sm:$0xf] %vm1559, %v1549
      %p1567 = scmp.lt.s32.totalorder %s15, 1
      %s1568 = scalar_select %p1567, %s15, 1
      %s1569 = smul.addr %s1568, 12
      %s1570 = smul.addr %s1569, 4
      %s1571 = scalar_lea.vmem %s4, %s1570
      // Predicated region
      $region37: #{decoder2d_forward.7} parent=35 // pred_check
        %p1572 = pneg %p122
      $region38: #{decoder2d_forward.7} parent=35 // pred_check_branch
        %1574 = sbr.rel (%p1572) target = $region40
      $region39: #{decoder2d_forward.7} parent=35 // pred_region
        _
      $region40: #{decoder2d_forward.7} parent=35 // pred_fallthru
        _
    $region36: #{decoder2d_forward.7} parent=5 // pred_fallthru
      _
    %p1575 = scmp.le.s32.totalorder 2, %s10
    // Predicated region
    $region41: #{decoder2d_forward.7} parent=5 // pred_check
      %p1576 = pneg %p1575
    $region42: #{decoder2d_forward.7} parent=5 // pred_check_branch
      %1578 = sbr.rel (%p1576) target = $region44
    $region43: #{decoder2d_forward.7} parent=5 // pred_region
      %s1579 = ssub.s32 %s10, 2
      // Predicated region
      $region45: #{decoder2d_forward.7} parent=43 // pred_check
        %p1580 = pneg %p128
      $region46: #{decoder2d_forward.7} parent=43 // pred_check_branch
        %1582 = sbr.rel (%p1580) target = $region48
      $region47: #{decoder2d_forward.7} parent=43 // pred_region
        %p1583 = scmp.lt.s32.totalorder %s16, 1
        %s1584 = scalar_select %p1583, %s16, 1
        %s1585 = smul.addr %s1584, 12
        %s1586 = smul.addr %s1585, 4
        %s1587 = scalar_lea.vmem %s4, %s1586
      $region48: #{decoder2d_forward.7} parent=43 // pred_fallthru
        _
    $region44: #{decoder2d_forward.7} parent=5 // pred_fallthru
      _
  $region6: #{decoder2d_forward.7} parent=0 // loop_footer
    %s14 = sadd.s32 1, %s10
  $region7: #{decoder2d_forward.7} parent=0 // loop_footer_branch
    %9 = sbr.rel target = $region3
  $region8: #{decoder2d_forward.7} parent=0 // loop_exit
    _

// kernel: decoder2d_forward.8
$region0: #{decoder2d_forward.8}
  #allocation0 [shape = 'u32[]', space=smem, size = 0x4, offset = 0x4, fixed_abs, tag = 'smem constant byte address 0x4 - core index']
  #allocation1 [shape = 'u32[144,128]{1,0:T(1,128)}', space=vmem, size = 0x12000, scoped, tag = 'internal scratch']
  %s0 = inlined_call_operand.vmem [shape: bf16[2,32,288], index: 0, kind: input, shape index: {}]
  %s1 = inlined_call_operand.vmem [shape: bf16[32,288], index: 1, kind: input, shape index: {}]
  %s2 = inlined_call_operand.vmem [shape: f32[32,1], index: 2, kind: input, shape index: {}]
  %s3 = inlined_call_operand.vmem [shape: bf16[32,288], index: 3, kind: input, shape index: {}]
  %s4 = inlined_call_operand.vmem [shape: f32[32,1], index: 4, kind: input, shape index: {}]
  %s5 = inlined_call_operand.vmem [shape: f32[2,32], index: 5, kind: input, shape index: {}]
  %s6 = inlined_call_operand.vmem [shape: f32[32,2], index: 6, kind: input, shape index: {}]
  %s7 = inlined_call_operand.vmem [shape: f32[1,288], index: 7, kind: input, shape index: {}]
  %s8 = inlined_call_operand.vmem [shape: bf16[2,32,288], index: 8, kind: output, shape index: {}]
  %s9 = sld [smem:[#allocation0]]
  $region65: #{decoder2d_forward.8} parent=0
    _
  %s11 = ssub.s32 1, %s9
  %s12 = scalar_select 0, %s11, %s9
  loop: start=0, step=1, limit=4
  $region2: #{decoder2d_forward.8} parent=0 // loop_pre_header
    _
  $region3: #{decoder2d_forward.8} parent=0 // loop_header
    %s14 = sphi 0, %s18
    %p15 = scmp.ge.s32.totalorder %s14, 4
    %s24 = sphi 0, %s26
    %s27 = sphi 0, %s24
    %s28 = sphi 0, %s27
    %s44 = sphi 0, %s28
    %s48 = sphi 0, %s48
    %s50 = sphi 0, %s48
    %s51 = sphi 0, %s50
    %s65 = sphi 0, %s51
    %s69 = sphi 0, %s69
    %s71 = sphi 0, %s69
    %s72 = sphi 0, %s71
    %s86 = sphi 0, %s72
    %s90 = sphi 0, %s90
    %s92 = sphi 0, %s90
    %s93 = sphi 0, %s92
    %s107 = sphi 0, %s93
    %s111 = sphi 0, %s111
    %s113 = sphi 0, %s111
    %s114 = sphi 0, %s113
    %s128 = sphi 0, %s114
    %s132 = sphi 0, %s132
    %s134 = sphi 0, %s132
    %s135 = sphi 0, %s134
    %s149 = sphi 0, %s135
    %s153 = sphi 0, %s153
    %s155 = sphi 0, %s153
    %s156 = sphi 0, %s155
    %s170 = sphi 0, %s156
    %s174 = sphi 0, %s174
    %s176 = sphi 0, %s174
    %s177 = sphi 0, %s176
    %s191 = sphi 0, %s177
    %s197 = sphi 0, %s199
    %s200 = sphi 0, %s197
    %s201 = sphi 0, %s200
    %s217 = sphi 0, %s201
  $region4: #{decoder2d_forward.8} parent=0 // loop_header_branch
    %17 = sbr.rel (%p15) target = $region8
  $region5: #{decoder2d_forward.8} parent=0 // loop_body
    %s19 = ssub.s32 %s14, 1
    %s20 = ssub.s32 %s14, 2
    %s21 = sadd.s32 %s14, 1
    %s22 = ssub.s32 %s14, %s21
    %p23 = scmp.eq.s32.totalorder %s22, 0
    %s25 = sadd.s32 %s24, 1
    %s26 = scalar_select %p23, %s24, %s25
    %p29 = pneg %p23
    %p30 = scmp.eq.s32.totalorder %s14, 1
    %p31 = por %p29, %p30
    %p32 = scmp.ne.s32.totalorder %s24, %s27
    %p33 = scmp.eq.s32.totalorder %s14, 0
    %p34 = por %p32, %p33
    %p35 = scmp.ne.s32.totalorder %s24, %s27
    %p36 = scmp.eq.s32.totalorder %s19, 1
    %p37 = por %p35, %p36
    %p38 = scmp.ne.s32.totalorder %s27, %s28
    %p39 = scmp.eq.s32.totalorder %s19, 0
    %p40 = por %p38, %p39
    %p41 = scmp.ne.s32.totalorder %s27, %s28
    %p42 = scmp.eq.s32.totalorder %s20, 1
    %p43 = por %p41, %p42
    %p45 = scmp.ne.s32.totalorder %s28, %s44
    %p46 = scmp.eq.s32.totalorder %s20, 0
    %p47 = por %p45, %p46
    %s49 = sadd.s32 %s48, 1
    %p52 = scmp.eq.s32.totalorder %s14, 1
    %p53 = scmp.ne.s32.totalorder %s48, %s50
    %p54 = scmp.eq.s32.totalorder %s14, 0
    %p55 = por %p53, %p54
    %p56 = scmp.ne.s32.totalorder %s48, %s50
    %p57 = scmp.eq.s32.totalorder %s19, 1
    %p58 = por %p56, %p57
    %p59 = scmp.ne.s32.totalorder %s50, %s51
    %p60 = scmp.eq.s32.totalorder %s19, 0
    %p61 = por %p59, %p60
    %p62 = scmp.ne.s32.totalorder %s50, %s51
    %p63 = scmp.eq.s32.totalorder %s20, 1
    %p64 = por %p62, %p63
    %p66 = scmp.ne.s32.totalorder %s51, %s65
    %p67 = scmp.eq.s32.totalorder %s20, 0
    %p68 = por %p66, %p67
    %s70 = sadd.s32 %s69, 1
    %p73 = scmp.eq.s32.totalorder %s14, 1
    %p74 = scmp.ne.s32.totalorder %s69, %s71
    %p75 = scmp.eq.s32.totalorder %s14, 0
    %p76 = por %p74, %p75
    %p77 = scmp.ne.s32.totalorder %s69, %s71
    %p78 = scmp.eq.s32.totalorder %s19, 1
    %p79 = por %p77, %p78
    %p80 = scmp.ne.s32.totalorder %s71, %s72
    %p81 = scmp.eq.s32.totalorder %s19, 0
    %p82 = por %p80, %p81
    %p83 = scmp.ne.s32.totalorder %s71, %s72
    %p84 = scmp.eq.s32.totalorder %s20, 1
    %p85 = por %p83, %p84
    %p87 = scmp.ne.s32.totalorder %s72, %s86
    %p88 = scmp.eq.s32.totalorder %s20, 0
    %p89 = por %p87, %p88
    %s91 = sadd.s32 %s90, 1
    %p94 = scmp.eq.s32.totalorder %s14, 1
    %p95 = scmp.ne.s32.totalorder %s90, %s92
    %p96 = scmp.eq.s32.totalorder %s14, 0
    %p97 = por %p95, %p96
    %p98 = scmp.ne.s32.totalorder %s90, %s92
    %p99 = scmp.eq.s32.totalorder %s19, 1
    %p100 = por %p98, %p99
    %p101 = scmp.ne.s32.totalorder %s92, %s93
    %p102 = scmp.eq.s32.totalorder %s19, 0
    %p103 = por %p101, %p102
    %p104 = scmp.ne.s32.totalorder %s92, %s93
    %p105 = scmp.eq.s32.totalorder %s20, 1
    %p106 = por %p104, %p105
    %p108 = scmp.ne.s32.totalorder %s93, %s107
    %p109 = scmp.eq.s32.totalorder %s20, 0
    %p110 = por %p108, %p109
    %s112 = sadd.s32 %s111, 1
    %p115 = scmp.eq.s32.totalorder %s14, 1
    %p116 = scmp.ne.s32.totalorder %s111, %s113
    %p117 = scmp.eq.s32.totalorder %s14, 0
    %p118 = por %p116, %p117
    %p119 = scmp.ne.s32.totalorder %s111, %s113
    %p120 = scmp.eq.s32.totalorder %s19, 1
    %p121 = por %p119, %p120
    %p122 = scmp.ne.s32.totalorder %s113, %s114
    %p123 = scmp.eq.s32.totalorder %s19, 0
    %p124 = por %p122, %p123
    %p125 = scmp.ne.s32.totalorder %s113, %s114
    %p126 = scmp.eq.s32.totalorder %s20, 1
    %p127 = por %p125, %p126
    %p129 = scmp.ne.s32.totalorder %s114, %s128
    %p130 = scmp.eq.s32.totalorder %s20, 0
    %p131 = por %p129, %p130
    %s133 = sadd.s32 %s132, 1
    %p136 = scmp.eq.s32.totalorder %s14, 1
    %p137 = scmp.ne.s32.totalorder %s132, %s134
    %p138 = scmp.eq.s32.totalorder %s14, 0
    %p139 = por %p137, %p138
    %p140 = scmp.ne.s32.totalorder %s132, %s134
    %p141 = scmp.eq.s32.totalorder %s19, 1
    %p142 = por %p140, %p141
    %p143 = scmp.ne.s32.totalorder %s134, %s135
    %p144 = scmp.eq.s32.totalorder %s19, 0
    %p145 = por %p143, %p144
    %p146 = scmp.ne.s32.totalorder %s134, %s135
    %p147 = scmp.eq.s32.totalorder %s20, 1
    %p148 = por %p146, %p147
    %p150 = scmp.ne.s32.totalorder %s135, %s149
    %p151 = scmp.eq.s32.totalorder %s20, 0
    %p152 = por %p150, %p151
    %s154 = sadd.s32 %s153, 1
    %p157 = scmp.eq.s32.totalorder %s14, 1
    %p158 = scmp.ne.s32.totalorder %s153, %s155
    %p159 = scmp.eq.s32.totalorder %s14, 0
    %p160 = por %p158, %p159
    %p161 = scmp.ne.s32.totalorder %s153, %s155
    %p162 = scmp.eq.s32.totalorder %s19, 1
    %p163 = por %p161, %p162
    %p164 = scmp.ne.s32.totalorder %s155, %s156
    %p165 = scmp.eq.s32.totalorder %s19, 0
    %p166 = por %p164, %p165
    %p167 = scmp.ne.s32.totalorder %s155, %s156
    %p168 = scmp.eq.s32.totalorder %s20, 1
    %p169 = por %p167, %p168
    %p171 = scmp.ne.s32.totalorder %s156, %s170
    %p172 = scmp.eq.s32.totalorder %s20, 0
    %p173 = por %p171, %p172
    %s175 = sadd.s32 %s174, 1
    %p178 = scmp.eq.s32.totalorder %s14, 1
    %p179 = scmp.ne.s32.totalorder %s174, %s176
    %p180 = scmp.eq.s32.totalorder %s14, 0
    %p181 = por %p179, %p180
    %p182 = scmp.ne.s32.totalorder %s174, %s176
    %p183 = scmp.eq.s32.totalorder %s19, 1
    %p184 = por %p182, %p183
    %p185 = scmp.ne.s32.totalorder %s176, %s177
    %p186 = scmp.eq.s32.totalorder %s19, 0
    %p187 = por %p185, %p186
    %p188 = scmp.ne.s32.totalorder %s176, %s177
    %p189 = scmp.eq.s32.totalorder %s20, 1
    %p190 = por %p188, %p189
    %p192 = scmp.ne.s32.totalorder %s177, %s191
    %p193 = scmp.eq.s32.totalorder %s20, 0
    %p194 = por %p192, %p193
    %s195 = ssub.s32 %s14, %s21
    %p196 = scmp.eq.s32.totalorder %s195, 0
    %s198 = sadd.s32 %s197, 1
    %s199 = scalar_select %p196, %s197, %s198
    %p202 = pneg %p196
    %p203 = scmp.eq.s32.totalorder %s14, 1
    %p204 = por %p202, %p203
    %p205 = scmp.ne.s32.totalorder %s197, %s200
    %p206 = scmp.eq.s32.totalorder %s14, 0
    %p207 = por %p205, %p206
    %p208 = scmp.ne.s32.totalorder %s197, %s200
    %p209 = scmp.eq.s32.totalorder %s19, 1
    %p210 = por %p208, %p209
    %p211 = scmp.ne.s32.totalorder %s200, %s201
    %p212 = scmp.eq.s32.totalorder %s19, 0
    %p213 = por %p211, %p212
    %p214 = scmp.ne.s32.totalorder %s200, %s201
    %p215 = scmp.eq.s32.totalorder %s20, 1
    %p216 = por %p214, %p215
    %p218 = scmp.ne.s32.totalorder %s201, %s217
    %p219 = scmp.eq.s32.totalorder %s20, 0
    %p220 = por %p218, %p219
    %p221 = scmp.le.s32.totalorder 1, %s14
    %p222 = scmp.lt.s32.totalorder %s14, 3
    %p223 = pnand %p221, %p222
    %p224 = pneg %p223
    // Predicated region
    $region9: #{decoder2d_forward.8} parent=5 // pred_check
      _
    $region10: #{decoder2d_forward.8} parent=5 // pred_check_branch
      %226 = sbr.rel (%p223) target = $region12
    $region11: #{decoder2d_forward.8} parent=5 // pred_region
      %s227 = ssub.s32 %s14, 1
      // Predicated region
      $region13: #{decoder2d_forward.8} parent=11 // pred_check
        %p228 = pneg %p61
      $region14: #{decoder2d_forward.8} parent=11 // pred_check_branch
        %230 = sbr.rel (%p228) target = $region16
      $region15: #{decoder2d_forward.8} parent=11 // pred_region
        _
      $region16: #{decoder2d_forward.8} parent=11 // pred_fallthru
        _
      // Predicated region
      $region17: #{decoder2d_forward.8} parent=11 // pred_check
        %p231 = pneg %p82
      $region18: #{decoder2d_forward.8} parent=11 // pred_check_branch
        %233 = sbr.rel (%p231) target = $region20
      $region19: #{decoder2d_forward.8} parent=11 // pred_region
        _
      $region20: #{decoder2d_forward.8} parent=11 // pred_fallthru
        _
      // Predicated region
      $region21: #{decoder2d_forward.8} parent=11 // pred_check
        %p234 = pneg %p103
      $region22: #{decoder2d_forward.8} parent=11 // pred_check_branch
        %236 = sbr.rel (%p234) target = $region24
      $region23: #{decoder2d_forward.8} parent=11 // pred_region
        _
      $region24: #{decoder2d_forward.8} parent=11 // pred_fallthru
        _
      // Predicated region
      $region25: #{decoder2d_forward.8} parent=11 // pred_check
        %p237 = pneg %p124
      $region26: #{decoder2d_forward.8} parent=11 // pred_check_branch
        %239 = sbr.rel (%p237) target = $region28
      $region27: #{decoder2d_forward.8} parent=11 // pred_region
        _
      $region28: #{decoder2d_forward.8} parent=11 // pred_fallthru
        _
      // Predicated region
      $region29: #{decoder2d_forward.8} parent=11 // pred_check
        %p240 = pneg %p145
      $region30: #{decoder2d_forward.8} parent=11 // pred_check_branch
        %242 = sbr.rel (%p240) target = $region32
      $region31: #{decoder2d_forward.8} parent=11 // pred_region
        _
      $region32: #{decoder2d_forward.8} parent=11 // pred_fallthru
        _
      // Predicated region
      $region33: #{decoder2d_forward.8} parent=11 // pred_check
        %p243 = pneg %p166
      $region34: #{decoder2d_forward.8} parent=11 // pred_check_branch
        %245 = sbr.rel (%p243) target = $region36
      $region35: #{decoder2d_forward.8} parent=11 // pred_region
        _
      $region36: #{decoder2d_forward.8} parent=11 // pred_fallthru
        _
      // Predicated region
      $region37: #{decoder2d_forward.8} parent=11 // pred_check
        %p246 = pneg %p187
      $region38: #{decoder2d_forward.8} parent=11 // pred_check_branch
        %248 = sbr.rel (%p246) target = $region40
      $region39: #{decoder2d_forward.8} parent=11 // pred_region
        _
      $region40: #{decoder2d_forward.8} parent=11 // pred_fallthru
        _
    $region12: #{decoder2d_forward.8} parent=5 // pred_fallthru
      _
    %p249 = scmp.lt.s32.totalorder %s14, 2
    // Predicated region
    $region41: #{decoder2d_forward.8} parent=5 // pred_check
      %p250 = pneg %p249
    $region42: #{decoder2d_forward.8} parent=5 // pred_check_branch
      %252 = sbr.rel (%p250) target = $region44
    $region43: #{decoder2d_forward.8} parent=5 // pred_region
      // Predicated region
      $region45: #{decoder2d_forward.8} parent=43 // pred_check
        %p253 = pneg %p34
      $region46: #{decoder2d_forward.8} parent=43 // pred_check_branch
        %255 = sbr.rel (%p253) target = $region48
      $region47: #{decoder2d_forward.8} parent=43 // pred_region
        %p256 = scmp.lt.s32.totalorder %s14, 1
        %s257 = scalar_select %p256, %s14, 1
        %s258 = smul.addr %s257, 12
        %s259 = smul.addr %s258, 4
        %s260 = scalar_lea.vmem %s0, %s259
      $region48: #{decoder2d_forward.8} parent=43 // pred_fallthru
        _
    $region44: #{decoder2d_forward.8} parent=5 // pred_fallthru
      _
    %p261 = scmp.le.s32.totalorder 1, %s14
    %p262 = scmp.lt.s32.totalorder %s14, 3
    %p263 = pnand %p261, %p262
    %p264 = pneg %p263
    // Predicated region
    $region49: #{decoder2d_forward.8} parent=5 // pred_check
      _
    $region50: #{decoder2d_forward.8} parent=5 // pred_check_branch
      %266 = sbr.rel (%p263) target = $region52
    $region51: #{decoder2d_forward.8} parent=5 // pred_region
      %s267 = ssub.s32 %s14, 1
      %p268 = scmp.lt.s32.totalorder %s19, 1
      %s269 = scalar_select %p268, %s19, 1
      %s270 = smul.addr %s269, 12
      %s271 = smul.addr %s270, 4
      %s272 = scalar_lea.vmem %s0, %s271
      %p273 = pneg %p40
      %p274 = pneg %p37
      %p275 = pneg %p61
      %p276 = pneg %p58
      %p277 = pneg %p82
      %p278 = pneg %p79
      %p279 = pneg %p103
      %p280 = pneg %p100
      %p281 = pneg %p124
      %p282 = pneg %p121
      %p283 = pneg %p145
      %p284 = pneg %p142
      %p285 = pneg %p166
      %p286 = pneg %p163
      %p287 = pneg %p187
      %p288 = pneg %p184
      %p289 = pneg %p213
      %p290 = pneg %p210
      %p291 = scmp.lt.s32.totalorder %s19, 1
      %s292 = scalar_select %p291, %s19, 1
      %s293 = smul.addr %s292, 12
      %s294 = smul.addr %s293, 4
      %s295 = scalar_lea.vmem %s8, %s294
      %p296 = scmp.lt.s32.totalorder %s19, 1
      %s297 = scalar_select %p296, %s19, 1
      %s298 = smul.addr %s297, 12
      %s299 = smul.addr %s298, 4
      %s300 = scalar_lea.vmem %s0, %s299
      %p301 = scmp.lt.s32.totalorder %s19, 1
      %s302 = scalar_select %p301, %s19, 1
      %s303 = smul.addr %s302, 12
      %s304 = smul.addr %s303, 4
      %s305 = scalar_lea.vmem %s8, %s304
      %v307 = vld [vmem:[%s300] sm:$0xff]
      %v308 = vld [vmem:[%s300 + $0x8] sm:$0xf]
      %v309 = vld [vmem:[%s300 + $0xc] sm:$0xff]
      %v310 = vld [vmem:[%s300 + $0x14] sm:$0xf]
      %v311 = vld [vmem:[%s300 + $0x18] sm:$0xff]
      %v312 = vld [vmem:[%s300 + $0x20] sm:$0xf]
      %v313 = vld [vmem:[%s300 + $0x24] sm:$0xff]
      %v314 = vld [vmem:[%s300 + $0x2c] sm:$0xf]
      %v315 = vunpack.c.l.bf16 %v307
      %v316 = vunpack.c.h.bf16 %v307
      %v317 = vunpack.c.l.bf16 %v308
      %v318 = vunpack.c.l.bf16 %v309
      %v319 = vunpack.c.h.bf16 %v309
      %v320 = vunpack.c.l.bf16 %v310
      %v321 = vunpack.c.l.bf16 %v311
      %v322 = vunpack.c.h.bf16 %v311
      %v323 = vunpack.c.l.bf16 %v312
      %v324 = vunpack.c.l.bf16 %v313
      %v325 = vunpack.c.h.bf16 %v313
      %v326 = vunpack.c.l.bf16 %v314
      %v327 = vld [vmem:[%s7] sm:$0x7]
      %v329 = vlaneseq
      %v330 = vshrl.u32 %v329, 7
      %v331 = vsub.s32 0, %v330
      %v332 = vrot.slane %v327, %v331
      %v333 = vlaneseq
      %v334 = vshrl.u32 %v333, 7
      %v335 = vsub.s32 1, %v334
      %v336 = vrot.slane %v327, %v335
      %v337 = vlaneseq
      %v338 = vshrl.u32 %v337, 7
      %v339 = vsub.s32 2, %v338
      %v340 = vrot.slane %v327, %v339
      %v344 = vmul.f32 %v315, %v332
      %v345 = vmul.f32 %v316, %v336
      %v346 = vmul.f32 %v317, %v340
      %v347 = vmul.f32 %v318, %v332
      %v348 = vmul.f32 %v319, %v336
      %v349 = vmul.f32 %v320, %v340
      %v350 = vmul.f32 %v321, %v332
      %v351 = vmul.f32 %v322, %v336
      %v352 = vmul.f32 %v323, %v340
      %v353 = vmul.f32 %v324, %v332
      %v354 = vmul.f32 %v325, %v336
      %v355 = vmul.f32 %v326, %v340
      %v356 = vadd.f32 %v344, %v345
      %vm357 = vcmask 261120
      %v358 = vsel %vm357, %v346, 0.0
      %v359 = vadd.f32 %v356, %v358
      %360 = vadd.xlane.f32.xlu0 %v359
      %v361 = vpop.xlane.xlu0 %360
      %v362 = vadd.f32 %v347, %v348
      %v363 = vsel %vm357, %v349, 0.0
      %v364 = vadd.f32 %v362, %v363
      %365 = vadd.xlane.f32.xlu0 %v364
      %v366 = vpop.xlane.xlu0 %365
      %v367 = vadd.f32 %v350, %v351
      %v368 = vsel %vm357, %v352, 0.0
      %v369 = vadd.f32 %v367, %v368
      %370 = vadd.xlane.f32.xlu0 %v369
      %v371 = vpop.xlane.xlu0 %370
      %v372 = vadd.f32 %v353, %v354
      %v373 = vsel %vm357, %v355, 0.0
      %v374 = vadd.f32 %v372, %v373
      %375 = vadd.xlane.f32.xlu0 %v374
      %v376 = vpop.xlane.xlu0 %375
      %v377 = vmul.f32 %v361, 0.00390625
      %v378 = vmul.f32 %v366, 0.00390625
      %v379 = vmul.f32 %v371, 0.00390625
      %v380 = vmul.f32 %v376, 0.00390625
      %v381 = vld [vmem:[%s5] sm:$0x3]
      %v383 = vsel %vm357, %v381, 0
      %385 = vmatprep.subr.mxu0 0.0
      %386 = vmatpush1.msra.mxu0 0.0
      %387 = vmatprep.subr.mxu0 0.0
      %388 = vmatpush1.msra.mxu0 0.0
      %389 = vmatprep.subr.mxu0 0.0
      %390 = vmatpush1.msra.mxu0 0.0
      %391 = vmatprep.subr.mxu0 0.0
      %392 = vmatpush1.msra.mxu0 0.0
      %393 = vmatprep.subr.mxu0 0.0
      %394 = vmatpush1.msra.mxu0 0.0
      %395 = vmatprep.subr.mxu0 0.0
      %396 = vmatpush1.msra.mxu0 0.0
      %397 = vmatprep.subr.mxu0 0.0
      %398 = vmatpush1.msra.mxu0 0.0
      %399 = vmatprep.subr.mxu0 0.0
      %400 = vmatpush1.msra.mxu0 0.0
      %401 = vmatprep.subr.mxu0 0.0
      %402 = vmatpush1.msra.mxu0 0.0
      %403 = vmatprep.subr.mxu0 0.0
      %404 = vmatpush1.msra.mxu0 0.0
      %405 = vmatprep.subr.mxu0 0.0
      %406 = vmatpush1.msra.mxu0 0.0
      %407 = vmatprep.subr.mxu0 0.0
      %408 = vmatpush1.msra.mxu0 0.0
      %409 = vmatprep.subr.mxu0 0.0
      %410 = vmatpush1.msra.mxu0 %v380
      %411 = vmatprep.subr.mxu0 0.0
      %412 = vmatpush1.msra.mxu0 %v379
      %413 = vmatprep.subr.mxu0 0.0
      %414 = vmatpush1.msra.mxu0 %v378
      %415 = vmatprep.subr.mxu0 0.0
      %416 = vmatpush1.msra.mxu0 %v377
      %417 = vmatprep.subr.mxu0 0.0
      %418 = vmatpush2.msra.mxu0 0.0
      %419 = vmatprep.subr.mxu0 0.0
      %420 = vmatpush2.msra.mxu0 0.0
      %421 = vmatprep.subr.mxu0 0.0
      %422 = vmatpush2.msra.mxu0 0.0
      %423 = vmatprep.subr.mxu0 0.0
      %424 = vmatpush2.msra.mxu0 0.0
      %425 = vmatprep.subr.mxu0 0.0
      %426 = vmatpush2.msra.mxu0 0.0
      %427 = vmatprep.subr.mxu0 0.0
      %428 = vmatpush2.msra.mxu0 0.0
      %429 = vmatprep.subr.mxu0 0.0
      %430 = vmatpush2.msra.mxu0 0.0
      %431 = vmatprep.subr.mxu0 0.0
      %432 = vmatpush2.msra.mxu0 0.0
      %433 = vmatprep.subr.mxu0 0.0
      %434 = vmatpush2.msra.mxu0 0.0
      %435 = vmatprep.subr.mxu0 0.0
      %436 = vmatpush2.msra.mxu0 0.0
      %437 = vmatprep.subr.mxu0 0.0
      %438 = vmatpush2.msra.mxu0 0.0
      %439 = vmatprep.subr.mxu0 0.0
      %440 = vmatpush2.msra.mxu0 0.0
      %441 = vmatprep.subr.mxu0 0.0
      %442 = vmatpush2.msra.mxu0 0.0
      %443 = vmatprep.subr.mxu0 0.0
      %444 = vmatpush2.msra.mxu0 0.0
      %445 = vmatprep.subr.mxu0 0.0
      %446 = vmatpush2.msra.mxu0 0.0
      %447 = vmatprep.subr.mxu0 0.0
      %448 = vmatpush2.msra.mxu0 0.0
      %449 = vmatprep.mubr.f32.mxu0 0.0
      %450 = vmatmul.mubr.f32.gmra.mxu0 %v383
      %v451 = vpop.f32.mrf.mxu0
      %v452 = vadd.f32 0.0, %v451
      %v453 = vpop.f32.mrf.mxu0
      %454 = vdwg.mxu0
      %v455 = vmax.f32 %v452, 0.0
      %v456 = vld [vmem:[%s6] sm:$0xff]
      %v457 = vld [vmem:[%s6 + $0x8] sm:$0xff]
      %v458 = vld [vmem:[%s6 + $0x10] sm:$0xff]
      %v459 = vld [vmem:[%s6 + $0x18] sm:$0xff]
      %vm460 = vcmask 15360
      %v462 = vsel %vm460, %v456, 0
      %v465 = vsel %vm460, %v457, 0
      %v468 = vsel %vm460, %v458, 0
      %v471 = vsel %vm460, %v459, 0
      %vm473 = vcmask 1041408
      %v475 = vsel %vm473, %v455, 0
      %477 = vmatprep.subr.mxu0 0.0
      %478 = vmatpush1.msra.mxu0 0.0
      %479 = vmatprep.subr.mxu0 0.0
      %480 = vmatpush1.msra.mxu0 0.0
      %481 = vmatprep.subr.mxu0 0.0
      %482 = vmatpush1.msra.mxu0 0.0
      %483 = vmatprep.subr.mxu0 0.0
      %484 = vmatpush1.msra.mxu0 0.0
      %485 = vmatprep.subr.mxu0 0.0
      %486 = vmatpush1.msra.mxu0 0.0
      %487 = vmatprep.subr.mxu0 0.0
      %488 = vmatpush1.msra.mxu0 0.0
      %489 = vmatprep.subr.mxu0 0.0
      %490 = vmatpush1.msra.mxu0 0.0
      %491 = vmatprep.subr.mxu0 0.0
      %492 = vmatpush1.msra.mxu0 0.0
      %493 = vmatprep.subr.mxu0 0.0
      %494 = vmatpush1.msra.mxu0 0.0
      %495 = vmatprep.subr.mxu0 0.0
      %496 = vmatpush1.msra.mxu0 0.0
      %497 = vmatprep.subr.mxu0 0.0
      %498 = vmatpush1.msra.mxu0 0.0
      %499 = vmatprep.subr.mxu0 0.0
      %500 = vmatpush1.msra.mxu0 0.0
      %501 = vmatprep.subr.mxu0 0.0
      %502 = vmatpush1.msra.mxu0 0.0
      %503 = vmatprep.subr.mxu0 0.0
      %504 = vmatpush1.msra.mxu0 0.0
      %505 = vmatprep.subr.mxu0 0.0
      %506 = vmatpush1.msra.mxu0 0.0
      %507 = vmatprep.subr.mxu0 0.0
      %508 = vmatpush1.msra.mxu0 %v475
      %509 = vmatprep.subr.mxu0 0.0
      %510 = vmatpush2.msra.mxu0 0.0
      %511 = vmatprep.subr.mxu0 0.0
      %512 = vmatpush2.msra.mxu0 0.0
      %513 = vmatprep.subr.mxu0 0.0
      %514 = vmatpush2.msra.mxu0 0.0
      %515 = vmatprep.subr.mxu0 0.0
      %516 = vmatpush2.msra.mxu0 0.0
      %517 = vmatprep.subr.mxu0 0.0
      %518 = vmatpush2.msra.mxu0 0.0
      %519 = vmatprep.subr.mxu0 0.0
      %520 = vmatpush2.msra.mxu0 0.0
      %521 = vmatprep.subr.mxu0 0.0
      %522 = vmatpush2.msra.mxu0 0.0
      %523 = vmatprep.subr.mxu0 0.0
      %524 = vmatpush2.msra.mxu0 0.0
      %525 = vmatprep.subr.mxu0 0.0
      %526 = vmatpush2.msra.mxu0 0.0
      %527 = vmatprep.subr.mxu0 0.0
      %528 = vmatpush2.msra.mxu0 0.0
      %529 = vmatprep.subr.mxu0 0.0
      %530 = vmatpush2.msra.mxu0 0.0
      %531 = vmatprep.subr.mxu0 0.0
      %532 = vmatpush2.msra.mxu0 0.0
      %533 = vmatprep.subr.mxu0 0.0
      %534 = vmatpush2.msra.mxu0 0.0
      %535 = vmatprep.subr.mxu0 0.0
      %536 = vmatpush2.msra.mxu0 0.0
      %537 = vmatprep.subr.mxu0 0.0
      %538 = vmatpush2.msra.mxu0 0.0
      %539 = vmatprep.subr.mxu0 0.0
      %540 = vmatpush2.msra.mxu0 0.0
      %541 = vmatprep.mubr.f32.mxu0 0.0
      %542 = vmatmul.mubr.f32.gmra.mxu0 %v462
      %v543 = vpop.f32.mrf.mxu0
      %v544 = vadd.f32 0.0, %v543
      %v545 = vpop.f32.mrf.mxu0
      %546 = vmatprep.mubr.f32.mxu0 0.0
      %547 = vmatmul.mubr.f32.gmra.mxu0 %v465
      %v548 = vpop.f32.mrf.mxu0
      %v549 = vadd.f32 0.0, %v548
      %v550 = vpop.f32.mrf.mxu0
      %551 = vmatprep.mubr.f32.mxu0 0.0
      %552 = vmatmul.mubr.f32.gmra.mxu0 %v468
      %v553 = vpop.f32.mrf.mxu0
      %v554 = vadd.f32 0.0, %v553
      %v555 = vpop.f32.mrf.mxu0
      %556 = vmatprep.mubr.f32.mxu0 0.0
      %557 = vmatmul.mubr.f32.gmra.mxu0 %v471
      %v558 = vpop.f32.mrf.mxu0
      %v559 = vadd.f32 0.0, %v558
      %v560 = vpop.f32.mrf.mxu0
      %561 = vdwg.mxu0
      %v562 = vxor.u32 %v544, 2147483648
      %v563 = vxor.u32 %v549, 2147483648
      %v564 = vxor.u32 %v554, 2147483648
      %v565 = vxor.u32 %v559, 2147483648
      %v566 = vmul.f32 %v562, 1.442695
      %v567 = vpow.pop %v566
      %v568 = vmul.f32 %v563, 1.442695
      %v569 = vpow.pop %v568
      %v570 = vmul.f32 %v564, 1.442695
      %v571 = vpow.pop %v570
      %v572 = vmul.f32 %v565, 1.442695
      %v573 = vpow.pop %v572
      %v574 = vadd.f32 %v567, 1.0
      %v575 = vadd.f32 %v569, 1.0
      %v576 = vadd.f32 %v571, 1.0
      %v577 = vadd.f32 %v573, 1.0
      %v578 = vrcp.pop %v574
      %v579 = vmul.f32 1.0, %v578
      %v580 = vrcp.pop %v575
      %v581 = vmul.f32 1.0, %v580
      %v582 = vrcp.pop %v576
      %v583 = vmul.f32 1.0, %v582
      %v584 = vrcp.pop %v577
      %v585 = vmul.f32 1.0, %v584
      %587 = vset.pattern.permute.xlu0 0
      %588 = vperm.xlu0 %587, %v579
      %v589 = vpop.permute.xlu0 %588
      %592 = vset.pattern.permute.xlu0 0
      %593 = vperm.xlu0 %592, %v581
      %v594 = vpop.permute.xlu0 %593
      %597 = vset.pattern.permute.xlu0 0
      %598 = vperm.xlu0 %597, %v583
      %v599 = vpop.permute.xlu0 %598
      %602 = vset.pattern.permute.xlu0 0
      %603 = vperm.xlu0 %602, %v585
      %v604 = vpop.permute.xlu0 %603
      %v606 = vmul.f32 %v315, %v589
      %v607 = vmul.f32 %v316, %v589
      %v608 = vmul.f32 %v317, %v589
      %v609 = vmul.f32 %v318, %v594
      %v610 = vmul.f32 %v319, %v594
      %v611 = vmul.f32 %v320, %v594
      %v612 = vmul.f32 %v321, %v599
      %v613 = vmul.f32 %v322, %v599
      %v614 = vmul.f32 %v323, %v599
      %v615 = vmul.f32 %v324, %v604
      %v616 = vmul.f32 %v325, %v604
      %v617 = vmul.f32 %v326, %v604
      %v618 = vlaneseq
      %v619 = vand.u32 %v618, 127
      %v620 = vadd.s32 %v619, 128
      %v621 = vadd.s32 %v619, 256
      %vm622 = vcmp.lt.s32.totalorder %v619, 0
      %v623 = vsub.s32 0, %v619
      %v624 = vsel %vm622, %v623, %v619
      %v625 = vmul.u32.u64.compose %v624, 3817748708
      %v626 = vextract.low.u32 %v625
      %v627 = vextract.high.u32 %v625
      %v628 = vshrl.u32 %v627, 4
      %v629 = vmul.u32 %v628, 18
      %v630 = vsub.s32 %v624, %v629
      %v631 = vsub.s32 0, %v630
      %v632 = vsel %vm622, %v631, %v630
      %vm633 = vcmp.lt.s32.totalorder %v620, 0
      %v634 = vsub.s32 0, %v620
      %v635 = vsel %vm633, %v634, %v620
      %v636 = vmul.u32.u64.compose %v635, 3817748708
      %v637 = vextract.low.u32 %v636
      %v638 = vextract.high.u32 %v636
      %v639 = vshrl.u32 %v638, 4
      %v640 = vmul.u32 %v639, 18
      %v641 = vsub.s32 %v635, %v640
      %v642 = vsub.s32 0, %v641
      %v643 = vsel %vm633, %v642, %v641
      %vm644 = vcmp.lt.s32.totalorder %v621, 0
      %v645 = vsub.s32 0, %v621
      %v646 = vsel %vm644, %v645, %v621
      %v647 = vmul.u32.u64.compose %v646, 3817748708
      %v648 = vextract.low.u32 %v647
      %v649 = vextract.high.u32 %v647
      %v650 = vshrl.u32 %v649, 4
      %v651 = vmul.u32 %v650, 18
      %v652 = vsub.s32 %v646, %v651
      %v653 = vsub.s32 0, %v652
      %v654 = vsel %vm644, %v653, %v652
      %vm655 = vcmp.ne.s32.totalorder %v632, 0
      %vm656 = vcmp.ne.s32.totalorder %v643, 0
      %vm657 = vcmp.ne.s32.totalorder %v654, 0
      %vm658 = vcmp.lt.s32.totalorder %v632, 0
      %vm659 = vcmp.lt.s32.totalorder %v643, 0
      %vm660 = vcmp.lt.s32.totalorder %v654, 0
      %vm661 = vmand %vm658, %vm655
      %vm662 = vmand %vm659, %vm656
      %vm663 = vmand %vm660, %vm657
      %v664 = vadd.s32 %v632, 18
      %v665 = vadd.s32 %v643, 18
      %v666 = vadd.s32 %v654, 18
      %v667 = vsel %vm661, %v664, %v632
      %v668 = vsel %vm662, %v665, %v643
      %v669 = vsel %vm663, %v666, %v654
      %682 = vrot.lane.b32.xlu0 %v606, 1
      %v683 = vpop.permute.xlu0 %682
      %684 = vrot.lane.b32.xlu0 %v607, 1
      %v685 = vpop.permute.xlu0 %684
      %686 = vrot.lane.b32.xlu0 %v608, 1
      %v687 = vpop.permute.xlu0 %686
      %688 = vrot.lane.b32.xlu0 %v609, 1
      %v689 = vpop.permute.xlu0 %688
      %690 = vrot.lane.b32.xlu0 %v610, 1
      %v691 = vpop.permute.xlu0 %690
      %692 = vrot.lane.b32.xlu0 %v611, 1
      %v693 = vpop.permute.xlu0 %692
      %694 = vrot.lane.b32.xlu0 %v612, 1
      %v695 = vpop.permute.xlu0 %694
      %696 = vrot.lane.b32.xlu0 %v613, 1
      %v697 = vpop.permute.xlu0 %696
      %698 = vrot.lane.b32.xlu0 %v614, 1
      %v699 = vpop.permute.xlu0 %698
      %700 = vrot.lane.b32.xlu0 %v615, 1
      %v701 = vpop.permute.xlu0 %700
      %702 = vrot.lane.b32.xlu0 %v616, 1
      %v703 = vpop.permute.xlu0 %702
      %704 = vrot.lane.b32.xlu0 %v617, 1
      %v705 = vpop.permute.xlu0 %704
      %vm706 = vcmask 7168
      %v707 = vsel %vm706, %v683, %v685
      %v708 = vsel %vm706, %v685, %v687
      %v709 = vsel %vm706, %v689, %v691
      %v710 = vsel %vm706, %v691, %v693
      %v711 = vsel %vm706, %v695, %v697
      %v712 = vsel %vm706, %v697, %v699
      %v713 = vsel %vm706, %v701, %v703
      %v714 = vsel %vm706, %v703, %v705
      %v727 = vsel %vm706, 0.0, %v683
      %v728 = vsel %vm706, 0.0, %v689
      %v729 = vsel %vm706, 0.0, %v695
      %v730 = vsel %vm706, 0.0, %v701
      %731 = vrot.lane.b32.xlu0 %v606, 127
      %v732 = vpop.permute.xlu0 %731
      %733 = vrot.lane.b32.xlu0 %v607, 127
      %v734 = vpop.permute.xlu0 %733
      %735 = vrot.lane.b32.xlu0 %v608, 127
      %v736 = vpop.permute.xlu0 %735
      %737 = vrot.lane.b32.xlu0 %v609, 127
      %v738 = vpop.permute.xlu0 %737
      %739 = vrot.lane.b32.xlu0 %v610, 127
      %v740 = vpop.permute.xlu0 %739
      %741 = vrot.lane.b32.xlu0 %v611, 127
      %v742 = vpop.permute.xlu0 %741
      %743 = vrot.lane.b32.xlu0 %v612, 127
      %v744 = vpop.permute.xlu0 %743
      %745 = vrot.lane.b32.xlu0 %v613, 127
      %v746 = vpop.permute.xlu0 %745
      %747 = vrot.lane.b32.xlu0 %v614, 127
      %v748 = vpop.permute.xlu0 %747
      %749 = vrot.lane.b32.xlu0 %v615, 127
      %v750 = vpop.permute.xlu0 %749
      %751 = vrot.lane.b32.xlu0 %v616, 127
      %v752 = vpop.permute.xlu0 %751
      %753 = vrot.lane.b32.xlu0 %v617, 127
      %v754 = vpop.permute.xlu0 %753
      %vm755 = vcmask 1039360
      %v756 = vsel %vm755, %v732, %v734
      %v757 = vsel %vm755, %v734, %v736
      %v758 = vsel %vm755, %v738, %v740
      %v759 = vsel %vm755, %v740, %v742
      %v760 = vsel %vm755, %v744, %v746
      %v761 = vsel %vm755, %v746, %v748
      %v762 = vsel %vm755, %v750, %v752
      %v763 = vsel %vm755, %v752, %v754
      %vm776 = vcmask 252928
      %v777 = vsel %vm776, %v736, 0.0
      %v778 = vsel %vm776, %v742, 0.0
      %v779 = vsel %vm776, %v748, 0.0
      %v780 = vsel %vm776, %v754, 0.0
      %781 = vrot.lane.b32.xlu0 %v606, 3
      %v782 = vpop.permute.xlu0 %781
      %783 = vrot.lane.b32.xlu0 %v607, 3
      %v784 = vpop.permute.xlu0 %783
      %785 = vrot.lane.b32.xlu0 %v608, 3
      %v786 = vpop.permute.xlu0 %785
      %787 = vrot.lane.b32.xlu0 %v609, 3
      %v788 = vpop.permute.xlu0 %787
      %789 = vrot.lane.b32.xlu0 %v610, 3
      %v790 = vpop.permute.xlu0 %789
      %791 = vrot.lane.b32.xlu0 %v611, 3
      %v792 = vpop.permute.xlu0 %791
      %793 = vrot.lane.b32.xlu0 %v612, 3
      %v794 = vpop.permute.xlu0 %793
      %795 = vrot.lane.b32.xlu0 %v613, 3
      %v796 = vpop.permute.xlu0 %795
      %797 = vrot.lane.b32.xlu0 %v614, 3
      %v798 = vpop.permute.xlu0 %797
      %799 = vrot.lane.b32.xlu0 %v615, 3
      %v800 = vpop.permute.xlu0 %799
      %801 = vrot.lane.b32.xlu0 %v616, 3
      %v802 = vpop.permute.xlu0 %801
      %803 = vrot.lane.b32.xlu0 %v617, 3
      %v804 = vpop.permute.xlu0 %803
      %vm805 = vcmask 23552
      %v806 = vsel %vm805, %v782, %v784
      %v807 = vsel %vm805, %v784, %v786
      %v808 = vsel %vm805, %v788, %v790
      %v809 = vsel %vm805, %v790, %v792
      %v810 = vsel %vm805, %v794, %v796
      %v811 = vsel %vm805, %v796, %v798
      %v812 = vsel %vm805, %v800, %v802
      %v813 = vsel %vm805, %v802, %v804
      %v826 = vsel %vm805, 0.0, %v782
      %v827 = vsel %vm805, 0.0, %v788
      %v828 = vsel %vm805, 0.0, %v794
      %v829 = vsel %vm805, 0.0, %v800
      %vm830 = vcmp.eq.s32.totalorder %v667, 0
      %vm831 = vcmp.eq.s32.totalorder %v668, 0
      %vm832 = vcmp.eq.s32.totalorder %v669, 0
      %vm833 = vcmp.eq.s32.totalorder %v667, 17
      %vm834 = vcmp.eq.s32.totalorder %v668, 17
      %vm835 = vcmp.eq.s32.totalorder %v669, 17
      %v836 = vsel %vm833, 1, 0
      %v837 = vsel %vm834, 1, 0
      %v838 = vsel %vm835, 1, 0
      %vm839 = vcmp.eq.s32.totalorder %v836, 1
      %vm840 = vcmp.eq.s32.totalorder %v837, 1
      %vm841 = vcmp.eq.s32.totalorder %v838, 1
      %v842 = vsel %vm839, %v826, %v727
      %v843 = vsel %vm840, %v806, %v707
      %v844 = vsel %vm841, %v807, %v708
      %v845 = vsel %vm839, %v827, %v728
      %v846 = vsel %vm840, %v808, %v709
      %v847 = vsel %vm841, %v809, %v710
      %v848 = vsel %vm839, %v828, %v729
      %v849 = vsel %vm840, %v810, %v711
      %v850 = vsel %vm841, %v811, %v712
      %v851 = vsel %vm839, %v829, %v730
      %v852 = vsel %vm840, %v812, %v713
      %v853 = vsel %vm841, %v813, %v714
      %v854 = vsel %vm830, 1, 0
      %v855 = vsel %vm831, 1, 0
      %v856 = vsel %vm832, 1, 0
      %vm857 = vcmp.eq.s32.totalorder %v854, 1
      %vm858 = vcmp.eq.s32.totalorder %v855, 1
      %vm859 = vcmp.eq.s32.totalorder %v856, 1
      %v860 = vsel %vm857, %v756, %v842
      %v861 = vsel %vm858, %v757, %v843
      %v862 = vsel %vm859, %v777, %v844
      %v863 = vsel %vm857, %v758, %v845
      %v864 = vsel %vm858, %v759, %v846
      %v865 = vsel %vm859, %v778, %v847
      %v866 = vsel %vm857, %v760, %v848
      %v867 = vsel %vm858, %v761, %v849
      %v868 = vsel %vm859, %v779, %v850
      %v869 = vsel %vm857, %v762, %v851
      %v870 = vsel %vm858, %v763, %v852
      %v871 = vsel %vm859, %v780, %v853
      %876 = vrot.lane.b32.xlu0 %v860, 110
      %v877 = vpop.permute.xlu0 %876
      %878 = vrot.lane.b32.xlu0 %v863, 110
      %v879 = vpop.permute.xlu0 %878
      %880 = vrot.lane.b32.xlu0 %v866, 110
      %v881 = vpop.permute.xlu0 %880
      %882 = vrot.lane.b32.xlu0 %v869, 110
      %v883 = vpop.permute.xlu0 %882
      %896 = vrot.lane.b32.xlu0 %v860, 18
      %v897 = vpop.permute.xlu0 %896
      %898 = vrot.lane.b32.xlu0 %v861, 18
      %v899 = vpop.permute.xlu0 %898
      %900 = vrot.lane.b32.xlu0 %v862, 18
      %v901 = vpop.permute.xlu0 %900
      %902 = vrot.lane.b32.xlu0 %v863, 18
      %v903 = vpop.permute.xlu0 %902
      %904 = vrot.lane.b32.xlu0 %v864, 18
      %v905 = vpop.permute.xlu0 %904
      %906 = vrot.lane.b32.xlu0 %v865, 18
      %v907 = vpop.permute.xlu0 %906
      %908 = vrot.lane.b32.xlu0 %v866, 18
      %v909 = vpop.permute.xlu0 %908
      %910 = vrot.lane.b32.xlu0 %v867, 18
      %v911 = vpop.permute.xlu0 %910
      %912 = vrot.lane.b32.xlu0 %v868, 18
      %v913 = vpop.permute.xlu0 %912
      %914 = vrot.lane.b32.xlu0 %v869, 18
      %v915 = vpop.permute.xlu0 %914
      %916 = vrot.lane.b32.xlu0 %v870, 18
      %v917 = vpop.permute.xlu0 %916
      %918 = vrot.lane.b32.xlu0 %v871, 18
      %v919 = vpop.permute.xlu0 %918
      %vm920 = vcmask 146432
      %v921 = vsel %vm920, %v897, %v899
      %v922 = vsel %vm920, %v899, %v901
      %v923 = vsel %vm920, %v903, %v905
      %v924 = vsel %vm920, %v905, %v907
      %v925 = vsel %vm920, %v909, %v911
      %v926 = vsel %vm920, %v911, %v913
      %v927 = vsel %vm920, %v915, %v917
      %v928 = vsel %vm920, %v917, %v919
      %941 = vrot.lane.b32.xlu0 %v861, 54
      %v942 = vpop.permute.xlu0 %941
      %943 = vrot.lane.b32.xlu0 %v862, 54
      %v944 = vpop.permute.xlu0 %943
      %945 = vrot.lane.b32.xlu0 %v864, 54
      %v946 = vpop.permute.xlu0 %945
      %947 = vrot.lane.b32.xlu0 %v865, 54
      %v948 = vpop.permute.xlu0 %947
      %949 = vrot.lane.b32.xlu0 %v867, 54
      %v950 = vpop.permute.xlu0 %949
      %951 = vrot.lane.b32.xlu0 %v868, 54
      %v952 = vpop.permute.xlu0 %951
      %953 = vrot.lane.b32.xlu0 %v870, 54
      %v954 = vpop.permute.xlu0 %953
      %955 = vrot.lane.b32.xlu0 %v871, 54
      %v956 = vpop.permute.xlu0 %955
      %vm957 = vcmask 441344
      %v958 = vsel %vm957, %v942, %v944
      %v959 = vsel %vm957, %v946, %v948
      %v960 = vsel %vm957, %v950, %v952
      %v961 = vsel %vm957, %v954, %v956
      %v966 = vsel %vm920, %v877, %v897
      %v967 = vsel %vm920, %v879, %v903
      %v968 = vsel %vm920, %v881, %v909
      %v969 = vsel %vm920, %v883, %v915
      %vm970 = vcmask 408576
      %v971 = vsel %vm970, %v922, %v958
      %v972 = vsel %vm970, %v924, %v959
      %v973 = vsel %vm970, %v926, %v960
      %v974 = vsel %vm970, %v928, %v961
      %vm975 = vcmask 556032
      %v976 = vsel %vm975, %v971, 0.0
      %v977 = vsel %vm975, %v972, 0.0
      %v978 = vsel %vm975, %v973, 0.0
      %v979 = vsel %vm975, %v974, 0.0
      %v980 = vpack.c.bf16 %v967, %v966
      %v981 = vpack.c.bf16 %v923, %v921
      %v982 = vpack.c.bf16 %v977, %v976
      %v983 = vpack.c.bf16 %v969, %v968
      %v984 = vpack.c.bf16 %v927, %v925
      %v985 = vpack.c.bf16 %v979, %v978
      %v986 = vld [vmem:[%s1] sm:$0xff]
      %v987 = vld [vmem:[%s1 + $0x8] sm:$0xf]
      %v988 = vld [vmem:[%s1 + $0xc] sm:$0xff]
      %v989 = vld [vmem:[%s1 + $0x14] sm:$0xf]
      %v990 = vld [vmem:[%s1 + $0x18] sm:$0xff]
      %v991 = vld [vmem:[%s1 + $0x20] sm:$0xf]
      %v992 = vld [vmem:[%s1 + $0x24] sm:$0xff]
      %v993 = vld [vmem:[%s1 + $0x2c] sm:$0xf]
      %1000 = vrot.lane.b32.xlu0 %v980, 127
      %v1001 = vpop.permute.xlu0 %1000
      %1002 = vrot.lane.b32.xlu0 %v981, 127
      %v1003 = vpop.permute.xlu0 %1002
      %1004 = vrot.lane.b32.xlu0 %v982, 127
      %v1005 = vpop.permute.xlu0 %1004
      %1006 = vrot.lane.b32.xlu0 %v983, 127
      %v1007 = vpop.permute.xlu0 %1006
      %1008 = vrot.lane.b32.xlu0 %v984, 127
      %v1009 = vpop.permute.xlu0 %1008
      %1010 = vrot.lane.b32.xlu0 %v985, 127
      %v1011 = vpop.permute.xlu0 %1010
      %vm1012 = vcmask 1039360
      %v1013 = vsel %vm1012, %v1001, %v1003
      %v1014 = vsel %vm1012, %v1003, %v1005
      %v1015 = vsel %vm1012, %v1007, %v1009
      %v1016 = vsel %vm1012, %v1009, %v1011
      %1023 = vrot.lane.b32.xlu0 %v980, 126
      %v1024 = vpop.permute.xlu0 %1023
      %1025 = vrot.lane.b32.xlu0 %v981, 126
      %v1026 = vpop.permute.xlu0 %1025
      %1027 = vrot.lane.b32.xlu0 %v982, 126
      %v1028 = vpop.permute.xlu0 %1027
      %1029 = vrot.lane.b32.xlu0 %v983, 126
      %v1030 = vpop.permute.xlu0 %1029
      %1031 = vrot.lane.b32.xlu0 %v984, 126
      %v1032 = vpop.permute.xlu0 %1031
      %1033 = vrot.lane.b32.xlu0 %v985, 126
      %v1034 = vpop.permute.xlu0 %1033
      %vm1035 = vcmask 1031168
      %v1036 = vsel %vm1035, %v1024, %v1026
      %v1037 = vsel %vm1035, %v1026, %v1028
      %v1038 = vsel %vm1035, %v1030, %v1032
      %v1039 = vsel %vm1035, %v1032, %v1034
      %1046 = vrot.lane.b32.xlu0 %v980, 110
      %v1047 = vpop.permute.xlu0 %1046
      %1048 = vrot.lane.b32.xlu0 %v981, 110
      %v1049 = vpop.permute.xlu0 %1048
      %1050 = vrot.lane.b32.xlu0 %v982, 110
      %v1051 = vpop.permute.xlu0 %1050
      %1052 = vrot.lane.b32.xlu0 %v983, 110
      %v1053 = vpop.permute.xlu0 %1052
      %1054 = vrot.lane.b32.xlu0 %v984, 110
      %v1055 = vpop.permute.xlu0 %1054
      %1056 = vrot.lane.b32.xlu0 %v985, 110
      %v1057 = vpop.permute.xlu0 %1056
      %vm1058 = vcmask 900096
      %v1059 = vsel %vm1058, %v1047, %v1049
      %v1060 = vsel %vm1058, %v1049, %v1051
      %v1061 = vsel %vm1058, %v1053, %v1055
      %v1062 = vsel %vm1058, %v1055, %v1057
      %1069 = vrot.lane.b32.xlu0 %v980, 109
      %v1070 = vpop.permute.xlu0 %1069
      %1071 = vrot.lane.b32.xlu0 %v981, 109
      %v1072 = vpop.permute.xlu0 %1071
      %1073 = vrot.lane.b32.xlu0 %v982, 109
      %v1074 = vpop.permute.xlu0 %1073
      %1075 = vrot.lane.b32.xlu0 %v983, 109
      %v1076 = vpop.permute.xlu0 %1075
      %1077 = vrot.lane.b32.xlu0 %v984, 109
      %v1078 = vpop.permute.xlu0 %1077
      %1079 = vrot.lane.b32.xlu0 %v985, 109
      %v1080 = vpop.permute.xlu0 %1079
      %vm1081 = vcmask 891904
      %v1082 = vsel %vm1081, %v1070, %v1072
      %v1083 = vsel %vm1081, %v1072, %v1074
      %v1084 = vsel %vm1081, %v1076, %v1078
      %v1085 = vsel %vm1081, %v1078, %v1080
      %1092 = vrot.lane.b32.xlu0 %v980, 108
      %v1093 = vpop.permute.xlu0 %1092
      %1094 = vrot.lane.b32.xlu0 %v981, 108
      %v1095 = vpop.permute.xlu0 %1094
      %1096 = vrot.lane.b32.xlu0 %v982, 108
      %v1097 = vpop.permute.xlu0 %1096
      %1098 = vrot.lane.b32.xlu0 %v983, 108
      %v1099 = vpop.permute.xlu0 %1098
      %1100 = vrot.lane.b32.xlu0 %v984, 108
      %v1101 = vpop.permute.xlu0 %1100
      %1102 = vrot.lane.b32.xlu0 %v985, 108
      %v1103 = vpop.permute.xlu0 %1102
      %vm1104 = vcmask 883712
      %v1105 = vsel %vm1104, %v1093, %v1095
      %v1106 = vsel %vm1104, %v1095, %v1097
      %v1107 = vsel %vm1104, %v1099, %v1101
      %v1108 = vsel %vm1104, %v1101, %v1103
      %1115 = vrot.lane.b32.xlu0 %v980, 92
      %v1116 = vpop.permute.xlu0 %1115
      %1117 = vrot.lane.b32.xlu0 %v981, 92
      %v1118 = vpop.permute.xlu0 %1117
      %1119 = vrot.lane.b32.xlu0 %v982, 92
      %v1120 = vpop.permute.xlu0 %1119
      %1121 = vrot.lane.b32.xlu0 %v983, 92
      %v1122 = vpop.permute.xlu0 %1121
      %1123 = vrot.lane.b32.xlu0 %v984, 92
      %v1124 = vpop.permute.xlu0 %1123
      %1125 = vrot.lane.b32.xlu0 %v985, 92
      %v1126 = vpop.permute.xlu0 %1125
      %vm1127 = vcmask 752640
      %v1128 = vsel %vm1127, %v1116, %v1118
      %v1129 = vsel %vm1127, %v1118, %v1120
      %v1130 = vsel %vm1127, %v1122, %v1124
      %v1131 = vsel %vm1127, %v1124, %v1126
      %1138 = vrot.lane.b32.xlu0 %v980, 91
      %v1139 = vpop.permute.xlu0 %1138
      %1140 = vrot.lane.b32.xlu0 %v981, 91
      %v1141 = vpop.permute.xlu0 %1140
      %1142 = vrot.lane.b32.xlu0 %v982, 91
      %v1143 = vpop.permute.xlu0 %1142
      %1144 = vrot.lane.b32.xlu0 %v983, 91
      %v1145 = vpop.permute.xlu0 %1144
      %1146 = vrot.lane.b32.xlu0 %v984, 91
      %v1147 = vpop.permute.xlu0 %1146
      %1148 = vrot.lane.b32.xlu0 %v985, 91
      %v1149 = vpop.permute.xlu0 %1148
      %vm1150 = vcmask 744448
      %v1151 = vsel %vm1150, %v1139, %v1141
      %v1152 = vsel %vm1150, %v1141, %v1143
      %v1153 = vsel %vm1150, %v1145, %v1147
      %v1154 = vsel %vm1150, %v1147, %v1149
      %1161 = vrot.lane.b32.xlu0 %v980, 90
      %v1162 = vpop.permute.xlu0 %1161
      %1163 = vrot.lane.b32.xlu0 %v981, 90
      %v1164 = vpop.permute.xlu0 %1163
      %1165 = vrot.lane.b32.xlu0 %v982, 90
      %v1166 = vpop.permute.xlu0 %1165
      %1167 = vrot.lane.b32.xlu0 %v983, 90
      %v1168 = vpop.permute.xlu0 %1167
      %1169 = vrot.lane.b32.xlu0 %v984, 90
      %v1170 = vpop.permute.xlu0 %1169
      %1171 = vrot.lane.b32.xlu0 %v985, 90
      %v1172 = vpop.permute.xlu0 %1171
      %vm1173 = vcmask 736256
      %v1174 = vsel %vm1173, %v1162, %v1164
      %v1175 = vsel %vm1173, %v1164, %v1166
      %v1176 = vsel %vm1173, %v1168, %v1170
      %v1177 = vsel %vm1173, %v1170, %v1172
      %v1184 = vld [vmem:[%s2] sm:$0xff]
      %v1185 = vld [vmem:[%s2 + $0x8] sm:$0xff]
      %v1186 = vld [vmem:[%s2 + $0x10] sm:$0xff]
      %v1187 = vld [vmem:[%s2 + $0x18] sm:$0xff]
      %1189 = vset.pattern.permute.xlu0 0
      %1190 = vperm.xlu0 %1189, %v1184
      %v1191 = vpop.permute.xlu0 %1190
      %1194 = vset.pattern.permute.xlu0 0
      %1195 = vperm.xlu0 %1194, %v1185
      %v1196 = vpop.permute.xlu0 %1195
      %1199 = vset.pattern.permute.xlu0 0
      %1200 = vperm.xlu0 %1199, %v1186
      %v1201 = vpop.permute.xlu0 %1200
      %1204 = vset.pattern.permute.xlu0 0
      %1205 = vperm.xlu0 %1204, %v1187
      %v1206 = vpop.permute.xlu0 %1205
      %v1216 = vunpack.c.l.b16 %v986
      %v1217 = vunpack.c.h.b16 %v986
      %v1218 = vunpack.c.l.b16 %v987
      %v1219 = vunpack.c.l.b16 %v988
      %v1220 = vunpack.c.h.b16 %v988
      %v1221 = vunpack.c.l.b16 %v989
      %v1222 = vunpack.c.l.b16 %v990
      %v1223 = vunpack.c.h.b16 %v990
      %v1224 = vunpack.c.l.b16 %v991
      %v1225 = vunpack.c.l.b16 %v992
      %v1226 = vunpack.c.h.b16 %v992
      %v1227 = vunpack.c.l.b16 %v993
      %v1228 = vpack.c.b16 %v1219, %v1216
      %v1229 = vpack.c.b16 %v1220, %v1217
      %v1230 = vpack.c.b16 %v1221, %v1218
      %v1231 = vpack.c.b16 %v1225, %v1222
      %v1232 = vpack.c.b16 %v1226, %v1223
      %v1233 = vpack.c.b16 %v1227, %v1224
      %v1239 = vsel %vm357, %v1230, 0
      %v1242 = vsel %vm357, %v1233, 0
      %1244 = vmatprep.subr.bf16.mxu0 %v1062
      %1245 = vmatpush1.bf16.msra.mxu0 %v1061
      %1246 = vmatprep.subr.bf16.mxu0 %v1060
      %1247 = vmatpush1.bf16.msra.mxu0 %v1059
      %1248 = vmatprep.subr.bf16.mxu0 %v1039
      %1249 = vmatpush1.bf16.msra.mxu0 %v1038
      %1250 = vmatprep.subr.bf16.mxu0 %v1037
      %1251 = vmatpush1.bf16.msra.mxu0 %v1036
      %1252 = vmatprep.subr.bf16.mxu0 %v1016
      %1253 = vmatpush1.bf16.msra.mxu0 %v1015
      %1254 = vmatprep.subr.bf16.mxu0 %v1014
      %1255 = vmatpush1.bf16.msra.mxu0 %v1013
      %1256 = vmatprep.subr.bf16.mxu0 %v984
      %1257 = vmatpush1.bf16.msra.mxu0 %v983
      %1258 = vmatprep.subr.bf16.mxu0 %v981
      %1259 = vmatpush1.bf16.msra.mxu0 %v980
      %1260 = vmatprep.subr.bf16.mxu0 %v1154
      %1261 = vmatpush2.bf16.msra.mxu0 %v1153
      %1262 = vmatprep.subr.bf16.mxu0 %v1152
      %1263 = vmatpush2.bf16.msra.mxu0 %v1151
      %1264 = vmatprep.subr.bf16.mxu0 %v1131
      %1265 = vmatpush2.bf16.msra.mxu0 %v1130
      %1266 = vmatprep.subr.bf16.mxu0 %v1129
      %1267 = vmatpush2.bf16.msra.mxu0 %v1128
      %1268 = vmatprep.subr.bf16.mxu0 %v1108
      %1269 = vmatpush2.bf16.msra.mxu0 %v1107
      %1270 = vmatprep.subr.bf16.mxu0 %v1106
      %1271 = vmatpush2.bf16.msra.mxu0 %v1105
      %1272 = vmatprep.subr.bf16.mxu0 %v1085
      %1273 = vmatpush2.bf16.msra.mxu0 %v1084
      %1274 = vmatprep.subr.bf16.mxu0 %v1083
      %1275 = vmatpush2.bf16.msra.mxu0 %v1082
      %1276 = vmatprep.mubr.bf16.mxu0 %v1229
      %1277 = vmatmul.mubr.bf16.gmra.mxu0 %v1228
      %v1278 = vpop.f32.mrf.mxu0
      %v1279 = vadd.f32 %v1191, %v1278
      %v1280 = vpop.f32.mrf.mxu0
      %v1281 = vadd.f32 %v1191, %v1280
      %v1282 = vpop.f32.mrf.mxu0
      %v1283 = vadd.f32 %v1196, %v1282
      %v1284 = vpop.f32.mrf.mxu0
      %v1285 = vadd.f32 %v1196, %v1284
      %1286 = vmatprep.mubr.bf16.mxu0 %v1232
      %1287 = vmatmul.mubr.bf16.gmra.mxu0 %v1231
      %v1288 = vpop.f32.mrf.mxu0
      %v1289 = vadd.f32 %v1201, %v1288
      %v1290 = vpop.f32.mrf.mxu0
      %v1291 = vadd.f32 %v1201, %v1290
      %v1292 = vpop.f32.mrf.mxu0
      %v1293 = vadd.f32 %v1206, %v1292
      %v1294 = vpop.f32.mrf.mxu0
      %v1295 = vadd.f32 %v1206, %v1294
      %1296 = vdwg.mxu0
      %1297 = vmatprep.subr.bf16.mxu0 0
      %1298 = vmatpush1.bf16.msra.mxu0 0
      %1299 = vmatprep.subr.bf16.mxu0 0
      %1300 = vmatpush1.bf16.msra.mxu0 0
      %1301 = vmatprep.subr.bf16.mxu0 0
      %1302 = vmatpush1.bf16.msra.mxu0 0
      %1303 = vmatprep.subr.bf16.mxu0 0
      %1304 = vmatpush1.bf16.msra.mxu0 0
      %1305 = vmatprep.subr.bf16.mxu0 0
      %1306 = vmatpush1.bf16.msra.mxu0 0
      %1307 = vmatprep.subr.bf16.mxu0 0
      %1308 = vmatpush1.bf16.msra.mxu0 0
      %1309 = vmatprep.subr.bf16.mxu0 %v1177
      %1310 = vmatpush1.bf16.msra.mxu0 %v1176
      %1311 = vmatprep.subr.bf16.mxu0 %v1175
      %1312 = vmatpush1.bf16.msra.mxu0 %v1174
      %1313 = vmatprep.subr.bf16.mxu0 0
      %1314 = vmatpush2.bf16.msra.mxu0 0
      %1315 = vmatprep.subr.bf16.mxu0 0
      %1316 = vmatpush2.bf16.msra.mxu0 0
      %1317 = vmatprep.subr.bf16.mxu0 0
      %1318 = vmatpush2.bf16.msra.mxu0 0
      %1319 = vmatprep.subr.bf16.mxu0 0
      %1320 = vmatpush2.bf16.msra.mxu0 0
      %1321 = vmatprep.subr.bf16.mxu0 0
      %1322 = vmatpush2.bf16.msra.mxu0 0
      %1323 = vmatprep.subr.bf16.mxu0 0
      %1324 = vmatpush2.bf16.msra.mxu0 0
      %1325 = vmatprep.subr.bf16.mxu0 0
      %1326 = vmatpush2.bf16.msra.mxu0 0
      %1327 = vmatprep.subr.bf16.mxu0 0
      %1328 = vmatpush2.bf16.msra.mxu0 0
      %1329 = vmatprep.mubr.bf16.mxu0 0
      %1330 = vmatmul.mubr.bf16.gmra.mxu0 %v1239
      %v1331 = vpop.f32.mrf.mxu0
      %v1332 = vadd.f32 %v1279, %v1331
      %v1333 = vpop.f32.mrf.mxu0
      %v1334 = vadd.f32 %v1281, %v1333
      %v1335 = vpop.f32.mrf.mxu0
      %v1336 = vadd.f32 %v1283, %v1335
      %v1337 = vpop.f32.mrf.mxu0
      %v1338 = vadd.f32 %v1285, %v1337
      %1339 = vmatprep.mubr.bf16.mxu0 0
      %1340 = vmatmul.mubr.bf16.gmra.mxu0 %v1242
      %v1341 = vpop.f32.mrf.mxu0
      %v1342 = vadd.f32 %v1289, %v1341
      %v1343 = vpop.f32.mrf.mxu0
      %v1344 = vadd.f32 %v1291, %v1343
      %v1345 = vpop.f32.mrf.mxu0
      %v1346 = vadd.f32 %v1293, %v1345
      %v1347 = vpop.f32.mrf.mxu0
      %v1348 = vadd.f32 %v1295, %v1347
      %1349 = vdwg.mxu0
      %1350 = vmatprep.subr.bf16.mxu0 0
      %1351 = vmatpush1.bf16.msra.mxu0 %v1057
      %1352 = vmatprep.subr.bf16.mxu0 0
      %1353 = vmatpush1.bf16.msra.mxu0 %v1051
      %1354 = vmatprep.subr.bf16.mxu0 0
      %1355 = vmatpush1.bf16.msra.mxu0 %v1034
      %1356 = vmatprep.subr.bf16.mxu0 0
      %1357 = vmatpush1.bf16.msra.mxu0 %v1028
      %1358 = vmatprep.subr.bf16.mxu0 0
      %1359 = vmatpush1.bf16.msra.mxu0 %v1011
      %1360 = vmatprep.subr.bf16.mxu0 0
      %1361 = vmatpush1.bf16.msra.mxu0 %v1005
      %1362 = vmatprep.subr.bf16.mxu0 0
      %1363 = vmatpush1.bf16.msra.mxu0 %v985
      %1364 = vmatprep.subr.bf16.mxu0 0
      %1365 = vmatpush1.bf16.msra.mxu0 %v982
      %1366 = vmatprep.subr.bf16.mxu0 0
      %1367 = vmatpush2.bf16.msra.mxu0 %v1149
      %1368 = vmatprep.subr.bf16.mxu0 0
      %1369 = vmatpush2.bf16.msra.mxu0 %v1143
      %1370 = vmatprep.subr.bf16.mxu0 0
      %1371 = vmatpush2.bf16.msra.mxu0 %v1126
      %1372 = vmatprep.subr.bf16.mxu0 0
      %1373 = vmatpush2.bf16.msra.mxu0 %v1120
      %1374 = vmatprep.subr.bf16.mxu0 0
      %1375 = vmatpush2.bf16.msra.mxu0 %v1103
      %1376 = vmatprep.subr.bf16.mxu0 0
      %1377 = vmatpush2.bf16.msra.mxu0 %v1097
      %1378 = vmatprep.subr.bf16.mxu0 0
      %1379 = vmatpush2.bf16.msra.mxu0 %v1080
      %1380 = vmatprep.subr.bf16.mxu0 0
      %1381 = vmatpush2.bf16.msra.mxu0 %v1074
      %1382 = vmatprep.mubr.bf16.mxu0 %v1229
      %1383 = vmatmul.mubr.bf16.gmra.mxu0 %v1228
      %v1384 = vpop.f32.mrf.mxu0
      %v1385 = vadd.f32 %v1191, %v1384
      %v1386 = vpop.f32.mrf.mxu0
      %v1387 = vpop.f32.mrf.mxu0
      %v1388 = vadd.f32 %v1196, %v1387
      %v1389 = vpop.f32.mrf.mxu0
      %1390 = vmatprep.mubr.bf16.mxu0 %v1232
      %1391 = vmatmul.mubr.bf16.gmra.mxu0 %v1231
      %v1392 = vpop.f32.mrf.mxu0
      %v1393 = vadd.f32 %v1201, %v1392
      %v1394 = vpop.f32.mrf.mxu0
      %v1395 = vpop.f32.mrf.mxu0
      %v1396 = vadd.f32 %v1206, %v1395
      %v1397 = vpop.f32.mrf.mxu0
      %1398 = vdwg.mxu0
      %1399 = vmatprep.subr.bf16.mxu0 0
      %1400 = vmatpush1.bf16.msra.mxu0 0
      %1401 = vmatprep.subr.bf16.mxu0 0
      %1402 = vmatpush1.bf16.msra.mxu0 0
      %1403 = vmatprep.subr.bf16.mxu0 0
      %1404 = vmatpush1.bf16.msra.mxu0 0
      %1405 = vmatprep.subr.bf16.mxu0 0
      %1406 = vmatpush1.bf16.msra.mxu0 0
      %1407 = vmatprep.subr.bf16.mxu0 0
      %1408 = vmatpush1.bf16.msra.mxu0 0
      %1409 = vmatprep.subr.bf16.mxu0 0
      %1410 = vmatpush1.bf16.msra.mxu0 0
      %1411 = vmatprep.subr.bf16.mxu0 0
      %1412 = vmatpush1.bf16.msra.mxu0 %v1172
      %1413 = vmatprep.subr.bf16.mxu0 0
      %1414 = vmatpush1.bf16.msra.mxu0 %v1166
      %1415 = vmatprep.subr.bf16.mxu0 0
      %1416 = vmatpush2.bf16.msra.mxu0 0
      %1417 = vmatprep.subr.bf16.mxu0 0
      %1418 = vmatpush2.bf16.msra.mxu0 0
      %1419 = vmatprep.subr.bf16.mxu0 0
      %1420 = vmatpush2.bf16.msra.mxu0 0
      %1421 = vmatprep.subr.bf16.mxu0 0
      %1422 = vmatpush2.bf16.msra.mxu0 0
      %1423 = vmatprep.subr.bf16.mxu0 0
      %1424 = vmatpush2.bf16.msra.mxu0 0
      %1425 = vmatprep.subr.bf16.mxu0 0
      %1426 = vmatpush2.bf16.msra.mxu0 0
      %1427 = vmatprep.subr.bf16.mxu0 0
      %1428 = vmatpush2.bf16.msra.mxu0 0
      %1429 = vmatprep.subr.bf16.mxu0 0
      %1430 = vmatpush2.bf16.msra.mxu0 0
      %1431 = vmatprep.mubr.bf16.mxu0 0
      %1432 = vmatmul.mubr.bf16.gmra.mxu0 %v1239
      %v1433 = vpop.f32.mrf.mxu0
      %v1434 = vadd.f32 %v1385, %v1433
      %v1435 = vpop.f32.mrf.mxu0
      %v1436 = vpop.f32.mrf.mxu0
      %v1437 = vadd.f32 %v1388, %v1436
      %v1438 = vpop.f32.mrf.mxu0
      %1439 = vmatprep.mubr.bf16.mxu0 0
      %1440 = vmatmul.mubr.bf16.gmra.mxu0 %v1242
      %v1441 = vpop.f32.mrf.mxu0
      %v1442 = vadd.f32 %v1393, %v1441
      %v1443 = vpop.f32.mrf.mxu0
      %v1444 = vpop.f32.mrf.mxu0
      %v1445 = vadd.f32 %v1396, %v1444
      %v1446 = vpop.f32.mrf.mxu0
      %1447 = vdwg.mxu0
      %v1448 = vmul.f32 %v1332, %v332
      %v1449 = vmul.f32 %v1334, %v336
      %v1450 = vmul.f32 %v1434, %v340
      %v1451 = vmul.f32 %v1336, %v332
      %v1452 = vmul.f32 %v1338, %v336
      %v1453 = vmul.f32 %v1437, %v340
      %v1454 = vmul.f32 %v1342, %v332
      %v1455 = vmul.f32 %v1344, %v336
      %v1456 = vmul.f32 %v1442, %v340
      %v1457 = vmul.f32 %v1346, %v332
      %v1458 = vmul.f32 %v1348, %v336
      %v1459 = vmul.f32 %v1445, %v340
      %v1460 = vadd.f32 %v1448, %v1449
      %v1461 = vsel %vm357, %v1450, 0.0
      %v1462 = vadd.f32 %v1460, %v1461
      %1463 = vadd.xlane.f32.xlu0 %v1462
      %v1464 = vpop.xlane.xlu0 %1463
      %v1465 = vadd.f32 %v1451, %v1452
      %v1466 = vsel %vm357, %v1453, 0.0
      %v1467 = vadd.f32 %v1465, %v1466
      %1468 = vadd.xlane.f32.xlu0 %v1467
      %v1469 = vpop.xlane.xlu0 %1468
      %v1470 = vadd.f32 %v1454, %v1455
      %v1471 = vsel %vm357, %v1456, 0.0
      %v1472 = vadd.f32 %v1470, %v1471
      %1473 = vadd.xlane.f32.xlu0 %v1472
      %v1474 = vpop.xlane.xlu0 %1473
      %v1475 = vadd.f32 %v1457, %v1458
      %v1476 = vsel %vm357, %v1459, 0.0
      %v1477 = vadd.f32 %v1475, %v1476
      %1478 = vadd.xlane.f32.xlu0 %v1477
      %v1479 = vpop.xlane.xlu0 %1478
      %v1480 = vmul.f32 %v1464, 0.00390625
      %v1481 = vmul.f32 %v1469, 0.00390625
      %v1482 = vmul.f32 %v1474, 0.00390625
      %v1483 = vmul.f32 %v1479, 0.00390625
      %v1484 = vsub.f32 %v1332, %v1480
      %v1485 = vsub.f32 %v1334, %v1480
      %v1486 = vsub.f32 %v1434, %v1480
      %v1487 = vsub.f32 %v1336, %v1481
      %v1488 = vsub.f32 %v1338, %v1481
      %v1489 = vsub.f32 %v1437, %v1481
      %v1490 = vsub.f32 %v1342, %v1482
      %v1491 = vsub.f32 %v1344, %v1482
      %v1492 = vsub.f32 %v1442, %v1482
      %v1493 = vsub.f32 %v1346, %v1483
      %v1494 = vsub.f32 %v1348, %v1483
      %v1495 = vsub.f32 %v1445, %v1483
      %v1496 = vmul.f32 %v1484, %v1484
      %v1497 = vmul.f32 %v1485, %v1485
      %v1498 = vmul.f32 %v1486, %v1486
      %v1499 = vmul.f32 %v1487, %v1487
      %v1500 = vmul.f32 %v1488, %v1488
      %v1501 = vmul.f32 %v1489, %v1489
      %v1502 = vmul.f32 %v1490, %v1490
      %v1503 = vmul.f32 %v1491, %v1491
      %v1504 = vmul.f32 %v1492, %v1492
      %v1505 = vmul.f32 %v1493, %v1493
      %v1506 = vmul.f32 %v1494, %v1494
      %v1507 = vmul.f32 %v1495, %v1495
      %v1508 = vmul.f32 %v1496, %v332
      %v1509 = vmul.f32 %v1497, %v336
      %v1510 = vmul.f32 %v1498, %v340
      %v1511 = vmul.f32 %v1499, %v332
      %v1512 = vmul.f32 %v1500, %v336
      %v1513 = vmul.f32 %v1501, %v340
      %v1514 = vmul.f32 %v1502, %v332
      %v1515 = vmul.f32 %v1503, %v336
      %v1516 = vmul.f32 %v1504, %v340
      %v1517 = vmul.f32 %v1505, %v332
      %v1518 = vmul.f32 %v1506, %v336
      %v1519 = vmul.f32 %v1507, %v340
      %v1520 = vadd.f32 %v1508, %v1509
      %v1521 = vsel %vm357, %v1510, 0.0
      %v1522 = vadd.f32 %v1520, %v1521
      %1523 = vadd.xlane.f32.xlu0 %v1522
      %v1524 = vpop.xlane.xlu0 %1523
      %v1525 = vadd.f32 %v1511, %v1512
      %v1526 = vsel %vm357, %v1513, 0.0
      %v1527 = vadd.f32 %v1525, %v1526
      %1528 = vadd.xlane.f32.xlu0 %v1527
      %v1529 = vpop.xlane.xlu0 %1528
      %v1530 = vadd.f32 %v1514, %v1515
      %v1531 = vsel %vm357, %v1516, 0.0
      %v1532 = vadd.f32 %v1530, %v1531
      %1533 = vadd.xlane.f32.xlu0 %v1532
      %v1534 = vpop.xlane.xlu0 %1533
      %v1535 = vadd.f32 %v1517, %v1518
      %v1536 = vsel %vm357, %v1519, 0.0
      %v1537 = vadd.f32 %v1535, %v1536
      %1538 = vadd.xlane.f32.xlu0 %v1537
      %v1539 = vpop.xlane.xlu0 %1538
      %v1540 = vmul.f32 %v1524, 0.00390625
      %v1541 = vmul.f32 %v1529, 0.00390625
      %v1542 = vmul.f32 %v1534, 0.00390625
      %v1543 = vmul.f32 %v1539, 0.00390625
      %v1544 = vadd.f32 %v1540, 1e-05
      %v1545 = vadd.f32 %v1541, 1e-05
      %v1546 = vadd.f32 %v1542, 1e-05
      %v1547 = vadd.f32 %v1543, 1e-05
      %v1548 = vrsqrt.pop %v1544
      %v1549 = vrsqrt.pop %v1545
      %v1550 = vrsqrt.pop %v1546
      %v1551 = vrsqrt.pop %v1547
      %v1552 = vmul.f32 %v1484, %v1548
      %v1553 = vmul.f32 %v1485, %v1548
      %v1554 = vmul.f32 %v1486, %v1548
      %v1555 = vmul.f32 %v1487, %v1549
      %v1556 = vmul.f32 %v1488, %v1549
      %v1557 = vmul.f32 %v1489, %v1549
      %v1558 = vmul.f32 %v1490, %v1550
      %v1559 = vmul.f32 %v1491, %v1550
      %v1560 = vmul.f32 %v1492, %v1550
      %v1561 = vmul.f32 %v1493, %v1551
      %v1562 = vmul.f32 %v1494, %v1551
      %v1563 = vmul.f32 %v1495, %v1551
      %v1564 = vmax.f32 %v1552, 0.0
      %v1565 = vmax.f32 %v1553, 0.0
      %v1566 = vmax.f32 %v1554, 0.0
      %v1567 = vmax.f32 %v1555, 0.0
      %v1568 = vmax.f32 %v1556, 0.0
      %v1569 = vmax.f32 %v1557, 0.0
      %v1570 = vmax.f32 %v1558, 0.0
      %v1571 = vmax.f32 %v1559, 0.0
      %v1572 = vmax.f32 %v1560, 0.0
      %v1573 = vmax.f32 %v1561, 0.0
      %v1574 = vmax.f32 %v1562, 0.0
      %v1575 = vmax.f32 %v1563, 0.0
      %1588 = vrot.lane.b32.xlu0 %v1564, 1
      %v1589 = vpop.permute.xlu0 %1588
      %1590 = vrot.lane.b32.xlu0 %v1565, 1
      %v1591 = vpop.permute.xlu0 %1590
      %1592 = vrot.lane.b32.xlu0 %v1566, 1
      %v1593 = vpop.permute.xlu0 %1592
      %1594 = vrot.lane.b32.xlu0 %v1567, 1
      %v1595 = vpop.permute.xlu0 %1594
      %1596 = vrot.lane.b32.xlu0 %v1568, 1
      %v1597 = vpop.permute.xlu0 %1596
      %1598 = vrot.lane.b32.xlu0 %v1569, 1
      %v1599 = vpop.permute.xlu0 %1598
      %1600 = vrot.lane.b32.xlu0 %v1570, 1
      %v1601 = vpop.permute.xlu0 %1600
      %1602 = vrot.lane.b32.xlu0 %v1571, 1
      %v1603 = vpop.permute.xlu0 %1602
      %1604 = vrot.lane.b32.xlu0 %v1572, 1
      %v1605 = vpop.permute.xlu0 %1604
      %1606 = vrot.lane.b32.xlu0 %v1573, 1
      %v1607 = vpop.permute.xlu0 %1606
      %1608 = vrot.lane.b32.xlu0 %v1574, 1
      %v1609 = vpop.permute.xlu0 %1608
      %1610 = vrot.lane.b32.xlu0 %v1575, 1
      %v1611 = vpop.permute.xlu0 %1610
      %v1612 = vsel %vm706, %v1589, %v1591
      %v1613 = vsel %vm706, %v1591, %v1593
      %v1614 = vsel %vm706, %v1595, %v1597
      %v1615 = vsel %vm706, %v1597, %v1599
      %v1616 = vsel %vm706, %v1601, %v1603
      %v1617 = vsel %vm706, %v1603, %v1605
      %v1618 = vsel %vm706, %v1607, %v1609
      %v1619 = vsel %vm706, %v1609, %v1611
      %v1632 = vsel %vm706, 0.0, %v1589
      %v1633 = vsel %vm706, 0.0, %v1595
      %v1634 = vsel %vm706, 0.0, %v1601
      %v1635 = vsel %vm706, 0.0, %v1607
      %1636 = vrot.lane.b32.xlu0 %v1564, 127
      %v1637 = vpop.permute.xlu0 %1636
      %1638 = vrot.lane.b32.xlu0 %v1565, 127
      %v1639 = vpop.permute.xlu0 %1638
      %1640 = vrot.lane.b32.xlu0 %v1566, 127
      %v1641 = vpop.permute.xlu0 %1640
      %1642 = vrot.lane.b32.xlu0 %v1567, 127
      %v1643 = vpop.permute.xlu0 %1642
      %1644 = vrot.lane.b32.xlu0 %v1568, 127
      %v1645 = vpop.permute.xlu0 %1644
      %1646 = vrot.lane.b32.xlu0 %v1569, 127
      %v1647 = vpop.permute.xlu0 %1646
      %1648 = vrot.lane.b32.xlu0 %v1570, 127
      %v1649 = vpop.permute.xlu0 %1648
      %1650 = vrot.lane.b32.xlu0 %v1571, 127
      %v1651 = vpop.permute.xlu0 %1650
      %1652 = vrot.lane.b32.xlu0 %v1572, 127
      %v1653 = vpop.permute.xlu0 %1652
      %1654 = vrot.lane.b32.xlu0 %v1573, 127
      %v1655 = vpop.permute.xlu0 %1654
      %1656 = vrot.lane.b32.xlu0 %v1574, 127
      %v1657 = vpop.permute.xlu0 %1656
      %1658 = vrot.lane.b32.xlu0 %v1575, 127
      %v1659 = vpop.permute.xlu0 %1658
      %v1660 = vsel %vm755, %v1637, %v1639
      %v1661 = vsel %vm755, %v1639, %v1641
      %v1662 = vsel %vm755, %v1643, %v1645
      %v1663 = vsel %vm755, %v1645, %v1647
      %v1664 = vsel %vm755, %v1649, %v1651
      %v1665 = vsel %vm755, %v1651, %v1653
      %v1666 = vsel %vm755, %v1655, %v1657
      %v1667 = vsel %vm755, %v1657, %v1659
      %v1680 = vsel %vm776, %v1641, 0.0
      %v1681 = vsel %vm776, %v1647, 0.0
      %v1682 = vsel %vm776, %v1653, 0.0
      %v1683 = vsel %vm776, %v1659, 0.0
      %1684 = vrot.lane.b32.xlu0 %v1564, 3
      %v1685 = vpop.permute.xlu0 %1684
      %1686 = vrot.lane.b32.xlu0 %v1565, 3
      %v1687 = vpop.permute.xlu0 %1686
      %1688 = vrot.lane.b32.xlu0 %v1566, 3
      %v1689 = vpop.permute.xlu0 %1688
      %1690 = vrot.lane.b32.xlu0 %v1567, 3
      %v1691 = vpop.permute.xlu0 %1690
      %1692 = vrot.lane.b32.xlu0 %v1568, 3
      %v1693 = vpop.permute.xlu0 %1692
      %1694 = vrot.lane.b32.xlu0 %v1569, 3
      %v1695 = vpop.permute.xlu0 %1694
      %1696 = vrot.lane.b32.xlu0 %v1570, 3
      %v1697 = vpop.permute.xlu0 %1696
      %1698 = vrot.lane.b32.xlu0 %v1571, 3
      %v1699 = vpop.permute.xlu0 %1698
      %1700 = vrot.lane.b32.xlu0 %v1572, 3
      %v1701 = vpop.permute.xlu0 %1700
      %1702 = vrot.lane.b32.xlu0 %v1573, 3
      %v1703 = vpop.permute.xlu0 %1702
      %1704 = vrot.lane.b32.xlu0 %v1574, 3
      %v1705 = vpop.permute.xlu0 %1704
      %1706 = vrot.lane.b32.xlu0 %v1575, 3
      %v1707 = vpop.permute.xlu0 %1706
      %v1708 = vsel %vm805, %v1685, %v1687
      %v1709 = vsel %vm805, %v1687, %v1689
      %v1710 = vsel %vm805, %v1691, %v1693
      %v1711 = vsel %vm805, %v1693, %v1695
      %v1712 = vsel %vm805, %v1697, %v1699
      %v1713 = vsel %vm805, %v1699, %v1701
      %v1714 = vsel %vm805, %v1703, %v1705
      %v1715 = vsel %vm805, %v1705, %v1707
      %v1728 = vsel %vm805, 0.0, %v1685
      %v1729 = vsel %vm805, 0.0, %v1691
      %v1730 = vsel %vm805, 0.0, %v1697
      %v1731 = vsel %vm805, 0.0, %v1703
      %v1732 = vsel %vm839, %v1728, %v1632
      %v1733 = vsel %vm840, %v1708, %v1612
      %v1734 = vsel %vm841, %v1709, %v1613
      %v1735 = vsel %vm839, %v1729, %v1633
      %v1736 = vsel %vm840, %v1710, %v1614
      %v1737 = vsel %vm841, %v1711, %v1615
      %v1738 = vsel %vm839, %v1730, %v1634
      %v1739 = vsel %vm840, %v1712, %v1616
      %v1740 = vsel %vm841, %v1713, %v1617
      %v1741 = vsel %vm839, %v1731, %v1635
      %v1742 = vsel %vm840, %v1714, %v1618
      %v1743 = vsel %vm841, %v1715, %v1619
      %v1744 = vsel %vm857, %v1660, %v1732
      %v1745 = vsel %vm858, %v1661, %v1733
      %v1746 = vsel %vm859, %v1680, %v1734
      %v1747 = vsel %vm857, %v1662, %v1735
      %v1748 = vsel %vm858, %v1663, %v1736
      %v1749 = vsel %vm859, %v1681, %v1737
      %v1750 = vsel %vm857, %v1664, %v1738
      %v1751 = vsel %vm858, %v1665, %v1739
      %v1752 = vsel %vm859, %v1682, %v1740
      %v1753 = vsel %vm857, %v1666, %v1741
      %v1754 = vsel %vm858, %v1667, %v1742
      %v1755 = vsel %vm859, %v1683, %v1743
      %1760 = vrot.lane.b32.xlu0 %v1744, 110
      %v1761 = vpop.permute.xlu0 %1760
      %1762 = vrot.lane.b32.xlu0 %v1747, 110
      %v1763 = vpop.permute.xlu0 %1762
      %1764 = vrot.lane.b32.xlu0 %v1750, 110
      %v1765 = vpop.permute.xlu0 %1764
      %1766 = vrot.lane.b32.xlu0 %v1753, 110
      %v1767 = vpop.permute.xlu0 %1766
      %1780 = vrot.lane.b32.xlu0 %v1744, 18
      %v1781 = vpop.permute.xlu0 %1780
      %1782 = vrot.lane.b32.xlu0 %v1745, 18
      %v1783 = vpop.permute.xlu0 %1782
      %1784 = vrot.lane.b32.xlu0 %v1746, 18
      %v1785 = vpop.permute.xlu0 %1784
      %1786 = vrot.lane.b32.xlu0 %v1747, 18
      %v1787 = vpop.permute.xlu0 %1786
      %1788 = vrot.lane.b32.xlu0 %v1748, 18
      %v1789 = vpop.permute.xlu0 %1788
      %1790 = vrot.lane.b32.xlu0 %v1749, 18
      %v1791 = vpop.permute.xlu0 %1790
      %1792 = vrot.lane.b32.xlu0 %v1750, 18
      %v1793 = vpop.permute.xlu0 %1792
      %1794 = vrot.lane.b32.xlu0 %v1751, 18
      %v1795 = vpop.permute.xlu0 %1794
      %1796 = vrot.lane.b32.xlu0 %v1752, 18
      %v1797 = vpop.permute.xlu0 %1796
      %1798 = vrot.lane.b32.xlu0 %v1753, 18
      %v1799 = vpop.permute.xlu0 %1798
      %1800 = vrot.lane.b32.xlu0 %v1754, 18
      %v1801 = vpop.permute.xlu0 %1800
      %1802 = vrot.lane.b32.xlu0 %v1755, 18
      %v1803 = vpop.permute.xlu0 %1802
      %v1804 = vsel %vm920, %v1781, %v1783
      %v1805 = vsel %vm920, %v1783, %v1785
      %v1806 = vsel %vm920, %v1787, %v1789
      %v1807 = vsel %vm920, %v1789, %v1791
      %v1808 = vsel %vm920, %v1793, %v1795
      %v1809 = vsel %vm920, %v1795, %v1797
      %v1810 = vsel %vm920, %v1799, %v1801
      %v1811 = vsel %vm920, %v1801, %v1803
      %1824 = vrot.lane.b32.xlu0 %v1745, 54
      %v1825 = vpop.permute.xlu0 %1824
      %1826 = vrot.lane.b32.xlu0 %v1746, 54
      %v1827 = vpop.permute.xlu0 %1826
      %1828 = vrot.lane.b32.xlu0 %v1748, 54
      %v1829 = vpop.permute.xlu0 %1828
      %1830 = vrot.lane.b32.xlu0 %v1749, 54
      %v1831 = vpop.permute.xlu0 %1830
      %1832 = vrot.lane.b32.xlu0 %v1751, 54
      %v1833 = vpop.permute.xlu0 %1832
      %1834 = vrot.lane.b32.xlu0 %v1752, 54
      %v1835 = vpop.permute.xlu0 %1834
      %1836 = vrot.lane.b32.xlu0 %v1754, 54
      %v1837 = vpop.permute.xlu0 %1836
      %1838 = vrot.lane.b32.xlu0 %v1755, 54
      %v1839 = vpop.permute.xlu0 %1838
      %v1840 = vsel %vm957, %v1825, %v1827
      %v1841 = vsel %vm957, %v1829, %v1831
      %v1842 = vsel %vm957, %v1833, %v1835
      %v1843 = vsel %vm957, %v1837, %v1839
      %v1848 = vsel %vm920, %v1761, %v1781
      %v1849 = vsel %vm920, %v1763, %v1787
      %v1850 = vsel %vm920, %v1765, %v1793
      %v1851 = vsel %vm920, %v1767, %v1799
      %v1852 = vsel %vm970, %v1805, %v1840
      %v1853 = vsel %vm970, %v1807, %v1841
      %v1854 = vsel %vm970, %v1809, %v1842
      %v1855 = vsel %vm970, %v1811, %v1843
      %v1856 = vsel %vm975, %v1852, 0.0
      %v1857 = vsel %vm975, %v1853, 0.0
      %v1858 = vsel %vm975, %v1854, 0.0
      %v1859 = vsel %vm975, %v1855, 0.0
      %v1860 = vpack.c.bf16 %v1849, %v1848
      %v1861 = vpack.c.bf16 %v1806, %v1804
      %v1862 = vpack.c.bf16 %v1857, %v1856
      %v1863 = vpack.c.bf16 %v1851, %v1850
      %v1864 = vpack.c.bf16 %v1810, %v1808
      %v1865 = vpack.c.bf16 %v1859, %v1858
      %v1866 = vld [vmem:[%s3] sm:$0xff]
      %v1867 = vld [vmem:[%s3 + $0x8] sm:$0xf]
      %v1868 = vld [vmem:[%s3 + $0xc] sm:$0xff]
      %v1869 = vld [vmem:[%s3 + $0x14] sm:$0xf]
      %v1870 = vld [vmem:[%s3 + $0x18] sm:$0xff]
      %v1871 = vld [vmem:[%s3 + $0x20] sm:$0xf]
      %v1872 = vld [vmem:[%s3 + $0x24] sm:$0xff]
      %v1873 = vld [vmem:[%s3 + $0x2c] sm:$0xf]
      %1880 = vrot.lane.b32.xlu0 %v1860, 127
      %v1881 = vpop.permute.xlu0 %1880
      %1882 = vrot.lane.b32.xlu0 %v1861, 127
      %v1883 = vpop.permute.xlu0 %1882
      %1884 = vrot.lane.b32.xlu0 %v1862, 127
      %v1885 = vpop.permute.xlu0 %1884
      %1886 = vrot.lane.b32.xlu0 %v1863, 127
      %v1887 = vpop.permute.xlu0 %1886
      %1888 = vrot.lane.b32.xlu0 %v1864, 127
      %v1889 = vpop.permute.xlu0 %1888
      %1890 = vrot.lane.b32.xlu0 %v1865, 127
      %v1891 = vpop.permute.xlu0 %1890
      %v1892 = vsel %vm1012, %v1881, %v1883
      %v1893 = vsel %vm1012, %v1883, %v1885
      %v1894 = vsel %vm1012, %v1887, %v1889
      %v1895 = vsel %vm1012, %v1889, %v1891
      %1902 = vrot.lane.b32.xlu0 %v1860, 126
      %v1903 = vpop.permute.xlu0 %1902
      %1904 = vrot.lane.b32.xlu0 %v1861, 126
      %v1905 = vpop.permute.xlu0 %1904
      %1906 = vrot.lane.b32.xlu0 %v1862, 126
      %v1907 = vpop.permute.xlu0 %1906
      %1908 = vrot.lane.b32.xlu0 %v1863, 126
      %v1909 = vpop.permute.xlu0 %1908
      %1910 = vrot.lane.b32.xlu0 %v1864, 126
      %v1911 = vpop.permute.xlu0 %1910
      %1912 = vrot.lane.b32.xlu0 %v1865, 126
      %v1913 = vpop.permute.xlu0 %1912
      %v1914 = vsel %vm1035, %v1903, %v1905
      %v1915 = vsel %vm1035, %v1905, %v1907
      %v1916 = vsel %vm1035, %v1909, %v1911
      %v1917 = vsel %vm1035, %v1911, %v1913
      %1924 = vrot.lane.b32.xlu0 %v1860, 110
      %v1925 = vpop.permute.xlu0 %1924
      %1926 = vrot.lane.b32.xlu0 %v1861, 110
      %v1927 = vpop.permute.xlu0 %1926
      %1928 = vrot.lane.b32.xlu0 %v1862, 110
      %v1929 = vpop.permute.xlu0 %1928
      %1930 = vrot.lane.b32.xlu0 %v1863, 110
      %v1931 = vpop.permute.xlu0 %1930
      %1932 = vrot.lane.b32.xlu0 %v1864, 110
      %v1933 = vpop.permute.xlu0 %1932
      %1934 = vrot.lane.b32.xlu0 %v1865, 110
      %v1935 = vpop.permute.xlu0 %1934
      %v1936 = vsel %vm1058, %v1925, %v1927
      %v1937 = vsel %vm1058, %v1927, %v1929
      %v1938 = vsel %vm1058, %v1931, %v1933
      %v1939 = vsel %vm1058, %v1933, %v1935
      %1946 = vrot.lane.b32.xlu0 %v1860, 109
      %v1947 = vpop.permute.xlu0 %1946
      %1948 = vrot.lane.b32.xlu0 %v1861, 109
      %v1949 = vpop.permute.xlu0 %1948
      %1950 = vrot.lane.b32.xlu0 %v1862, 109
      %v1951 = vpop.permute.xlu0 %1950
      %1952 = vrot.lane.b32.xlu0 %v1863, 109
      %v1953 = vpop.permute.xlu0 %1952
      %1954 = vrot.lane.b32.xlu0 %v1864, 109
      %v1955 = vpop.permute.xlu0 %1954
      %1956 = vrot.lane.b32.xlu0 %v1865, 109
      %v1957 = vpop.permute.xlu0 %1956
      %v1958 = vsel %vm1081, %v1947, %v1949
      %v1959 = vsel %vm1081, %v1949, %v1951
      %v1960 = vsel %vm1081, %v1953, %v1955
      %v1961 = vsel %vm1081, %v1955, %v1957
      %1968 = vrot.lane.b32.xlu0 %v1860, 108
      %v1969 = vpop.permute.xlu0 %1968
      %1970 = vrot.lane.b32.xlu0 %v1861, 108
      %v1971 = vpop.permute.xlu0 %1970
      %1972 = vrot.lane.b32.xlu0 %v1862, 108
      %v1973 = vpop.permute.xlu0 %1972
      %1974 = vrot.lane.b32.xlu0 %v1863, 108
      %v1975 = vpop.permute.xlu0 %1974
      %1976 = vrot.lane.b32.xlu0 %v1864, 108
      %v1977 = vpop.permute.xlu0 %1976
      %1978 = vrot.lane.b32.xlu0 %v1865, 108
      %v1979 = vpop.permute.xlu0 %1978
      %v1980 = vsel %vm1104, %v1969, %v1971
      %v1981 = vsel %vm1104, %v1971, %v1973
      %v1982 = vsel %vm1104, %v1975, %v1977
      %v1983 = vsel %vm1104, %v1977, %v1979
      %1990 = vrot.lane.b32.xlu0 %v1860, 92
      %v1991 = vpop.permute.xlu0 %1990
      %1992 = vrot.lane.b32.xlu0 %v1861, 92
      %v1993 = vpop.permute.xlu0 %1992
      %1994 = vrot.lane.b32.xlu0 %v1862, 92
      %v1995 = vpop.permute.xlu0 %1994
      %1996 = vrot.lane.b32.xlu0 %v1863, 92
      %v1997 = vpop.permute.xlu0 %1996
      %1998 = vrot.lane.b32.xlu0 %v1864, 92
      %v1999 = vpop.permute.xlu0 %1998
      %2000 = vrot.lane.b32.xlu0 %v1865, 92
      %v2001 = vpop.permute.xlu0 %2000
      %v2002 = vsel %vm1127, %v1991, %v1993
      %v2003 = vsel %vm1127, %v1993, %v1995
      %v2004 = vsel %vm1127, %v1997, %v1999
      %v2005 = vsel %vm1127, %v1999, %v2001
      %2012 = vrot.lane.b32.xlu0 %v1860, 91
      %v2013 = vpop.permute.xlu0 %2012
      %2014 = vrot.lane.b32.xlu0 %v1861, 91
      %v2015 = vpop.permute.xlu0 %2014
      %2016 = vrot.lane.b32.xlu0 %v1862, 91
      %v2017 = vpop.permute.xlu0 %2016
      %2018 = vrot.lane.b32.xlu0 %v1863, 91
      %v2019 = vpop.permute.xlu0 %2018
      %2020 = vrot.lane.b32.xlu0 %v1864, 91
      %v2021 = vpop.permute.xlu0 %2020
      %2022 = vrot.lane.b32.xlu0 %v1865, 91
      %v2023 = vpop.permute.xlu0 %2022
      %v2024 = vsel %vm1150, %v2013, %v2015
      %v2025 = vsel %vm1150, %v2015, %v2017
      %v2026 = vsel %vm1150, %v2019, %v2021
      %v2027 = vsel %vm1150, %v2021, %v2023
      %2034 = vrot.lane.b32.xlu0 %v1860, 90
      %v2035 = vpop.permute.xlu0 %2034
      %2036 = vrot.lane.b32.xlu0 %v1861, 90
      %v2037 = vpop.permute.xlu0 %2036
      %2038 = vrot.lane.b32.xlu0 %v1862, 90
      %v2039 = vpop.permute.xlu0 %2038
      %2040 = vrot.lane.b32.xlu0 %v1863, 90
      %v2041 = vpop.permute.xlu0 %2040
      %2042 = vrot.lane.b32.xlu0 %v1864, 90
      %v2043 = vpop.permute.xlu0 %2042
      %2044 = vrot.lane.b32.xlu0 %v1865, 90
      %v2045 = vpop.permute.xlu0 %2044
      %v2046 = vsel %vm1173, %v2035, %v2037
      %v2047 = vsel %vm1173, %v2037, %v2039
      %v2048 = vsel %vm1173, %v2041, %v2043
      %v2049 = vsel %vm1173, %v2043, %v2045
      %v2056 = vld [vmem:[%s4] sm:$0xff]
      %v2057 = vld [vmem:[%s4 + $0x8] sm:$0xff]
      %v2058 = vld [vmem:[%s4 + $0x10] sm:$0xff]
      %v2059 = vld [vmem:[%s4 + $0x18] sm:$0xff]
      %2061 = vset.pattern.permute.xlu0 0
      %2062 = vperm.xlu0 %2061, %v2056
      %v2063 = vpop.permute.xlu0 %2062
      %2066 = vset.pattern.permute.xlu0 0
      %2067 = vperm.xlu0 %2066, %v2057
      %v2068 = vpop.permute.xlu0 %2067
      %2071 = vset.pattern.permute.xlu0 0
      %2072 = vperm.xlu0 %2071, %v2058
      %v2073 = vpop.permute.xlu0 %2072
      %2076 = vset.pattern.permute.xlu0 0
      %2077 = vperm.xlu0 %2076, %v2059
      %v2078 = vpop.permute.xlu0 %2077
      %v2088 = vunpack.c.l.b16 %v1866
      %v2089 = vunpack.c.h.b16 %v1866
      %v2090 = vunpack.c.l.b16 %v1867
      %v2091 = vunpack.c.l.b16 %v1868
      %v2092 = vunpack.c.h.b16 %v1868
      %v2093 = vunpack.c.l.b16 %v1869
      %v2094 = vunpack.c.l.b16 %v1870
      %v2095 = vunpack.c.h.b16 %v1870
      %v2096 = vunpack.c.l.b16 %v1871
      %v2097 = vunpack.c.l.b16 %v1872
      %v2098 = vunpack.c.h.b16 %v1872
      %v2099 = vunpack.c.l.b16 %v1873
      %v2100 = vpack.c.b16 %v2091, %v2088
      %v2101 = vpack.c.b16 %v2092, %v2089
      %v2102 = vpack.c.b16 %v2093, %v2090
      %v2103 = vpack.c.b16 %v2097, %v2094
      %v2104 = vpack.c.b16 %v2098, %v2095
      %v2105 = vpack.c.b16 %v2099, %v2096
      %v2111 = vsel %vm357, %v2102, 0
      %v2114 = vsel %vm357, %v2105, 0
      %2116 = vmatprep.subr.bf16.mxu0 %v1939
      %2117 = vmatpush1.bf16.msra.mxu0 %v1938
      %2118 = vmatprep.subr.bf16.mxu0 %v1937
      %2119 = vmatpush1.bf16.msra.mxu0 %v1936
      %2120 = vmatprep.subr.bf16.mxu0 %v1917
      %2121 = vmatpush1.bf16.msra.mxu0 %v1916
      %2122 = vmatprep.subr.bf16.mxu0 %v1915
      %2123 = vmatpush1.bf16.msra.mxu0 %v1914
      %2124 = vmatprep.subr.bf16.mxu0 %v1895
      %2125 = vmatpush1.bf16.msra.mxu0 %v1894
      %2126 = vmatprep.subr.bf16.mxu0 %v1893
      %2127 = vmatpush1.bf16.msra.mxu0 %v1892
      %2128 = vmatprep.subr.bf16.mxu0 %v1864
      %2129 = vmatpush1.bf16.msra.mxu0 %v1863
      %2130 = vmatprep.subr.bf16.mxu0 %v1861
      %2131 = vmatpush1.bf16.msra.mxu0 %v1860
      %2132 = vmatprep.subr.bf16.mxu0 %v2027
      %2133 = vmatpush2.bf16.msra.mxu0 %v2026
      %2134 = vmatprep.subr.bf16.mxu0 %v2025
      %2135 = vmatpush2.bf16.msra.mxu0 %v2024
      %2136 = vmatprep.subr.bf16.mxu0 %v2005
      %2137 = vmatpush2.bf16.msra.mxu0 %v2004
      %2138 = vmatprep.subr.bf16.mxu0 %v2003
      %2139 = vmatpush2.bf16.msra.mxu0 %v2002
      %2140 = vmatprep.subr.bf16.mxu0 %v1983
      %2141 = vmatpush2.bf16.msra.mxu0 %v1982
      %2142 = vmatprep.subr.bf16.mxu0 %v1981
      %2143 = vmatpush2.bf16.msra.mxu0 %v1980
      %2144 = vmatprep.subr.bf16.mxu0 %v1961
      %2145 = vmatpush2.bf16.msra.mxu0 %v1960
      %2146 = vmatprep.subr.bf16.mxu0 %v1959
      %2147 = vmatpush2.bf16.msra.mxu0 %v1958
      %2148 = vmatprep.mubr.bf16.mxu0 %v2101
      %2149 = vmatmul.mubr.bf16.gmra.mxu0 %v2100
      %v2150 = vpop.f32.mrf.mxu0
      %v2151 = vadd.f32 %v2063, %v2150
      %v2152 = vpop.f32.mrf.mxu0
      %v2153 = vadd.f32 %v2063, %v2152
      %v2154 = vpop.f32.mrf.mxu0
      %v2155 = vadd.f32 %v2068, %v2154
      %v2156 = vpop.f32.mrf.mxu0
      %v2157 = vadd.f32 %v2068, %v2156
      %2158 = vmatprep.mubr.bf16.mxu0 %v2104
      %2159 = vmatmul.mubr.bf16.gmra.mxu0 %v2103
      %v2160 = vpop.f32.mrf.mxu0
      %v2161 = vadd.f32 %v2073, %v2160
      %v2162 = vpop.f32.mrf.mxu0
      %v2163 = vadd.f32 %v2073, %v2162
      %v2164 = vpop.f32.mrf.mxu0
      %v2165 = vadd.f32 %v2078, %v2164
      %v2166 = vpop.f32.mrf.mxu0
      %v2167 = vadd.f32 %v2078, %v2166
      %2168 = vdwg.mxu0
      %2169 = vmatprep.subr.bf16.mxu0 0
      %2170 = vmatpush1.bf16.msra.mxu0 0
      %2171 = vmatprep.subr.bf16.mxu0 0
      %2172 = vmatpush1.bf16.msra.mxu0 0
      %2173 = vmatprep.subr.bf16.mxu0 0
      %2174 = vmatpush1.bf16.msra.mxu0 0
      %2175 = vmatprep.subr.bf16.mxu0 0
      %2176 = vmatpush1.bf16.msra.mxu0 0
      %2177 = vmatprep.subr.bf16.mxu0 0
      %2178 = vmatpush1.bf16.msra.mxu0 0
      %2179 = vmatprep.subr.bf16.mxu0 0
      %2180 = vmatpush1.bf16.msra.mxu0 0
      %2181 = vmatprep.subr.bf16.mxu0 %v2049
      %2182 = vmatpush1.bf16.msra.mxu0 %v2048
      %2183 = vmatprep.subr.bf16.mxu0 %v2047
      %2184 = vmatpush1.bf16.msra.mxu0 %v2046
      %2185 = vmatprep.subr.bf16.mxu0 0
      %2186 = vmatpush2.bf16.msra.mxu0 0
      %2187 = vmatprep.subr.bf16.mxu0 0
      %2188 = vmatpush2.bf16.msra.mxu0 0
      %2189 = vmatprep.subr.bf16.mxu0 0
      %2190 = vmatpush2.bf16.msra.mxu0 0
      %2191 = vmatprep.subr.bf16.mxu0 0
      %2192 = vmatpush2.bf16.msra.mxu0 0
      %2193 = vmatprep.subr.bf16.mxu0 0
      %2194 = vmatpush2.bf16.msra.mxu0 0
      %2195 = vmatprep.subr.bf16.mxu0 0
      %2196 = vmatpush2.bf16.msra.mxu0 0
      %2197 = vmatprep.subr.bf16.mxu0 0
      %2198 = vmatpush2.bf16.msra.mxu0 0
      %2199 = vmatprep.subr.bf16.mxu0 0
      %2200 = vmatpush2.bf16.msra.mxu0 0
      %2201 = vmatprep.mubr.bf16.mxu0 0
      %2202 = vmatmul.mubr.bf16.gmra.mxu0 %v2111
      %v2203 = vpop.f32.mrf.mxu0
      %v2204 = vadd.f32 %v2151, %v2203
      %v2205 = vpop.f32.mrf.mxu0
      %v2206 = vadd.f32 %v2153, %v2205
      %v2207 = vpop.f32.mrf.mxu0
      %v2208 = vadd.f32 %v2155, %v2207
      %v2209 = vpop.f32.mrf.mxu0
      %v2210 = vadd.f32 %v2157, %v2209
      %2211 = vmatprep.mubr.bf16.mxu0 0
      %2212 = vmatmul.mubr.bf16.gmra.mxu0 %v2114
      %v2213 = vpop.f32.mrf.mxu0
      %v2214 = vadd.f32 %v2161, %v2213
      %v2215 = vpop.f32.mrf.mxu0
      %v2216 = vadd.f32 %v2163, %v2215
      %v2217 = vpop.f32.mrf.mxu0
      %v2218 = vadd.f32 %v2165, %v2217
      %v2219 = vpop.f32.mrf.mxu0
      %v2220 = vadd.f32 %v2167, %v2219
      %2221 = vdwg.mxu0
      %2222 = vmatprep.subr.bf16.mxu0 0
      %2223 = vmatpush1.bf16.msra.mxu0 %v1935
      %2224 = vmatprep.subr.bf16.mxu0 0
      %2225 = vmatpush1.bf16.msra.mxu0 %v1929
      %2226 = vmatprep.subr.bf16.mxu0 0
      %2227 = vmatpush1.bf16.msra.mxu0 %v1913
      %2228 = vmatprep.subr.bf16.mxu0 0
      %2229 = vmatpush1.bf16.msra.mxu0 %v1907
      %2230 = vmatprep.subr.bf16.mxu0 0
      %2231 = vmatpush1.bf16.msra.mxu0 %v1891
      %2232 = vmatprep.subr.bf16.mxu0 0
      %2233 = vmatpush1.bf16.msra.mxu0 %v1885
      %2234 = vmatprep.subr.bf16.mxu0 0
      %2235 = vmatpush1.bf16.msra.mxu0 %v1865
      %2236 = vmatprep.subr.bf16.mxu0 0
      %2237 = vmatpush1.bf16.msra.mxu0 %v1862
      %2238 = vmatprep.subr.bf16.mxu0 0
      %2239 = vmatpush2.bf16.msra.mxu0 %v2023
      %2240 = vmatprep.subr.bf16.mxu0 0
      %2241 = vmatpush2.bf16.msra.mxu0 %v2017
      %2242 = vmatprep.subr.bf16.mxu0 0
      %2243 = vmatpush2.bf16.msra.mxu0 %v2001
      %2244 = vmatprep.subr.bf16.mxu0 0
      %2245 = vmatpush2.bf16.msra.mxu0 %v1995
      %2246 = vmatprep.subr.bf16.mxu0 0
      %2247 = vmatpush2.bf16.msra.mxu0 %v1979
      %2248 = vmatprep.subr.bf16.mxu0 0
      %2249 = vmatpush2.bf16.msra.mxu0 %v1973
      %2250 = vmatprep.subr.bf16.mxu0 0
      %2251 = vmatpush2.bf16.msra.mxu0 %v1957
      %2252 = vmatprep.subr.bf16.mxu0 0
      %2253 = vmatpush2.bf16.msra.mxu0 %v1951
      %2254 = vmatprep.mubr.bf16.mxu0 %v2101
      %2255 = vmatmul.mubr.bf16.gmra.mxu0 %v2100
      %v2256 = vpop.f32.mrf.mxu0
      %v2257 = vadd.f32 %v2063, %v2256
      %v2258 = vpop.f32.mrf.mxu0
      %v2259 = vpop.f32.mrf.mxu0
      %v2260 = vadd.f32 %v2068, %v2259
      %v2261 = vpop.f32.mrf.mxu0
      %2262 = vmatprep.mubr.bf16.mxu0 %v2104
      %2263 = vmatmul.mubr.bf16.gmra.mxu0 %v2103
      %v2264 = vpop.f32.mrf.mxu0
      %v2265 = vadd.f32 %v2073, %v2264
      %v2266 = vpop.f32.mrf.mxu0
      %v2267 = vpop.f32.mrf.mxu0
      %v2268 = vadd.f32 %v2078, %v2267
      %v2269 = vpop.f32.mrf.mxu0
      %2270 = vdwg.mxu0
      %2271 = vmatprep.subr.bf16.mxu0 0
      %2272 = vmatpush1.bf16.msra.mxu0 0
      %2273 = vmatprep.subr.bf16.mxu0 0
      %2274 = vmatpush1.bf16.msra.mxu0 0
      %2275 = vmatprep.subr.bf16.mxu0 0
      %2276 = vmatpush1.bf16.msra.mxu0 0
      %2277 = vmatprep.subr.bf16.mxu0 0
      %2278 = vmatpush1.bf16.msra.mxu0 0
      %2279 = vmatprep.subr.bf16.mxu0 0
      %2280 = vmatpush1.bf16.msra.mxu0 0
      %2281 = vmatprep.subr.bf16.mxu0 0
      %2282 = vmatpush1.bf16.msra.mxu0 0
      %2283 = vmatprep.subr.bf16.mxu0 0
      %2284 = vmatpush1.bf16.msra.mxu0 %v2045
      %2285 = vmatprep.subr.bf16.mxu0 0
      %2286 = vmatpush1.bf16.msra.mxu0 %v2039
      %2287 = vmatprep.subr.bf16.mxu0 0
      %2288 = vmatpush2.bf16.msra.mxu0 0
      %2289 = vmatprep.subr.bf16.mxu0 0
      %2290 = vmatpush2.bf16.msra.mxu0 0
      %2291 = vmatprep.subr.bf16.mxu0 0
      %2292 = vmatpush2.bf16.msra.mxu0 0
      %2293 = vmatprep.subr.bf16.mxu0 0
      %2294 = vmatpush2.bf16.msra.mxu0 0
      %2295 = vmatprep.subr.bf16.mxu0 0
      %2296 = vmatpush2.bf16.msra.mxu0 0
      %2297 = vmatprep.subr.bf16.mxu0 0
      %2298 = vmatpush2.bf16.msra.mxu0 0
      %2299 = vmatprep.subr.bf16.mxu0 0
      %2300 = vmatpush2.bf16.msra.mxu0 0
      %2301 = vmatprep.subr.bf16.mxu0 0
      %2302 = vmatpush2.bf16.msra.mxu0 0
      %2303 = vmatprep.mubr.bf16.mxu0 0
      %2304 = vmatmul.mubr.bf16.gmra.mxu0 %v2111
      %v2305 = vpop.f32.mrf.mxu0
      %v2306 = vadd.f32 %v2257, %v2305
      %v2307 = vpop.f32.mrf.mxu0
      %v2308 = vpop.f32.mrf.mxu0
      %v2309 = vadd.f32 %v2260, %v2308
      %v2310 = vpop.f32.mrf.mxu0
      %2311 = vmatprep.mubr.bf16.mxu0 0
      %2312 = vmatmul.mubr.bf16.gmra.mxu0 %v2114
      %v2313 = vpop.f32.mrf.mxu0
      %v2314 = vadd.f32 %v2265, %v2313
      %v2315 = vpop.f32.mrf.mxu0
      %v2316 = vpop.f32.mrf.mxu0
      %v2317 = vadd.f32 %v2268, %v2316
      %v2318 = vpop.f32.mrf.mxu0
      %2319 = vdwg.mxu0
      %v2320 = vmul.f32 %v2204, %v332
      %v2321 = vmul.f32 %v2206, %v336
      %v2322 = vmul.f32 %v2306, %v340
      %v2323 = vmul.f32 %v2208, %v332
      %v2324 = vmul.f32 %v2210, %v336
      %v2325 = vmul.f32 %v2309, %v340
      %v2326 = vmul.f32 %v2214, %v332
      %v2327 = vmul.f32 %v2216, %v336
      %v2328 = vmul.f32 %v2314, %v340
      %v2329 = vmul.f32 %v2218, %v332
      %v2330 = vmul.f32 %v2220, %v336
      %v2331 = vmul.f32 %v2317, %v340
      %v2332 = vadd.f32 %v2320, %v2321
      %v2333 = vsel %vm357, %v2322, 0.0
      %v2334 = vadd.f32 %v2332, %v2333
      %2335 = vadd.xlane.f32.xlu0 %v2334
      %v2336 = vpop.xlane.xlu0 %2335
      %v2337 = vadd.f32 %v2323, %v2324
      %v2338 = vsel %vm357, %v2325, 0.0
      %v2339 = vadd.f32 %v2337, %v2338
      %2340 = vadd.xlane.f32.xlu0 %v2339
      %v2341 = vpop.xlane.xlu0 %2340
      %v2342 = vadd.f32 %v2326, %v2327
      %v2343 = vsel %vm357, %v2328, 0.0
      %v2344 = vadd.f32 %v2342, %v2343
      %2345 = vadd.xlane.f32.xlu0 %v2344
      %v2346 = vpop.xlane.xlu0 %2345
      %v2347 = vadd.f32 %v2329, %v2330
      %v2348 = vsel %vm357, %v2331, 0.0
      %v2349 = vadd.f32 %v2347, %v2348
      %2350 = vadd.xlane.f32.xlu0 %v2349
      %v2351 = vpop.xlane.xlu0 %2350
      %v2352 = vmul.f32 %v2336, 0.00390625
      %v2353 = vmul.f32 %v2341, 0.00390625
      %v2354 = vmul.f32 %v2346, 0.00390625
      %v2355 = vmul.f32 %v2351, 0.00390625
      %v2356 = vsub.f32 %v2204, %v2352
      %v2357 = vsub.f32 %v2206, %v2352
      %v2358 = vsub.f32 %v2306, %v2352
      %v2359 = vsub.f32 %v2208, %v2353
      %v2360 = vsub.f32 %v2210, %v2353
      %v2361 = vsub.f32 %v2309, %v2353
      %v2362 = vsub.f32 %v2214, %v2354
      %v2363 = vsub.f32 %v2216, %v2354
      %v2364 = vsub.f32 %v2314, %v2354
      %v2365 = vsub.f32 %v2218, %v2355
      %v2366 = vsub.f32 %v2220, %v2355
      %v2367 = vsub.f32 %v2317, %v2355
      %v2368 = vmul.f32 %v2356, %v2356
      %v2369 = vmul.f32 %v2357, %v2357
      %v2370 = vmul.f32 %v2358, %v2358
      %v2371 = vmul.f32 %v2359, %v2359
      %v2372 = vmul.f32 %v2360, %v2360
      %v2373 = vmul.f32 %v2361, %v2361
      %v2374 = vmul.f32 %v2362, %v2362
      %v2375 = vmul.f32 %v2363, %v2363
      %v2376 = vmul.f32 %v2364, %v2364
      %v2377 = vmul.f32 %v2365, %v2365
      %v2378 = vmul.f32 %v2366, %v2366
      %v2379 = vmul.f32 %v2367, %v2367
      %v2380 = vmul.f32 %v2368, %v332
      %v2381 = vmul.f32 %v2369, %v336
      %v2382 = vmul.f32 %v2370, %v340
      %v2383 = vmul.f32 %v2371, %v332
      %v2384 = vmul.f32 %v2372, %v336
      %v2385 = vmul.f32 %v2373, %v340
      %v2386 = vmul.f32 %v2374, %v332
      %v2387 = vmul.f32 %v2375, %v336
      %v2388 = vmul.f32 %v2376, %v340
      %v2389 = vmul.f32 %v2377, %v332
      %v2390 = vmul.f32 %v2378, %v336
      %v2391 = vmul.f32 %v2379, %v340
      %v2392 = vadd.f32 %v2380, %v2381
      %v2393 = vsel %vm357, %v2382, 0.0
      %v2394 = vadd.f32 %v2392, %v2393
      %2395 = vadd.xlane.f32.xlu0 %v2394
      %v2396 = vpop.xlane.xlu0 %2395
      %v2397 = vadd.f32 %v2383, %v2384
      %v2398 = vsel %vm357, %v2385, 0.0
      %v2399 = vadd.f32 %v2397, %v2398
      %2400 = vadd.xlane.f32.xlu0 %v2399
      %v2401 = vpop.xlane.xlu0 %2400
      %v2402 = vadd.f32 %v2386, %v2387
      %v2403 = vsel %vm357, %v2388, 0.0
      %v2404 = vadd.f32 %v2402, %v2403
      %2405 = vadd.xlane.f32.xlu0 %v2404
      %v2406 = vpop.xlane.xlu0 %2405
      %v2407 = vadd.f32 %v2389, %v2390
      %v2408 = vsel %vm357, %v2391, 0.0
      %v2409 = vadd.f32 %v2407, %v2408
      %2410 = vadd.xlane.f32.xlu0 %v2409
      %v2411 = vpop.xlane.xlu0 %2410
      %v2412 = vmul.f32 %v2396, 0.00390625
      %v2413 = vmul.f32 %v2401, 0.00390625
      %v2414 = vmul.f32 %v2406, 0.00390625
      %v2415 = vmul.f32 %v2411, 0.00390625
      %v2416 = vadd.f32 %v2412, 1e-05
      %v2417 = vadd.f32 %v2413, 1e-05
      %v2418 = vadd.f32 %v2414, 1e-05
      %v2419 = vadd.f32 %v2415, 1e-05
      %v2420 = vrsqrt.pop %v2416
      %v2421 = vrsqrt.pop %v2417
      %v2422 = vrsqrt.pop %v2418
      %v2423 = vrsqrt.pop %v2419
      %v2424 = vmul.f32 %v2356, %v2420
      %v2425 = vmul.f32 %v2357, %v2420
      %v2426 = vmul.f32 %v2358, %v2420
      %v2427 = vmul.f32 %v2359, %v2421
      %v2428 = vmul.f32 %v2360, %v2421
      %v2429 = vmul.f32 %v2361, %v2421
      %v2430 = vmul.f32 %v2362, %v2422
      %v2431 = vmul.f32 %v2363, %v2422
      %v2432 = vmul.f32 %v2364, %v2422
      %v2433 = vmul.f32 %v2365, %v2423
      %v2434 = vmul.f32 %v2366, %v2423
      %v2435 = vmul.f32 %v2367, %v2423
      %v2436 = vadd.f32 %v606, %v2424
      %v2437 = vadd.f32 %v607, %v2425
      %v2438 = vadd.f32 %v608, %v2426
      %v2439 = vadd.f32 %v609, %v2427
      %v2440 = vadd.f32 %v610, %v2428
      %v2441 = vadd.f32 %v611, %v2429
      %v2442 = vadd.f32 %v612, %v2430
      %v2443 = vadd.f32 %v613, %v2431
      %v2444 = vadd.f32 %v614, %v2432
      %v2445 = vadd.f32 %v615, %v2433
      %v2446 = vadd.f32 %v616, %v2434
      %v2447 = vadd.f32 %v617, %v2435
      %v2448 = vpack.c.bf16 %v2439, %v2436
      %v2449 = vpack.c.bf16 %v2440, %v2437
      %v2450 = vpack.c.bf16 %v2441, %v2438
      %v2451 = vpack.c.bf16 %v2445, %v2442
      %v2452 = vpack.c.bf16 %v2446, %v2443
      %v2453 = vpack.c.bf16 %v2447, %v2444
      %v2460 = vunpack.c.l.b16 %v2448
      %v2461 = vunpack.c.l.b16 %v2449
      %v2462 = vunpack.c.l.b16 %v2450
      %v2463 = vunpack.c.h.b16 %v2448
      %v2464 = vunpack.c.h.b16 %v2449
      %v2465 = vunpack.c.h.b16 %v2450
      %v2466 = vunpack.c.l.b16 %v2451
      %v2467 = vunpack.c.l.b16 %v2452
      %v2468 = vunpack.c.l.b16 %v2453
      %v2469 = vunpack.c.h.b16 %v2451
      %v2470 = vunpack.c.h.b16 %v2452
      %v2471 = vunpack.c.h.b16 %v2453
      %v2472 = vpack.c.b16 %v2461, %v2460
      %v2473 = vpack.c.b16 %v2462, %v2462
      %v2474 = vpack.c.b16 %v2464, %v2463
      %v2475 = vpack.c.b16 %v2465, %v2465
      %v2476 = vpack.c.b16 %v2467, %v2466
      %v2477 = vpack.c.b16 %v2468, %v2468
      %v2478 = vpack.c.b16 %v2470, %v2469
      %v2479 = vpack.c.b16 %v2471, %v2471
      %2488 = vst [vmem:[%s305] sm:$0xff] %v2472
      %vm2489 = vcmask 257024
      %2490 = vst.msk [vmem:[%s305 + $0x8] sm:$0xf] %vm2489, %v2473
      %2491 = vst [vmem:[%s305 + $0xc] sm:$0xff] %v2474
      %2492 = vst.msk [vmem:[%s305 + $0x14] sm:$0xf] %vm2489, %v2475
      %2493 = vst [vmem:[%s305 + $0x18] sm:$0xff] %v2476
      %2494 = vst.msk [vmem:[%s305 + $0x20] sm:$0xf] %vm2489, %v2477
      %2495 = vst [vmem:[%s305 + $0x24] sm:$0xff] %v2478
      %2496 = vst.msk [vmem:[%s305 + $0x2c] sm:$0xf] %vm2489, %v2479
      %p2497 = scmp.lt.s32.totalorder %s19, 1
      %s2498 = scalar_select %p2497, %s19, 1
      %s2499 = smul.addr %s2498, 12
      %s2500 = smul.addr %s2499, 4
      %s2501 = scalar_lea.vmem %s8, %s2500
      // Predicated region
      $region53: #{decoder2d_forward.8} parent=51 // pred_check
        %p2502 = pneg %p210
      $region54: #{decoder2d_forward.8} parent=51 // pred_check_branch
        %2504 = sbr.rel (%p2502) target = $region56
      $region55: #{decoder2d_forward.8} parent=51 // pred_region
        _
      $region56: #{decoder2d_forward.8} parent=51 // pred_fallthru
        _
    $region52: #{decoder2d_forward.8} parent=5 // pred_fallthru
      _
    %p2505 = scmp.le.s32.totalorder 2, %s14
    // Predicated region
    $region57: #{decoder2d_forward.8} parent=5 // pred_check
      %p2506 = pneg %p2505
    $region58: #{decoder2d_forward.8} parent=5 // pred_check_branch
      %2508 = sbr.rel (%p2506) target = $region60
    $region59: #{decoder2d_forward.8} parent=5 // pred_region
      %s2509 = ssub.s32 %s14, 2
      // Predicated region
      $region61: #{decoder2d_forward.8} parent=59 // pred_check
        %p2510 = pneg %p216
      $region62: #{decoder2d_forward.8} parent=59 // pred_check_branch
        %2512 = sbr.rel (%p2510) target = $region64
      $region63: #{decoder2d_forward.8} parent=59 // pred_region
        %p2513 = scmp.lt.s32.totalorder %s20, 1
        %s2514 = scalar_select %p2513, %s20, 1
        %s2515 = smul.addr %s2514, 12
        %s2516 = smul.addr %s2515, 4
        %s2517 = scalar_lea.vmem %s8, %s2516
      $region64: #{decoder2d_forward.8} parent=59 // pred_fallthru
        _
    $region60: #{decoder2d_forward.8} parent=5 // pred_fallthru
      _
  $region6: #{decoder2d_forward.8} parent=0 // loop_footer
    %s18 = sadd.s32 1, %s14
  $region7: #{decoder2d_forward.8} parent=0 // loop_footer_branch
    %13 = sbr.rel target = $region3
  $region8: #{decoder2d_forward.8} parent=0 // loop_exit
    _

// kernel: decoder2d_forward.12
$region0: #{decoder2d_forward.12}
  #allocation0 [shape = 'u32[]', space=smem, size = 0x4, offset = 0x4, fixed_abs, tag = 'smem constant byte address 0x4 - core index']
  #allocation1 [shape = 'u32[144,128]{1,0:T(1,128)}', space=vmem, size = 0x12000, scoped, tag = 'internal scratch']
  %s0 = inlined_call_operand.vmem [shape: bf16[2,32,676], index: 0, kind: input, shape index: {}]
  %s1 = inlined_call_operand.vmem [shape: bf16[2,32,676], index: 1, kind: output, shape index: {}]
  %s2 = sld [smem:[#allocation0]]
  $region37: #{decoder2d_forward.12} parent=0
    _
  %s4 = ssub.s32 1, %s2
  %s5 = scalar_select 0, %s4, %s2
  loop: start=0, step=1, limit=4
  $region2: #{decoder2d_forward.12} parent=0 // loop_pre_header
    _
  $region3: #{decoder2d_forward.12} parent=0 // loop_header
    %s7 = sphi 0, %s11
    %p8 = scmp.ge.s32.totalorder %s7, 4
    %s17 = sphi 0, %s19
    %s20 = sphi 0, %s17
    %s21 = sphi 0, %s20
    %s37 = sphi 0, %s21
    %s43 = sphi 0, %s45
    %s46 = sphi 0, %s43
    %s47 = sphi 0, %s46
    %s63 = sphi 0, %s47
  $region4: #{decoder2d_forward.12} parent=0 // loop_header_branch
    %10 = sbr.rel (%p8) target = $region8
  $region5: #{decoder2d_forward.12} parent=0 // loop_body
    %s12 = ssub.s32 %s7, 1
    %s13 = ssub.s32 %s7, 2
    %s14 = sadd.s32 %s7, 1
    %s15 = ssub.s32 %s7, %s14
    %p16 = scmp.eq.s32.totalorder %s15, 0
    %s18 = sadd.s32 %s17, 1
    %s19 = scalar_select %p16, %s17, %s18
    %p22 = pneg %p16
    %p23 = scmp.eq.s32.totalorder %s7, 1
    %p24 = por %p22, %p23
    %p25 = scmp.ne.s32.totalorder %s17, %s20
    %p26 = scmp.eq.s32.totalorder %s7, 0
    %p27 = por %p25, %p26
    %p28 = scmp.ne.s32.totalorder %s17, %s20
    %p29 = scmp.eq.s32.totalorder %s12, 1
    %p30 = por %p28, %p29
    %p31 = scmp.ne.s32.totalorder %s20, %s21
    %p32 = scmp.eq.s32.totalorder %s12, 0
    %p33 = por %p31, %p32
    %p34 = scmp.ne.s32.totalorder %s20, %s21
    %p35 = scmp.eq.s32.totalorder %s13, 1
    %p36 = por %p34, %p35
    %p38 = scmp.ne.s32.totalorder %s21, %s37
    %p39 = scmp.eq.s32.totalorder %s13, 0
    %p40 = por %p38, %p39
    %s41 = ssub.s32 %s7, %s14
    %p42 = scmp.eq.s32.totalorder %s41, 0
    %s44 = sadd.s32 %s43, 1
    %s45 = scalar_select %p42, %s43, %s44
    %p48 = pneg %p42
    %p49 = scmp.eq.s32.totalorder %s7, 1
    %p50 = por %p48, %p49
    %p51 = scmp.ne.s32.totalorder %s43, %s46
    %p52 = scmp.eq.s32.totalorder %s7, 0
    %p53 = por %p51, %p52
    %p54 = scmp.ne.s32.totalorder %s43, %s46
    %p55 = scmp.eq.s32.totalorder %s12, 1
    %p56 = por %p54, %p55
    %p57 = scmp.ne.s32.totalorder %s46, %s47
    %p58 = scmp.eq.s32.totalorder %s12, 0
    %p59 = por %p57, %p58
    %p60 = scmp.ne.s32.totalorder %s46, %s47
    %p61 = scmp.eq.s32.totalorder %s13, 1
    %p62 = por %p60, %p61
    %p64 = scmp.ne.s32.totalorder %s47, %s63
    %p65 = scmp.eq.s32.totalorder %s13, 0
    %p66 = por %p64, %p65
    %p67 = scmp.le.s32.totalorder 1, %s7
    %p68 = scmp.lt.s32.totalorder %s7, 3
    %p69 = pnand %p67, %p68
    %p70 = pneg %p69
    // Predicated region
    $region9: #{decoder2d_forward.12} parent=5 // pred_check
      _
    $region10: #{decoder2d_forward.12} parent=5 // pred_check_branch
      %72 = sbr.rel (%p69) target = $region12
    $region11: #{decoder2d_forward.12} parent=5 // pred_region
      %s73 = ssub.s32 %s7, 1
    $region12: #{decoder2d_forward.12} parent=5 // pred_fallthru
      _
    %p74 = scmp.lt.s32.totalorder %s7, 2
    // Predicated region
    $region13: #{decoder2d_forward.12} parent=5 // pred_check
      %p75 = pneg %p74
    $region14: #{decoder2d_forward.12} parent=5 // pred_check_branch
      %77 = sbr.rel (%p75) target = $region16
    $region15: #{decoder2d_forward.12} parent=5 // pred_region
      // Predicated region
      $region17: #{decoder2d_forward.12} parent=15 // pred_check
        %p78 = pneg %p27
      $region18: #{decoder2d_forward.12} parent=15 // pred_check_branch
        %80 = sbr.rel (%p78) target = $region20
      $region19: #{decoder2d_forward.12} parent=15 // pred_region
        %p81 = scmp.lt.s32.totalorder %s7, 1
        %s82 = scalar_select %p81, %s7, 1
        %s83 = smul.addr %s82, 24
        %s84 = smul.addr %s83, 4
        %s85 = scalar_lea.vmem %s0, %s84
      $region20: #{decoder2d_forward.12} parent=15 // pred_fallthru
        _
    $region16: #{decoder2d_forward.12} parent=5 // pred_fallthru
      _
    %p86 = scmp.le.s32.totalorder 1, %s7
    %p87 = scmp.lt.s32.totalorder %s7, 3
    %p88 = pnand %p86, %p87
    %p89 = pneg %p88
    // Predicated region
    $region21: #{decoder2d_forward.12} parent=5 // pred_check
      _
    $region22: #{decoder2d_forward.12} parent=5 // pred_check_branch
      %91 = sbr.rel (%p88) target = $region24
    $region23: #{decoder2d_forward.12} parent=5 // pred_region
      %s92 = ssub.s32 %s7, 1
      %p93 = scmp.lt.s32.totalorder %s12, 1
      %s94 = scalar_select %p93, %s12, 1
      %s95 = smul.addr %s94, 24
      %s96 = smul.addr %s95, 4
      %s97 = scalar_lea.vmem %s0, %s96
      %p98 = pneg %p33
      %p99 = pneg %p30
      %p100 = pneg %p59
      %p101 = pneg %p56
      %p102 = scmp.lt.s32.totalorder %s12, 1
      %s103 = scalar_select %p102, %s12, 1
      %s104 = smul.addr %s103, 24
      %s105 = smul.addr %s104, 4
      %s106 = scalar_lea.vmem %s1, %s105
      %p107 = scmp.lt.s32.totalorder %s12, 1
      %s108 = scalar_select %p107, %s12, 1
      %s109 = smul.addr %s108, 24
      %s110 = smul.addr %s109, 4
      %s111 = scalar_lea.vmem %s0, %s110
      %p112 = scmp.lt.s32.totalorder %s12, 1
      %s113 = scalar_select %p112, %s12, 1
      %s114 = smul.addr %s113, 24
      %s115 = smul.addr %s114, 4
      %s116 = scalar_lea.vmem %s1, %s115
      %v117 = vld [vmem:[%s111] sm:$0xff]
      %v118 = vld [vmem:[%s111 + $0x8] sm:$0xff]
      %v119 = vld [vmem:[%s111 + $0x10] sm:$0xff]
      %v120 = vld [vmem:[%s111 + $0x18] sm:$0xff]
      %v121 = vld [vmem:[%s111 + $0x20] sm:$0xff]
      %v122 = vld [vmem:[%s111 + $0x28] sm:$0xff]
      %v123 = vld [vmem:[%s111 + $0x30] sm:$0xff]
      %v124 = vld [vmem:[%s111 + $0x38] sm:$0xff]
      %v125 = vld [vmem:[%s111 + $0x40] sm:$0xff]
      %v126 = vld [vmem:[%s111 + $0x48] sm:$0xff]
      %v127 = vld [vmem:[%s111 + $0x50] sm:$0xff]
      %v128 = vld [vmem:[%s111 + $0x58] sm:$0xff]
      %v129 = vunpack.c.l.bf16 %v117
      %v130 = vunpack.c.h.bf16 %v117
      %v131 = vunpack.c.l.bf16 %v118
      %v132 = vunpack.c.h.bf16 %v118
      %v133 = vunpack.c.l.bf16 %v119
      %v134 = vunpack.c.h.bf16 %v119
      %v135 = vunpack.c.l.bf16 %v120
      %v136 = vunpack.c.h.bf16 %v120
      %v137 = vunpack.c.l.bf16 %v121
      %v138 = vunpack.c.h.bf16 %v121
      %v139 = vunpack.c.l.bf16 %v122
      %v140 = vunpack.c.h.bf16 %v122
      %v141 = vunpack.c.l.bf16 %v123
      %v142 = vunpack.c.h.bf16 %v123
      %v143 = vunpack.c.l.bf16 %v124
      %v144 = vunpack.c.h.bf16 %v124
      %v145 = vunpack.c.l.bf16 %v125
      %v146 = vunpack.c.h.bf16 %v125
      %v147 = vunpack.c.l.bf16 %v126
      %v148 = vunpack.c.h.bf16 %v126
      %v149 = vunpack.c.l.bf16 %v127
      %v150 = vunpack.c.h.bf16 %v127
      %v151 = vunpack.c.l.bf16 %v128
      %v152 = vunpack.c.h.bf16 %v128
      %v153 = vadd.f32 %v129, %v130
      %v154 = vadd.f32 %v153, %v131
      %v155 = vadd.f32 %v154, %v132
      %v156 = vadd.f32 %v155, %v133
      %vm157 = vcmask 293888
      %v158 = vsel %vm157, %v134, 0.0
      %v159 = vadd.f32 %v156, %v158
      %160 = vadd.xlane.f32.xlu0 %v159
      %v161 = vpop.xlane.xlu0 %160
      %v162 = vadd.f32 %v135, %v136
      %v163 = vadd.f32 %v162, %v137
      %v164 = vadd.f32 %v163, %v138
      %v165 = vadd.f32 %v164, %v139
      %v166 = vsel %vm157, %v140, 0.0
      %v167 = vadd.f32 %v165, %v166
      %168 = vadd.xlane.f32.xlu0 %v167
      %v169 = vpop.xlane.xlu0 %168
      %v170 = vadd.f32 %v141, %v142
      %v171 = vadd.f32 %v170, %v143
      %v172 = vadd.f32 %v171, %v144
      %v173 = vadd.f32 %v172, %v145
      %v174 = vsel %vm157, %v146, 0.0
      %v175 = vadd.f32 %v173, %v174
      %176 = vadd.xlane.f32.xlu0 %v175
      %v177 = vpop.xlane.xlu0 %176
      %v178 = vadd.f32 %v147, %v148
      %v179 = vadd.f32 %v178, %v149
      %v180 = vadd.f32 %v179, %v150
      %v181 = vadd.f32 %v180, %v151
      %v182 = vsel %vm157, %v152, 0.0
      %v183 = vadd.f32 %v181, %v182
      %184 = vadd.xlane.f32.xlu0 %v183
      %v185 = vpop.xlane.xlu0 %184
      %v186 = vrcp.pop 676.0
      %v187 = vmul.f32 %v161, %v186
      %v188 = vmul.f32 %v169, %v186
      %v189 = vmul.f32 %v177, %v186
      %v190 = vmul.f32 %v185, %v186
      %v191 = vsub.f32 %v129, %v187
      %v192 = vsub.f32 %v130, %v187
      %v193 = vsub.f32 %v131, %v187
      %v194 = vsub.f32 %v132, %v187
      %v195 = vsub.f32 %v133, %v187
      %v196 = vsub.f32 %v134, %v187
      %v197 = vsub.f32 %v135, %v188
      %v198 = vsub.f32 %v136, %v188
      %v199 = vsub.f32 %v137, %v188
      %v200 = vsub.f32 %v138, %v188
      %v201 = vsub.f32 %v139, %v188
      %v202 = vsub.f32 %v140, %v188
      %v203 = vsub.f32 %v141, %v189
      %v204 = vsub.f32 %v142, %v189
      %v205 = vsub.f32 %v143, %v189
      %v206 = vsub.f32 %v144, %v189
      %v207 = vsub.f32 %v145, %v189
      %v208 = vsub.f32 %v146, %v189
      %v209 = vsub.f32 %v147, %v190
      %v210 = vsub.f32 %v148, %v190
      %v211 = vsub.f32 %v149, %v190
      %v212 = vsub.f32 %v150, %v190
      %v213 = vsub.f32 %v151, %v190
      %v214 = vsub.f32 %v152, %v190
      %v215 = vmul.f32 %v191, %v191
      %v216 = vmul.f32 %v192, %v192
      %v217 = vmul.f32 %v193, %v193
      %v218 = vmul.f32 %v194, %v194
      %v219 = vmul.f32 %v195, %v195
      %v220 = vmul.f32 %v196, %v196
      %v221 = vmul.f32 %v197, %v197
      %v222 = vmul.f32 %v198, %v198
      %v223 = vmul.f32 %v199, %v199
      %v224 = vmul.f32 %v200, %v200
      %v225 = vmul.f32 %v201, %v201
      %v226 = vmul.f32 %v202, %v202
      %v227 = vmul.f32 %v203, %v203
      %v228 = vmul.f32 %v204, %v204
      %v229 = vmul.f32 %v205, %v205
      %v230 = vmul.f32 %v206, %v206
      %v231 = vmul.f32 %v207, %v207
      %v232 = vmul.f32 %v208, %v208
      %v233 = vmul.f32 %v209, %v209
      %v234 = vmul.f32 %v210, %v210
      %v235 = vmul.f32 %v211, %v211
      %v236 = vmul.f32 %v212, %v212
      %v237 = vmul.f32 %v213, %v213
      %v238 = vmul.f32 %v214, %v214
      %v239 = vadd.f32 %v215, %v216
      %v240 = vadd.f32 %v239, %v217
      %v241 = vadd.f32 %v240, %v218
      %v242 = vadd.f32 %v241, %v219
      %v243 = vsel %vm157, %v220, 0.0
      %v244 = vadd.f32 %v242, %v243
      %245 = vadd.xlane.f32.xlu0 %v244
      %v246 = vpop.xlane.xlu0 %245
      %v247 = vadd.f32 %v221, %v222
      %v248 = vadd.f32 %v247, %v223
      %v249 = vadd.f32 %v248, %v224
      %v250 = vadd.f32 %v249, %v225
      %v251 = vsel %vm157, %v226, 0.0
      %v252 = vadd.f32 %v250, %v251
      %253 = vadd.xlane.f32.xlu0 %v252
      %v254 = vpop.xlane.xlu0 %253
      %v255 = vadd.f32 %v227, %v228
      %v256 = vadd.f32 %v255, %v229
      %v257 = vadd.f32 %v256, %v230
      %v258 = vadd.f32 %v257, %v231
      %v259 = vsel %vm157, %v232, 0.0
      %v260 = vadd.f32 %v258, %v259
      %261 = vadd.xlane.f32.xlu0 %v260
      %v262 = vpop.xlane.xlu0 %261
      %v263 = vadd.f32 %v233, %v234
      %v264 = vadd.f32 %v263, %v235
      %v265 = vadd.f32 %v264, %v236
      %v266 = vadd.f32 %v265, %v237
      %v267 = vsel %vm157, %v238, 0.0
      %v268 = vadd.f32 %v266, %v267
      %269 = vadd.xlane.f32.xlu0 %v268
      %v270 = vpop.xlane.xlu0 %269
      %v271 = vmul.f32 %v246, %v186
      %v272 = vmul.f32 %v254, %v186
      %v273 = vmul.f32 %v262, %v186
      %v274 = vmul.f32 %v270, %v186
      %v275 = vadd.f32 %v271, 1e-05
      %v276 = vadd.f32 %v272, 1e-05
      %v277 = vadd.f32 %v273, 1e-05
      %v278 = vadd.f32 %v274, 1e-05
      %v279 = vrsqrt.pop %v275
      %v280 = vrsqrt.pop %v276
      %v281 = vrsqrt.pop %v277
      %v282 = vrsqrt.pop %v278
      %v283 = vmul.f32 %v191, %v279
      %v284 = vmul.f32 %v192, %v279
      %v285 = vmul.f32 %v193, %v279
      %v286 = vmul.f32 %v194, %v279
      %v287 = vmul.f32 %v195, %v279
      %v288 = vmul.f32 %v196, %v279
      %v289 = vmul.f32 %v197, %v280
      %v290 = vmul.f32 %v198, %v280
      %v291 = vmul.f32 %v199, %v280
      %v292 = vmul.f32 %v200, %v280
      %v293 = vmul.f32 %v201, %v280
      %v294 = vmul.f32 %v202, %v280
      %v295 = vmul.f32 %v203, %v281
      %v296 = vmul.f32 %v204, %v281
      %v297 = vmul.f32 %v205, %v281
      %v298 = vmul.f32 %v206, %v281
      %v299 = vmul.f32 %v207, %v281
      %v300 = vmul.f32 %v208, %v281
      %v301 = vmul.f32 %v209, %v282
      %v302 = vmul.f32 %v210, %v282
      %v303 = vmul.f32 %v211, %v282
      %v304 = vmul.f32 %v212, %v282
      %v305 = vmul.f32 %v213, %v282
      %v306 = vmul.f32 %v214, %v282
      %v307 = vmax.f32 %v283, 0.0
      %v308 = vmax.f32 %v284, 0.0
      %v309 = vmax.f32 %v285, 0.0
      %v310 = vmax.f32 %v286, 0.0
      %v311 = vmax.f32 %v287, 0.0
      %v312 = vmax.f32 %v288, 0.0
      %v313 = vmax.f32 %v289, 0.0
      %v314 = vmax.f32 %v290, 0.0
      %v315 = vmax.f32 %v291, 0.0
      %v316 = vmax.f32 %v292, 0.0
      %v317 = vmax.f32 %v293, 0.0
      %v318 = vmax.f32 %v294, 0.0
      %v319 = vmax.f32 %v295, 0.0
      %v320 = vmax.f32 %v296, 0.0
      %v321 = vmax.f32 %v297, 0.0
      %v322 = vmax.f32 %v298, 0.0
      %v323 = vmax.f32 %v299, 0.0
      %v324 = vmax.f32 %v300, 0.0
      %v325 = vmax.f32 %v301, 0.0
      %v326 = vmax.f32 %v302, 0.0
      %v327 = vmax.f32 %v303, 0.0
      %v328 = vmax.f32 %v304, 0.0
      %v329 = vmax.f32 %v305, 0.0
      %v330 = vmax.f32 %v306, 0.0
      %v331 = vpack.c.bf16 %v313, %v307
      %v332 = vpack.c.bf16 %v314, %v308
      %v333 = vpack.c.bf16 %v315, %v309
      %v334 = vpack.c.bf16 %v316, %v310
      %v335 = vpack.c.bf16 %v317, %v311
      %v336 = vpack.c.bf16 %v318, %v312
      %v337 = vpack.c.bf16 %v325, %v319
      %v338 = vpack.c.bf16 %v326, %v320
      %v339 = vpack.c.bf16 %v327, %v321
      %v340 = vpack.c.bf16 %v328, %v322
      %v341 = vpack.c.bf16 %v329, %v323
      %v342 = vpack.c.bf16 %v330, %v324
      %v355 = vunpack.c.l.b16 %v331
      %v356 = vunpack.c.l.b16 %v332
      %v357 = vunpack.c.l.b16 %v333
      %v358 = vunpack.c.l.b16 %v334
      %v359 = vunpack.c.l.b16 %v335
      %v360 = vunpack.c.l.b16 %v336
      %v361 = vunpack.c.h.b16 %v331
      %v362 = vunpack.c.h.b16 %v332
      %v363 = vunpack.c.h.b16 %v333
      %v364 = vunpack.c.h.b16 %v334
      %v365 = vunpack.c.h.b16 %v335
      %v366 = vunpack.c.h.b16 %v336
      %v367 = vunpack.c.l.b16 %v337
      %v368 = vunpack.c.l.b16 %v338
      %v369 = vunpack.c.l.b16 %v339
      %v370 = vunpack.c.l.b16 %v340
      %v371 = vunpack.c.l.b16 %v341
      %v372 = vunpack.c.l.b16 %v342
      %v373 = vunpack.c.h.b16 %v337
      %v374 = vunpack.c.h.b16 %v338
      %v375 = vunpack.c.h.b16 %v339
      %v376 = vunpack.c.h.b16 %v340
      %v377 = vunpack.c.h.b16 %v341
      %v378 = vunpack.c.h.b16 %v342
      %v379 = vpack.c.b16 %v356, %v355
      %v380 = vpack.c.b16 %v358, %v357
      %v381 = vpack.c.b16 %v360, %v359
      %v382 = vpack.c.b16 %v362, %v361
      %v383 = vpack.c.b16 %v364, %v363
      %v384 = vpack.c.b16 %v366, %v365
      %v385 = vpack.c.b16 %v368, %v367
      %v386 = vpack.c.b16 %v370, %v369
      %v387 = vpack.c.b16 %v372, %v371
      %v388 = vpack.c.b16 %v374, %v373
      %v389 = vpack.c.b16 %v376, %v375
      %v390 = vpack.c.b16 %v378, %v377
      %403 = vst [vmem:[%s116] sm:$0xff] %v379
      %404 = vst [vmem:[%s116 + $0x8] sm:$0xff] %v380
      %vm405 = vcmask 1043456
      %vm406 = vcmask 293892
      %vm407 = vmor %vm406, %vm405
      %408 = vst.msk [vmem:[%s116 + $0x10] sm:$0xff] %vm407, %v381
      %409 = vst [vmem:[%s116 + $0x18] sm:$0xff] %v382
      %410 = vst [vmem:[%s116 + $0x20] sm:$0xff] %v383
      %411 = vst.msk [vmem:[%s116 + $0x28] sm:$0xff] %vm407, %v384
      %412 = vst [vmem:[%s116 + $0x30] sm:$0xff] %v385
      %413 = vst [vmem:[%s116 + $0x38] sm:$0xff] %v386
      %414 = vst.msk [vmem:[%s116 + $0x40] sm:$0xff] %vm407, %v387
      %415 = vst [vmem:[%s116 + $0x48] sm:$0xff] %v388
      %416 = vst [vmem:[%s116 + $0x50] sm:$0xff] %v389
      %417 = vst.msk [vmem:[%s116 + $0x58] sm:$0xff] %vm407, %v390
      %p418 = scmp.lt.s32.totalorder %s12, 1
      %s419 = scalar_select %p418, %s12, 1
      %s420 = smul.addr %s419, 24
      %s421 = smul.addr %s420, 4
      %s422 = scalar_lea.vmem %s1, %s421
      // Predicated region
      $region25: #{decoder2d_forward.12} parent=23 // pred_check
        %p423 = pneg %p56
      $region26: #{decoder2d_forward.12} parent=23 // pred_check_branch
        %425 = sbr.rel (%p423) target = $region28
      $region27: #{decoder2d_forward.12} parent=23 // pred_region
        _
      $region28: #{decoder2d_forward.12} parent=23 // pred_fallthru
        _
    $region24: #{decoder2d_forward.12} parent=5 // pred_fallthru
      _
    %p426 = scmp.le.s32.totalorder 2, %s7
    // Predicated region
    $region29: #{decoder2d_forward.12} parent=5 // pred_check
      %p427 = pneg %p426
    $region30: #{decoder2d_forward.12} parent=5 // pred_check_branch
      %429 = sbr.rel (%p427) target = $region32
    $region31: #{decoder2d_forward.12} parent=5 // pred_region
      %s430 = ssub.s32 %s7, 2
      // Predicated region
      $region33: #{decoder2d_forward.12} parent=31 // pred_check
        %p431 = pneg %p62
      $region34: #{decoder2d_forward.12} parent=31 // pred_check_branch
        %433 = sbr.rel (%p431) target = $region36
      $region35: #{decoder2d_forward.12} parent=31 // pred_region
        %p434 = scmp.lt.s32.totalorder %s13, 1
        %s435 = scalar_select %p434, %s13, 1
        %s436 = smul.addr %s435, 24
        %s437 = smul.addr %s436, 4
        %s438 = scalar_lea.vmem %s1, %s437
      $region36: #{decoder2d_forward.12} parent=31 // pred_fallthru
        _
    $region32: #{decoder2d_forward.12} parent=5 // pred_fallthru
      _
  $region6: #{decoder2d_forward.12} parent=0 // loop_footer
    %s11 = sadd.s32 1, %s7
  $region7: #{decoder2d_forward.12} parent=0 // loop_footer_branch
    %6 = sbr.rel target = $region3
  $region8: #{decoder2d_forward.12} parent=0 // loop_exit
    _

// kernel: decoder2d_forward.13
$region0: #{decoder2d_forward.13}
  #allocation0 [shape = 'u32[]', space=smem, size = 0x4, offset = 0x4, fixed_abs, tag = 'smem constant byte address 0x4 - core index']
  #allocation1 [shape = 'u32[144,128]{1,0:T(1,128)}', space=vmem, size = 0x12000, scoped, tag = 'internal scratch']
  %s0 = inlined_call_operand.vmem [shape: bf16[2,32,2027], index: 0, kind: input, shape index: {}]
  %s1 = inlined_call_operand.vmem [shape: bf16[8,288], index: 1, kind: input, shape index: {}]
  %s2 = inlined_call_operand.vmem [shape: f32[8,1], index: 2, kind: input, shape index: {}]
  %s3 = inlined_call_operand.vmem [shape: f32[1,2027], index: 3, kind: input, shape index: {}]
  %s4 = inlined_call_operand.vmem [shape: f32[2,8,1935], index: 4, kind: output, shape index: {}]
  %s5 = sld [smem:[#allocation0]]
  $region49: #{decoder2d_forward.13} parent=0
    _
  %s7 = ssub.s32 1, %s5
  %s8 = scalar_select 0, %s7, %s5
  loop: start=0, step=1, limit=4
  $region2: #{decoder2d_forward.13} parent=0 // loop_pre_header
    _
  $region3: #{decoder2d_forward.13} parent=0 // loop_header
    %s10 = sphi 0, %s14
    %p11 = scmp.ge.s32.totalorder %s10, 4
    %s20 = sphi 0, %s22
    %s23 = sphi 0, %s20
    %s24 = sphi 0, %s23
    %s40 = sphi 0, %s24
    %s44 = sphi 0, %s44
    %s46 = sphi 0, %s44
    %s47 = sphi 0, %s46
    %s61 = sphi 0, %s47
    %s65 = sphi 0, %s65
    %s67 = sphi 0, %s65
    %s68 = sphi 0, %s67
    %s82 = sphi 0, %s68
    %s86 = sphi 0, %s86
    %s88 = sphi 0, %s86
    %s89 = sphi 0, %s88
    %s103 = sphi 0, %s89
    %s109 = sphi 0, %s111
    %s112 = sphi 0, %s109
    %s113 = sphi 0, %s112
    %s129 = sphi 0, %s113
  $region4: #{decoder2d_forward.13} parent=0 // loop_header_branch
    %13 = sbr.rel (%p11) target = $region8
  $region5: #{decoder2d_forward.13} parent=0 // loop_body
    %s15 = ssub.s32 %s10, 1
    %s16 = ssub.s32 %s10, 2
    %s17 = sadd.s32 %s10, 1
    %s18 = ssub.s32 %s10, %s17
    %p19 = scmp.eq.s32.totalorder %s18, 0
    %s21 = sadd.s32 %s20, 1
    %s22 = scalar_select %p19, %s20, %s21
    %p25 = pneg %p19
    %p26 = scmp.eq.s32.totalorder %s10, 1
    %p27 = por %p25, %p26
    %p28 = scmp.ne.s32.totalorder %s20, %s23
    %p29 = scmp.eq.s32.totalorder %s10, 0
    %p30 = por %p28, %p29
    %p31 = scmp.ne.s32.totalorder %s20, %s23
    %p32 = scmp.eq.s32.totalorder %s15, 1
    %p33 = por %p31, %p32
    %p34 = scmp.ne.s32.totalorder %s23, %s24
    %p35 = scmp.eq.s32.totalorder %s15, 0
    %p36 = por %p34, %p35
    %p37 = scmp.ne.s32.totalorder %s23, %s24
    %p38 = scmp.eq.s32.totalorder %s16, 1
    %p39 = por %p37, %p38
    %p41 = scmp.ne.s32.totalorder %s24, %s40
    %p42 = scmp.eq.s32.totalorder %s16, 0
    %p43 = por %p41, %p42
    %s45 = sadd.s32 %s44, 1
    %p48 = scmp.eq.s32.totalorder %s10, 1
    %p49 = scmp.ne.s32.totalorder %s44, %s46
    %p50 = scmp.eq.s32.totalorder %s10, 0
    %p51 = por %p49, %p50
    %p52 = scmp.ne.s32.totalorder %s44, %s46
    %p53 = scmp.eq.s32.totalorder %s15, 1
    %p54 = por %p52, %p53
    %p55 = scmp.ne.s32.totalorder %s46, %s47
    %p56 = scmp.eq.s32.totalorder %s15, 0
    %p57 = por %p55, %p56
    %p58 = scmp.ne.s32.totalorder %s46, %s47
    %p59 = scmp.eq.s32.totalorder %s16, 1
    %p60 = por %p58, %p59
    %p62 = scmp.ne.s32.totalorder %s47, %s61
    %p63 = scmp.eq.s32.totalorder %s16, 0
    %p64 = por %p62, %p63
    %s66 = sadd.s32 %s65, 1
    %p69 = scmp.eq.s32.totalorder %s10, 1
    %p70 = scmp.ne.s32.totalorder %s65, %s67
    %p71 = scmp.eq.s32.totalorder %s10, 0
    %p72 = por %p70, %p71
    %p73 = scmp.ne.s32.totalorder %s65, %s67
    %p74 = scmp.eq.s32.totalorder %s15, 1
    %p75 = por %p73, %p74
    %p76 = scmp.ne.s32.totalorder %s67, %s68
    %p77 = scmp.eq.s32.totalorder %s15, 0
    %p78 = por %p76, %p77
    %p79 = scmp.ne.s32.totalorder %s67, %s68
    %p80 = scmp.eq.s32.totalorder %s16, 1
    %p81 = por %p79, %p80
    %p83 = scmp.ne.s32.totalorder %s68, %s82
    %p84 = scmp.eq.s32.totalorder %s16, 0
    %p85 = por %p83, %p84
    %s87 = sadd.s32 %s86, 1
    %p90 = scmp.eq.s32.totalorder %s10, 1
    %p91 = scmp.ne.s32.totalorder %s86, %s88
    %p92 = scmp.eq.s32.totalorder %s10, 0
    %p93 = por %p91, %p92
    %p94 = scmp.ne.s32.totalorder %s86, %s88
    %p95 = scmp.eq.s32.totalorder %s15, 1
    %p96 = por %p94, %p95
    %p97 = scmp.ne.s32.totalorder %s88, %s89
    %p98 = scmp.eq.s32.totalorder %s15, 0
    %p99 = por %p97, %p98
    %p100 = scmp.ne.s32.totalorder %s88, %s89
    %p101 = scmp.eq.s32.totalorder %s16, 1
    %p102 = por %p100, %p101
    %p104 = scmp.ne.s32.totalorder %s89, %s103
    %p105 = scmp.eq.s32.totalorder %s16, 0
    %p106 = por %p104, %p105
    %s107 = ssub.s32 %s10, %s17
    %p108 = scmp.eq.s32.totalorder %s107, 0
    %s110 = sadd.s32 %s109, 1
    %s111 = scalar_select %p108, %s109, %s110
    %p114 = pneg %p108
    %p115 = scmp.eq.s32.totalorder %s10, 1
    %p116 = por %p114, %p115
    %p117 = scmp.ne.s32.totalorder %s109, %s112
    %p118 = scmp.eq.s32.totalorder %s10, 0
    %p119 = por %p117, %p118
    %p120 = scmp.ne.s32.totalorder %s109, %s112
    %p121 = scmp.eq.s32.totalorder %s15, 1
    %p122 = por %p120, %p121
    %p123 = scmp.ne.s32.totalorder %s112, %s113
    %p124 = scmp.eq.s32.totalorder %s15, 0
    %p125 = por %p123, %p124
    %p126 = scmp.ne.s32.totalorder %s112, %s113
    %p127 = scmp.eq.s32.totalorder %s16, 1
    %p128 = por %p126, %p127
    %p130 = scmp.ne.s32.totalorder %s113, %s129
    %p131 = scmp.eq.s32.totalorder %s16, 0
    %p132 = por %p130, %p131
    %p133 = scmp.le.s32.totalorder 1, %s10
    %p134 = scmp.lt.s32.totalorder %s10, 3
    %p135 = pnand %p133, %p134
    %p136 = pneg %p135
    // Predicated region
    $region9: #{decoder2d_forward.13} parent=5 // pred_check
      _
    $region10: #{decoder2d_forward.13} parent=5 // pred_check_branch
      %138 = sbr.rel (%p135) target = $region12
    $region11: #{decoder2d_forward.13} parent=5 // pred_region
      %s139 = ssub.s32 %s10, 1
      // Predicated region
      $region13: #{decoder2d_forward.13} parent=11 // pred_check
        %p140 = pneg %p57
      $region14: #{decoder2d_forward.13} parent=11 // pred_check_branch
        %142 = sbr.rel (%p140) target = $region16
      $region15: #{decoder2d_forward.13} parent=11 // pred_region
        _
      $region16: #{decoder2d_forward.13} parent=11 // pred_fallthru
        _
      // Predicated region
      $region17: #{decoder2d_forward.13} parent=11 // pred_check
        %p143 = pneg %p78
      $region18: #{decoder2d_forward.13} parent=11 // pred_check_branch
        %145 = sbr.rel (%p143) target = $region20
      $region19: #{decoder2d_forward.13} parent=11 // pred_region
        _
      $region20: #{decoder2d_forward.13} parent=11 // pred_fallthru
        _
      // Predicated region
      $region21: #{decoder2d_forward.13} parent=11 // pred_check
        %p146 = pneg %p99
      $region22: #{decoder2d_forward.13} parent=11 // pred_check_branch
        %148 = sbr.rel (%p146) target = $region24
      $region23: #{decoder2d_forward.13} parent=11 // pred_region
        _
      $region24: #{decoder2d_forward.13} parent=11 // pred_fallthru
        _
    $region12: #{decoder2d_forward.13} parent=5 // pred_fallthru
      _
    %p149 = scmp.lt.s32.totalorder %s10, 2
    // Predicated region
    $region25: #{decoder2d_forward.13} parent=5 // pred_check
      %p150 = pneg %p149
    $region26: #{decoder2d_forward.13} parent=5 // pred_check_branch
      %152 = sbr.rel (%p150) target = $region28
    $region27: #{decoder2d_forward.13} parent=5 // pred_region
      // Predicated region
      $region29: #{decoder2d_forward.13} parent=27 // pred_check
        %p153 = pneg %p30
      $region30: #{decoder2d_forward.13} parent=27 // pred_check_branch
        %155 = sbr.rel (%p153) target = $region32
      $region31: #{decoder2d_forward.13} parent=27 // pred_region
        %p156 = scmp.lt.s32.totalorder %s10, 1
        %s157 = scalar_select %p156, %s10, 1
        %s158 = smul.addr %s157, 64
        %s159 = smul.addr %s158, 4
        %s160 = scalar_lea.vmem %s0, %s159
      $region32: #{decoder2d_forward.13} parent=27 // pred_fallthru
        _
    $region28: #{decoder2d_forward.13} parent=5 // pred_fallthru
      _
    %p161 = scmp.le.s32.totalorder 1, %s10
    %p162 = scmp.lt.s32.totalorder %s10, 3
    %p163 = pnand %p161, %p162
    %p164 = pneg %p163
    // Predicated region
    $region33: #{decoder2d_forward.13} parent=5 // pred_check
      _
    $region34: #{decoder2d_forward.13} parent=5 // pred_check_branch
      %166 = sbr.rel (%p163) target = $region36
    $region35: #{decoder2d_forward.13} parent=5 // pred_region
      %s167 = ssub.s32 %s10, 1
      %p168 = scmp.lt.s32.totalorder %s15, 1
      %s169 = scalar_select %p168, %s15, 1
      %s170 = smul.addr %s169, 64
      %s171 = smul.addr %s170, 4
      %s172 = scalar_lea.vmem %s0, %s171
      %p173 = pneg %p36
      %p174 = pneg %p33
      %p175 = pneg %p57
      %p176 = pneg %p54
      %p177 = pneg %p78
      %p178 = pneg %p75
      %p179 = pneg %p99
      %p180 = pneg %p96
      %p181 = pneg %p125
      %p182 = pneg %p122
      %p183 = scmp.lt.s32.totalorder %s15, 1
      %s184 = scalar_select %p183, %s15, 1
      %s185 = smul.addr %s184, 16
      %s186 = smul.addr %s185, 8
      %s187 = scalar_lea.vmem %s4, %s186
      %p188 = scmp.lt.s32.totalorder %s15, 1
      %s189 = scalar_select %p188, %s15, 1
      %s190 = smul.addr %s189, 64
      %s191 = smul.addr %s190, 4
      %s192 = scalar_lea.vmem %s0, %s191
      %p193 = scmp.lt.s32.totalorder %s15, 1
      %s194 = scalar_select %p193, %s15, 1
      %s195 = smul.addr %s194, 16
      %s196 = smul.addr %s195, 8
      %s197 = scalar_lea.vmem %s4, %s196
      %v199 = vld [vmem:[%s192] sm:$0xff]
      %v200 = vld [vmem:[%s192 + $0x8] sm:$0xff]
      %v201 = vld [vmem:[%s192 + $0x10] sm:$0xff]
      %v202 = vld [vmem:[%s192 + $0x18] sm:$0xff]
      %v203 = vld [vmem:[%s192 + $0x20] sm:$0xff]
      %v204 = vld [vmem:[%s192 + $0x28] sm:$0xff]
      %v205 = vld [vmem:[%s192 + $0x30] sm:$0xff]
      %v206 = vld [vmem:[%s192 + $0x38] sm:$0xff]
      %v207 = vld [vmem:[%s192 + $0x40] sm:$0xff]
      %v208 = vld [vmem:[%s192 + $0x48] sm:$0xff]
      %v209 = vld [vmem:[%s192 + $0x50] sm:$0xff]
      %v210 = vld [vmem:[%s192 + $0x58] sm:$0xff]
      %v211 = vld [vmem:[%s192 + $0x60] sm:$0xff]
      %v212 = vld [vmem:[%s192 + $0x68] sm:$0xff]
      %v213 = vld [vmem:[%s192 + $0x70] sm:$0xff]
      %v214 = vld [vmem:[%s192 + $0x78] sm:$0xff]
      %v215 = vld [vmem:[%s192 + $0x80] sm:$0xff]
      %v216 = vld [vmem:[%s192 + $0x88] sm:$0xff]
      %v217 = vld [vmem:[%s192 + $0x90] sm:$0xff]
      %v218 = vld [vmem:[%s192 + $0x98] sm:$0xff]
      %v219 = vld [vmem:[%s192 + $0xa0] sm:$0xff]
      %v220 = vld [vmem:[%s192 + $0xa8] sm:$0xff]
      %v221 = vld [vmem:[%s192 + $0xb0] sm:$0xff]
      %v222 = vld [vmem:[%s192 + $0xb8] sm:$0xff]
      %v223 = vld [vmem:[%s192 + $0xc0] sm:$0xff]
      %v224 = vld [vmem:[%s192 + $0xc8] sm:$0xff]
      %v225 = vld [vmem:[%s192 + $0xd0] sm:$0xff]
      %v226 = vld [vmem:[%s192 + $0xd8] sm:$0xff]
      %v227 = vld [vmem:[%s192 + $0xe0] sm:$0xff]
      %v228 = vld [vmem:[%s192 + $0xe8] sm:$0xff]
      %v229 = vld [vmem:[%s192 + $0xf0] sm:$0xff]
      %v230 = vld [vmem:[%s192 + $0xf8] sm:$0xff]
      %v231 = vunpack.c.l.bf16 %v199
      %v232 = vunpack.c.h.bf16 %v199
      %v233 = vunpack.c.l.bf16 %v200
      %v234 = vunpack.c.h.bf16 %v200
      %v235 = vunpack.c.l.bf16 %v201
      %v236 = vunpack.c.h.bf16 %v201
      %v237 = vunpack.c.l.bf16 %v202
      %v238 = vunpack.c.h.bf16 %v202
      %v239 = vunpack.c.l.bf16 %v203
      %v240 = vunpack.c.h.bf16 %v203
      %v241 = vunpack.c.l.bf16 %v204
      %v242 = vunpack.c.h.bf16 %v204
      %v243 = vunpack.c.l.bf16 %v205
      %v244 = vunpack.c.h.bf16 %v205
      %v245 = vunpack.c.l.bf16 %v206
      %v246 = vunpack.c.h.bf16 %v206
      %v247 = vunpack.c.l.bf16 %v207
      %v248 = vunpack.c.h.bf16 %v207
      %v249 = vunpack.c.l.bf16 %v208
      %v250 = vunpack.c.h.bf16 %v208
      %v251 = vunpack.c.l.bf16 %v209
      %v252 = vunpack.c.h.bf16 %v209
      %v253 = vunpack.c.l.bf16 %v210
      %v254 = vunpack.c.h.bf16 %v210
      %v255 = vunpack.c.l.bf16 %v211
      %v256 = vunpack.c.h.bf16 %v211
      %v257 = vunpack.c.l.bf16 %v212
      %v258 = vunpack.c.h.bf16 %v212
      %v259 = vunpack.c.l.bf16 %v213
      %v260 = vunpack.c.h.bf16 %v213
      %v261 = vunpack.c.l.bf16 %v214
      %v262 = vunpack.c.h.bf16 %v214
      %v263 = vunpack.c.l.bf16 %v215
      %v264 = vunpack.c.h.bf16 %v215
      %v265 = vunpack.c.l.bf16 %v216
      %v266 = vunpack.c.h.bf16 %v216
      %v267 = vunpack.c.l.bf16 %v217
      %v268 = vunpack.c.h.bf16 %v217
      %v269 = vunpack.c.l.bf16 %v218
      %v270 = vunpack.c.h.bf16 %v218
      %v271 = vunpack.c.l.bf16 %v219
      %v272 = vunpack.c.h.bf16 %v219
      %v273 = vunpack.c.l.bf16 %v220
      %v274 = vunpack.c.h.bf16 %v220
      %v275 = vunpack.c.l.bf16 %v221
      %v276 = vunpack.c.h.bf16 %v221
      %v277 = vunpack.c.l.bf16 %v222
      %v278 = vunpack.c.h.bf16 %v222
      %v279 = vunpack.c.l.bf16 %v223
      %v280 = vunpack.c.h.bf16 %v223
      %v281 = vunpack.c.l.bf16 %v224
      %v282 = vunpack.c.h.bf16 %v224
      %v283 = vunpack.c.l.bf16 %v225
      %v284 = vunpack.c.h.bf16 %v225
      %v285 = vunpack.c.l.bf16 %v226
      %v286 = vunpack.c.h.bf16 %v226
      %v287 = vunpack.c.l.bf16 %v227
      %v288 = vunpack.c.h.bf16 %v227
      %v289 = vunpack.c.l.bf16 %v228
      %v290 = vunpack.c.h.bf16 %v228
      %v291 = vunpack.c.l.bf16 %v229
      %v292 = vunpack.c.h.bf16 %v229
      %v293 = vunpack.c.l.bf16 %v230
      %v294 = vunpack.c.h.bf16 %v230
      %v295 = vld [vmem:[%s3] sm:$0xff]
      %v296 = vld [vmem:[%s3 + $0x8] sm:$0xff]
      %v299 = vlaneseq
      %v300 = vshrl.u32 %v299, 7
      %v301 = vsub.s32 0, %v300
      %v302 = vrot.slane %v295, %v301
      %v303 = vlaneseq
      %v304 = vshrl.u32 %v303, 7
      %v305 = vsub.s32 1, %v304
      %v306 = vrot.slane %v295, %v305
      %v307 = vlaneseq
      %v308 = vshrl.u32 %v307, 7
      %v309 = vsub.s32 2, %v308
      %v310 = vrot.slane %v295, %v309
      %v311 = vlaneseq
      %v312 = vshrl.u32 %v311, 7
      %v313 = vsub.s32 3, %v312
      %v314 = vrot.slane %v295, %v313
      %v315 = vlaneseq
      %v316 = vshrl.u32 %v315, 7
      %v317 = vsub.s32 4, %v316
      %v318 = vrot.slane %v295, %v317
      %v319 = vlaneseq
      %v320 = vshrl.u32 %v319, 7
      %v321 = vsub.s32 5, %v320
      %v322 = vrot.slane %v295, %v321
      %v323 = vlaneseq
      %v324 = vshrl.u32 %v323, 7
      %v325 = vsub.s32 6, %v324
      %v326 = vrot.slane %v295, %v325
      %v327 = vlaneseq
      %v328 = vshrl.u32 %v327, 7
      %v329 = vsub.s32 7, %v328
      %v330 = vrot.slane %v295, %v329
      %v331 = vlaneseq
      %v332 = vshrl.u32 %v331, 7
      %v333 = vsub.s32 0, %v332
      %v334 = vrot.slane %v296, %v333
      %v335 = vlaneseq
      %v336 = vshrl.u32 %v335, 7
      %v337 = vsub.s32 1, %v336
      %v338 = vrot.slane %v296, %v337
      %v339 = vlaneseq
      %v340 = vshrl.u32 %v339, 7
      %v341 = vsub.s32 2, %v340
      %v342 = vrot.slane %v296, %v341
      %v343 = vlaneseq
      %v344 = vshrl.u32 %v343, 7
      %v345 = vsub.s32 3, %v344
      %v346 = vrot.slane %v296, %v345
      %v347 = vlaneseq
      %v348 = vshrl.u32 %v347, 7
      %v349 = vsub.s32 4, %v348
      %v350 = vrot.slane %v296, %v349
      %v351 = vlaneseq
      %v352 = vshrl.u32 %v351, 7
      %v353 = vsub.s32 5, %v352
      %v354 = vrot.slane %v296, %v353
      %v355 = vlaneseq
      %v356 = vshrl.u32 %v355, 7
      %v357 = vsub.s32 6, %v356
      %v358 = vrot.slane %v296, %v357
      %v359 = vlaneseq
      %v360 = vshrl.u32 %v359, 7
      %v361 = vsub.s32 7, %v360
      %v362 = vrot.slane %v296, %v361
      %v379 = vmul.f32 %v231, %v302
      %v380 = vmul.f32 %v232, %v306
      %v381 = vmul.f32 %v233, %v310
      %v382 = vmul.f32 %v234, %v314
      %v383 = vmul.f32 %v235, %v318
      %v384 = vmul.f32 %v236, %v322
      %v385 = vmul.f32 %v237, %v326
      %v386 = vmul.f32 %v238, %v330
      %v387 = vmul.f32 %v239, %v334
      %v388 = vmul.f32 %v240, %v338
      %v389 = vmul.f32 %v241, %v342
      %v390 = vmul.f32 %v242, %v346
      %v391 = vmul.f32 %v243, %v350
      %v392 = vmul.f32 %v244, %v354
      %v393 = vmul.f32 %v245, %v358
      %v394 = vmul.f32 %v246, %v362
      %v395 = vmul.f32 %v247, %v302
      %v396 = vmul.f32 %v248, %v306
      %v397 = vmul.f32 %v249, %v310
      %v398 = vmul.f32 %v250, %v314
      %v399 = vmul.f32 %v251, %v318
      %v400 = vmul.f32 %v252, %v322
      %v401 = vmul.f32 %v253, %v326
      %v402 = vmul.f32 %v254, %v330
      %v403 = vmul.f32 %v255, %v334
      %v404 = vmul.f32 %v256, %v338
      %v405 = vmul.f32 %v257, %v342
      %v406 = vmul.f32 %v258, %v346
      %v407 = vmul.f32 %v259, %v350
      %v408 = vmul.f32 %v260, %v354
      %v409 = vmul.f32 %v261, %v358
      %v410 = vmul.f32 %v262, %v362
      %v411 = vmul.f32 %v263, %v302
      %v412 = vmul.f32 %v264, %v306
      %v413 = vmul.f32 %v265, %v310
      %v414 = vmul.f32 %v266, %v314
      %v415 = vmul.f32 %v267, %v318
      %v416 = vmul.f32 %v268, %v322
      %v417 = vmul.f32 %v269, %v326
      %v418 = vmul.f32 %v270, %v330
      %v419 = vmul.f32 %v271, %v334
      %v420 = vmul.f32 %v272, %v338
      %v421 = vmul.f32 %v273, %v342
      %v422 = vmul.f32 %v274, %v346
      %v423 = vmul.f32 %v275, %v350
      %v424 = vmul.f32 %v276, %v354
      %v425 = vmul.f32 %v277, %v358
      %v426 = vmul.f32 %v278, %v362
      %v427 = vmul.f32 %v279, %v302
      %v428 = vmul.f32 %v280, %v306
      %v429 = vmul.f32 %v281, %v310
      %v430 = vmul.f32 %v282, %v314
      %v431 = vmul.f32 %v283, %v318
      %v432 = vmul.f32 %v284, %v322
      %v433 = vmul.f32 %v285, %v326
      %v434 = vmul.f32 %v286, %v330
      %v435 = vmul.f32 %v287, %v334
      %v436 = vmul.f32 %v288, %v338
      %v437 = vmul.f32 %v289, %v342
      %v438 = vmul.f32 %v290, %v346
      %v439 = vmul.f32 %v291, %v350
      %v440 = vmul.f32 %v292, %v354
      %v441 = vmul.f32 %v293, %v358
      %v442 = vmul.f32 %v294, %v362
      %v443 = vadd.f32 %v379, %v380
      %v444 = vadd.f32 %v443, %v381
      %v445 = vadd.f32 %v444, %v382
      %v446 = vadd.f32 %v445, %v383
      %v447 = vadd.f32 %v446, %v384
      %v448 = vadd.f32 %v447, %v385
      %v449 = vadd.f32 %v448, %v386
      %v450 = vadd.f32 %v449, %v387
      %v451 = vadd.f32 %v450, %v388
      %v452 = vadd.f32 %v451, %v389
      %v453 = vadd.f32 %v452, %v390
      %v454 = vadd.f32 %v453, %v391
      %v455 = vadd.f32 %v454, %v392
      %v456 = vadd.f32 %v455, %v393
      %vm457 = vcmask 875520
      %v458 = vsel %vm457, %v394, 0.0
      %v459 = vadd.f32 %v456, %v458
      %460 = vadd.xlane.f32.xlu0 %v459
      %v461 = vpop.xlane.xlu0 %460
      %v462 = vadd.f32 %v395, %v396
      %v463 = vadd.f32 %v462, %v397
      %v464 = vadd.f32 %v463, %v398
      %v465 = vadd.f32 %v464, %v399
      %v466 = vadd.f32 %v465, %v400
      %v467 = vadd.f32 %v466, %v401
      %v468 = vadd.f32 %v467, %v402
      %v469 = vadd.f32 %v468, %v403
      %v470 = vadd.f32 %v469, %v404
      %v471 = vadd.f32 %v470, %v405
      %v472 = vadd.f32 %v471, %v406
      %v473 = vadd.f32 %v472, %v407
      %v474 = vadd.f32 %v473, %v408
      %v475 = vadd.f32 %v474, %v409
      %v476 = vsel %vm457, %v410, 0.0
      %v477 = vadd.f32 %v475, %v476
      %478 = vadd.xlane.f32.xlu0 %v477
      %v479 = vpop.xlane.xlu0 %478
      %v480 = vadd.f32 %v411, %v412
      %v481 = vadd.f32 %v480, %v413
      %v482 = vadd.f32 %v481, %v414
      %v483 = vadd.f32 %v482, %v415
      %v484 = vadd.f32 %v483, %v416
      %v485 = vadd.f32 %v484, %v417
      %v486 = vadd.f32 %v485, %v418
      %v487 = vadd.f32 %v486, %v419
      %v488 = vadd.f32 %v487, %v420
      %v489 = vadd.f32 %v488, %v421
      %v490 = vadd.f32 %v489, %v422
      %v491 = vadd.f32 %v490, %v423
      %v492 = vadd.f32 %v491, %v424
      %v493 = vadd.f32 %v492, %v425
      %v494 = vsel %vm457, %v426, 0.0
      %v495 = vadd.f32 %v493, %v494
      %496 = vadd.xlane.f32.xlu0 %v495
      %v497 = vpop.xlane.xlu0 %496
      %v498 = vadd.f32 %v427, %v428
      %v499 = vadd.f32 %v498, %v429
      %v500 = vadd.f32 %v499, %v430
      %v501 = vadd.f32 %v500, %v431
      %v502 = vadd.f32 %v501, %v432
      %v503 = vadd.f32 %v502, %v433
      %v504 = vadd.f32 %v503, %v434
      %v505 = vadd.f32 %v504, %v435
      %v506 = vadd.f32 %v505, %v436
      %v507 = vadd.f32 %v506, %v437
      %v508 = vadd.f32 %v507, %v438
      %v509 = vadd.f32 %v508, %v439
      %v510 = vadd.f32 %v509, %v440
      %v511 = vadd.f32 %v510, %v441
      %v512 = vsel %vm457, %v442, 0.0
      %v513 = vadd.f32 %v511, %v512
      %514 = vadd.xlane.f32.xlu0 %v513
      %v515 = vpop.xlane.xlu0 %514
      %v516 = vmul.f32 %v461, 0.0005408329
      %v517 = vmul.f32 %v479, 0.0005408329
      %v518 = vmul.f32 %v497, 0.0005408329
      %v519 = vmul.f32 %v515, 0.0005408329
      %v520 = vsub.f32 %v231, %v516
      %v521 = vsub.f32 %v232, %v516
      %v522 = vsub.f32 %v233, %v516
      %v523 = vsub.f32 %v234, %v516
      %v524 = vsub.f32 %v235, %v516
      %v525 = vsub.f32 %v236, %v516
      %v526 = vsub.f32 %v237, %v516
      %v527 = vsub.f32 %v238, %v516
      %v528 = vsub.f32 %v239, %v516
      %v529 = vsub.f32 %v240, %v516
      %v530 = vsub.f32 %v241, %v516
      %v531 = vsub.f32 %v242, %v516
      %v532 = vsub.f32 %v243, %v516
      %v533 = vsub.f32 %v244, %v516
      %v534 = vsub.f32 %v245, %v516
      %v535 = vsub.f32 %v246, %v516
      %v536 = vsub.f32 %v247, %v517
      %v537 = vsub.f32 %v248, %v517
      %v538 = vsub.f32 %v249, %v517
      %v539 = vsub.f32 %v250, %v517
      %v540 = vsub.f32 %v251, %v517
      %v541 = vsub.f32 %v252, %v517
      %v542 = vsub.f32 %v253, %v517
      %v543 = vsub.f32 %v254, %v517
      %v544 = vsub.f32 %v255, %v517
      %v545 = vsub.f32 %v256, %v517
      %v546 = vsub.f32 %v257, %v517
      %v547 = vsub.f32 %v258, %v517
      %v548 = vsub.f32 %v259, %v517
      %v549 = vsub.f32 %v260, %v517
      %v550 = vsub.f32 %v261, %v517
      %v551 = vsub.f32 %v262, %v517
      %v552 = vsub.f32 %v263, %v518
      %v553 = vsub.f32 %v264, %v518
      %v554 = vsub.f32 %v265, %v518
      %v555 = vsub.f32 %v266, %v518
      %v556 = vsub.f32 %v267, %v518
      %v557 = vsub.f32 %v268, %v518
      %v558 = vsub.f32 %v269, %v518
      %v559 = vsub.f32 %v270, %v518
      %v560 = vsub.f32 %v271, %v518
      %v561 = vsub.f32 %v272, %v518
      %v562 = vsub.f32 %v273, %v518
      %v563 = vsub.f32 %v274, %v518
      %v564 = vsub.f32 %v275, %v518
      %v565 = vsub.f32 %v276, %v518
      %v566 = vsub.f32 %v277, %v518
      %v567 = vsub.f32 %v278, %v518
      %v568 = vsub.f32 %v279, %v519
      %v569 = vsub.f32 %v280, %v519
      %v570 = vsub.f32 %v281, %v519
      %v571 = vsub.f32 %v282, %v519
      %v572 = vsub.f32 %v283, %v519
      %v573 = vsub.f32 %v284, %v519
      %v574 = vsub.f32 %v285, %v519
      %v575 = vsub.f32 %v286, %v519
      %v576 = vsub.f32 %v287, %v519
      %v577 = vsub.f32 %v288, %v519
      %v578 = vsub.f32 %v289, %v519
      %v579 = vsub.f32 %v290, %v519
      %v580 = vsub.f32 %v291, %v519
      %v581 = vsub.f32 %v292, %v519
      %v582 = vsub.f32 %v293, %v519
      %v583 = vsub.f32 %v294, %v519
      %v584 = vmul.f32 %v520, %v520
      %v585 = vmul.f32 %v521, %v521
      %v586 = vmul.f32 %v522, %v522
      %v587 = vmul.f32 %v523, %v523
      %v588 = vmul.f32 %v524, %v524
      %v589 = vmul.f32 %v525, %v525
      %v590 = vmul.f32 %v526, %v526
      %v591 = vmul.f32 %v527, %v527
      %v592 = vmul.f32 %v528, %v528
      %v593 = vmul.f32 %v529, %v529
      %v594 = vmul.f32 %v530, %v530
      %v595 = vmul.f32 %v531, %v531
      %v596 = vmul.f32 %v532, %v532
      %v597 = vmul.f32 %v533, %v533
      %v598 = vmul.f32 %v534, %v534
      %v599 = vmul.f32 %v535, %v535
      %v600 = vmul.f32 %v536, %v536
      %v601 = vmul.f32 %v537, %v537
      %v602 = vmul.f32 %v538, %v538
      %v603 = vmul.f32 %v539, %v539
      %v604 = vmul.f32 %v540, %v540
      %v605 = vmul.f32 %v541, %v541
      %v606 = vmul.f32 %v542, %v542
      %v607 = vmul.f32 %v543, %v543
      %v608 = vmul.f32 %v544, %v544
      %v609 = vmul.f32 %v545, %v545
      %v610 = vmul.f32 %v546, %v546
      %v611 = vmul.f32 %v547, %v547
      %v612 = vmul.f32 %v548, %v548
      %v613 = vmul.f32 %v549, %v549
      %v614 = vmul.f32 %v550, %v550
      %v615 = vmul.f32 %v551, %v551
      %v616 = vmul.f32 %v552, %v552
      %v617 = vmul.f32 %v553, %v553
      %v618 = vmul.f32 %v554, %v554
      %v619 = vmul.f32 %v555, %v555
      %v620 = vmul.f32 %v556, %v556
      %v621 = vmul.f32 %v557, %v557
      %v622 = vmul.f32 %v558, %v558
      %v623 = vmul.f32 %v559, %v559
      %v624 = vmul.f32 %v560, %v560
      %v625 = vmul.f32 %v561, %v561
      %v626 = vmul.f32 %v562, %v562
      %v627 = vmul.f32 %v563, %v563
      %v628 = vmul.f32 %v564, %v564
      %v629 = vmul.f32 %v565, %v565
      %v630 = vmul.f32 %v566, %v566
      %v631 = vmul.f32 %v567, %v567
      %v632 = vmul.f32 %v568, %v568
      %v633 = vmul.f32 %v569, %v569
      %v634 = vmul.f32 %v570, %v570
      %v635 = vmul.f32 %v571, %v571
      %v636 = vmul.f32 %v572, %v572
      %v637 = vmul.f32 %v573, %v573
      %v638 = vmul.f32 %v574, %v574
      %v639 = vmul.f32 %v575, %v575
      %v640 = vmul.f32 %v576, %v576
      %v641 = vmul.f32 %v577, %v577
      %v642 = vmul.f32 %v578, %v578
      %v643 = vmul.f32 %v579, %v579
      %v644 = vmul.f32 %v580, %v580
      %v645 = vmul.f32 %v581, %v581
      %v646 = vmul.f32 %v582, %v582
      %v647 = vmul.f32 %v583, %v583
      %v648 = vmul.f32 %v584, %v302
      %v649 = vmul.f32 %v585, %v306
      %v650 = vmul.f32 %v586, %v310
      %v651 = vmul.f32 %v587, %v314
      %v652 = vmul.f32 %v588, %v318
      %v653 = vmul.f32 %v589, %v322
      %v654 = vmul.f32 %v590, %v326
      %v655 = vmul.f32 %v591, %v330
      %v656 = vmul.f32 %v592, %v334
      %v657 = vmul.f32 %v593, %v338
      %v658 = vmul.f32 %v594, %v342
      %v659 = vmul.f32 %v595, %v346
      %v660 = vmul.f32 %v596, %v350
      %v661 = vmul.f32 %v597, %v354
      %v662 = vmul.f32 %v598, %v358
      %v663 = vmul.f32 %v599, %v362
      %v664 = vmul.f32 %v600, %v302
      %v665 = vmul.f32 %v601, %v306
      %v666 = vmul.f32 %v602, %v310
      %v667 = vmul.f32 %v603, %v314
      %v668 = vmul.f32 %v604, %v318
      %v669 = vmul.f32 %v605, %v322
      %v670 = vmul.f32 %v606, %v326
      %v671 = vmul.f32 %v607, %v330
      %v672 = vmul.f32 %v608, %v334
      %v673 = vmul.f32 %v609, %v338
      %v674 = vmul.f32 %v610, %v342
      %v675 = vmul.f32 %v611, %v346
      %v676 = vmul.f32 %v612, %v350
      %v677 = vmul.f32 %v613, %v354
      %v678 = vmul.f32 %v614, %v358
      %v679 = vmul.f32 %v615, %v362
      %v680 = vmul.f32 %v616, %v302
      %v681 = vmul.f32 %v617, %v306
      %v682 = vmul.f32 %v618, %v310
      %v683 = vmul.f32 %v619, %v314
      %v684 = vmul.f32 %v620, %v318
      %v685 = vmul.f32 %v621, %v322
      %v686 = vmul.f32 %v622, %v326
      %v687 = vmul.f32 %v623, %v330
      %v688 = vmul.f32 %v624, %v334
      %v689 = vmul.f32 %v625, %v338
      %v690 = vmul.f32 %v626, %v342
      %v691 = vmul.f32 %v627, %v346
      %v692 = vmul.f32 %v628, %v350
      %v693 = vmul.f32 %v629, %v354
      %v694 = vmul.f32 %v630, %v358
      %v695 = vmul.f32 %v631, %v362
      %v696 = vmul.f32 %v632, %v302
      %v697 = vmul.f32 %v633, %v306
      %v698 = vmul.f32 %v634, %v310
      %v699 = vmul.f32 %v635, %v314
      %v700 = vmul.f32 %v636, %v318
      %v701 = vmul.f32 %v637, %v322
      %v702 = vmul.f32 %v638, %v326
      %v703 = vmul.f32 %v639, %v330
      %v704 = vmul.f32 %v640, %v334
      %v705 = vmul.f32 %v641, %v338
      %v706 = vmul.f32 %v642, %v342
      %v707 = vmul.f32 %v643, %v346
      %v708 = vmul.f32 %v644, %v350
      %v709 = vmul.f32 %v645, %v354
      %v710 = vmul.f32 %v646, %v358
      %v711 = vmul.f32 %v647, %v362
      %v712 = vadd.f32 %v648, %v649
      %v713 = vadd.f32 %v712, %v650
      %v714 = vadd.f32 %v713, %v651
      %v715 = vadd.f32 %v714, %v652
      %v716 = vadd.f32 %v715, %v653
      %v717 = vadd.f32 %v716, %v654
      %v718 = vadd.f32 %v717, %v655
      %v719 = vadd.f32 %v718, %v656
      %v720 = vadd.f32 %v719, %v657
      %v721 = vadd.f32 %v720, %v658
      %v722 = vadd.f32 %v721, %v659
      %v723 = vadd.f32 %v722, %v660
      %v724 = vadd.f32 %v723, %v661
      %v725 = vadd.f32 %v724, %v662
      %v726 = vsel %vm457, %v663, 0.0
      %v727 = vadd.f32 %v725, %v726
      %728 = vadd.xlane.f32.xlu0 %v727
      %v729 = vpop.xlane.xlu0 %728
      %v730 = vadd.f32 %v664, %v665
      %v731 = vadd.f32 %v730, %v666
      %v732 = vadd.f32 %v731, %v667
      %v733 = vadd.f32 %v732, %v668
      %v734 = vadd.f32 %v733, %v669
      %v735 = vadd.f32 %v734, %v670
      %v736 = vadd.f32 %v735, %v671
      %v737 = vadd.f32 %v736, %v672
      %v738 = vadd.f32 %v737, %v673
      %v739 = vadd.f32 %v738, %v674
      %v740 = vadd.f32 %v739, %v675
      %v741 = vadd.f32 %v740, %v676
      %v742 = vadd.f32 %v741, %v677
      %v743 = vadd.f32 %v742, %v678
      %v744 = vsel %vm457, %v679, 0.0
      %v745 = vadd.f32 %v743, %v744
      %746 = vadd.xlane.f32.xlu0 %v745
      %v747 = vpop.xlane.xlu0 %746
      %v748 = vadd.f32 %v680, %v681
      %v749 = vadd.f32 %v748, %v682
      %v750 = vadd.f32 %v749, %v683
      %v751 = vadd.f32 %v750, %v684
      %v752 = vadd.f32 %v751, %v685
      %v753 = vadd.f32 %v752, %v686
      %v754 = vadd.f32 %v753, %v687
      %v755 = vadd.f32 %v754, %v688
      %v756 = vadd.f32 %v755, %v689
      %v757 = vadd.f32 %v756, %v690
      %v758 = vadd.f32 %v757, %v691
      %v759 = vadd.f32 %v758, %v692
      %v760 = vadd.f32 %v759, %v693
      %v761 = vadd.f32 %v760, %v694
      %v762 = vsel %vm457, %v695, 0.0
      %v763 = vadd.f32 %v761, %v762
      %764 = vadd.xlane.f32.xlu0 %v763
      %v765 = vpop.xlane.xlu0 %764
      %v766 = vadd.f32 %v696, %v697
      %v767 = vadd.f32 %v766, %v698
      %v768 = vadd.f32 %v767, %v699
      %v769 = vadd.f32 %v768, %v700
      %v770 = vadd.f32 %v769, %v701
      %v771 = vadd.f32 %v770, %v702
      %v772 = vadd.f32 %v771, %v703
      %v773 = vadd.f32 %v772, %v704
      %v774 = vadd.f32 %v773, %v705
      %v775 = vadd.f32 %v774, %v706
      %v776 = vadd.f32 %v775, %v707
      %v777 = vadd.f32 %v776, %v708
      %v778 = vadd.f32 %v777, %v709
      %v779 = vadd.f32 %v778, %v710
      %v780 = vsel %vm457, %v711, 0.0
      %v781 = vadd.f32 %v779, %v780
      %782 = vadd.xlane.f32.xlu0 %v781
      %v783 = vpop.xlane.xlu0 %782
      %v784 = vmul.f32 %v729, 0.0005408329
      %v785 = vmul.f32 %v747, 0.0005408329
      %v786 = vmul.f32 %v765, 0.0005408329
      %v787 = vmul.f32 %v783, 0.0005408329
      %v788 = vadd.f32 %v784, 1e-05
      %v789 = vadd.f32 %v785, 1e-05
      %v790 = vadd.f32 %v786, 1e-05
      %v791 = vadd.f32 %v787, 1e-05
      %v792 = vrsqrt.pop %v788
      %v793 = vrsqrt.pop %v789
      %v794 = vrsqrt.pop %v790
      %v795 = vrsqrt.pop %v791
      %v796 = vmul.f32 %v520, %v792
      %v797 = vmul.f32 %v521, %v792
      %v798 = vmul.f32 %v522, %v792
      %v799 = vmul.f32 %v523, %v792
      %v800 = vmul.f32 %v524, %v792
      %v801 = vmul.f32 %v525, %v792
      %v802 = vmul.f32 %v526, %v792
      %v803 = vmul.f32 %v527, %v792
      %v804 = vmul.f32 %v528, %v792
      %v805 = vmul.f32 %v529, %v792
      %v806 = vmul.f32 %v530, %v792
      %v807 = vmul.f32 %v531, %v792
      %v808 = vmul.f32 %v532, %v792
      %v809 = vmul.f32 %v533, %v792
      %v810 = vmul.f32 %v534, %v792
      %v811 = vmul.f32 %v535, %v792
      %v812 = vmul.f32 %v536, %v793
      %v813 = vmul.f32 %v537, %v793
      %v814 = vmul.f32 %v538, %v793
      %v815 = vmul.f32 %v539, %v793
      %v816 = vmul.f32 %v540, %v793
      %v817 = vmul.f32 %v541, %v793
      %v818 = vmul.f32 %v542, %v793
      %v819 = vmul.f32 %v543, %v793
      %v820 = vmul.f32 %v544, %v793
      %v821 = vmul.f32 %v545, %v793
      %v822 = vmul.f32 %v546, %v793
      %v823 = vmul.f32 %v547, %v793
      %v824 = vmul.f32 %v548, %v793
      %v825 = vmul.f32 %v549, %v793
      %v826 = vmul.f32 %v550, %v793
      %v827 = vmul.f32 %v551, %v793
      %v828 = vmul.f32 %v552, %v794
      %v829 = vmul.f32 %v553, %v794
      %v830 = vmul.f32 %v554, %v794
      %v831 = vmul.f32 %v555, %v794
      %v832 = vmul.f32 %v556, %v794
      %v833 = vmul.f32 %v557, %v794
      %v834 = vmul.f32 %v558, %v794
      %v835 = vmul.f32 %v559, %v794
      %v836 = vmul.f32 %v560, %v794
      %v837 = vmul.f32 %v561, %v794
      %v838 = vmul.f32 %v562, %v794
      %v839 = vmul.f32 %v563, %v794
      %v840 = vmul.f32 %v564, %v794
      %v841 = vmul.f32 %v565, %v794
      %v842 = vmul.f32 %v566, %v794
      %v843 = vmul.f32 %v567, %v794
      %v844 = vmul.f32 %v568, %v795
      %v845 = vmul.f32 %v569, %v795
      %v846 = vmul.f32 %v570, %v795
      %v847 = vmul.f32 %v571, %v795
      %v848 = vmul.f32 %v572, %v795
      %v849 = vmul.f32 %v573, %v795
      %v850 = vmul.f32 %v574, %v795
      %v851 = vmul.f32 %v575, %v795
      %v852 = vmul.f32 %v576, %v795
      %v853 = vmul.f32 %v577, %v795
      %v854 = vmul.f32 %v578, %v795
      %v855 = vmul.f32 %v579, %v795
      %v856 = vmul.f32 %v580, %v795
      %v857 = vmul.f32 %v581, %v795
      %v858 = vmul.f32 %v582, %v795
      %v859 = vmul.f32 %v583, %v795
      %v860 = vmax.f32 %v796, 0.0
      %v861 = vmax.f32 %v797, 0.0
      %v862 = vmax.f32 %v798, 0.0
      %v863 = vmax.f32 %v799, 0.0
      %v864 = vmax.f32 %v800, 0.0
      %v865 = vmax.f32 %v801, 0.0
      %v866 = vmax.f32 %v802, 0.0
      %v867 = vmax.f32 %v803, 0.0
      %v868 = vmax.f32 %v804, 0.0
      %v869 = vmax.f32 %v805, 0.0
      %v870 = vmax.f32 %v806, 0.0
      %v871 = vmax.f32 %v807, 0.0
      %v872 = vmax.f32 %v808, 0.0
      %v873 = vmax.f32 %v809, 0.0
      %v874 = vmax.f32 %v810, 0.0
      %v875 = vmax.f32 %v811, 0.0
      %v876 = vmax.f32 %v812, 0.0
      %v877 = vmax.f32 %v813, 0.0
      %v878 = vmax.f32 %v814, 0.0
      %v879 = vmax.f32 %v815, 0.0
      %v880 = vmax.f32 %v816, 0.0
      %v881 = vmax.f32 %v817, 0.0
      %v882 = vmax.f32 %v818, 0.0
      %v883 = vmax.f32 %v819, 0.0
      %v884 = vmax.f32 %v820, 0.0
      %v885 = vmax.f32 %v821, 0.0
      %v886 = vmax.f32 %v822, 0.0
      %v887 = vmax.f32 %v823, 0.0
      %v888 = vmax.f32 %v824, 0.0
      %v889 = vmax.f32 %v825, 0.0
      %v890 = vmax.f32 %v826, 0.0
      %v891 = vmax.f32 %v827, 0.0
      %v892 = vmax.f32 %v828, 0.0
      %v893 = vmax.f32 %v829, 0.0
      %v894 = vmax.f32 %v830, 0.0
      %v895 = vmax.f32 %v831, 0.0
      %v896 = vmax.f32 %v832, 0.0
      %v897 = vmax.f32 %v833, 0.0
      %v898 = vmax.f32 %v834, 0.0
      %v899 = vmax.f32 %v835, 0.0
      %v900 = vmax.f32 %v836, 0.0
      %v901 = vmax.f32 %v837, 0.0
      %v902 = vmax.f32 %v838, 0.0
      %v903 = vmax.f32 %v839, 0.0
      %v904 = vmax.f32 %v840, 0.0
      %v905 = vmax.f32 %v841, 0.0
      %v906 = vmax.f32 %v842, 0.0
      %v907 = vmax.f32 %v843, 0.0
      %v908 = vmax.f32 %v844, 0.0
      %v909 = vmax.f32 %v845, 0.0
      %v910 = vmax.f32 %v846, 0.0
      %v911 = vmax.f32 %v847, 0.0
      %v912 = vmax.f32 %v848, 0.0
      %v913 = vmax.f32 %v849, 0.0
      %v914 = vmax.f32 %v850, 0.0
      %v915 = vmax.f32 %v851, 0.0
      %v916 = vmax.f32 %v852, 0.0
      %v917 = vmax.f32 %v853, 0.0
      %v918 = vmax.f32 %v854, 0.0
      %v919 = vmax.f32 %v855, 0.0
      %v920 = vmax.f32 %v856, 0.0
      %v921 = vmax.f32 %v857, 0.0
      %v922 = vmax.f32 %v858, 0.0
      %v923 = vmax.f32 %v859, 0.0
      %v924 = vmul.f32 %v860, %v302
      %v925 = vmul.f32 %v861, %v306
      %v926 = vmul.f32 %v862, %v310
      %v927 = vmul.f32 %v863, %v314
      %v928 = vmul.f32 %v864, %v318
      %v929 = vmul.f32 %v865, %v322
      %v930 = vmul.f32 %v866, %v326
      %v931 = vmul.f32 %v867, %v330
      %v932 = vmul.f32 %v868, %v334
      %v933 = vmul.f32 %v869, %v338
      %v934 = vmul.f32 %v870, %v342
      %v935 = vmul.f32 %v871, %v346
      %v936 = vmul.f32 %v872, %v350
      %v937 = vmul.f32 %v873, %v354
      %v938 = vmul.f32 %v874, %v358
      %v939 = vmul.f32 %v875, %v362
      %v940 = vmul.f32 %v876, %v302
      %v941 = vmul.f32 %v877, %v306
      %v942 = vmul.f32 %v878, %v310
      %v943 = vmul.f32 %v879, %v314
      %v944 = vmul.f32 %v880, %v318
      %v945 = vmul.f32 %v881, %v322
      %v946 = vmul.f32 %v882, %v326
      %v947 = vmul.f32 %v883, %v330
      %v948 = vmul.f32 %v884, %v334
      %v949 = vmul.f32 %v885, %v338
      %v950 = vmul.f32 %v886, %v342
      %v951 = vmul.f32 %v887, %v346
      %v952 = vmul.f32 %v888, %v350
      %v953 = vmul.f32 %v889, %v354
      %v954 = vmul.f32 %v890, %v358
      %v955 = vmul.f32 %v891, %v362
      %v956 = vmul.f32 %v892, %v302
      %v957 = vmul.f32 %v893, %v306
      %v958 = vmul.f32 %v894, %v310
      %v959 = vmul.f32 %v895, %v314
      %v960 = vmul.f32 %v896, %v318
      %v961 = vmul.f32 %v897, %v322
      %v962 = vmul.f32 %v898, %v326
      %v963 = vmul.f32 %v899, %v330
      %v964 = vmul.f32 %v900, %v334
      %v965 = vmul.f32 %v901, %v338
      %v966 = vmul.f32 %v902, %v342
      %v967 = vmul.f32 %v903, %v346
      %v968 = vmul.f32 %v904, %v350
      %v969 = vmul.f32 %v905, %v354
      %v970 = vmul.f32 %v906, %v358
      %v971 = vmul.f32 %v907, %v362
      %v972 = vmul.f32 %v908, %v302
      %v973 = vmul.f32 %v909, %v306
      %v974 = vmul.f32 %v910, %v310
      %v975 = vmul.f32 %v911, %v314
      %v976 = vmul.f32 %v912, %v318
      %v977 = vmul.f32 %v913, %v322
      %v978 = vmul.f32 %v914, %v326
      %v979 = vmul.f32 %v915, %v330
      %v980 = vmul.f32 %v916, %v334
      %v981 = vmul.f32 %v917, %v338
      %v982 = vmul.f32 %v918, %v342
      %v983 = vmul.f32 %v919, %v346
      %v984 = vmul.f32 %v920, %v350
      %v985 = vmul.f32 %v921, %v354
      %v986 = vmul.f32 %v922, %v358
      %v987 = vmul.f32 %v923, %v362
      %v988 = vld [vmem:[%s1] sm:$0xff]
      %v989 = vld [vmem:[%s1 + $0x8] sm:$0xf]
      %v990 = vpack.c.bf16 %v940, %v924
      %v991 = vpack.c.bf16 %v941, %v925
      %v992 = vpack.c.bf16 %v942, %v926
      %v993 = vpack.c.bf16 %v943, %v927
      %v994 = vpack.c.bf16 %v944, %v928
      %v995 = vpack.c.bf16 %v945, %v929
      %v996 = vpack.c.bf16 %v946, %v930
      %v997 = vpack.c.bf16 %v947, %v931
      %v998 = vpack.c.bf16 %v948, %v932
      %v999 = vpack.c.bf16 %v949, %v933
      %v1000 = vpack.c.bf16 %v950, %v934
      %v1001 = vpack.c.bf16 %v951, %v935
      %v1002 = vpack.c.bf16 %v952, %v936
      %v1003 = vpack.c.bf16 %v953, %v937
      %v1004 = vpack.c.bf16 %v954, %v938
      %v1005 = vpack.c.bf16 %v955, %v939
      %v1006 = vpack.c.bf16 %v972, %v956
      %v1007 = vpack.c.bf16 %v973, %v957
      %v1008 = vpack.c.bf16 %v974, %v958
      %v1009 = vpack.c.bf16 %v975, %v959
      %v1010 = vpack.c.bf16 %v976, %v960
      %v1011 = vpack.c.bf16 %v977, %v961
      %v1012 = vpack.c.bf16 %v978, %v962
      %v1013 = vpack.c.bf16 %v979, %v963
      %v1014 = vpack.c.bf16 %v980, %v964
      %v1015 = vpack.c.bf16 %v981, %v965
      %v1016 = vpack.c.bf16 %v982, %v966
      %v1017 = vpack.c.bf16 %v983, %v967
      %v1018 = vpack.c.bf16 %v984, %v968
      %v1019 = vpack.c.bf16 %v985, %v969
      %v1020 = vpack.c.bf16 %v986, %v970
      %v1021 = vpack.c.bf16 %v987, %v971
      %1054 = vrot.lane.b32.xlu0 %v990, 127
      %v1055 = vpop.permute.xlu0 %1054
      %1056 = vrot.lane.b32.xlu0 %v991, 127
      %v1057 = vpop.permute.xlu0 %1056
      %1058 = vrot.lane.b32.xlu0 %v992, 127
      %v1059 = vpop.permute.xlu0 %1058
      %1060 = vrot.lane.b32.xlu0 %v993, 127
      %v1061 = vpop.permute.xlu0 %1060
      %1062 = vrot.lane.b32.xlu0 %v994, 127
      %v1063 = vpop.permute.xlu0 %1062
      %1064 = vrot.lane.b32.xlu0 %v995, 127
      %v1065 = vpop.permute.xlu0 %1064
      %1066 = vrot.lane.b32.xlu0 %v996, 127
      %v1067 = vpop.permute.xlu0 %1066
      %1068 = vrot.lane.b32.xlu0 %v997, 127
      %v1069 = vpop.permute.xlu0 %1068
      %1070 = vrot.lane.b32.xlu0 %v998, 127
      %v1071 = vpop.permute.xlu0 %1070
      %1072 = vrot.lane.b32.xlu0 %v999, 127
      %v1073 = vpop.permute.xlu0 %1072
      %1074 = vrot.lane.b32.xlu0 %v1000, 127
      %v1075 = vpop.permute.xlu0 %1074
      %1076 = vrot.lane.b32.xlu0 %v1001, 127
      %v1077 = vpop.permute.xlu0 %1076
      %1078 = vrot.lane.b32.xlu0 %v1002, 127
      %v1079 = vpop.permute.xlu0 %1078
      %1080 = vrot.lane.b32.xlu0 %v1003, 127
      %v1081 = vpop.permute.xlu0 %1080
      %1082 = vrot.lane.b32.xlu0 %v1004, 127
      %v1083 = vpop.permute.xlu0 %1082
      %1084 = vrot.lane.b32.xlu0 %v1005, 127
      %v1085 = vpop.permute.xlu0 %1084
      %1086 = vrot.lane.b32.xlu0 %v1006, 127
      %v1087 = vpop.permute.xlu0 %1086
      %1088 = vrot.lane.b32.xlu0 %v1007, 127
      %v1089 = vpop.permute.xlu0 %1088
      %1090 = vrot.lane.b32.xlu0 %v1008, 127
      %v1091 = vpop.permute.xlu0 %1090
      %1092 = vrot.lane.b32.xlu0 %v1009, 127
      %v1093 = vpop.permute.xlu0 %1092
      %1094 = vrot.lane.b32.xlu0 %v1010, 127
      %v1095 = vpop.permute.xlu0 %1094
      %1096 = vrot.lane.b32.xlu0 %v1011, 127
      %v1097 = vpop.permute.xlu0 %1096
      %1098 = vrot.lane.b32.xlu0 %v1012, 127
      %v1099 = vpop.permute.xlu0 %1098
      %1100 = vrot.lane.b32.xlu0 %v1013, 127
      %v1101 = vpop.permute.xlu0 %1100
      %1102 = vrot.lane.b32.xlu0 %v1014, 127
      %v1103 = vpop.permute.xlu0 %1102
      %1104 = vrot.lane.b32.xlu0 %v1015, 127
      %v1105 = vpop.permute.xlu0 %1104
      %1106 = vrot.lane.b32.xlu0 %v1016, 127
      %v1107 = vpop.permute.xlu0 %1106
      %1108 = vrot.lane.b32.xlu0 %v1017, 127
      %v1109 = vpop.permute.xlu0 %1108
      %1110 = vrot.lane.b32.xlu0 %v1018, 127
      %v1111 = vpop.permute.xlu0 %1110
      %1112 = vrot.lane.b32.xlu0 %v1019, 127
      %v1113 = vpop.permute.xlu0 %1112
      %1114 = vrot.lane.b32.xlu0 %v1020, 127
      %v1115 = vpop.permute.xlu0 %1114
      %1116 = vrot.lane.b32.xlu0 %v1021, 127
      %v1117 = vpop.permute.xlu0 %1116
      %vm1118 = vcmask 1039360
      %v1119 = vsel %vm1118, %v1055, %v1057
      %v1120 = vsel %vm1118, %v1057, %v1059
      %v1121 = vsel %vm1118, %v1059, %v1061
      %v1122 = vsel %vm1118, %v1061, %v1063
      %v1123 = vsel %vm1118, %v1063, %v1065
      %v1124 = vsel %vm1118, %v1065, %v1067
      %v1125 = vsel %vm1118, %v1067, %v1069
      %v1126 = vsel %vm1118, %v1069, %v1071
      %v1127 = vsel %vm1118, %v1071, %v1073
      %v1128 = vsel %vm1118, %v1073, %v1075
      %v1129 = vsel %vm1118, %v1075, %v1077
      %v1130 = vsel %vm1118, %v1077, %v1079
      %v1131 = vsel %vm1118, %v1079, %v1081
      %v1132 = vsel %vm1118, %v1081, %v1083
      %v1133 = vsel %vm1118, %v1083, %v1085
      %v1134 = vsel %vm1118, %v1087, %v1089
      %v1135 = vsel %vm1118, %v1089, %v1091
      %v1136 = vsel %vm1118, %v1091, %v1093
      %v1137 = vsel %vm1118, %v1093, %v1095
      %v1138 = vsel %vm1118, %v1095, %v1097
      %v1139 = vsel %vm1118, %v1097, %v1099
      %v1140 = vsel %vm1118, %v1099, %v1101
      %v1141 = vsel %vm1118, %v1101, %v1103
      %v1142 = vsel %vm1118, %v1103, %v1105
      %v1143 = vsel %vm1118, %v1105, %v1107
      %v1144 = vsel %vm1118, %v1107, %v1109
      %v1145 = vsel %vm1118, %v1109, %v1111
      %v1146 = vsel %vm1118, %v1111, %v1113
      %v1147 = vsel %vm1118, %v1113, %v1115
      %v1148 = vsel %vm1118, %v1115, %v1117
      %1181 = vrot.lane.b32.xlu0 %v990, 126
      %v1182 = vpop.permute.xlu0 %1181
      %1183 = vrot.lane.b32.xlu0 %v991, 126
      %v1184 = vpop.permute.xlu0 %1183
      %1185 = vrot.lane.b32.xlu0 %v992, 126
      %v1186 = vpop.permute.xlu0 %1185
      %1187 = vrot.lane.b32.xlu0 %v993, 126
      %v1188 = vpop.permute.xlu0 %1187
      %1189 = vrot.lane.b32.xlu0 %v994, 126
      %v1190 = vpop.permute.xlu0 %1189
      %1191 = vrot.lane.b32.xlu0 %v995, 126
      %v1192 = vpop.permute.xlu0 %1191
      %1193 = vrot.lane.b32.xlu0 %v996, 126
      %v1194 = vpop.permute.xlu0 %1193
      %1195 = vrot.lane.b32.xlu0 %v997, 126
      %v1196 = vpop.permute.xlu0 %1195
      %1197 = vrot.lane.b32.xlu0 %v998, 126
      %v1198 = vpop.permute.xlu0 %1197
      %1199 = vrot.lane.b32.xlu0 %v999, 126
      %v1200 = vpop.permute.xlu0 %1199
      %1201 = vrot.lane.b32.xlu0 %v1000, 126
      %v1202 = vpop.permute.xlu0 %1201
      %1203 = vrot.lane.b32.xlu0 %v1001, 126
      %v1204 = vpop.permute.xlu0 %1203
      %1205 = vrot.lane.b32.xlu0 %v1002, 126
      %v1206 = vpop.permute.xlu0 %1205
      %1207 = vrot.lane.b32.xlu0 %v1003, 126
      %v1208 = vpop.permute.xlu0 %1207
      %1209 = vrot.lane.b32.xlu0 %v1004, 126
      %v1210 = vpop.permute.xlu0 %1209
      %1211 = vrot.lane.b32.xlu0 %v1005, 126
      %v1212 = vpop.permute.xlu0 %1211
      %1213 = vrot.lane.b32.xlu0 %v1006, 126
      %v1214 = vpop.permute.xlu0 %1213
      %1215 = vrot.lane.b32.xlu0 %v1007, 126
      %v1216 = vpop.permute.xlu0 %1215
      %1217 = vrot.lane.b32.xlu0 %v1008, 126
      %v1218 = vpop.permute.xlu0 %1217
      %1219 = vrot.lane.b32.xlu0 %v1009, 126
      %v1220 = vpop.permute.xlu0 %1219
      %1221 = vrot.lane.b32.xlu0 %v1010, 126
      %v1222 = vpop.permute.xlu0 %1221
      %1223 = vrot.lane.b32.xlu0 %v1011, 126
      %v1224 = vpop.permute.xlu0 %1223
      %1225 = vrot.lane.b32.xlu0 %v1012, 126
      %v1226 = vpop.permute.xlu0 %1225
      %1227 = vrot.lane.b32.xlu0 %v1013, 126
      %v1228 = vpop.permute.xlu0 %1227
      %1229 = vrot.lane.b32.xlu0 %v1014, 126
      %v1230 = vpop.permute.xlu0 %1229
      %1231 = vrot.lane.b32.xlu0 %v1015, 126
      %v1232 = vpop.permute.xlu0 %1231
      %1233 = vrot.lane.b32.xlu0 %v1016, 126
      %v1234 = vpop.permute.xlu0 %1233
      %1235 = vrot.lane.b32.xlu0 %v1017, 126
      %v1236 = vpop.permute.xlu0 %1235
      %1237 = vrot.lane.b32.xlu0 %v1018, 126
      %v1238 = vpop.permute.xlu0 %1237
      %1239 = vrot.lane.b32.xlu0 %v1019, 126
      %v1240 = vpop.permute.xlu0 %1239
      %1241 = vrot.lane.b32.xlu0 %v1020, 126
      %v1242 = vpop.permute.xlu0 %1241
      %1243 = vrot.lane.b32.xlu0 %v1021, 126
      %v1244 = vpop.permute.xlu0 %1243
      %vm1245 = vcmask 1031168
      %v1246 = vsel %vm1245, %v1182, %v1184
      %v1247 = vsel %vm1245, %v1184, %v1186
      %v1248 = vsel %vm1245, %v1186, %v1188
      %v1249 = vsel %vm1245, %v1188, %v1190
      %v1250 = vsel %vm1245, %v1190, %v1192
      %v1251 = vsel %vm1245, %v1192, %v1194
      %v1252 = vsel %vm1245, %v1194, %v1196
      %v1253 = vsel %vm1245, %v1196, %v1198
      %v1254 = vsel %vm1245, %v1198, %v1200
      %v1255 = vsel %vm1245, %v1200, %v1202
      %v1256 = vsel %vm1245, %v1202, %v1204
      %v1257 = vsel %vm1245, %v1204, %v1206
      %v1258 = vsel %vm1245, %v1206, %v1208
      %v1259 = vsel %vm1245, %v1208, %v1210
      %v1260 = vsel %vm1245, %v1210, %v1212
      %v1261 = vsel %vm1245, %v1214, %v1216
      %v1262 = vsel %vm1245, %v1216, %v1218
      %v1263 = vsel %vm1245, %v1218, %v1220
      %v1264 = vsel %vm1245, %v1220, %v1222
      %v1265 = vsel %vm1245, %v1222, %v1224
      %v1266 = vsel %vm1245, %v1224, %v1226
      %v1267 = vsel %vm1245, %v1226, %v1228
      %v1268 = vsel %vm1245, %v1228, %v1230
      %v1269 = vsel %vm1245, %v1230, %v1232
      %v1270 = vsel %vm1245, %v1232, %v1234
      %v1271 = vsel %vm1245, %v1234, %v1236
      %v1272 = vsel %vm1245, %v1236, %v1238
      %v1273 = vsel %vm1245, %v1238, %v1240
      %v1274 = vsel %vm1245, %v1240, %v1242
      %v1275 = vsel %vm1245, %v1242, %v1244
      %1308 = vrot.lane.b32.xlu0 %v990, 83
      %v1309 = vpop.permute.xlu0 %1308
      %1310 = vrot.lane.b32.xlu0 %v991, 83
      %v1311 = vpop.permute.xlu0 %1310
      %1312 = vrot.lane.b32.xlu0 %v992, 83
      %v1313 = vpop.permute.xlu0 %1312
      %1314 = vrot.lane.b32.xlu0 %v993, 83
      %v1315 = vpop.permute.xlu0 %1314
      %1316 = vrot.lane.b32.xlu0 %v994, 83
      %v1317 = vpop.permute.xlu0 %1316
      %1318 = vrot.lane.b32.xlu0 %v995, 83
      %v1319 = vpop.permute.xlu0 %1318
      %1320 = vrot.lane.b32.xlu0 %v996, 83
      %v1321 = vpop.permute.xlu0 %1320
      %1322 = vrot.lane.b32.xlu0 %v997, 83
      %v1323 = vpop.permute.xlu0 %1322
      %1324 = vrot.lane.b32.xlu0 %v998, 83
      %v1325 = vpop.permute.xlu0 %1324
      %1326 = vrot.lane.b32.xlu0 %v999, 83
      %v1327 = vpop.permute.xlu0 %1326
      %1328 = vrot.lane.b32.xlu0 %v1000, 83
      %v1329 = vpop.permute.xlu0 %1328
      %1330 = vrot.lane.b32.xlu0 %v1001, 83
      %v1331 = vpop.permute.xlu0 %1330
      %1332 = vrot.lane.b32.xlu0 %v1002, 83
      %v1333 = vpop.permute.xlu0 %1332
      %1334 = vrot.lane.b32.xlu0 %v1003, 83
      %v1335 = vpop.permute.xlu0 %1334
      %1336 = vrot.lane.b32.xlu0 %v1004, 83
      %v1337 = vpop.permute.xlu0 %1336
      %1338 = vrot.lane.b32.xlu0 %v1005, 83
      %v1339 = vpop.permute.xlu0 %1338
      %1340 = vrot.lane.b32.xlu0 %v1006, 83
      %v1341 = vpop.permute.xlu0 %1340
      %1342 = vrot.lane.b32.xlu0 %v1007, 83
      %v1343 = vpop.permute.xlu0 %1342
      %1344 = vrot.lane.b32.xlu0 %v1008, 83
      %v1345 = vpop.permute.xlu0 %1344
      %1346 = vrot.lane.b32.xlu0 %v1009, 83
      %v1347 = vpop.permute.xlu0 %1346
      %1348 = vrot.lane.b32.xlu0 %v1010, 83
      %v1349 = vpop.permute.xlu0 %1348
      %1350 = vrot.lane.b32.xlu0 %v1011, 83
      %v1351 = vpop.permute.xlu0 %1350
      %1352 = vrot.lane.b32.xlu0 %v1012, 83
      %v1353 = vpop.permute.xlu0 %1352
      %1354 = vrot.lane.b32.xlu0 %v1013, 83
      %v1355 = vpop.permute.xlu0 %1354
      %1356 = vrot.lane.b32.xlu0 %v1014, 83
      %v1357 = vpop.permute.xlu0 %1356
      %1358 = vrot.lane.b32.xlu0 %v1015, 83
      %v1359 = vpop.permute.xlu0 %1358
      %1360 = vrot.lane.b32.xlu0 %v1016, 83
      %v1361 = vpop.permute.xlu0 %1360
      %1362 = vrot.lane.b32.xlu0 %v1017, 83
      %v1363 = vpop.permute.xlu0 %1362
      %1364 = vrot.lane.b32.xlu0 %v1018, 83
      %v1365 = vpop.permute.xlu0 %1364
      %1366 = vrot.lane.b32.xlu0 %v1019, 83
      %v1367 = vpop.permute.xlu0 %1366
      %1368 = vrot.lane.b32.xlu0 %v1020, 83
      %v1369 = vpop.permute.xlu0 %1368
      %1370 = vrot.lane.b32.xlu0 %v1021, 83
      %v1371 = vpop.permute.xlu0 %1370
      %vm1372 = vcmask 678912
      %v1373 = vsel %vm1372, %v1309, %v1311
      %v1374 = vsel %vm1372, %v1311, %v1313
      %v1375 = vsel %vm1372, %v1313, %v1315
      %v1376 = vsel %vm1372, %v1315, %v1317
      %v1377 = vsel %vm1372, %v1317, %v1319
      %v1378 = vsel %vm1372, %v1319, %v1321
      %v1379 = vsel %vm1372, %v1321, %v1323
      %v1380 = vsel %vm1372, %v1323, %v1325
      %v1381 = vsel %vm1372, %v1325, %v1327
      %v1382 = vsel %vm1372, %v1327, %v1329
      %v1383 = vsel %vm1372, %v1329, %v1331
      %v1384 = vsel %vm1372, %v1331, %v1333
      %v1385 = vsel %vm1372, %v1333, %v1335
      %v1386 = vsel %vm1372, %v1335, %v1337
      %v1387 = vsel %vm1372, %v1337, %v1339
      %v1388 = vsel %vm1372, %v1341, %v1343
      %v1389 = vsel %vm1372, %v1343, %v1345
      %v1390 = vsel %vm1372, %v1345, %v1347
      %v1391 = vsel %vm1372, %v1347, %v1349
      %v1392 = vsel %vm1372, %v1349, %v1351
      %v1393 = vsel %vm1372, %v1351, %v1353
      %v1394 = vsel %vm1372, %v1353, %v1355
      %v1395 = vsel %vm1372, %v1355, %v1357
      %v1396 = vsel %vm1372, %v1357, %v1359
      %v1397 = vsel %vm1372, %v1359, %v1361
      %v1398 = vsel %vm1372, %v1361, %v1363
      %v1399 = vsel %vm1372, %v1363, %v1365
      %v1400 = vsel %vm1372, %v1365, %v1367
      %v1401 = vsel %vm1372, %v1367, %v1369
      %v1402 = vsel %vm1372, %v1369, %v1371
      %1435 = vrot.lane.b32.xlu0 %v990, 82
      %v1436 = vpop.permute.xlu0 %1435
      %1437 = vrot.lane.b32.xlu0 %v991, 82
      %v1438 = vpop.permute.xlu0 %1437
      %1439 = vrot.lane.b32.xlu0 %v992, 82
      %v1440 = vpop.permute.xlu0 %1439
      %1441 = vrot.lane.b32.xlu0 %v993, 82
      %v1442 = vpop.permute.xlu0 %1441
      %1443 = vrot.lane.b32.xlu0 %v994, 82
      %v1444 = vpop.permute.xlu0 %1443
      %1445 = vrot.lane.b32.xlu0 %v995, 82
      %v1446 = vpop.permute.xlu0 %1445
      %1447 = vrot.lane.b32.xlu0 %v996, 82
      %v1448 = vpop.permute.xlu0 %1447
      %1449 = vrot.lane.b32.xlu0 %v997, 82
      %v1450 = vpop.permute.xlu0 %1449
      %1451 = vrot.lane.b32.xlu0 %v998, 82
      %v1452 = vpop.permute.xlu0 %1451
      %1453 = vrot.lane.b32.xlu0 %v999, 82
      %v1454 = vpop.permute.xlu0 %1453
      %1455 = vrot.lane.b32.xlu0 %v1000, 82
      %v1456 = vpop.permute.xlu0 %1455
      %1457 = vrot.lane.b32.xlu0 %v1001, 82
      %v1458 = vpop.permute.xlu0 %1457
      %1459 = vrot.lane.b32.xlu0 %v1002, 82
      %v1460 = vpop.permute.xlu0 %1459
      %1461 = vrot.lane.b32.xlu0 %v1003, 82
      %v1462 = vpop.permute.xlu0 %1461
      %1463 = vrot.lane.b32.xlu0 %v1004, 82
      %v1464 = vpop.permute.xlu0 %1463
      %1465 = vrot.lane.b32.xlu0 %v1005, 82
      %v1466 = vpop.permute.xlu0 %1465
      %1467 = vrot.lane.b32.xlu0 %v1006, 82
      %v1468 = vpop.permute.xlu0 %1467
      %1469 = vrot.lane.b32.xlu0 %v1007, 82
      %v1470 = vpop.permute.xlu0 %1469
      %1471 = vrot.lane.b32.xlu0 %v1008, 82
      %v1472 = vpop.permute.xlu0 %1471
      %1473 = vrot.lane.b32.xlu0 %v1009, 82
      %v1474 = vpop.permute.xlu0 %1473
      %1475 = vrot.lane.b32.xlu0 %v1010, 82
      %v1476 = vpop.permute.xlu0 %1475
      %1477 = vrot.lane.b32.xlu0 %v1011, 82
      %v1478 = vpop.permute.xlu0 %1477
      %1479 = vrot.lane.b32.xlu0 %v1012, 82
      %v1480 = vpop.permute.xlu0 %1479
      %1481 = vrot.lane.b32.xlu0 %v1013, 82
      %v1482 = vpop.permute.xlu0 %1481
      %1483 = vrot.lane.b32.xlu0 %v1014, 82
      %v1484 = vpop.permute.xlu0 %1483
      %1485 = vrot.lane.b32.xlu0 %v1015, 82
      %v1486 = vpop.permute.xlu0 %1485
      %1487 = vrot.lane.b32.xlu0 %v1016, 82
      %v1488 = vpop.permute.xlu0 %1487
      %1489 = vrot.lane.b32.xlu0 %v1017, 82
      %v1490 = vpop.permute.xlu0 %1489
      %1491 = vrot.lane.b32.xlu0 %v1018, 82
      %v1492 = vpop.permute.xlu0 %1491
      %1493 = vrot.lane.b32.xlu0 %v1019, 82
      %v1494 = vpop.permute.xlu0 %1493
      %1495 = vrot.lane.b32.xlu0 %v1020, 82
      %v1496 = vpop.permute.xlu0 %1495
      %1497 = vrot.lane.b32.xlu0 %v1021, 82
      %v1498 = vpop.permute.xlu0 %1497
      %vm1499 = vcmask 670720
      %v1500 = vsel %vm1499, %v1436, %v1438
      %v1501 = vsel %vm1499, %v1438, %v1440
      %v1502 = vsel %vm1499, %v1440, %v1442
      %v1503 = vsel %vm1499, %v1442, %v1444
      %v1504 = vsel %vm1499, %v1444, %v1446
      %v1505 = vsel %vm1499, %v1446, %v1448
      %v1506 = vsel %vm1499, %v1448, %v1450
      %v1507 = vsel %vm1499, %v1450, %v1452
      %v1508 = vsel %vm1499, %v1452, %v1454
      %v1509 = vsel %vm1499, %v1454, %v1456
      %v1510 = vsel %vm1499, %v1456, %v1458
      %v1511 = vsel %vm1499, %v1458, %v1460
      %v1512 = vsel %vm1499, %v1460, %v1462
      %v1513 = vsel %vm1499, %v1462, %v1464
      %v1514 = vsel %vm1499, %v1464, %v1466
      %v1515 = vsel %vm1499, %v1468, %v1470
      %v1516 = vsel %vm1499, %v1470, %v1472
      %v1517 = vsel %vm1499, %v1472, %v1474
      %v1518 = vsel %vm1499, %v1474, %v1476
      %v1519 = vsel %vm1499, %v1476, %v1478
      %v1520 = vsel %vm1499, %v1478, %v1480
      %v1521 = vsel %vm1499, %v1480, %v1482
      %v1522 = vsel %vm1499, %v1482, %v1484
      %v1523 = vsel %vm1499, %v1484, %v1486
      %v1524 = vsel %vm1499, %v1486, %v1488
      %v1525 = vsel %vm1499, %v1488, %v1490
      %v1526 = vsel %vm1499, %v1490, %v1492
      %v1527 = vsel %vm1499, %v1492, %v1494
      %v1528 = vsel %vm1499, %v1494, %v1496
      %v1529 = vsel %vm1499, %v1496, %v1498
      %1562 = vrot.lane.b32.xlu0 %v990, 81
      %v1563 = vpop.permute.xlu0 %1562
      %1564 = vrot.lane.b32.xlu0 %v991, 81
      %v1565 = vpop.permute.xlu0 %1564
      %1566 = vrot.lane.b32.xlu0 %v992, 81
      %v1567 = vpop.permute.xlu0 %1566
      %1568 = vrot.lane.b32.xlu0 %v993, 81
      %v1569 = vpop.permute.xlu0 %1568
      %1570 = vrot.lane.b32.xlu0 %v994, 81
      %v1571 = vpop.permute.xlu0 %1570
      %1572 = vrot.lane.b32.xlu0 %v995, 81
      %v1573 = vpop.permute.xlu0 %1572
      %1574 = vrot.lane.b32.xlu0 %v996, 81
      %v1575 = vpop.permute.xlu0 %1574
      %1576 = vrot.lane.b32.xlu0 %v997, 81
      %v1577 = vpop.permute.xlu0 %1576
      %1578 = vrot.lane.b32.xlu0 %v998, 81
      %v1579 = vpop.permute.xlu0 %1578
      %1580 = vrot.lane.b32.xlu0 %v999, 81
      %v1581 = vpop.permute.xlu0 %1580
      %1582 = vrot.lane.b32.xlu0 %v1000, 81
      %v1583 = vpop.permute.xlu0 %1582
      %1584 = vrot.lane.b32.xlu0 %v1001, 81
      %v1585 = vpop.permute.xlu0 %1584
      %1586 = vrot.lane.b32.xlu0 %v1002, 81
      %v1587 = vpop.permute.xlu0 %1586
      %1588 = vrot.lane.b32.xlu0 %v1003, 81
      %v1589 = vpop.permute.xlu0 %1588
      %1590 = vrot.lane.b32.xlu0 %v1004, 81
      %v1591 = vpop.permute.xlu0 %1590
      %1592 = vrot.lane.b32.xlu0 %v1005, 81
      %v1593 = vpop.permute.xlu0 %1592
      %1594 = vrot.lane.b32.xlu0 %v1006, 81
      %v1595 = vpop.permute.xlu0 %1594
      %1596 = vrot.lane.b32.xlu0 %v1007, 81
      %v1597 = vpop.permute.xlu0 %1596
      %1598 = vrot.lane.b32.xlu0 %v1008, 81
      %v1599 = vpop.permute.xlu0 %1598
      %1600 = vrot.lane.b32.xlu0 %v1009, 81
      %v1601 = vpop.permute.xlu0 %1600
      %1602 = vrot.lane.b32.xlu0 %v1010, 81
      %v1603 = vpop.permute.xlu0 %1602
      %1604 = vrot.lane.b32.xlu0 %v1011, 81
      %v1605 = vpop.permute.xlu0 %1604
      %1606 = vrot.lane.b32.xlu0 %v1012, 81
      %v1607 = vpop.permute.xlu0 %1606
      %1608 = vrot.lane.b32.xlu0 %v1013, 81
      %v1609 = vpop.permute.xlu0 %1608
      %1610 = vrot.lane.b32.xlu0 %v1014, 81
      %v1611 = vpop.permute.xlu0 %1610
      %1612 = vrot.lane.b32.xlu0 %v1015, 81
      %v1613 = vpop.permute.xlu0 %1612
      %1614 = vrot.lane.b32.xlu0 %v1016, 81
      %v1615 = vpop.permute.xlu0 %1614
      %1616 = vrot.lane.b32.xlu0 %v1017, 81
      %v1617 = vpop.permute.xlu0 %1616
      %1618 = vrot.lane.b32.xlu0 %v1018, 81
      %v1619 = vpop.permute.xlu0 %1618
      %1620 = vrot.lane.b32.xlu0 %v1019, 81
      %v1621 = vpop.permute.xlu0 %1620
      %1622 = vrot.lane.b32.xlu0 %v1020, 81
      %v1623 = vpop.permute.xlu0 %1622
      %1624 = vrot.lane.b32.xlu0 %v1021, 81
      %v1625 = vpop.permute.xlu0 %1624
      %vm1626 = vcmask 662528
      %v1627 = vsel %vm1626, %v1563, %v1565
      %v1628 = vsel %vm1626, %v1565, %v1567
      %v1629 = vsel %vm1626, %v1567, %v1569
      %v1630 = vsel %vm1626, %v1569, %v1571
      %v1631 = vsel %vm1626, %v1571, %v1573
      %v1632 = vsel %vm1626, %v1573, %v1575
      %v1633 = vsel %vm1626, %v1575, %v1577
      %v1634 = vsel %vm1626, %v1577, %v1579
      %v1635 = vsel %vm1626, %v1579, %v1581
      %v1636 = vsel %vm1626, %v1581, %v1583
      %v1637 = vsel %vm1626, %v1583, %v1585
      %v1638 = vsel %vm1626, %v1585, %v1587
      %v1639 = vsel %vm1626, %v1587, %v1589
      %v1640 = vsel %vm1626, %v1589, %v1591
      %v1641 = vsel %vm1626, %v1591, %v1593
      %v1642 = vsel %vm1626, %v1595, %v1597
      %v1643 = vsel %vm1626, %v1597, %v1599
      %v1644 = vsel %vm1626, %v1599, %v1601
      %v1645 = vsel %vm1626, %v1601, %v1603
      %v1646 = vsel %vm1626, %v1603, %v1605
      %v1647 = vsel %vm1626, %v1605, %v1607
      %v1648 = vsel %vm1626, %v1607, %v1609
      %v1649 = vsel %vm1626, %v1609, %v1611
      %v1650 = vsel %vm1626, %v1611, %v1613
      %v1651 = vsel %vm1626, %v1613, %v1615
      %v1652 = vsel %vm1626, %v1615, %v1617
      %v1653 = vsel %vm1626, %v1617, %v1619
      %v1654 = vsel %vm1626, %v1619, %v1621
      %v1655 = vsel %vm1626, %v1621, %v1623
      %v1656 = vsel %vm1626, %v1623, %v1625
      %1689 = vrot.lane.b32.xlu0 %v990, 38
      %v1690 = vpop.permute.xlu0 %1689
      %1691 = vrot.lane.b32.xlu0 %v991, 38
      %v1692 = vpop.permute.xlu0 %1691
      %1693 = vrot.lane.b32.xlu0 %v992, 38
      %v1694 = vpop.permute.xlu0 %1693
      %1695 = vrot.lane.b32.xlu0 %v993, 38
      %v1696 = vpop.permute.xlu0 %1695
      %1697 = vrot.lane.b32.xlu0 %v994, 38
      %v1698 = vpop.permute.xlu0 %1697
      %1699 = vrot.lane.b32.xlu0 %v995, 38
      %v1700 = vpop.permute.xlu0 %1699
      %1701 = vrot.lane.b32.xlu0 %v996, 38
      %v1702 = vpop.permute.xlu0 %1701
      %1703 = vrot.lane.b32.xlu0 %v997, 38
      %v1704 = vpop.permute.xlu0 %1703
      %1705 = vrot.lane.b32.xlu0 %v998, 38
      %v1706 = vpop.permute.xlu0 %1705
      %1707 = vrot.lane.b32.xlu0 %v999, 38
      %v1708 = vpop.permute.xlu0 %1707
      %1709 = vrot.lane.b32.xlu0 %v1000, 38
      %v1710 = vpop.permute.xlu0 %1709
      %1711 = vrot.lane.b32.xlu0 %v1001, 38
      %v1712 = vpop.permute.xlu0 %1711
      %1713 = vrot.lane.b32.xlu0 %v1002, 38
      %v1714 = vpop.permute.xlu0 %1713
      %1715 = vrot.lane.b32.xlu0 %v1003, 38
      %v1716 = vpop.permute.xlu0 %1715
      %1717 = vrot.lane.b32.xlu0 %v1004, 38
      %v1718 = vpop.permute.xlu0 %1717
      %1719 = vrot.lane.b32.xlu0 %v1005, 38
      %v1720 = vpop.permute.xlu0 %1719
      %1721 = vrot.lane.b32.xlu0 %v1006, 38
      %v1722 = vpop.permute.xlu0 %1721
      %1723 = vrot.lane.b32.xlu0 %v1007, 38
      %v1724 = vpop.permute.xlu0 %1723
      %1725 = vrot.lane.b32.xlu0 %v1008, 38
      %v1726 = vpop.permute.xlu0 %1725
      %1727 = vrot.lane.b32.xlu0 %v1009, 38
      %v1728 = vpop.permute.xlu0 %1727
      %1729 = vrot.lane.b32.xlu0 %v1010, 38
      %v1730 = vpop.permute.xlu0 %1729
      %1731 = vrot.lane.b32.xlu0 %v1011, 38
      %v1732 = vpop.permute.xlu0 %1731
      %1733 = vrot.lane.b32.xlu0 %v1012, 38
      %v1734 = vpop.permute.xlu0 %1733
      %1735 = vrot.lane.b32.xlu0 %v1013, 38
      %v1736 = vpop.permute.xlu0 %1735
      %1737 = vrot.lane.b32.xlu0 %v1014, 38
      %v1738 = vpop.permute.xlu0 %1737
      %1739 = vrot.lane.b32.xlu0 %v1015, 38
      %v1740 = vpop.permute.xlu0 %1739
      %1741 = vrot.lane.b32.xlu0 %v1016, 38
      %v1742 = vpop.permute.xlu0 %1741
      %1743 = vrot.lane.b32.xlu0 %v1017, 38
      %v1744 = vpop.permute.xlu0 %1743
      %1745 = vrot.lane.b32.xlu0 %v1018, 38
      %v1746 = vpop.permute.xlu0 %1745
      %1747 = vrot.lane.b32.xlu0 %v1019, 38
      %v1748 = vpop.permute.xlu0 %1747
      %1749 = vrot.lane.b32.xlu0 %v1020, 38
      %v1750 = vpop.permute.xlu0 %1749
      %1751 = vrot.lane.b32.xlu0 %v1021, 38
      %v1752 = vpop.permute.xlu0 %1751
      %vm1753 = vcmask 310272
      %v1754 = vsel %vm1753, %v1690, %v1692
      %v1755 = vsel %vm1753, %v1692, %v1694
      %v1756 = vsel %vm1753, %v1694, %v1696
      %v1757 = vsel %vm1753, %v1696, %v1698
      %v1758 = vsel %vm1753, %v1698, %v1700
      %v1759 = vsel %vm1753, %v1700, %v1702
      %v1760 = vsel %vm1753, %v1702, %v1704
      %v1761 = vsel %vm1753, %v1704, %v1706
      %v1762 = vsel %vm1753, %v1706, %v1708
      %v1763 = vsel %vm1753, %v1708, %v1710
      %v1764 = vsel %vm1753, %v1710, %v1712
      %v1765 = vsel %vm1753, %v1712, %v1714
      %v1766 = vsel %vm1753, %v1714, %v1716
      %v1767 = vsel %vm1753, %v1716, %v1718
      %v1768 = vsel %vm1753, %v1718, %v1720
      %v1769 = vsel %vm1753, %v1722, %v1724
      %v1770 = vsel %vm1753, %v1724, %v1726
      %v1771 = vsel %vm1753, %v1726, %v1728
      %v1772 = vsel %vm1753, %v1728, %v1730
      %v1773 = vsel %vm1753, %v1730, %v1732
      %v1774 = vsel %vm1753, %v1732, %v1734
      %v1775 = vsel %vm1753, %v1734, %v1736
      %v1776 = vsel %vm1753, %v1736, %v1738
      %v1777 = vsel %vm1753, %v1738, %v1740
      %v1778 = vsel %vm1753, %v1740, %v1742
      %v1779 = vsel %vm1753, %v1742, %v1744
      %v1780 = vsel %vm1753, %v1744, %v1746
      %v1781 = vsel %vm1753, %v1746, %v1748
      %v1782 = vsel %vm1753, %v1748, %v1750
      %v1783 = vsel %vm1753, %v1750, %v1752
      %1816 = vrot.lane.b32.xlu0 %v990, 37
      %v1817 = vpop.permute.xlu0 %1816
      %1818 = vrot.lane.b32.xlu0 %v991, 37
      %v1819 = vpop.permute.xlu0 %1818
      %1820 = vrot.lane.b32.xlu0 %v992, 37
      %v1821 = vpop.permute.xlu0 %1820
      %1822 = vrot.lane.b32.xlu0 %v993, 37
      %v1823 = vpop.permute.xlu0 %1822
      %1824 = vrot.lane.b32.xlu0 %v994, 37
      %v1825 = vpop.permute.xlu0 %1824
      %1826 = vrot.lane.b32.xlu0 %v995, 37
      %v1827 = vpop.permute.xlu0 %1826
      %1828 = vrot.lane.b32.xlu0 %v996, 37
      %v1829 = vpop.permute.xlu0 %1828
      %1830 = vrot.lane.b32.xlu0 %v997, 37
      %v1831 = vpop.permute.xlu0 %1830
      %1832 = vrot.lane.b32.xlu0 %v998, 37
      %v1833 = vpop.permute.xlu0 %1832
      %1834 = vrot.lane.b32.xlu0 %v999, 37
      %v1835 = vpop.permute.xlu0 %1834
      %1836 = vrot.lane.b32.xlu0 %v1000, 37
      %v1837 = vpop.permute.xlu0 %1836
      %1838 = vrot.lane.b32.xlu0 %v1001, 37
      %v1839 = vpop.permute.xlu0 %1838
      %1840 = vrot.lane.b32.xlu0 %v1002, 37
      %v1841 = vpop.permute.xlu0 %1840
      %1842 = vrot.lane.b32.xlu0 %v1003, 37
      %v1843 = vpop.permute.xlu0 %1842
      %1844 = vrot.lane.b32.xlu0 %v1004, 37
      %v1845 = vpop.permute.xlu0 %1844
      %1846 = vrot.lane.b32.xlu0 %v1005, 37
      %v1847 = vpop.permute.xlu0 %1846
      %1848 = vrot.lane.b32.xlu0 %v1006, 37
      %v1849 = vpop.permute.xlu0 %1848
      %1850 = vrot.lane.b32.xlu0 %v1007, 37
      %v1851 = vpop.permute.xlu0 %1850
      %1852 = vrot.lane.b32.xlu0 %v1008, 37
      %v1853 = vpop.permute.xlu0 %1852
      %1854 = vrot.lane.b32.xlu0 %v1009, 37
      %v1855 = vpop.permute.xlu0 %1854
      %1856 = vrot.lane.b32.xlu0 %v1010, 37
      %v1857 = vpop.permute.xlu0 %1856
      %1858 = vrot.lane.b32.xlu0 %v1011, 37
      %v1859 = vpop.permute.xlu0 %1858
      %1860 = vrot.lane.b32.xlu0 %v1012, 37
      %v1861 = vpop.permute.xlu0 %1860
      %1862 = vrot.lane.b32.xlu0 %v1013, 37
      %v1863 = vpop.permute.xlu0 %1862
      %1864 = vrot.lane.b32.xlu0 %v1014, 37
      %v1865 = vpop.permute.xlu0 %1864
      %1866 = vrot.lane.b32.xlu0 %v1015, 37
      %v1867 = vpop.permute.xlu0 %1866
      %1868 = vrot.lane.b32.xlu0 %v1016, 37
      %v1869 = vpop.permute.xlu0 %1868
      %1870 = vrot.lane.b32.xlu0 %v1017, 37
      %v1871 = vpop.permute.xlu0 %1870
      %1872 = vrot.lane.b32.xlu0 %v1018, 37
      %v1873 = vpop.permute.xlu0 %1872
      %1874 = vrot.lane.b32.xlu0 %v1019, 37
      %v1875 = vpop.permute.xlu0 %1874
      %1876 = vrot.lane.b32.xlu0 %v1020, 37
      %v1877 = vpop.permute.xlu0 %1876
      %1878 = vrot.lane.b32.xlu0 %v1021, 37
      %v1879 = vpop.permute.xlu0 %1878
      %vm1880 = vcmask 302080
      %v1881 = vsel %vm1880, %v1817, %v1819
      %v1882 = vsel %vm1880, %v1819, %v1821
      %v1883 = vsel %vm1880, %v1821, %v1823
      %v1884 = vsel %vm1880, %v1823, %v1825
      %v1885 = vsel %vm1880, %v1825, %v1827
      %v1886 = vsel %vm1880, %v1827, %v1829
      %v1887 = vsel %vm1880, %v1829, %v1831
      %v1888 = vsel %vm1880, %v1831, %v1833
      %v1889 = vsel %vm1880, %v1833, %v1835
      %v1890 = vsel %vm1880, %v1835, %v1837
      %v1891 = vsel %vm1880, %v1837, %v1839
      %v1892 = vsel %vm1880, %v1839, %v1841
      %v1893 = vsel %vm1880, %v1841, %v1843
      %v1894 = vsel %vm1880, %v1843, %v1845
      %v1895 = vsel %vm1880, %v1845, %v1847
      %v1896 = vsel %vm1880, %v1849, %v1851
      %v1897 = vsel %vm1880, %v1851, %v1853
      %v1898 = vsel %vm1880, %v1853, %v1855
      %v1899 = vsel %vm1880, %v1855, %v1857
      %v1900 = vsel %vm1880, %v1857, %v1859
      %v1901 = vsel %vm1880, %v1859, %v1861
      %v1902 = vsel %vm1880, %v1861, %v1863
      %v1903 = vsel %vm1880, %v1863, %v1865
      %v1904 = vsel %vm1880, %v1865, %v1867
      %v1905 = vsel %vm1880, %v1867, %v1869
      %v1906 = vsel %vm1880, %v1869, %v1871
      %v1907 = vsel %vm1880, %v1871, %v1873
      %v1908 = vsel %vm1880, %v1873, %v1875
      %v1909 = vsel %vm1880, %v1875, %v1877
      %v1910 = vsel %vm1880, %v1877, %v1879
      %1943 = vrot.lane.b32.xlu0 %v990, 36
      %v1944 = vpop.permute.xlu0 %1943
      %1945 = vrot.lane.b32.xlu0 %v991, 36
      %v1946 = vpop.permute.xlu0 %1945
      %1947 = vrot.lane.b32.xlu0 %v992, 36
      %v1948 = vpop.permute.xlu0 %1947
      %1949 = vrot.lane.b32.xlu0 %v993, 36
      %v1950 = vpop.permute.xlu0 %1949
      %1951 = vrot.lane.b32.xlu0 %v994, 36
      %v1952 = vpop.permute.xlu0 %1951
      %1953 = vrot.lane.b32.xlu0 %v995, 36
      %v1954 = vpop.permute.xlu0 %1953
      %1955 = vrot.lane.b32.xlu0 %v996, 36
      %v1956 = vpop.permute.xlu0 %1955
      %1957 = vrot.lane.b32.xlu0 %v997, 36
      %v1958 = vpop.permute.xlu0 %1957
      %1959 = vrot.lane.b32.xlu0 %v998, 36
      %v1960 = vpop.permute.xlu0 %1959
      %1961 = vrot.lane.b32.xlu0 %v999, 36
      %v1962 = vpop.permute.xlu0 %1961
      %1963 = vrot.lane.b32.xlu0 %v1000, 36
      %v1964 = vpop.permute.xlu0 %1963
      %1965 = vrot.lane.b32.xlu0 %v1001, 36
      %v1966 = vpop.permute.xlu0 %1965
      %1967 = vrot.lane.b32.xlu0 %v1002, 36
      %v1968 = vpop.permute.xlu0 %1967
      %1969 = vrot.lane.b32.xlu0 %v1003, 36
      %v1970 = vpop.permute.xlu0 %1969
      %1971 = vrot.lane.b32.xlu0 %v1004, 36
      %v1972 = vpop.permute.xlu0 %1971
      %1973 = vrot.lane.b32.xlu0 %v1005, 36
      %v1974 = vpop.permute.xlu0 %1973
      %1975 = vrot.lane.b32.xlu0 %v1006, 36
      %v1976 = vpop.permute.xlu0 %1975
      %1977 = vrot.lane.b32.xlu0 %v1007, 36
      %v1978 = vpop.permute.xlu0 %1977
      %1979 = vrot.lane.b32.xlu0 %v1008, 36
      %v1980 = vpop.permute.xlu0 %1979
      %1981 = vrot.lane.b32.xlu0 %v1009, 36
      %v1982 = vpop.permute.xlu0 %1981
      %1983 = vrot.lane.b32.xlu0 %v1010, 36
      %v1984 = vpop.permute.xlu0 %1983
      %1985 = vrot.lane.b32.xlu0 %v1011, 36
      %v1986 = vpop.permute.xlu0 %1985
      %1987 = vrot.lane.b32.xlu0 %v1012, 36
      %v1988 = vpop.permute.xlu0 %1987
      %1989 = vrot.lane.b32.xlu0 %v1013, 36
      %v1990 = vpop.permute.xlu0 %1989
      %1991 = vrot.lane.b32.xlu0 %v1014, 36
      %v1992 = vpop.permute.xlu0 %1991
      %1993 = vrot.lane.b32.xlu0 %v1015, 36
      %v1994 = vpop.permute.xlu0 %1993
      %1995 = vrot.lane.b32.xlu0 %v1016, 36
      %v1996 = vpop.permute.xlu0 %1995
      %1997 = vrot.lane.b32.xlu0 %v1017, 36
      %v1998 = vpop.permute.xlu0 %1997
      %1999 = vrot.lane.b32.xlu0 %v1018, 36
      %v2000 = vpop.permute.xlu0 %1999
      %2001 = vrot.lane.b32.xlu0 %v1019, 36
      %v2002 = vpop.permute.xlu0 %2001
      %2003 = vrot.lane.b32.xlu0 %v1020, 36
      %v2004 = vpop.permute.xlu0 %2003
      %2005 = vrot.lane.b32.xlu0 %v1021, 36
      %v2006 = vpop.permute.xlu0 %2005
      %vm2007 = vcmask 293888
      %v2008 = vsel %vm2007, %v1944, %v1946
      %v2009 = vsel %vm2007, %v1946, %v1948
      %v2010 = vsel %vm2007, %v1948, %v1950
      %v2011 = vsel %vm2007, %v1950, %v1952
      %v2012 = vsel %vm2007, %v1952, %v1954
      %v2013 = vsel %vm2007, %v1954, %v1956
      %v2014 = vsel %vm2007, %v1956, %v1958
      %v2015 = vsel %vm2007, %v1958, %v1960
      %v2016 = vsel %vm2007, %v1960, %v1962
      %v2017 = vsel %vm2007, %v1962, %v1964
      %v2018 = vsel %vm2007, %v1964, %v1966
      %v2019 = vsel %vm2007, %v1966, %v1968
      %v2020 = vsel %vm2007, %v1968, %v1970
      %v2021 = vsel %vm2007, %v1970, %v1972
      %v2022 = vsel %vm2007, %v1972, %v1974
      %v2023 = vsel %vm2007, %v1976, %v1978
      %v2024 = vsel %vm2007, %v1978, %v1980
      %v2025 = vsel %vm2007, %v1980, %v1982
      %v2026 = vsel %vm2007, %v1982, %v1984
      %v2027 = vsel %vm2007, %v1984, %v1986
      %v2028 = vsel %vm2007, %v1986, %v1988
      %v2029 = vsel %vm2007, %v1988, %v1990
      %v2030 = vsel %vm2007, %v1990, %v1992
      %v2031 = vsel %vm2007, %v1992, %v1994
      %v2032 = vsel %vm2007, %v1994, %v1996
      %v2033 = vsel %vm2007, %v1996, %v1998
      %v2034 = vsel %vm2007, %v1998, %v2000
      %v2035 = vsel %vm2007, %v2000, %v2002
      %v2036 = vsel %vm2007, %v2002, %v2004
      %v2037 = vsel %vm2007, %v2004, %v2006
      %v2070 = vld [vmem:[%s2] sm:$0xff]
      %2072 = vset.pattern.permute.xlu0 0
      %2073 = vperm.xlu0 %2072, %v2070
      %v2074 = vpop.permute.xlu0 %2073
      %v2078 = vunpack.c.l.b16 %v988
      %v2079 = vunpack.c.h.b16 %v988
      %v2080 = vunpack.c.l.b16 %v989
      %v2081 = vpack.c.b16 %v2078, %v2078
      %v2082 = vpack.c.b16 %v2079, %v2079
      %v2083 = vpack.c.b16 %v2080, %v2080
      %vm2086 = vcmask 261120
      %v2088 = vsel %vm2086, %v2083, 0
      %2090 = vmatprep.subr.bf16.mxu0 %v1389
      %2091 = vmatpush1.bf16.msra.mxu0 %v1388
      %2092 = vmatprep.subr.bf16.mxu0 %v1374
      %2093 = vmatpush1.bf16.msra.mxu0 %v1373
      %2094 = vmatprep.subr.bf16.mxu0 %v1262
      %2095 = vmatpush1.bf16.msra.mxu0 %v1261
      %2096 = vmatprep.subr.bf16.mxu0 %v1247
      %2097 = vmatpush1.bf16.msra.mxu0 %v1246
      %2098 = vmatprep.subr.bf16.mxu0 %v1135
      %2099 = vmatpush1.bf16.msra.mxu0 %v1134
      %2100 = vmatprep.subr.bf16.mxu0 %v1120
      %2101 = vmatpush1.bf16.msra.mxu0 %v1119
      %2102 = vmatprep.subr.bf16.mxu0 %v1007
      %2103 = vmatpush1.bf16.msra.mxu0 %v1006
      %2104 = vmatprep.subr.bf16.mxu0 %v991
      %2105 = vmatpush1.bf16.msra.mxu0 %v990
      %2106 = vmatprep.subr.bf16.mxu0 %v1897
      %2107 = vmatpush2.bf16.msra.mxu0 %v1896
      %2108 = vmatprep.subr.bf16.mxu0 %v1882
      %2109 = vmatpush2.bf16.msra.mxu0 %v1881
      %2110 = vmatprep.subr.bf16.mxu0 %v1770
      %2111 = vmatpush2.bf16.msra.mxu0 %v1769
      %2112 = vmatprep.subr.bf16.mxu0 %v1755
      %2113 = vmatpush2.bf16.msra.mxu0 %v1754
      %2114 = vmatprep.subr.bf16.mxu0 %v1643
      %2115 = vmatpush2.bf16.msra.mxu0 %v1642
      %2116 = vmatprep.subr.bf16.mxu0 %v1628
      %2117 = vmatpush2.bf16.msra.mxu0 %v1627
      %2118 = vmatprep.subr.bf16.mxu0 %v1516
      %2119 = vmatpush2.bf16.msra.mxu0 %v1515
      %2120 = vmatprep.subr.bf16.mxu0 %v1501
      %2121 = vmatpush2.bf16.msra.mxu0 %v1500
      %2122 = vmatprep.mubr.bf16.mxu0 %v2082
      %2123 = vmatmul.mubr.bf16.gmra.mxu0 %v2081
      %v2124 = vpop.f32.mrf.mxu0
      %v2125 = vadd.f32 %v2074, %v2124
      %v2126 = vpop.f32.mrf.mxu0
      %v2127 = vadd.f32 %v2074, %v2126
      %v2128 = vpop.f32.mrf.mxu0
      %v2129 = vpop.f32.mrf.mxu0
      %2130 = vdwg.mxu0
      %2131 = vmatprep.subr.bf16.mxu0 0
      %2132 = vmatpush1.bf16.msra.mxu0 0
      %2133 = vmatprep.subr.bf16.mxu0 0
      %2134 = vmatpush1.bf16.msra.mxu0 0
      %2135 = vmatprep.subr.bf16.mxu0 0
      %2136 = vmatpush1.bf16.msra.mxu0 0
      %2137 = vmatprep.subr.bf16.mxu0 0
      %2138 = vmatpush1.bf16.msra.mxu0 0
      %2139 = vmatprep.subr.bf16.mxu0 0
      %2140 = vmatpush1.bf16.msra.mxu0 0
      %2141 = vmatprep.subr.bf16.mxu0 0
      %2142 = vmatpush1.bf16.msra.mxu0 0
      %2143 = vmatprep.subr.bf16.mxu0 %v2024
      %2144 = vmatpush1.bf16.msra.mxu0 %v2023
      %2145 = vmatprep.subr.bf16.mxu0 %v2009
      %2146 = vmatpush1.bf16.msra.mxu0 %v2008
      %2147 = vmatprep.subr.bf16.mxu0 0
      %2148 = vmatpush2.bf16.msra.mxu0 0
      %2149 = vmatprep.subr.bf16.mxu0 0
      %2150 = vmatpush2.bf16.msra.mxu0 0
      %2151 = vmatprep.subr.bf16.mxu0 0
      %2152 = vmatpush2.bf16.msra.mxu0 0
      %2153 = vmatprep.subr.bf16.mxu0 0
      %2154 = vmatpush2.bf16.msra.mxu0 0
      %2155 = vmatprep.subr.bf16.mxu0 0
      %2156 = vmatpush2.bf16.msra.mxu0 0
      %2157 = vmatprep.subr.bf16.mxu0 0
      %2158 = vmatpush2.bf16.msra.mxu0 0
      %2159 = vmatprep.subr.bf16.mxu0 0
      %2160 = vmatpush2.bf16.msra.mxu0 0
      %2161 = vmatprep.subr.bf16.mxu0 0
      %2162 = vmatpush2.bf16.msra.mxu0 0
      %2163 = vmatprep.mubr.bf16.mxu0 0
      %2164 = vmatmul.mubr.bf16.gmra.mxu0 %v2088
      %v2165 = vpop.f32.mrf.mxu0
      %v2166 = vadd.f32 %v2125, %v2165
      %v2167 = vpop.f32.mrf.mxu0
      %v2168 = vadd.f32 %v2127, %v2167
      %v2169 = vpop.f32.mrf.mxu0
      %v2170 = vpop.f32.mrf.mxu0
      %2171 = vdwg.mxu0
      %2172 = vmatprep.subr.bf16.mxu0 %v1391
      %2173 = vmatpush1.bf16.msra.mxu0 %v1390
      %2174 = vmatprep.subr.bf16.mxu0 %v1376
      %2175 = vmatpush1.bf16.msra.mxu0 %v1375
      %2176 = vmatprep.subr.bf16.mxu0 %v1264
      %2177 = vmatpush1.bf16.msra.mxu0 %v1263
      %2178 = vmatprep.subr.bf16.mxu0 %v1249
      %2179 = vmatpush1.bf16.msra.mxu0 %v1248
      %2180 = vmatprep.subr.bf16.mxu0 %v1137
      %2181 = vmatpush1.bf16.msra.mxu0 %v1136
      %2182 = vmatprep.subr.bf16.mxu0 %v1122
      %2183 = vmatpush1.bf16.msra.mxu0 %v1121
      %2184 = vmatprep.subr.bf16.mxu0 %v1009
      %2185 = vmatpush1.bf16.msra.mxu0 %v1008
      %2186 = vmatprep.subr.bf16.mxu0 %v993
      %2187 = vmatpush1.bf16.msra.mxu0 %v992
      %2188 = vmatprep.subr.bf16.mxu0 %v1899
      %2189 = vmatpush2.bf16.msra.mxu0 %v1898
      %2190 = vmatprep.subr.bf16.mxu0 %v1884
      %2191 = vmatpush2.bf16.msra.mxu0 %v1883
      %2192 = vmatprep.subr.bf16.mxu0 %v1772
      %2193 = vmatpush2.bf16.msra.mxu0 %v1771
      %2194 = vmatprep.subr.bf16.mxu0 %v1757
      %2195 = vmatpush2.bf16.msra.mxu0 %v1756
      %2196 = vmatprep.subr.bf16.mxu0 %v1645
      %2197 = vmatpush2.bf16.msra.mxu0 %v1644
      %2198 = vmatprep.subr.bf16.mxu0 %v1630
      %2199 = vmatpush2.bf16.msra.mxu0 %v1629
      %2200 = vmatprep.subr.bf16.mxu0 %v1518
      %2201 = vmatpush2.bf16.msra.mxu0 %v1517
      %2202 = vmatprep.subr.bf16.mxu0 %v1503
      %2203 = vmatpush2.bf16.msra.mxu0 %v1502
      %2204 = vmatprep.mubr.bf16.mxu0 %v2082
      %2205 = vmatmul.mubr.bf16.gmra.mxu0 %v2081
      %v2206 = vpop.f32.mrf.mxu0
      %v2207 = vadd.f32 %v2074, %v2206
      %v2208 = vpop.f32.mrf.mxu0
      %v2209 = vadd.f32 %v2074, %v2208
      %v2210 = vpop.f32.mrf.mxu0
      %v2211 = vpop.f32.mrf.mxu0
      %2212 = vdwg.mxu0
      %2213 = vmatprep.subr.bf16.mxu0 0
      %2214 = vmatpush1.bf16.msra.mxu0 0
      %2215 = vmatprep.subr.bf16.mxu0 0
      %2216 = vmatpush1.bf16.msra.mxu0 0
      %2217 = vmatprep.subr.bf16.mxu0 0
      %2218 = vmatpush1.bf16.msra.mxu0 0
      %2219 = vmatprep.subr.bf16.mxu0 0
      %2220 = vmatpush1.bf16.msra.mxu0 0
      %2221 = vmatprep.subr.bf16.mxu0 0
      %2222 = vmatpush1.bf16.msra.mxu0 0
      %2223 = vmatprep.subr.bf16.mxu0 0
      %2224 = vmatpush1.bf16.msra.mxu0 0
      %2225 = vmatprep.subr.bf16.mxu0 %v2026
      %2226 = vmatpush1.bf16.msra.mxu0 %v2025
      %2227 = vmatprep.subr.bf16.mxu0 %v2011
      %2228 = vmatpush1.bf16.msra.mxu0 %v2010
      %2229 = vmatprep.subr.bf16.mxu0 0
      %2230 = vmatpush2.bf16.msra.mxu0 0
      %2231 = vmatprep.subr.bf16.mxu0 0
      %2232 = vmatpush2.bf16.msra.mxu0 0
      %2233 = vmatprep.subr.bf16.mxu0 0
      %2234 = vmatpush2.bf16.msra.mxu0 0
      %2235 = vmatprep.subr.bf16.mxu0 0
      %2236 = vmatpush2.bf16.msra.mxu0 0
      %2237 = vmatprep.subr.bf16.mxu0 0
      %2238 = vmatpush2.bf16.msra.mxu0 0
      %2239 = vmatprep.subr.bf16.mxu0 0
      %2240 = vmatpush2.bf16.msra.mxu0 0
      %2241 = vmatprep.subr.bf16.mxu0 0
      %2242 = vmatpush2.bf16.msra.mxu0 0
      %2243 = vmatprep.subr.bf16.mxu0 0
      %2244 = vmatpush2.bf16.msra.mxu0 0
      %2245 = vmatprep.mubr.bf16.mxu0 0
      %2246 = vmatmul.mubr.bf16.gmra.mxu0 %v2088
      %v2247 = vpop.f32.mrf.mxu0
      %v2248 = vadd.f32 %v2207, %v2247
      %v2249 = vpop.f32.mrf.mxu0
      %v2250 = vadd.f32 %v2209, %v2249
      %v2251 = vpop.f32.mrf.mxu0
      %v2252 = vpop.f32.mrf.mxu0
      %2253 = vdwg.mxu0
      %2254 = vmatprep.subr.bf16.mxu0 %v1393
      %2255 = vmatpush1.bf16.msra.mxu0 %v1392
      %2256 = vmatprep.subr.bf16.mxu0 %v1378
      %2257 = vmatpush1.bf16.msra.mxu0 %v1377
      %2258 = vmatprep.subr.bf16.mxu0 %v1266
      %2259 = vmatpush1.bf16.msra.mxu0 %v1265
      %2260 = vmatprep.subr.bf16.mxu0 %v1251
      %2261 = vmatpush1.bf16.msra.mxu0 %v1250
      %2262 = vmatprep.subr.bf16.mxu0 %v1139
      %2263 = vmatpush1.bf16.msra.mxu0 %v1138
      %2264 = vmatprep.subr.bf16.mxu0 %v1124
      %2265 = vmatpush1.bf16.msra.mxu0 %v1123
      %2266 = vmatprep.subr.bf16.mxu0 %v1011
      %2267 = vmatpush1.bf16.msra.mxu0 %v1010
      %2268 = vmatprep.subr.bf16.mxu0 %v995
      %2269 = vmatpush1.bf16.msra.mxu0 %v994
      %2270 = vmatprep.subr.bf16.mxu0 %v1901
      %2271 = vmatpush2.bf16.msra.mxu0 %v1900
      %2272 = vmatprep.subr.bf16.mxu0 %v1886
      %2273 = vmatpush2.bf16.msra.mxu0 %v1885
      %2274 = vmatprep.subr.bf16.mxu0 %v1774
      %2275 = vmatpush2.bf16.msra.mxu0 %v1773
      %2276 = vmatprep.subr.bf16.mxu0 %v1759
      %2277 = vmatpush2.bf16.msra.mxu0 %v1758
      %2278 = vmatprep.subr.bf16.mxu0 %v1647
      %2279 = vmatpush2.bf16.msra.mxu0 %v1646
      %2280 = vmatprep.subr.bf16.mxu0 %v1632
      %2281 = vmatpush2.bf16.msra.mxu0 %v1631
      %2282 = vmatprep.subr.bf16.mxu0 %v1520
      %2283 = vmatpush2.bf16.msra.mxu0 %v1519
      %2284 = vmatprep.subr.bf16.mxu0 %v1505
      %2285 = vmatpush2.bf16.msra.mxu0 %v1504
      %2286 = vmatprep.mubr.bf16.mxu0 %v2082
      %2287 = vmatmul.mubr.bf16.gmra.mxu0 %v2081
      %v2288 = vpop.f32.mrf.mxu0
      %v2289 = vadd.f32 %v2074, %v2288
      %v2290 = vpop.f32.mrf.mxu0
      %v2291 = vadd.f32 %v2074, %v2290
      %v2292 = vpop.f32.mrf.mxu0
      %v2293 = vpop.f32.mrf.mxu0
      %2294 = vdwg.mxu0
      %2295 = vmatprep.subr.bf16.mxu0 0
      %2296 = vmatpush1.bf16.msra.mxu0 0
      %2297 = vmatprep.subr.bf16.mxu0 0
      %2298 = vmatpush1.bf16.msra.mxu0 0
      %2299 = vmatprep.subr.bf16.mxu0 0
      %2300 = vmatpush1.bf16.msra.mxu0 0
      %2301 = vmatprep.subr.bf16.mxu0 0
      %2302 = vmatpush1.bf16.msra.mxu0 0
      %2303 = vmatprep.subr.bf16.mxu0 0
      %2304 = vmatpush1.bf16.msra.mxu0 0
      %2305 = vmatprep.subr.bf16.mxu0 0
      %2306 = vmatpush1.bf16.msra.mxu0 0
      %2307 = vmatprep.subr.bf16.mxu0 %v2028
      %2308 = vmatpush1.bf16.msra.mxu0 %v2027
      %2309 = vmatprep.subr.bf16.mxu0 %v2013
      %2310 = vmatpush1.bf16.msra.mxu0 %v2012
      %2311 = vmatprep.subr.bf16.mxu0 0
      %2312 = vmatpush2.bf16.msra.mxu0 0
      %2313 = vmatprep.subr.bf16.mxu0 0
      %2314 = vmatpush2.bf16.msra.mxu0 0
      %2315 = vmatprep.subr.bf16.mxu0 0
      %2316 = vmatpush2.bf16.msra.mxu0 0
      %2317 = vmatprep.subr.bf16.mxu0 0
      %2318 = vmatpush2.bf16.msra.mxu0 0
      %2319 = vmatprep.subr.bf16.mxu0 0
      %2320 = vmatpush2.bf16.msra.mxu0 0
      %2321 = vmatprep.subr.bf16.mxu0 0
      %2322 = vmatpush2.bf16.msra.mxu0 0
      %2323 = vmatprep.subr.bf16.mxu0 0
      %2324 = vmatpush2.bf16.msra.mxu0 0
      %2325 = vmatprep.subr.bf16.mxu0 0
      %2326 = vmatpush2.bf16.msra.mxu0 0
      %2327 = vmatprep.mubr.bf16.mxu0 0
      %2328 = vmatmul.mubr.bf16.gmra.mxu0 %v2088
      %v2329 = vpop.f32.mrf.mxu0
      %v2330 = vadd.f32 %v2289, %v2329
      %v2331 = vpop.f32.mrf.mxu0
      %v2332 = vadd.f32 %v2291, %v2331
      %v2333 = vpop.f32.mrf.mxu0
      %v2334 = vpop.f32.mrf.mxu0
      %2335 = vdwg.mxu0
      %2336 = vmatprep.subr.bf16.mxu0 %v1395
      %2337 = vmatpush1.bf16.msra.mxu0 %v1394
      %2338 = vmatprep.subr.bf16.mxu0 %v1380
      %2339 = vmatpush1.bf16.msra.mxu0 %v1379
      %2340 = vmatprep.subr.bf16.mxu0 %v1268
      %2341 = vmatpush1.bf16.msra.mxu0 %v1267
      %2342 = vmatprep.subr.bf16.mxu0 %v1253
      %2343 = vmatpush1.bf16.msra.mxu0 %v1252
      %2344 = vmatprep.subr.bf16.mxu0 %v1141
      %2345 = vmatpush1.bf16.msra.mxu0 %v1140
      %2346 = vmatprep.subr.bf16.mxu0 %v1126
      %2347 = vmatpush1.bf16.msra.mxu0 %v1125
      %2348 = vmatprep.subr.bf16.mxu0 %v1013
      %2349 = vmatpush1.bf16.msra.mxu0 %v1012
      %2350 = vmatprep.subr.bf16.mxu0 %v997
      %2351 = vmatpush1.bf16.msra.mxu0 %v996
      %2352 = vmatprep.subr.bf16.mxu0 %v1903
      %2353 = vmatpush2.bf16.msra.mxu0 %v1902
      %2354 = vmatprep.subr.bf16.mxu0 %v1888
      %2355 = vmatpush2.bf16.msra.mxu0 %v1887
      %2356 = vmatprep.subr.bf16.mxu0 %v1776
      %2357 = vmatpush2.bf16.msra.mxu0 %v1775
      %2358 = vmatprep.subr.bf16.mxu0 %v1761
      %2359 = vmatpush2.bf16.msra.mxu0 %v1760
      %2360 = vmatprep.subr.bf16.mxu0 %v1649
      %2361 = vmatpush2.bf16.msra.mxu0 %v1648
      %2362 = vmatprep.subr.bf16.mxu0 %v1634
      %2363 = vmatpush2.bf16.msra.mxu0 %v1633
      %2364 = vmatprep.subr.bf16.mxu0 %v1522
      %2365 = vmatpush2.bf16.msra.mxu0 %v1521
      %2366 = vmatprep.subr.bf16.mxu0 %v1507
      %2367 = vmatpush2.bf16.msra.mxu0 %v1506
      %2368 = vmatprep.mubr.bf16.mxu0 %v2082
      %2369 = vmatmul.mubr.bf16.gmra.mxu0 %v2081
      %v2370 = vpop.f32.mrf.mxu0
      %v2371 = vadd.f32 %v2074, %v2370
      %v2372 = vpop.f32.mrf.mxu0
      %v2373 = vadd.f32 %v2074, %v2372
      %v2374 = vpop.f32.mrf.mxu0
      %v2375 = vpop.f32.mrf.mxu0
      %2376 = vdwg.mxu0
      %2377 = vmatprep.subr.bf16.mxu0 0
      %2378 = vmatpush1.bf16.msra.mxu0 0
      %2379 = vmatprep.subr.bf16.mxu0 0
      %2380 = vmatpush1.bf16.msra.mxu0 0
      %2381 = vmatprep.subr.bf16.mxu0 0
      %2382 = vmatpush1.bf16.msra.mxu0 0
      %2383 = vmatprep.subr.bf16.mxu0 0
      %2384 = vmatpush1.bf16.msra.mxu0 0
      %2385 = vmatprep.subr.bf16.mxu0 0
      %2386 = vmatpush1.bf16.msra.mxu0 0
      %2387 = vmatprep.subr.bf16.mxu0 0
      %2388 = vmatpush1.bf16.msra.mxu0 0
      %2389 = vmatprep.subr.bf16.mxu0 %v2030
      %2390 = vmatpush1.bf16.msra.mxu0 %v2029
      %2391 = vmatprep.subr.bf16.mxu0 %v2015
      %2392 = vmatpush1.bf16.msra.mxu0 %v2014
      %2393 = vmatprep.subr.bf16.mxu0 0
      %2394 = vmatpush2.bf16.msra.mxu0 0
      %2395 = vmatprep.subr.bf16.mxu0 0
      %2396 = vmatpush2.bf16.msra.mxu0 0
      %2397 = vmatprep.subr.bf16.mxu0 0
      %2398 = vmatpush2.bf16.msra.mxu0 0
      %2399 = vmatprep.subr.bf16.mxu0 0
      %2400 = vmatpush2.bf16.msra.mxu0 0
      %2401 = vmatprep.subr.bf16.mxu0 0
      %2402 = vmatpush2.bf16.msra.mxu0 0
      %2403 = vmatprep.subr.bf16.mxu0 0
      %2404 = vmatpush2.bf16.msra.mxu0 0
      %2405 = vmatprep.subr.bf16.mxu0 0
      %2406 = vmatpush2.bf16.msra.mxu0 0
      %2407 = vmatprep.subr.bf16.mxu0 0
      %2408 = vmatpush2.bf16.msra.mxu0 0
      %2409 = vmatprep.mubr.bf16.mxu0 0
      %2410 = vmatmul.mubr.bf16.gmra.mxu0 %v2088
      %v2411 = vpop.f32.mrf.mxu0
      %v2412 = vadd.f32 %v2371, %v2411
      %v2413 = vpop.f32.mrf.mxu0
      %v2414 = vadd.f32 %v2373, %v2413
      %v2415 = vpop.f32.mrf.mxu0
      %v2416 = vpop.f32.mrf.mxu0
      %2417 = vdwg.mxu0
      %2418 = vmatprep.subr.bf16.mxu0 %v1397
      %2419 = vmatpush1.bf16.msra.mxu0 %v1396
      %2420 = vmatprep.subr.bf16.mxu0 %v1382
      %2421 = vmatpush1.bf16.msra.mxu0 %v1381
      %2422 = vmatprep.subr.bf16.mxu0 %v1270
      %2423 = vmatpush1.bf16.msra.mxu0 %v1269
      %2424 = vmatprep.subr.bf16.mxu0 %v1255
      %2425 = vmatpush1.bf16.msra.mxu0 %v1254
      %2426 = vmatprep.subr.bf16.mxu0 %v1143
      %2427 = vmatpush1.bf16.msra.mxu0 %v1142
      %2428 = vmatprep.subr.bf16.mxu0 %v1128
      %2429 = vmatpush1.bf16.msra.mxu0 %v1127
      %2430 = vmatprep.subr.bf16.mxu0 %v1015
      %2431 = vmatpush1.bf16.msra.mxu0 %v1014
      %2432 = vmatprep.subr.bf16.mxu0 %v999
      %2433 = vmatpush1.bf16.msra.mxu0 %v998
      %2434 = vmatprep.subr.bf16.mxu0 %v1905
      %2435 = vmatpush2.bf16.msra.mxu0 %v1904
      %2436 = vmatprep.subr.bf16.mxu0 %v1890
      %2437 = vmatpush2.bf16.msra.mxu0 %v1889
      %2438 = vmatprep.subr.bf16.mxu0 %v1778
      %2439 = vmatpush2.bf16.msra.mxu0 %v1777
      %2440 = vmatprep.subr.bf16.mxu0 %v1763
      %2441 = vmatpush2.bf16.msra.mxu0 %v1762
      %2442 = vmatprep.subr.bf16.mxu0 %v1651
      %2443 = vmatpush2.bf16.msra.mxu0 %v1650
      %2444 = vmatprep.subr.bf16.mxu0 %v1636
      %2445 = vmatpush2.bf16.msra.mxu0 %v1635
      %2446 = vmatprep.subr.bf16.mxu0 %v1524
      %2447 = vmatpush2.bf16.msra.mxu0 %v1523
      %2448 = vmatprep.subr.bf16.mxu0 %v1509
      %2449 = vmatpush2.bf16.msra.mxu0 %v1508
      %2450 = vmatprep.mubr.bf16.mxu0 %v2082
      %2451 = vmatmul.mubr.bf16.gmra.mxu0 %v2081
      %v2452 = vpop.f32.mrf.mxu0
      %v2453 = vadd.f32 %v2074, %v2452
      %v2454 = vpop.f32.mrf.mxu0
      %v2455 = vadd.f32 %v2074, %v2454
      %v2456 = vpop.f32.mrf.mxu0
      %v2457 = vpop.f32.mrf.mxu0
      %2458 = vdwg.mxu0
      %2459 = vmatprep.subr.bf16.mxu0 0
      %2460 = vmatpush1.bf16.msra.mxu0 0
      %2461 = vmatprep.subr.bf16.mxu0 0
      %2462 = vmatpush1.bf16.msra.mxu0 0
      %2463 = vmatprep.subr.bf16.mxu0 0
      %2464 = vmatpush1.bf16.msra.mxu0 0
      %2465 = vmatprep.subr.bf16.mxu0 0
      %2466 = vmatpush1.bf16.msra.mxu0 0
      %2467 = vmatprep.subr.bf16.mxu0 0
      %2468 = vmatpush1.bf16.msra.mxu0 0
      %2469 = vmatprep.subr.bf16.mxu0 0
      %2470 = vmatpush1.bf16.msra.mxu0 0
      %2471 = vmatprep.subr.bf16.mxu0 %v2032
      %2472 = vmatpush1.bf16.msra.mxu0 %v2031
      %2473 = vmatprep.subr.bf16.mxu0 %v2017
      %2474 = vmatpush1.bf16.msra.mxu0 %v2016
      %2475 = vmatprep.subr.bf16.mxu0 0
      %2476 = vmatpush2.bf16.msra.mxu0 0
      %2477 = vmatprep.subr.bf16.mxu0 0
      %2478 = vmatpush2.bf16.msra.mxu0 0
      %2479 = vmatprep.subr.bf16.mxu0 0
      %2480 = vmatpush2.bf16.msra.mxu0 0
      %2481 = vmatprep.subr.bf16.mxu0 0
      %2482 = vmatpush2.bf16.msra.mxu0 0
      %2483 = vmatprep.subr.bf16.mxu0 0
      %2484 = vmatpush2.bf16.msra.mxu0 0
      %2485 = vmatprep.subr.bf16.mxu0 0
      %2486 = vmatpush2.bf16.msra.mxu0 0
      %2487 = vmatprep.subr.bf16.mxu0 0
      %2488 = vmatpush2.bf16.msra.mxu0 0
      %2489 = vmatprep.subr.bf16.mxu0 0
      %2490 = vmatpush2.bf16.msra.mxu0 0
      %2491 = vmatprep.mubr.bf16.mxu0 0
      %2492 = vmatmul.mubr.bf16.gmra.mxu0 %v2088
      %v2493 = vpop.f32.mrf.mxu0
      %v2494 = vadd.f32 %v2453, %v2493
      %v2495 = vpop.f32.mrf.mxu0
      %v2496 = vadd.f32 %v2455, %v2495
      %v2497 = vpop.f32.mrf.mxu0
      %v2498 = vpop.f32.mrf.mxu0
      %2499 = vdwg.mxu0
      %2500 = vmatprep.subr.bf16.mxu0 %v1399
      %2501 = vmatpush1.bf16.msra.mxu0 %v1398
      %2502 = vmatprep.subr.bf16.mxu0 %v1384
      %2503 = vmatpush1.bf16.msra.mxu0 %v1383
      %2504 = vmatprep.subr.bf16.mxu0 %v1272
      %2505 = vmatpush1.bf16.msra.mxu0 %v1271
      %2506 = vmatprep.subr.bf16.mxu0 %v1257
      %2507 = vmatpush1.bf16.msra.mxu0 %v1256
      %2508 = vmatprep.subr.bf16.mxu0 %v1145
      %2509 = vmatpush1.bf16.msra.mxu0 %v1144
      %2510 = vmatprep.subr.bf16.mxu0 %v1130
      %2511 = vmatpush1.bf16.msra.mxu0 %v1129
      %2512 = vmatprep.subr.bf16.mxu0 %v1017
      %2513 = vmatpush1.bf16.msra.mxu0 %v1016
      %2514 = vmatprep.subr.bf16.mxu0 %v1001
      %2515 = vmatpush1.bf16.msra.mxu0 %v1000
      %2516 = vmatprep.subr.bf16.mxu0 %v1907
      %2517 = vmatpush2.bf16.msra.mxu0 %v1906
      %2518 = vmatprep.subr.bf16.mxu0 %v1892
      %2519 = vmatpush2.bf16.msra.mxu0 %v1891
      %2520 = vmatprep.subr.bf16.mxu0 %v1780
      %2521 = vmatpush2.bf16.msra.mxu0 %v1779
      %2522 = vmatprep.subr.bf16.mxu0 %v1765
      %2523 = vmatpush2.bf16.msra.mxu0 %v1764
      %2524 = vmatprep.subr.bf16.mxu0 %v1653
      %2525 = vmatpush2.bf16.msra.mxu0 %v1652
      %2526 = vmatprep.subr.bf16.mxu0 %v1638
      %2527 = vmatpush2.bf16.msra.mxu0 %v1637
      %2528 = vmatprep.subr.bf16.mxu0 %v1526
      %2529 = vmatpush2.bf16.msra.mxu0 %v1525
      %2530 = vmatprep.subr.bf16.mxu0 %v1511
      %2531 = vmatpush2.bf16.msra.mxu0 %v1510
      %2532 = vmatprep.mubr.bf16.mxu0 %v2082
      %2533 = vmatmul.mubr.bf16.gmra.mxu0 %v2081
      %v2534 = vpop.f32.mrf.mxu0
      %v2535 = vadd.f32 %v2074, %v2534
      %v2536 = vpop.f32.mrf.mxu0
      %v2537 = vadd.f32 %v2074, %v2536
      %v2538 = vpop.f32.mrf.mxu0
      %v2539 = vpop.f32.mrf.mxu0
      %2540 = vdwg.mxu0
      %2541 = vmatprep.subr.bf16.mxu0 0
      %2542 = vmatpush1.bf16.msra.mxu0 0
      %2543 = vmatprep.subr.bf16.mxu0 0
      %2544 = vmatpush1.bf16.msra.mxu0 0
      %2545 = vmatprep.subr.bf16.mxu0 0
      %2546 = vmatpush1.bf16.msra.mxu0 0
      %2547 = vmatprep.subr.bf16.mxu0 0
      %2548 = vmatpush1.bf16.msra.mxu0 0
      %2549 = vmatprep.subr.bf16.mxu0 0
      %2550 = vmatpush1.bf16.msra.mxu0 0
      %2551 = vmatprep.subr.bf16.mxu0 0
      %2552 = vmatpush1.bf16.msra.mxu0 0
      %2553 = vmatprep.subr.bf16.mxu0 %v2034
      %2554 = vmatpush1.bf16.msra.mxu0 %v2033
      %2555 = vmatprep.subr.bf16.mxu0 %v2019
      %2556 = vmatpush1.bf16.msra.mxu0 %v2018
      %2557 = vmatprep.subr.bf16.mxu0 0
      %2558 = vmatpush2.bf16.msra.mxu0 0
      %2559 = vmatprep.subr.bf16.mxu0 0
      %2560 = vmatpush2.bf16.msra.mxu0 0
      %2561 = vmatprep.subr.bf16.mxu0 0
      %2562 = vmatpush2.bf16.msra.mxu0 0
      %2563 = vmatprep.subr.bf16.mxu0 0
      %2564 = vmatpush2.bf16.msra.mxu0 0
      %2565 = vmatprep.subr.bf16.mxu0 0
      %2566 = vmatpush2.bf16.msra.mxu0 0
      %2567 = vmatprep.subr.bf16.mxu0 0
      %2568 = vmatpush2.bf16.msra.mxu0 0
      %2569 = vmatprep.subr.bf16.mxu0 0
      %2570 = vmatpush2.bf16.msra.mxu0 0
      %2571 = vmatprep.subr.bf16.mxu0 0
      %2572 = vmatpush2.bf16.msra.mxu0 0
      %2573 = vmatprep.mubr.bf16.mxu0 0
      %2574 = vmatmul.mubr.bf16.gmra.mxu0 %v2088
      %v2575 = vpop.f32.mrf.mxu0
      %v2576 = vadd.f32 %v2535, %v2575
      %v2577 = vpop.f32.mrf.mxu0
      %v2578 = vadd.f32 %v2537, %v2577
      %v2579 = vpop.f32.mrf.mxu0
      %v2580 = vpop.f32.mrf.mxu0
      %2581 = vdwg.mxu0
      %2582 = vmatprep.subr.bf16.mxu0 %v1401
      %2583 = vmatpush1.bf16.msra.mxu0 %v1400
      %2584 = vmatprep.subr.bf16.mxu0 %v1386
      %2585 = vmatpush1.bf16.msra.mxu0 %v1385
      %2586 = vmatprep.subr.bf16.mxu0 %v1274
      %2587 = vmatpush1.bf16.msra.mxu0 %v1273
      %2588 = vmatprep.subr.bf16.mxu0 %v1259
      %2589 = vmatpush1.bf16.msra.mxu0 %v1258
      %2590 = vmatprep.subr.bf16.mxu0 %v1147
      %2591 = vmatpush1.bf16.msra.mxu0 %v1146
      %2592 = vmatprep.subr.bf16.mxu0 %v1132
      %2593 = vmatpush1.bf16.msra.mxu0 %v1131
      %2594 = vmatprep.subr.bf16.mxu0 %v1019
      %2595 = vmatpush1.bf16.msra.mxu0 %v1018
      %2596 = vmatprep.subr.bf16.mxu0 %v1003
      %2597 = vmatpush1.bf16.msra.mxu0 %v1002
      %2598 = vmatprep.subr.bf16.mxu0 %v1909
      %2599 = vmatpush2.bf16.msra.mxu0 %v1908
      %2600 = vmatprep.subr.bf16.mxu0 %v1894
      %2601 = vmatpush2.bf16.msra.mxu0 %v1893
      %2602 = vmatprep.subr.bf16.mxu0 %v1782
      %2603 = vmatpush2.bf16.msra.mxu0 %v1781
      %2604 = vmatprep.subr.bf16.mxu0 %v1767
      %2605 = vmatpush2.bf16.msra.mxu0 %v1766
      %2606 = vmatprep.subr.bf16.mxu0 %v1655
      %2607 = vmatpush2.bf16.msra.mxu0 %v1654
      %2608 = vmatprep.subr.bf16.mxu0 %v1640
      %2609 = vmatpush2.bf16.msra.mxu0 %v1639
      %2610 = vmatprep.subr.bf16.mxu0 %v1528
      %2611 = vmatpush2.bf16.msra.mxu0 %v1527
      %2612 = vmatprep.subr.bf16.mxu0 %v1513
      %2613 = vmatpush2.bf16.msra.mxu0 %v1512
      %2614 = vmatprep.mubr.bf16.mxu0 %v2082
      %2615 = vmatmul.mubr.bf16.gmra.mxu0 %v2081
      %v2616 = vpop.f32.mrf.mxu0
      %v2617 = vadd.f32 %v2074, %v2616
      %v2618 = vpop.f32.mrf.mxu0
      %v2619 = vadd.f32 %v2074, %v2618
      %v2620 = vpop.f32.mrf.mxu0
      %v2621 = vpop.f32.mrf.mxu0
      %2622 = vdwg.mxu0
      %2623 = vmatprep.subr.bf16.mxu0 0
      %2624 = vmatpush1.bf16.msra.mxu0 0
      %2625 = vmatprep.subr.bf16.mxu0 0
      %2626 = vmatpush1.bf16.msra.mxu0 0
      %2627 = vmatprep.subr.bf16.mxu0 0
      %2628 = vmatpush1.bf16.msra.mxu0 0
      %2629 = vmatprep.subr.bf16.mxu0 0
      %2630 = vmatpush1.bf16.msra.mxu0 0
      %2631 = vmatprep.subr.bf16.mxu0 0
      %2632 = vmatpush1.bf16.msra.mxu0 0
      %2633 = vmatprep.subr.bf16.mxu0 0
      %2634 = vmatpush1.bf16.msra.mxu0 0
      %2635 = vmatprep.subr.bf16.mxu0 %v2036
      %2636 = vmatpush1.bf16.msra.mxu0 %v2035
      %2637 = vmatprep.subr.bf16.mxu0 %v2021
      %2638 = vmatpush1.bf16.msra.mxu0 %v2020
      %2639 = vmatprep.subr.bf16.mxu0 0
      %2640 = vmatpush2.bf16.msra.mxu0 0
      %2641 = vmatprep.subr.bf16.mxu0 0
      %2642 = vmatpush2.bf16.msra.mxu0 0
      %2643 = vmatprep.subr.bf16.mxu0 0
      %2644 = vmatpush2.bf16.msra.mxu0 0
      %2645 = vmatprep.subr.bf16.mxu0 0
      %2646 = vmatpush2.bf16.msra.mxu0 0
      %2647 = vmatprep.subr.bf16.mxu0 0
      %2648 = vmatpush2.bf16.msra.mxu0 0
      %2649 = vmatprep.subr.bf16.mxu0 0
      %2650 = vmatpush2.bf16.msra.mxu0 0
      %2651 = vmatprep.subr.bf16.mxu0 0
      %2652 = vmatpush2.bf16.msra.mxu0 0
      %2653 = vmatprep.subr.bf16.mxu0 0
      %2654 = vmatpush2.bf16.msra.mxu0 0
      %2655 = vmatprep.mubr.bf16.mxu0 0
      %2656 = vmatmul.mubr.bf16.gmra.mxu0 %v2088
      %v2657 = vpop.f32.mrf.mxu0
      %v2658 = vadd.f32 %v2617, %v2657
      %v2659 = vpop.f32.mrf.mxu0
      %v2660 = vadd.f32 %v2619, %v2659
      %v2661 = vpop.f32.mrf.mxu0
      %v2662 = vpop.f32.mrf.mxu0
      %2663 = vdwg.mxu0
      %2664 = vmatprep.subr.bf16.mxu0 %v1371
      %2665 = vmatpush1.bf16.msra.mxu0 %v1402
      %2666 = vmatprep.subr.bf16.mxu0 %v1339
      %2667 = vmatpush1.bf16.msra.mxu0 %v1387
      %2668 = vmatprep.subr.bf16.mxu0 %v1244
      %2669 = vmatpush1.bf16.msra.mxu0 %v1275
      %2670 = vmatprep.subr.bf16.mxu0 %v1212
      %2671 = vmatpush1.bf16.msra.mxu0 %v1260
      %2672 = vmatprep.subr.bf16.mxu0 %v1117
      %2673 = vmatpush1.bf16.msra.mxu0 %v1148
      %2674 = vmatprep.subr.bf16.mxu0 %v1085
      %2675 = vmatpush1.bf16.msra.mxu0 %v1133
      %2676 = vmatprep.subr.bf16.mxu0 %v1021
      %2677 = vmatpush1.bf16.msra.mxu0 %v1020
      %2678 = vmatprep.subr.bf16.mxu0 %v1005
      %2679 = vmatpush1.bf16.msra.mxu0 %v1004
      %2680 = vmatprep.subr.bf16.mxu0 %v1879
      %2681 = vmatpush2.bf16.msra.mxu0 %v1910
      %2682 = vmatprep.subr.bf16.mxu0 %v1847
      %2683 = vmatpush2.bf16.msra.mxu0 %v1895
      %2684 = vmatprep.subr.bf16.mxu0 %v1752
      %2685 = vmatpush2.bf16.msra.mxu0 %v1783
      %2686 = vmatprep.subr.bf16.mxu0 %v1720
      %2687 = vmatpush2.bf16.msra.mxu0 %v1768
      %2688 = vmatprep.subr.bf16.mxu0 %v1625
      %2689 = vmatpush2.bf16.msra.mxu0 %v1656
      %2690 = vmatprep.subr.bf16.mxu0 %v1593
      %2691 = vmatpush2.bf16.msra.mxu0 %v1641
      %2692 = vmatprep.subr.bf16.mxu0 %v1498
      %2693 = vmatpush2.bf16.msra.mxu0 %v1529
      %2694 = vmatprep.subr.bf16.mxu0 %v1466
      %2695 = vmatpush2.bf16.msra.mxu0 %v1514
      %2696 = vmatprep.mubr.bf16.mxu0 %v2082
      %2697 = vmatmul.mubr.bf16.gmra.mxu0 %v2081
      %v2698 = vpop.f32.mrf.mxu0
      %v2699 = vadd.f32 %v2074, %v2698
      %v2700 = vpop.f32.mrf.mxu0
      %v2701 = vadd.f32 %v2074, %v2700
      %v2702 = vpop.f32.mrf.mxu0
      %v2703 = vpop.f32.mrf.mxu0
      %2704 = vdwg.mxu0
      %2705 = vmatprep.subr.bf16.mxu0 0
      %2706 = vmatpush1.bf16.msra.mxu0 0
      %2707 = vmatprep.subr.bf16.mxu0 0
      %2708 = vmatpush1.bf16.msra.mxu0 0
      %2709 = vmatprep.subr.bf16.mxu0 0
      %2710 = vmatpush1.bf16.msra.mxu0 0
      %2711 = vmatprep.subr.bf16.mxu0 0
      %2712 = vmatpush1.bf16.msra.mxu0 0
      %2713 = vmatprep.subr.bf16.mxu0 0
      %2714 = vmatpush1.bf16.msra.mxu0 0
      %2715 = vmatprep.subr.bf16.mxu0 0
      %2716 = vmatpush1.bf16.msra.mxu0 0
      %2717 = vmatprep.subr.bf16.mxu0 %v2006
      %2718 = vmatpush1.bf16.msra.mxu0 %v2037
      %2719 = vmatprep.subr.bf16.mxu0 %v1974
      %2720 = vmatpush1.bf16.msra.mxu0 %v2022
      %2721 = vmatprep.subr.bf16.mxu0 0
      %2722 = vmatpush2.bf16.msra.mxu0 0
      %2723 = vmatprep.subr.bf16.mxu0 0
      %2724 = vmatpush2.bf16.msra.mxu0 0
      %2725 = vmatprep.subr.bf16.mxu0 0
      %2726 = vmatpush2.bf16.msra.mxu0 0
      %2727 = vmatprep.subr.bf16.mxu0 0
      %2728 = vmatpush2.bf16.msra.mxu0 0
      %2729 = vmatprep.subr.bf16.mxu0 0
      %2730 = vmatpush2.bf16.msra.mxu0 0
      %2731 = vmatprep.subr.bf16.mxu0 0
      %2732 = vmatpush2.bf16.msra.mxu0 0
      %2733 = vmatprep.subr.bf16.mxu0 0
      %2734 = vmatpush2.bf16.msra.mxu0 0
      %2735 = vmatprep.subr.bf16.mxu0 0
      %2736 = vmatpush2.bf16.msra.mxu0 0
      %2737 = vmatprep.mubr.bf16.mxu0 0
      %2738 = vmatmul.mubr.bf16.gmra.mxu0 %v2088
      %v2739 = vpop.f32.mrf.mxu0
      %v2740 = vadd.f32 %v2699, %v2739
      %v2741 = vpop.f32.mrf.mxu0
      %v2742 = vadd.f32 %v2701, %v2741
      %v2743 = vpop.f32.mrf.mxu0
      %v2744 = vpop.f32.mrf.mxu0
      %2745 = vdwg.mxu0
      %v2746 = vmax.f32 %v2166, 0.0
      %v2747 = vmax.f32 %v2168, 0.0
      %v2748 = vmax.f32 %v2248, 0.0
      %v2749 = vmax.f32 %v2250, 0.0
      %v2750 = vmax.f32 %v2330, 0.0
      %v2751 = vmax.f32 %v2332, 0.0
      %v2752 = vmax.f32 %v2412, 0.0
      %v2753 = vmax.f32 %v2414, 0.0
      %v2754 = vmax.f32 %v2494, 0.0
      %v2755 = vmax.f32 %v2496, 0.0
      %v2756 = vmax.f32 %v2576, 0.0
      %v2757 = vmax.f32 %v2578, 0.0
      %v2758 = vmax.f32 %v2658, 0.0
      %v2759 = vmax.f32 %v2660, 0.0
      %v2760 = vmax.f32 %v2740, 0.0
      %v2761 = vmax.f32 %v2742, 0.0
      %2762 = vst [vmem:[%s197] sm:$0xff] %v2746
      %2763 = vst [vmem:[%s197 + $0x8] sm:$0xff] %v2747
      %2764 = vst [vmem:[%s197 + $0x10] sm:$0xff] %v2748
      %2765 = vst [vmem:[%s197 + $0x18] sm:$0xff] %v2749
      %2766 = vst [vmem:[%s197 + $0x20] sm:$0xff] %v2750
      %2767 = vst [vmem:[%s197 + $0x28] sm:$0xff] %v2751
      %2768 = vst [vmem:[%s197 + $0x30] sm:$0xff] %v2752
      %2769 = vst [vmem:[%s197 + $0x38] sm:$0xff] %v2753
      %2770 = vst [vmem:[%s197 + $0x40] sm:$0xff] %v2754
      %2771 = vst [vmem:[%s197 + $0x48] sm:$0xff] %v2755
      %2772 = vst [vmem:[%s197 + $0x50] sm:$0xff] %v2756
      %2773 = vst [vmem:[%s197 + $0x58] sm:$0xff] %v2757
      %2774 = vst [vmem:[%s197 + $0x60] sm:$0xff] %v2758
      %2775 = vst [vmem:[%s197 + $0x68] sm:$0xff] %v2759
      %2776 = vst [vmem:[%s197 + $0x70] sm:$0xff] %v2760
      %vm2777 = vcmask 121856
      %2778 = vst.msk [vmem:[%s197 + $0x78] sm:$0xff] %vm2777, %v2761
      %p2779 = scmp.lt.s32.totalorder %s15, 1
      %s2780 = scalar_select %p2779, %s15, 1
      %s2781 = smul.addr %s2780, 16
      %s2782 = smul.addr %s2781, 8
      %s2783 = scalar_lea.vmem %s4, %s2782
      // Predicated region
      $region37: #{decoder2d_forward.13} parent=35 // pred_check
        %p2784 = pneg %p122
      $region38: #{decoder2d_forward.13} parent=35 // pred_check_branch
        %2786 = sbr.rel (%p2784) target = $region40
      $region39: #{decoder2d_forward.13} parent=35 // pred_region
        _
      $region40: #{decoder2d_forward.13} parent=35 // pred_fallthru
        _
    $region36: #{decoder2d_forward.13} parent=5 // pred_fallthru
      _
    %p2787 = scmp.le.s32.totalorder 2, %s10
    // Predicated region
    $region41: #{decoder2d_forward.13} parent=5 // pred_check
      %p2788 = pneg %p2787
    $region42: #{decoder2d_forward.13} parent=5 // pred_check_branch
      %2790 = sbr.rel (%p2788) target = $region44
    $region43: #{decoder2d_forward.13} parent=5 // pred_region
      %s2791 = ssub.s32 %s10, 2
      // Predicated region
      $region45: #{decoder2d_forward.13} parent=43 // pred_check
        %p2792 = pneg %p128
      $region46: #{decoder2d_forward.13} parent=43 // pred_check_branch
        %2794 = sbr.rel (%p2792) target = $region48
      $region47: #{decoder2d_forward.13} parent=43 // pred_region
        %p2795 = scmp.lt.s32.totalorder %s16, 1
        %s2796 = scalar_select %p2795, %s16, 1
        %s2797 = smul.addr %s2796, 16
        %s2798 = smul.addr %s2797, 8
        %s2799 = scalar_lea.vmem %s4, %s2798
      $region48: #{decoder2d_forward.13} parent=43 // pred_fallthru
        _
    $region44: #{decoder2d_forward.13} parent=5 // pred_fallthru
      _
  $region6: #{decoder2d_forward.13} parent=0 // loop_footer
    %s14 = sadd.s32 1, %s10
  $region7: #{decoder2d_forward.13} parent=0 // loop_footer_branch
    %9 = sbr.rel target = $region3
  $region8: #{decoder2d_forward.13} parent=0 // loop_exit
    _

</llo_original>
